<compile_context>
chip_gen: v5e
topology: v5e:2x2
jax: 0.10.0
libtpu: 0.0.40
codegen_flags: <defaults>
</compile_context>

<pallas_src>
import jax
import jax.numpy as jnp
from jax.experimental import pallas as pl
from jax.experimental.pallas import tpu as pltpu


NI_PAD = 128  # lane-dense padded intent dimension


# ----------------------------- Pallas kernel --------------------------------
def intent_kernel(tok_ref, emb_ref, w1_ref, b1_ref, w2_ref, b2_ref,
                  wf1_ref, bf1_ref, wf2_ref, bf2_ref, out_ref):
    M = tok_ref.shape[0]              # Bt * L flattened token rows
    Vp, E = emb_ref.shape             # padded vocab, embedding dim
    H = w2_ref.shape[2]
    Bt = out_ref.shape[0]
    L = M // Bt

    # ---- fused embedding gather: one-hot (M, Vp) bf16 @ table (Vp, E) bf16 ----
    # Exact: 1.0 * bf16_value accumulated in f32 reproduces the bf16 table row.
    tok = tok_ref[...]                                            # (M, 1) int32
    vocab_iota = jax.lax.broadcasted_iota(jnp.int32, (M, Vp), 1)
    onehot = jnp.where(vocab_iota == tok, 1.0, 0.0).astype(jnp.bfloat16)
    x = jnp.dot(onehot, emb_ref[...],
                preferred_element_type=jnp.float32)               # (M, E) f32

    # Per-row sequence-boundary masks (Conv1d zero padding at both ends).
    row = jax.lax.broadcasted_iota(jnp.int32, (M, 1), 0)
    seq_first = (row % L) == 0
    seq_last = (row % L) == (L - 1)

    def conv3(x_f32, w_ref, b_ref):
        # kernel=3, padding=1 conv as THREE accumulating MXU matmuls -- no
        # (M, 3C) im2col buffer is ever materialized.  Roll wrap-around rows
        # always land on masked boundary rows, so nothing leaks.
        x_prev = jnp.where(seq_first, 0.0, pltpu.roll(x_f32, shift=1, axis=0))
        x_next = jnp.where(seq_last, 0.0, pltpu.roll(x_f32, shift=M - 1, axis=0))
        y = jnp.dot(x_prev.astype(jnp.bfloat16), w_ref[0],
                    preferred_element_type=jnp.float32)
        y = y + jnp.dot(x_f32.astype(jnp.bfloat16), w_ref[1],
                        preferred_element_type=jnp.float32)
        y = y + jnp.dot(x_next.astype(jnp.bfloat16), w_ref[2],
                        preferred_element_type=jnp.float32)
        return jnp.maximum(y + b_ref[...], 0.0)                   # (M, Cout) f32

    h1 = conv3(x, w1_ref, b1_ref)                                 # (M, H)
    h2 = conv3(h1, w2_ref, b2_ref)                                # (M, H)

    # AdaptiveMaxPool1d(1): max over the sequence axis of each batch row.
    pooled = jnp.max(h2.reshape(Bt, L, H), axis=1)                # (Bt, H)

    # Classifier: Linear -> ReLU -> (Dropout = identity in eval) -> Linear -> Softmax
    z1 = jnp.maximum(
        jnp.dot(pooled.astype(jnp.bfloat16), wf1_ref[...],
                preferred_element_type=jnp.float32) + bf1_ref[...], 0.0)   # (Bt, H//2)
    logits = jnp.dot(z1.astype(jnp.bfloat16), wf2_ref[...],
                     preferred_element_type=jnp.float32) + bf2_ref[...]    # (Bt, NI_PAD)
    # Padded lanes carry bias -1e9 (zero weight columns) -> exp underflows to 0.
    m = jnp.max(logits, axis=-1, keepdims=True)
    e = jnp.exp(logits - m)
    out_ref[...] = e / jnp.sum(e, axis=-1, keepdims=True)         # exact normalization


# ------------------------------ wrapper --------------------------------------
def _tensorcores_per_chip():
    """Best-effort TensorCore-per-chip count (megacore detection)."""
    try:
        kind = jax.devices()[0].device_kind.lower()
    except Exception:
        return 1
    for tag in ("v7", "v5p", "v4", "v3"):
        if tag in kind:
            return 2
    return 1


def intent_classifier_forward(tokens, params, *, batch_tile=None):
    """tokens: int32 (B, L).  Returns (B, num_intents) float32 probabilities."""
    emb_table = params["emb"]
    w1, b1 = params["w1"], params["b1"]
    w2, b2 = params["w2"], params["b2"]
    wf1, bf1 = params["wf1"], params["bf1"]
    wf2, bf2 = params["wf2"], params["bf2"]

    B, L = tokens.shape
    V, E = emb_table.shape
    H = w1.shape[2]
    NI = wf2.shape[1]
    assert NI <= NI_PAD

    # Batch tile: target M = Bt*L ~ 1024 rows per grid step (fills the MXU and
    # amortizes per-step overhead); keep >= num_tensorcores grid steps so both
    # TCs get work on megacore parts (v7x); Bt a multiple of 8 for tiling.
    if batch_tile is None:
        tc = _tensorcores_per_chip()
        cap_rows = max(8, ((1024 // max(L, 1)) // 8) * 8)
        per_core = max(8, ((-(-B // tc)) + 7) // 8 * 8)
        bt = min(cap_rows, per_core)
    else:
        bt = max(8, (batch_tile // 8) * 8)
    Bp = -(-B // bt) * bt
    if Bp != B:
        tokens = jnp.pad(tokens, ((0, Bp - B), (0, 0)))
    # Flatten token ids to (Bp*L, 1) so the kernel never needs a minor-dim reshape.
    tok_flat = tokens.reshape(Bp * L, 1).astype(jnp.int32)

    # Embedding table: bf16, vocab padded to a lane-dense multiple of 128 so the
    # in-kernel one-hot gather matmul has an MXU-friendly K dimension.
    Vp = -(-V // 128) * 128
    table = jnp.zeros((Vp, E), jnp.bfloat16).at[:V, :].set(
        emb_table.astype(jnp.bfloat16))

    # Weight prep: bf16 matmul operands kept as (3, Cin, Cout) tap-major stacks
    # (indexed per-tap in the kernel); lane-dense (128-padded) classifier head.
    w1_b = w1.astype(jnp.bfloat16)                                # (3, E, H)
    w2_b = w2.astype(jnp.bfloat16)                                # (3, H, H)
    wf1_b = wf1.astype(jnp.bfloat16)                              # (H, H//2)
    wf2_p = jnp.zeros((wf2.shape[0], NI_PAD), jnp.bfloat16).at[:, :NI].set(
        wf2.astype(jnp.bfloat16))                                 # (H//2, 128)
    bf2_p = jnp.full((1, NI_PAD), -1e9, jnp.float32).at[:, :NI].set(
        bf2.astype(jnp.float32))                                  # (1, 128)
    b1_f = b1.astype(jnp.float32)
    b2_f = b2.astype(jnp.float32)
    bf1_f = bf1.astype(jnp.float32)

    def _full(a):
        # Constant index_map -> Pallas DMAs this block once and reuses it
        # across all grid steps (no per-step weight re-fetch).
        nd = a.ndim
        return pl.BlockSpec(a.shape, lambda b, _n=nd: (0,) * _n)

    grid = (Bp // bt,)
    kernel_fn = pl.pallas_call(
        intent_kernel,
        out_shape=jax.ShapeDtypeStruct((Bp, NI_PAD), jnp.float32),
        grid_spec=pltpu.PrefetchScalarGridSpec(
            num_scalar_prefetch=0,
            grid=grid,
            in_specs=[
                pl.BlockSpec((bt * L, 1), lambda b: (b, 0)),      # token ids tile
                _full(table),
                _full(w1_b), _full(b1_f),
                _full(w2_b), _full(b2_f),
                _full(wf1_b), _full(bf1_f),
                _full(wf2_p), _full(bf2_p),
            ],
            out_specs=pl.BlockSpec((bt, NI_PAD), lambda b: (b, 0)),
        ),
        compiler_params=pltpu.CompilerParams(
            dimension_semantics=("parallel",),
            vmem_limit_bytes=32 * 1024 * 1024,
        ),
    )
    out_padded = kernel_fn(tok_flat, table, w1_b, b1_f, w2_b, b2_f,
                           wf1_b, bf1_f, wf2_p, bf2_p)
    return out_padded[:B, :NI]


# ------------------------- pure-JAX reference ---------------------------------
def reference_forward(tokens, params):
    """Reference mirroring the kernel's mixed precision: bf16 matmul operands,
    f32 accumulation / bias / activations / softmax (exact division)."""
    bf = jnp.bfloat16
    emb = params["emb"][tokens].astype(bf).astype(jnp.float32)    # (B, L, E)

    def conv_relu(x, w, b):  # x (B,L,Cin) f32, w (3,Cin,Cout), b (1,Cout)
        Lx = x.shape[1]
        xp = jnp.pad(x, ((0, 0), (1, 1), (0, 0)))
        y = sum(jnp.einsum("bli,io->blo",
                           xp[:, k:k + Lx, :].astype(bf),
                           w[k].astype(bf),
                           preferred_element_type=jnp.float32)
                for k in range(3))
        return jax.nn.relu(y + b[None].astype(jnp.float32))

    h1 = conv_relu(emb, params["w1"], params["b1"])
    h2 = conv_relu(h1, params["w2"], params["b2"])
    pooled = jnp.max(h2, axis=1)                                  # (B, H)
    z1 = jax.nn.relu(
        jnp.dot(pooled.astype(bf), params["wf1"].astype(bf),
                preferred_element_type=jnp.float32) + params["bf1"])
    logits = jnp.dot(z1.astype(bf), params["wf2"].astype(bf),
                     preferred_element_type=jnp.float32) + params["bf2"]
    return jax.nn.softmax(logits, axis=-1)


# --------------------------------- main ---------------------------------------
if __name__ == "__main__":
    # Module-consistent small shapes.
    vocab_size = 1000
    embedding_dim = 128
    hidden_dim = 256
    num_intents = 10
    B, L = 64, 8

    key = jax.random.PRNGKey(0)
    ks = jax.random.split(key, 10)
    s = 0.05  # deterministic synthetic init scale

    params = {
        "emb": jax.random.normal(ks[0], (vocab_size, embedding_dim), jnp.float32) * s,
        # conv weights stored as (k, in_ch, out_ch) == torch W[o,i,k] transposed
        "w1": jax.random.normal(ks[1], (3, embedding_dim, hidden_dim), jnp.float32) * s,
        "b1": jax.random.normal(ks[2], (1, hidden_dim), jnp.float32) * s,
        "w2": jax.random.normal(ks[3], (3, hidden_dim, hidden_dim), jnp.float32) * s,
        "b2": jax.random.normal(ks[4], (1, hidden_dim), jnp.float32) * s,
        # classifier: Linear(H, H//2), Linear(H//2, NI) stored as (in, out)
        "wf1": jax.random.normal(ks[5], (hidden_dim, hidden_dim // 2), jnp.float32) * s,
        "bf1": jax.random.normal(ks[6], (1, hidden_dim // 2), jnp.float32) * s,
        "wf2": jax.random.normal(ks[7], (hidden_dim // 2, num_intents), jnp.float32) * s,
        "bf2": jax.random.normal(ks[8], (1, num_intents), jnp.float32) * s,
    }

    tokens = jax.random.randint(ks[9], (B, L), 0, vocab_size, dtype=jnp.int32)

    # Dropout(0.3) is identity in eval mode; no RNG needed in the kernel.
    out = jax.block_until_ready(intent_classifier_forward(tokens, params))
    ref = jax.block_until_ready(reference_forward(tokens, params))

    assert out.shape == (B, num_intents)
    assert jnp.allclose(out, ref, rtol=2e-3, atol=1e-3), (out[:2], ref[:2])
    assert jnp.allclose(jnp.sum(out, axis=-1), 1.0, atol=1e-4)

    print("KERNEL_OK")
</pallas_src>

<mosaic_0001>
module attributes {stable_mosaic.version = 11 : i64} {
  func.func @intent_kernel(%arg0: i32, %arg1: memref<512x1xi32, #tpu.memory_space<vmem>>, %arg2: memref<1024x128xbf16, #tpu.memory_space<vmem>>, %arg3: memref<3x128x256xbf16, #tpu.memory_space<vmem>>, %arg4: memref<1x256xf32, #tpu.memory_space<vmem>>, %arg5: memref<3x256x256xbf16, #tpu.memory_space<vmem>>, %arg6: memref<1x256xf32, #tpu.memory_space<vmem>>, %arg7: memref<256x128xbf16, #tpu.memory_space<vmem>>, %arg8: memref<1x128xf32, #tpu.memory_space<vmem>>, %arg9: memref<128x128xbf16, #tpu.memory_space<vmem>>, %arg10: memref<1x128xf32, #tpu.memory_space<vmem>>, %arg11: memref<64x128xf32, #tpu.memory_space<vmem>>) attributes {dimension_semantics = [#tpu.dimension_semantics<parallel>], iteration_bounds = array<i64: 1>, scalar_prefetch = 0 : i64, scratch_operands = 0 : i64, tpu.core_type = #tpu.core_type<tc>, window_params = [{transform_indices = @transform_0, window_bounds = array<i64: 512, 1>}, {pipeline_mode = #tpu.pipeline_mode<synchronous>, transform_indices = @transform_1, window_bounds = array<i64: 1024, 128>}, {pipeline_mode = #tpu.pipeline_mode<synchronous>, transform_indices = @transform_2, window_bounds = array<i64: 3, 128, 256>}, {pipeline_mode = #tpu.pipeline_mode<synchronous>, transform_indices = @transform_3, window_bounds = array<i64: 1, 256>}, {pipeline_mode = #tpu.pipeline_mode<synchronous>, transform_indices = @transform_4, window_bounds = array<i64: 3, 256, 256>}, {pipeline_mode = #tpu.pipeline_mode<synchronous>, transform_indices = @transform_5, window_bounds = array<i64: 1, 256>}, {pipeline_mode = #tpu.pipeline_mode<synchronous>, transform_indices = @transform_6, window_bounds = array<i64: 256, 128>}, {pipeline_mode = #tpu.pipeline_mode<synchronous>, transform_indices = @transform_7, window_bounds = array<i64: 1, 128>}, {pipeline_mode = #tpu.pipeline_mode<synchronous>, transform_indices = @transform_8, window_bounds = array<i64: 128, 128>}, {pipeline_mode = #tpu.pipeline_mode<synchronous>, transform_indices = @transform_9, window_bounds = array<i64: 1, 128>}, {transform_indices = @transform_10, window_bounds = array<i64: 64, 128>}]} {
    %c0 = arith.constant 0 : index
    %c0_0 = arith.constant 0 : index
    %0 = vector.load %arg1[%c0, %c0_0] : memref<512x1xi32, #tpu.memory_space<vmem>>, vector<512x1xi32>
    %1 = tpu.iota {dimensions = array<i32: 1>} : vector<512x1024xi32>
    %2 = vector.broadcast %0 : vector<512x1xi32> to vector<512x1024xi32>
    %3 = arith.cmpi eq, %1, %2 : vector<512x1024xi32>
    %cst = arith.constant 1.000000e+00 : f32
    %cst_1 = arith.constant 0.000000e+00 : f32
    %4 = vector.broadcast %cst : f32 to vector<512x1024xf32>
    %5 = vector.broadcast %cst_1 : f32 to vector<512x1024xf32>
    %6 = arith.select %3, %4, %5 : vector<512x1024xi1>, vector<512x1024xf32>
    %7 = arith.truncf %6 : vector<512x1024xf32> to vector<512x1024xbf16>
    %c0_2 = arith.constant 0 : index
    %c0_3 = arith.constant 0 : index
    %8 = vector.load %arg2[%c0_2, %c0_3] : memref<1024x128xbf16, #tpu.memory_space<vmem>>, vector<1024x128xbf16>
    %cst_4 = arith.constant dense<0.000000e+00> : vector<512x128xf32>
    %9 = tpu.matmul %7, %8, %cst_4 {dimension_numbers = #tpu.dot_dimension_numbers<[1], [0], [0], [1], [0, 0, 1, 1], [], []>} : vector<512x1024xbf16>, vector<1024x128xbf16>, vector<512x128xf32> -> vector<512x128xf32>
    %10 = tpu.iota {dimensions = array<i32: 0>} : vector<512x1xi32>
    %c8_i32 = arith.constant 8 : i32
    %c0_i32 = arith.constant 0 : i32
    %11 = arith.cmpi eq, %c8_i32, %c0_i32 : i32
    %c1_i32 = arith.constant 1 : i32
    %12 = arith.select %11, %c1_i32, %c8_i32 : i32
    %13 = vector.broadcast %12 : i32 to vector<512x1xi32>
    %14 = arith.remsi %10, %13 : vector<512x1xi32>
    %c0_i32_5 = arith.constant 0 : i32
    %15 = vector.broadcast %c0_i32_5 : i32 to vector<512x1xi32>
    %16 = arith.cmpi ne, %14, %15 : vector<512x1xi32>
    %c0_i32_6 = arith.constant 0 : i32
    %17 = vector.broadcast %c0_i32_6 : i32 to vector<512x1xi32>
    %18 = arith.cmpi slt, %14, %17 : vector<512x1xi32>
    %c0_i32_7 = arith.constant 0 : i32
    %19 = arith.cmpi slt, %12, %c0_i32_7 : i32
    %20 = vector.broadcast %19 : i1 to vector<512x1xi1>
    %21 = vector.broadcast %20 : vector<512x1xi1> to vector<512x1xi1>
    %22 = arith.xori %18, %21 : vector<512x1xi1>
    %23 = arith.andi %22, %16 : vector<512x1xi1>
    %24 = vector.broadcast %12 : i32 to vector<512x1xi32>
    %25 = arith.addi %14, %24 : vector<512x1xi32>
    %26 = arith.select %23, %25, %14 : vector<512x1xi1>, vector<512x1xi32>
    %c0_i32_8 = arith.constant 0 : i32
    %27 = vector.broadcast %c0_i32_8 : i32 to vector<512x1xi32>
    %28 = arith.cmpi eq, %26, %27 : vector<512x1xi32>
    %c8_i32_9 = arith.constant 8 : i32
    %c0_i32_10 = arith.constant 0 : i32
    %29 = arith.cmpi eq, %c8_i32_9, %c0_i32_10 : i32
    %c1_i32_11 = arith.constant 1 : i32
    %30 = arith.select %29, %c1_i32_11, %c8_i32_9 : i32
    %31 = vector.broadcast %30 : i32 to vector<512x1xi32>
    %32 = arith.remsi %10, %31 : vector<512x1xi32>
    %c0_i32_12 = arith.constant 0 : i32
    %33 = vector.broadcast %c0_i32_12 : i32 to vector<512x1xi32>
    %34 = arith.cmpi ne, %32, %33 : vector<512x1xi32>
    %c0_i32_13 = arith.constant 0 : i32
    %35 = vector.broadcast %c0_i32_13 : i32 to vector<512x1xi32>
    %36 = arith.cmpi slt, %32, %35 : vector<512x1xi32>
    %c0_i32_14 = arith.constant 0 : i32
    %37 = arith.cmpi slt, %30, %c0_i32_14 : i32
    %38 = vector.broadcast %37 : i1 to vector<512x1xi1>
    %39 = vector.broadcast %38 : vector<512x1xi1> to vector<512x1xi1>
    %40 = arith.xori %36, %39 : vector<512x1xi1>
    %41 = arith.andi %40, %34 : vector<512x1xi1>
    %42 = vector.broadcast %30 : i32 to vector<512x1xi32>
    %43 = arith.addi %32, %42 : vector<512x1xi32>
    %44 = arith.select %41, %43, %32 : vector<512x1xi1>, vector<512x1xi32>
    %c7_i32 = arith.constant 7 : i32
    %45 = vector.broadcast %c7_i32 : i32 to vector<512x1xi32>
    %46 = arith.cmpi eq, %44, %45 : vector<512x1xi32>
    %c1_i32_15 = arith.constant 1 : i32
    %47 = tpu.dynamic_rotate %9 by %c1_i32_15 dim 0 : vector<512x128xf32>, i32 -> vector<512x128xf32>
    %cst_16 = arith.constant 0.000000e+00 : f32
    %48 = vector.shape_cast %28 : vector<512x1xi1> to vector<512x1xi1>
    %49 = vector.broadcast %48 : vector<512x1xi1> to vector<512x128xi1>
    %50 = vector.broadcast %cst_16 : f32 to vector<512x128xf32>
    %51 = arith.select %49, %50, %47 : vector<512x128xi1>, vector<512x128xf32>
    %c511_i32 = arith.constant 511 : i32
    %52 = tpu.dynamic_rotate %9 by %c511_i32 dim 0 : vector<512x128xf32>, i32 -> vector<512x128xf32>
    %cst_17 = arith.constant 0.000000e+00 : f32
    %53 = vector.shape_cast %46 : vector<512x1xi1> to vector<512x1xi1>
    %54 = vector.broadcast %53 : vector<512x1xi1> to vector<512x128xi1>
    %55 = vector.broadcast %cst_17 : f32 to vector<512x128xf32>
    %56 = arith.select %54, %55, %52 : vector<512x128xi1>, vector<512x128xf32>
    %57 = arith.truncf %51 : vector<512x128xf32> to vector<512x128xbf16>
    %c0_18 = arith.constant 0 : index
    %c0_19 = arith.constant 0 : index
    %c0_20 = arith.constant 0 : index
    %58 = vector.load %arg3[%c0_18, %c0_19, %c0_20] : memref<3x128x256xbf16, #tpu.memory_space<vmem>>, vector<1x128x256xbf16>
    %59 = vector.shape_cast %58 : vector<1x128x256xbf16> to vector<128x256xbf16>
    %cst_21 = arith.constant dense<0.000000e+00> : vector<512x256xf32>
    %60 = tpu.matmul %57, %59, %cst_21 {dimension_numbers = #tpu.dot_dimension_numbers<[1], [0], [0], [1], [0, 0, 1, 1], [], []>} : vector<512x128xbf16>, vector<128x256xbf16>, vector<512x256xf32> -> vector<512x256xf32>
    %61 = arith.truncf %9 : vector<512x128xf32> to vector<512x128xbf16>
    %c1 = arith.constant 1 : index
    %c0_22 = arith.constant 0 : index
    %c0_23 = arith.constant 0 : index
    %62 = vector.load %arg3[%c1, %c0_22, %c0_23] : memref<3x128x256xbf16, #tpu.memory_space<vmem>>, vector<1x128x256xbf16>
    %63 = vector.shape_cast %62 : vector<1x128x256xbf16> to vector<128x256xbf16>
    %cst_24 = arith.constant dense<0.000000e+00> : vector<512x256xf32>
    %64 = tpu.matmul %61, %63, %cst_24 {dimension_numbers = #tpu.dot_dimension_numbers<[1], [0], [0], [1], [0, 0, 1, 1], [], []>} : vector<512x128xbf16>, vector<128x256xbf16>, vector<512x256xf32> -> vector<512x256xf32>
    %65 = arith.addf %60, %64 : vector<512x256xf32>
    %66 = arith.truncf %56 : vector<512x128xf32> to vector<512x128xbf16>
    %c2 = arith.constant 2 : index
    %c0_25 = arith.constant 0 : index
    %c0_26 = arith.constant 0 : index
    %67 = vector.load %arg3[%c2, %c0_25, %c0_26] : memref<3x128x256xbf16, #tpu.memory_space<vmem>>, vector<1x128x256xbf16>
    %68 = vector.shape_cast %67 : vector<1x128x256xbf16> to vector<128x256xbf16>
    %cst_27 = arith.constant dense<0.000000e+00> : vector<512x256xf32>
    %69 = tpu.matmul %66, %68, %cst_27 {dimension_numbers = #tpu.dot_dimension_numbers<[1], [0], [0], [1], [0, 0, 1, 1], [], []>} : vector<512x128xbf16>, vector<128x256xbf16>, vector<512x256xf32> -> vector<512x256xf32>
    %70 = arith.addf %65, %69 : vector<512x256xf32>
    %c0_28 = arith.constant 0 : index
    %c0_29 = arith.constant 0 : index
    %71 = vector.load %arg4[%c0_28, %c0_29] : memref<1x256xf32, #tpu.memory_space<vmem>>, vector<1x256xf32>
    %72 = vector.broadcast %71 : vector<1x256xf32> to vector<512x256xf32>
    %73 = arith.addf %70, %72 : vector<512x256xf32>
    %cst_30 = arith.constant 0.000000e+00 : f32
    %74 = vector.broadcast %cst_30 : f32 to vector<512x256xf32>
    %75 = arith.maximumf %73, %74 : vector<512x256xf32>
    %c1_i32_31 = arith.constant 1 : i32
    %76 = tpu.dynamic_rotate %75 by %c1_i32_31 dim 0 : vector<512x256xf32>, i32 -> vector<512x256xf32>
    %cst_32 = arith.constant 0.000000e+00 : f32
    %77 = vector.shape_cast %28 : vector<512x1xi1> to vector<512x1xi1>
    %78 = vector.broadcast %77 : vector<512x1xi1> to vector<512x256xi1>
    %79 = vector.broadcast %cst_32 : f32 to vector<512x256xf32>
    %80 = arith.select %78, %79, %76 : vector<512x256xi1>, vector<512x256xf32>
    %c511_i32_33 = arith.constant 511 : i32
    %81 = tpu.dynamic_rotate %75 by %c511_i32_33 dim 0 : vector<512x256xf32>, i32 -> vector<512x256xf32>
    %cst_34 = arith.constant 0.000000e+00 : f32
    %82 = vector.shape_cast %46 : vector<512x1xi1> to vector<512x1xi1>
    %83 = vector.broadcast %82 : vector<512x1xi1> to vector<512x256xi1>
    %84 = vector.broadcast %cst_34 : f32 to vector<512x256xf32>
    %85 = arith.select %83, %84, %81 : vector<512x256xi1>, vector<512x256xf32>
    %86 = arith.truncf %80 : vector<512x256xf32> to vector<512x256xbf16>
    %c0_35 = arith.constant 0 : index
    %c0_36 = arith.constant 0 : index
    %c0_37 = arith.constant 0 : index
    %87 = vector.load %arg5[%c0_35, %c0_36, %c0_37] : memref<3x256x256xbf16, #tpu.memory_space<vmem>>, vector<1x256x256xbf16>
    %88 = vector.shape_cast %87 : vector<1x256x256xbf16> to vector<256x256xbf16>
    %cst_38 = arith.constant dense<0.000000e+00> : vector<512x256xf32>
    %89 = tpu.matmul %86, %88, %cst_38 {dimension_numbers = #tpu.dot_dimension_numbers<[1], [0], [0], [1], [0, 0, 1, 1], [], []>} : vector<512x256xbf16>, vector<256x256xbf16>, vector<512x256xf32> -> vector<512x256xf32>
    %90 = arith.truncf %75 : vector<512x256xf32> to vector<512x256xbf16>
    %c1_39 = arith.constant 1 : index
    %c0_40 = arith.constant 0 : index
    %c0_41 = arith.constant 0 : index
    %91 = vector.load %arg5[%c1_39, %c0_40, %c0_41] : memref<3x256x256xbf16, #tpu.memory_space<vmem>>, vector<1x256x256xbf16>
    %92 = vector.shape_cast %91 : vector<1x256x256xbf16> to vector<256x256xbf16>
    %cst_42 = arith.constant dense<0.000000e+00> : vector<512x256xf32>
    %93 = tpu.matmul %90, %92, %cst_42 {dimension_numbers = #tpu.dot_dimension_numbers<[1], [0], [0], [1], [0, 0, 1, 1], [], []>} : vector<512x256xbf16>, vector<256x256xbf16>, vector<512x256xf32> -> vector<512x256xf32>
    %94 = arith.addf %89, %93 : vector<512x256xf32>
    %95 = arith.truncf %85 : vector<512x256xf32> to vector<512x256xbf16>
    %c2_43 = arith.constant 2 : index
    %c0_44 = arith.constant 0 : index
    %c0_45 = arith.constant 0 : index
    %96 = vector.load %arg5[%c2_43, %c0_44, %c0_45] : memref<3x256x256xbf16, #tpu.memory_space<vmem>>, vector<1x256x256xbf16>
    %97 = vector.shape_cast %96 : vector<1x256x256xbf16> to vector<256x256xbf16>
    %cst_46 = arith.constant dense<0.000000e+00> : vector<512x256xf32>
    %98 = tpu.matmul %95, %97, %cst_46 {dimension_numbers = #tpu.dot_dimension_numbers<[1], [0], [0], [1], [0, 0, 1, 1], [], []>} : vector<512x256xbf16>, vector<256x256xbf16>, vector<512x256xf32> -> vector<512x256xf32>
    %99 = arith.addf %94, %98 : vector<512x256xf32>
    %c0_47 = arith.constant 0 : index
    %c0_48 = arith.constant 0 : index
    %100 = vector.load %arg6[%c0_47, %c0_48] : memref<1x256xf32, #tpu.memory_space<vmem>>, vector<1x256xf32>
    %101 = vector.broadcast %100 : vector<1x256xf32> to vector<512x256xf32>
    %102 = arith.addf %99, %101 : vector<512x256xf32>
    %cst_49 = arith.constant 0.000000e+00 : f32
    %103 = vector.broadcast %cst_49 : f32 to vector<512x256xf32>
    %104 = arith.maximumf %102, %103 : vector<512x256xf32>
    %105 = vector.shape_cast %104 : vector<512x256xf32> to vector<64x8x256xf32>
    %cst_50 = arith.constant dense<0xFF800000> : vector<64x256xf32>
    %106 = vector.multi_reduction <maximumf>, %105, %cst_50 [1] : vector<64x8x256xf32> to vector<64x256xf32>
    %107 = arith.truncf %106 : vector<64x256xf32> to vector<64x256xbf16>
    %c0_51 = arith.constant 0 : index
    %c0_52 = arith.constant 0 : index
    %108 = vector.load %arg7[%c0_51, %c0_52] : memref<256x128xbf16, #tpu.memory_space<vmem>>, vector<256x128xbf16>
    %cst_53 = arith.constant dense<0.000000e+00> : vector<64x128xf32>
    %109 = tpu.matmul %107, %108, %cst_53 {dimension_numbers = #tpu.dot_dimension_numbers<[1], [0], [0], [1], [0, 0, 1, 1], [], []>} : vector<64x256xbf16>, vector<256x128xbf16>, vector<64x128xf32> -> vector<64x128xf32>
    %c0_54 = arith.constant 0 : index
    %c0_55 = arith.constant 0 : index
    %110 = vector.load %arg8[%c0_54, %c0_55] : memref<1x128xf32, #tpu.memory_space<vmem>>, vector<1x128xf32>
    %111 = vector.broadcast %110 : vector<1x128xf32> to vector<64x128xf32>
    %112 = arith.addf %109, %111 : vector<64x128xf32>
    %cst_56 = arith.constant 0.000000e+00 : f32
    %113 = vector.broadcast %cst_56 : f32 to vector<64x128xf32>
    %114 = arith.maximumf %112, %113 : vector<64x128xf32>
    %115 = arith.truncf %114 : vector<64x128xf32> to vector<64x128xbf16>
    %c0_57 = arith.constant 0 : index
    %c0_58 = arith.constant 0 : index
    %116 = vector.load %arg9[%c0_57, %c0_58] : memref<128x128xbf16, #tpu.memory_space<vmem>>, vector<128x128xbf16>
    %cst_59 = arith.constant dense<0.000000e+00> : vector<64x128xf32>
    %117 = tpu.matmul %115, %116, %cst_59 {dimension_numbers = #tpu.dot_dimension_numbers<[1], [0], [0], [1], [0, 0, 1, 1], [], []>} : vector<64x128xbf16>, vector<128x128xbf16>, vector<64x128xf32> -> vector<64x128xf32>
    %c0_60 = arith.constant 0 : index
    %c0_61 = arith.constant 0 : index
    %118 = vector.load %arg10[%c0_60, %c0_61] : memref<1x128xf32, #tpu.memory_space<vmem>>, vector<1x128xf32>
    %119 = vector.broadcast %118 : vector<1x128xf32> to vector<64x128xf32>
    %120 = arith.addf %117, %119 : vector<64x128xf32>
    %cst_62 = arith.constant dense<0xFF800000> : vector<64xf32>
    %121 = vector.multi_reduction <maximumf>, %120, %cst_62 [1] : vector<64x128xf32> to vector<64xf32>
    %122 = vector.shape_cast %121 : vector<64xf32> to vector<64x1xf32>
    %123 = vector.broadcast %122 : vector<64x1xf32> to vector<64x128xf32>
    %124 = arith.subf %120, %123 : vector<64x128xf32>
    %125 = math.exp %124 : vector<64x128xf32>
    %cst_63 = arith.constant dense<0.000000e+00> : vector<64xf32>
    %126 = vector.multi_reduction <add>, %125, %cst_63 [1] : vector<64x128xf32> to vector<64xf32>
    %127 = vector.shape_cast %126 : vector<64xf32> to vector<64x1xf32>
    %128 = vector.broadcast %127 : vector<64x1xf32> to vector<64x128xf32>
    %129 = arith.divf %125, %128 : vector<64x128xf32>
    %c0_64 = arith.constant 0 : index
    %c0_65 = arith.constant 0 : index
    %130 = vector.load %arg11[%c0_64, %c0_65] : memref<64x128xf32, #tpu.memory_space<vmem>>, vector<64x128xf32>
    tpu.vector_store %arg11[%c0_64, %c0_65], %129 {strides = array<i32>} : memref<64x128xf32, #tpu.memory_space<vmem>>, vector<64x128xf32>,
    return
  }
  func.func @transform_0(%arg0: i32) -> (i32, i32) {
    %c0_i32 = arith.constant 0 : i32
    %c0_i32_0 = arith.constant 0 : i32
    return %arg0, %c0_i32 : i32, i32
  }
  func.func @transform_1(%arg0: i32) -> (i32, i32) {
    %c0_i32 = arith.constant 0 : i32
    %c0_i32_0 = arith.constant 0 : i32
    %c0_i32_1 = arith.constant 0 : i32
    return %c0_i32, %c0_i32_0 : i32, i32
  }
  func.func @transform_2(%arg0: i32) -> (i32, i32, i32) {
    %c0_i32 = arith.constant 0 : i32
    %c0_i32_0 = arith.constant 0 : i32
    %c0_i32_1 = arith.constant 0 : i32
    %c0_i32_2 = arith.constant 0 : i32
    return %c0_i32, %c0_i32_0, %c0_i32_1 : i32, i32, i32
  }
  func.func @transform_3(%arg0: i32) -> (i32, i32) {
    %c0_i32 = arith.constant 0 : i32
    %c0_i32_0 = arith.constant 0 : i32
    %c0_i32_1 = arith.constant 0 : i32
    return %c0_i32, %c0_i32_0 : i32, i32
  }
  func.func @transform_4(%arg0: i32) -> (i32, i32, i32) {
    %c0_i32 = arith.constant 0 : i32
    %c0_i32_0 = arith.constant 0 : i32
    %c0_i32_1 = arith.constant 0 : i32
    %c0_i32_2 = arith.constant 0 : i32
    return %c0_i32, %c0_i32_0, %c0_i32_1 : i32, i32, i32
  }
  func.func @transform_5(%arg0: i32) -> (i32, i32) {
    %c0_i32 = arith.constant 0 : i32
    %c0_i32_0 = arith.constant 0 : i32
    %c0_i32_1 = arith.constant 0 : i32
    return %c0_i32, %c0_i32_0 : i32, i32
  }
  func.func @transform_6(%arg0: i32) -> (i32, i32) {
    %c0_i32 = arith.constant 0 : i32
    %c0_i32_0 = arith.constant 0 : i32
    %c0_i32_1 = arith.constant 0 : i32
    return %c0_i32, %c0_i32_0 : i32, i32
  }
  func.func @transform_7(%arg0: i32) -> (i32, i32) {
    %c0_i32 = arith.constant 0 : i32
    %c0_i32_0 = arith.constant 0 : i32
    %c0_i32_1 = arith.constant 0 : i32
    return %c0_i32, %c0_i32_0 : i32, i32
  }
  func.func @transform_8(%arg0: i32) -> (i32, i32) {
    %c0_i32 = arith.constant 0 : i32
    %c0_i32_0 = arith.constant 0 : i32
    %c0_i32_1 = arith.constant 0 : i32
    return %c0_i32, %c0_i32_0 : i32, i32
  }
  func.func @transform_9(%arg0: i32) -> (i32, i32) {
    %c0_i32 = arith.constant 0 : i32
    %c0_i32_0 = arith.constant 0 : i32
    %c0_i32_1 = arith.constant 0 : i32
    return %c0_i32, %c0_i32_0 : i32, i32
  }
  func.func @transform_10(%arg0: i32) -> (i32, i32) {
    %c0_i32 = arith.constant 0 : i32
    %c0_i32_0 = arith.constant 0 : i32
    return %arg0, %c0_i32 : i32, i32
  }
}

</mosaic_0001>

<llo_original>
// kernel: tpu_custom_call.1
$region0: #{tpu_custom_call.1}
  #allocation0 [shape = 'u32[]', space=smem, size = 0x4, offset = 0x4, fixed_abs, tag = 'smem constant byte address 0x4 - core index']
  #allocation1 [shape = 'u32[72,128]{1,0:T(1,128)}', space=vmem, size = 0x9000, scoped, tag = 'internal scratch']
  %s0 = inlined_call_operand.vmem [shape: s32[512,1], index: 0, kind: input, shape index: {}]
  %s1 = inlined_call_operand.vmem [shape: bf16[1024,128], index: 1, kind: input, shape index: {}]
  %s2 = inlined_call_operand.hbm [shape: bf16[3,128,256], index: 2, kind: input, shape index: {}]
  %s3 = inlined_call_operand.vmem [shape: f32[1,256], index: 3, kind: input, shape index: {}]
  %s4 = inlined_call_operand.hbm [shape: bf16[3,256,256], index: 4, kind: input, shape index: {}]
  %s5 = inlined_call_operand.vmem [shape: f32[1,256], index: 5, kind: input, shape index: {}]
  %s6 = inlined_call_operand.hbm [shape: bf16[256,128], index: 6, kind: input, shape index: {}]
  %s7 = inlined_call_operand.vmem [shape: f32[1,128], index: 7, kind: input, shape index: {}]
  %s8 = inlined_call_operand.hbm [shape: bf16[128,128], index: 8, kind: input, shape index: {}]
  %s9 = inlined_call_operand.vmem [shape: f32[1,128], index: 9, kind: input, shape index: {}]
  %s10 = inlined_call_operand.hbm [shape: f32[64,128], index: 10, kind: output, shape index: {}]
  %s11 = sld [smem:[#allocation0]]
  $region66: #{tpu_custom_call.1} parent=0
    _
  %s13 = ssub.s32 1, %s11
  %s14 = scalar_select 0, %s13, %s11
  $region1: #{tpu_custom_call.1} parent=0
    #allocation2 [shape = 'u8[196608]{0}', space=vmem, size = 0x30000, scoped, tag = 'input window, operand 2, single buffered']
    #allocation3 [shape = 's32[1]{0}', space=sflag, size = 0x4, scoped, tag = 'scoped memory for tpu_custom_call.1']
    #allocation4 [shape = 's32[1]{0}', space=sflag, size = 0x4, scoped, tag = 'scoped memory for tpu_custom_call.1']
    #allocation5 [shape = 'u8[393216]{0}', space=vmem, size = 0x60000, scoped, tag = 'input window, operand 4, single buffered']
    #allocation6 [shape = 's32[1]{0}', space=sflag, size = 0x4, scoped, tag = 'scoped memory for tpu_custom_call.1']
    #allocation7 [shape = 'u8[65536]{0}', space=vmem, size = 0x10000, scoped, tag = 'input window, operand 6, single buffered']
    #allocation8 [shape = 'u8[32768]{0}', space=vmem, size = 0x8000, scoped, tag = 'input window, operand 8, single buffered']
    #allocation9 [shape = 's32[1]{0}', space=sflag, size = 0x4, scoped, tag = 'scoped memory for tpu_custom_call.1']
    #allocation10 [shape = 'u8[32768]{0}', space=vmem, size = 0x8000, scoped, tag = 'output window, operand 0, single buffered']
    %15 = vsyncpa [#allocation3], 0
    %16 = vsyncpa [#allocation6], 0
    %17 = vsyncpa [#allocation9], 0
    %18 = vsyncpa [#allocation4], 0
    // Predicated region
    $region2: #{tpu_custom_call.1} parent=1 // pred_check
      _
    $region3: #{tpu_custom_call.1} parent=1 // pred_check_branch
      %20 = sbr.rel (0) target = $region5
    $region4: #{tpu_custom_call.1} parent=1 // pred_region
      _
    $region5: #{tpu_custom_call.1} parent=1 // pred_fallthru
      _
    // Predicated region
    $region6: #{tpu_custom_call.1} parent=1 // pred_check
      _
    $region7: #{tpu_custom_call.1} parent=1 // pred_check_branch
      %22 = sbr.rel (0) target = $region9
    $region8: #{tpu_custom_call.1} parent=1 // pred_region
      _
    $region9: #{tpu_custom_call.1} parent=1 // pred_fallthru
      _
    // Predicated region
    $region10: #{tpu_custom_call.1} parent=1 // pred_check
      _
    $region11: #{tpu_custom_call.1} parent=1 // pred_check_branch
      %24 = sbr.rel (0) target = $region13
    $region12: #{tpu_custom_call.1} parent=1 // pred_region
      %26 = vsyncadd [#allocation3], 0
      %s27 = sshll.u32 %s2, 4
      %s28 = int_to_ptr.hbm [resolvable:$true] %s27
      %s29 = sshll.u32 [#allocation2], 4
      %s30 = int_to_ptr.vmem [resolvable:$true] %s29
      %35 = dma.hbm_to_vmem [thread:$0]  %s28, 6144, %s30, [#allocation3], 128, 128, 8
    $region13: #{tpu_custom_call.1} parent=1 // pred_fallthru
      _
    // Predicated region
    $region14: #{tpu_custom_call.1} parent=1 // pred_check
      _
    $region15: #{tpu_custom_call.1} parent=1 // pred_check_branch
      %37 = sbr.rel (0) target = $region17
    $region16: #{tpu_custom_call.1} parent=1 // pred_region
      _
    $region17: #{tpu_custom_call.1} parent=1 // pred_fallthru
      _
    // Predicated region
    $region18: #{tpu_custom_call.1} parent=1 // pred_check
      _
    $region19: #{tpu_custom_call.1} parent=1 // pred_check_branch
      %39 = sbr.rel (0) target = $region21
    $region20: #{tpu_custom_call.1} parent=1 // pred_region
      %41 = vsyncadd [#allocation6], 0
      %s42 = sshll.u32 %s4, 4
      %s43 = int_to_ptr.hbm [resolvable:$true] %s42
      %s44 = sshll.u32 [#allocation5], 4
      %s45 = int_to_ptr.vmem [resolvable:$true] %s44
      %50 = dma.hbm_to_vmem [thread:$0]  %s43, 12288, %s45, [#allocation6], 128, 128, 8
    $region21: #{tpu_custom_call.1} parent=1 // pred_fallthru
      _
    // Predicated region
    $region22: #{tpu_custom_call.1} parent=1 // pred_check
      _
    $region23: #{tpu_custom_call.1} parent=1 // pred_check_branch
      %52 = sbr.rel (0) target = $region25
    $region24: #{tpu_custom_call.1} parent=1 // pred_region
      _
    $region25: #{tpu_custom_call.1} parent=1 // pred_fallthru
      _
    // Predicated region
    $region26: #{tpu_custom_call.1} parent=1 // pred_check
      _
    $region27: #{tpu_custom_call.1} parent=1 // pred_check_branch
      %54 = sbr.rel (0) target = $region29
    $region28: #{tpu_custom_call.1} parent=1 // pred_region
      %56 = vsyncadd [#allocation6], 0
      %s57 = sshll.u32 %s6, 4
      %s58 = int_to_ptr.hbm [resolvable:$true] %s57
      %s59 = sshll.u32 [#allocation7], 4
      %s60 = int_to_ptr.vmem [resolvable:$true] %s59
      %65 = dma.hbm_to_vmem [thread:$0]  %s58, 2048, %s60, [#allocation6], 64, 64, 4
    $region29: #{tpu_custom_call.1} parent=1 // pred_fallthru
      _
    // Predicated region
    $region30: #{tpu_custom_call.1} parent=1 // pred_check
      _
    $region31: #{tpu_custom_call.1} parent=1 // pred_check_branch
      %67 = sbr.rel (0) target = $region33
    $region32: #{tpu_custom_call.1} parent=1 // pred_region
      _
    $region33: #{tpu_custom_call.1} parent=1 // pred_fallthru
      _
    // Predicated region
    $region34: #{tpu_custom_call.1} parent=1 // pred_check
      _
    $region35: #{tpu_custom_call.1} parent=1 // pred_check_branch
      %69 = sbr.rel (0) target = $region37
    $region36: #{tpu_custom_call.1} parent=1 // pred_region
      %71 = vsyncadd [#allocation9], 0
      %s72 = sshll.u32 %s8, 4
      %s73 = int_to_ptr.hbm [resolvable:$true] %s72
      %s74 = sshll.u32 [#allocation8], 4
      %s75 = int_to_ptr.vmem [resolvable:$true] %s74
      %80 = dma.hbm_to_vmem [thread:$0]  %s73, 1024, %s75, [#allocation9], 64, 64, 4
    $region37: #{tpu_custom_call.1} parent=1 // pred_fallthru
      _
    // Predicated region
    $region38: #{tpu_custom_call.1} parent=1 // pred_check
      _
    $region39: #{tpu_custom_call.1} parent=1 // pred_check_branch
      %82 = sbr.rel (0) target = $region41
    $region40: #{tpu_custom_call.1} parent=1 // pred_region
      _
    $region41: #{tpu_custom_call.1} parent=1 // pred_fallthru
      _
    // Predicated region
    $region42: #{tpu_custom_call.1} parent=1 // pred_check
      _
    $region43: #{tpu_custom_call.1} parent=1 // pred_check_branch
      %84 = sbr.rel (0) target = $region45
    $region44: #{tpu_custom_call.1} parent=1 // pred_region
      %86 = dma.done [#allocation3], 6144
    $region45: #{tpu_custom_call.1} parent=1 // pred_fallthru
      _
    // Predicated region
    $region46: #{tpu_custom_call.1} parent=1 // pred_check
      _
    $region47: #{tpu_custom_call.1} parent=1 // pred_check_branch
      %88 = sbr.rel (0) target = $region49
    $region48: #{tpu_custom_call.1} parent=1 // pred_region
      %90 = dma.done [#allocation6], 12288
    $region49: #{tpu_custom_call.1} parent=1 // pred_fallthru
      _
    // Predicated region
    $region50: #{tpu_custom_call.1} parent=1 // pred_check
      _
    $region51: #{tpu_custom_call.1} parent=1 // pred_check_branch
      %92 = sbr.rel (0) target = $region53
    $region52: #{tpu_custom_call.1} parent=1 // pred_region
      %94 = dma.done [#allocation6], 2048
    $region53: #{tpu_custom_call.1} parent=1 // pred_fallthru
      _
    // Predicated region
    $region54: #{tpu_custom_call.1} parent=1 // pred_check
      _
    $region55: #{tpu_custom_call.1} parent=1 // pred_check_branch
      %96 = sbr.rel (0) target = $region57
    $region56: #{tpu_custom_call.1} parent=1 // pred_region
      %98 = dma.done [#allocation9], 1024
    $region57: #{tpu_custom_call.1} parent=1 // pred_fallthru
      _
    %v99 = vld [vmem:[%s0] sm:$0xff]
    %v100 = vld [vmem:[%s0 + $0x8] sm:$0xff]
    %v101 = vld [vmem:[%s0 + $0x10] sm:$0xff]
    %v102 = vld [vmem:[%s0 + $0x18] sm:$0xff]
    %v103 = vld [vmem:[%s0 + $0x20] sm:$0xff]
    %v104 = vld [vmem:[%s0 + $0x28] sm:$0xff]
    %v105 = vld [vmem:[%s0 + $0x30] sm:$0xff]
    %v106 = vld [vmem:[%s0 + $0x38] sm:$0xff]
    %v107 = vld [vmem:[%s0 + $0x40] sm:$0xff]
    %v108 = vld [vmem:[%s0 + $0x48] sm:$0xff]
    %v109 = vld [vmem:[%s0 + $0x50] sm:$0xff]
    %v110 = vld [vmem:[%s0 + $0x58] sm:$0xff]
    %v111 = vld [vmem:[%s0 + $0x60] sm:$0xff]
    %v112 = vld [vmem:[%s0 + $0x68] sm:$0xff]
    %v113 = vld [vmem:[%s0 + $0x70] sm:$0xff]
    %v114 = vld [vmem:[%s0 + $0x78] sm:$0xff]
    %v115 = vld [vmem:[%s0 + $0x80] sm:$0xff]
    %v116 = vld [vmem:[%s0 + $0x88] sm:$0xff]
    %v117 = vld [vmem:[%s0 + $0x90] sm:$0xff]
    %v118 = vld [vmem:[%s0 + $0x98] sm:$0xff]
    %v119 = vld [vmem:[%s0 + $0xa0] sm:$0xff]
    %v120 = vld [vmem:[%s0 + $0xa8] sm:$0xff]
    %v121 = vld [vmem:[%s0 + $0xb0] sm:$0xff]
    %v122 = vld [vmem:[%s0 + $0xb8] sm:$0xff]
    %v123 = vld [vmem:[%s0 + $0xc0] sm:$0xff]
    %v124 = vld [vmem:[%s0 + $0xc8] sm:$0xff]
    %v125 = vld [vmem:[%s0 + $0xd0] sm:$0xff]
    %v126 = vld [vmem:[%s0 + $0xd8] sm:$0xff]
    %v127 = vld [vmem:[%s0 + $0xe0] sm:$0xff]
    %v128 = vld [vmem:[%s0 + $0xe8] sm:$0xff]
    %v129 = vld [vmem:[%s0 + $0xf0] sm:$0xff]
    %v130 = vld [vmem:[%s0 + $0xf8] sm:$0xff]
    %v131 = vld [vmem:[%s0 + $0x100] sm:$0xff]
    %v132 = vld [vmem:[%s0 + $0x108] sm:$0xff]
    %v133 = vld [vmem:[%s0 + $0x110] sm:$0xff]
    %v134 = vld [vmem:[%s0 + $0x118] sm:$0xff]
    %v135 = vld [vmem:[%s0 + $0x120] sm:$0xff]
    %v136 = vld [vmem:[%s0 + $0x128] sm:$0xff]
    %v137 = vld [vmem:[%s0 + $0x130] sm:$0xff]
    %v138 = vld [vmem:[%s0 + $0x138] sm:$0xff]
    %v139 = vld [vmem:[%s0 + $0x140] sm:$0xff]
    %v140 = vld [vmem:[%s0 + $0x148] sm:$0xff]
    %v141 = vld [vmem:[%s0 + $0x150] sm:$0xff]
    %v142 = vld [vmem:[%s0 + $0x158] sm:$0xff]
    %v143 = vld [vmem:[%s0 + $0x160] sm:$0xff]
    %v144 = vld [vmem:[%s0 + $0x168] sm:$0xff]
    %v145 = vld [vmem:[%s0 + $0x170] sm:$0xff]
    %v146 = vld [vmem:[%s0 + $0x178] sm:$0xff]
    %v147 = vld [vmem:[%s0 + $0x180] sm:$0xff]
    %v148 = vld [vmem:[%s0 + $0x188] sm:$0xff]
    %v149 = vld [vmem:[%s0 + $0x190] sm:$0xff]
    %v150 = vld [vmem:[%s0 + $0x198] sm:$0xff]
    %v151 = vld [vmem:[%s0 + $0x1a0] sm:$0xff]
    %v152 = vld [vmem:[%s0 + $0x1a8] sm:$0xff]
    %v153 = vld [vmem:[%s0 + $0x1b0] sm:$0xff]
    %v154 = vld [vmem:[%s0 + $0x1b8] sm:$0xff]
    %v155 = vld [vmem:[%s0 + $0x1c0] sm:$0xff]
    %v156 = vld [vmem:[%s0 + $0x1c8] sm:$0xff]
    %v157 = vld [vmem:[%s0 + $0x1d0] sm:$0xff]
    %v158 = vld [vmem:[%s0 + $0x1d8] sm:$0xff]
    %v159 = vld [vmem:[%s0 + $0x1e0] sm:$0xff]
    %v160 = vld [vmem:[%s0 + $0x1e8] sm:$0xff]
    %v161 = vld [vmem:[%s0 + $0x1f0] sm:$0xff]
    %v162 = vld [vmem:[%s0 + $0x1f8] sm:$0xff]
    %v163 = vlaneseq
    %v164 = vand.u32 %v163, 127
    %v165 = vadd.s32 %v164, 128
    %v166 = vadd.s32 %v164, 256
    %v167 = vadd.s32 %v164, 384
    %v168 = vadd.s32 %v164, 512
    %v169 = vadd.s32 %v164, 640
    %v170 = vadd.s32 %v164, 768
    %v171 = vadd.s32 %v164, 896
    %172 = vset.pattern.permute.xlu0 0
    %173 = vperm.xlu0 %172, %v99
    %v174 = vpop.permute.xlu0 %173
    %175 = vset.pattern.permute.xlu0 0
    %176 = vperm.xlu0 %175, %v100
    %v177 = vpop.permute.xlu0 %176
    %178 = vset.pattern.permute.xlu0 0
    %179 = vperm.xlu0 %178, %v101
    %v180 = vpop.permute.xlu0 %179
    %181 = vset.pattern.permute.xlu0 0
    %182 = vperm.xlu0 %181, %v102
    %v183 = vpop.permute.xlu0 %182
    %184 = vset.pattern.permute.xlu0 0
    %185 = vperm.xlu0 %184, %v103
    %v186 = vpop.permute.xlu0 %185
    %187 = vset.pattern.permute.xlu0 0
    %188 = vperm.xlu0 %187, %v104
    %v189 = vpop.permute.xlu0 %188
    %190 = vset.pattern.permute.xlu0 0
    %191 = vperm.xlu0 %190, %v105
    %v192 = vpop.permute.xlu0 %191
    %193 = vset.pattern.permute.xlu0 0
    %194 = vperm.xlu0 %193, %v106
    %v195 = vpop.permute.xlu0 %194
    %196 = vset.pattern.permute.xlu0 0
    %197 = vperm.xlu0 %196, %v107
    %v198 = vpop.permute.xlu0 %197
    %199 = vset.pattern.permute.xlu0 0
    %200 = vperm.xlu0 %199, %v108
    %v201 = vpop.permute.xlu0 %200
    %202 = vset.pattern.permute.xlu0 0
    %203 = vperm.xlu0 %202, %v109
    %v204 = vpop.permute.xlu0 %203
    %205 = vset.pattern.permute.xlu0 0
    %206 = vperm.xlu0 %205, %v110
    %v207 = vpop.permute.xlu0 %206
    %208 = vset.pattern.permute.xlu0 0
    %209 = vperm.xlu0 %208, %v111
    %v210 = vpop.permute.xlu0 %209
    %211 = vset.pattern.permute.xlu0 0
    %212 = vperm.xlu0 %211, %v112
    %v213 = vpop.permute.xlu0 %212
    %214 = vset.pattern.permute.xlu0 0
    %215 = vperm.xlu0 %214, %v113
    %v216 = vpop.permute.xlu0 %215
    %217 = vset.pattern.permute.xlu0 0
    %218 = vperm.xlu0 %217, %v114
    %v219 = vpop.permute.xlu0 %218
    %220 = vset.pattern.permute.xlu0 0
    %221 = vperm.xlu0 %220, %v115
    %v222 = vpop.permute.xlu0 %221
    %223 = vset.pattern.permute.xlu0 0
    %224 = vperm.xlu0 %223, %v116
    %v225 = vpop.permute.xlu0 %224
    %226 = vset.pattern.permute.xlu0 0
    %227 = vperm.xlu0 %226, %v117
    %v228 = vpop.permute.xlu0 %227
    %229 = vset.pattern.permute.xlu0 0
    %230 = vperm.xlu0 %229, %v118
    %v231 = vpop.permute.xlu0 %230
    %232 = vset.pattern.permute.xlu0 0
    %233 = vperm.xlu0 %232, %v119
    %v234 = vpop.permute.xlu0 %233
    %235 = vset.pattern.permute.xlu0 0
    %236 = vperm.xlu0 %235, %v120
    %v237 = vpop.permute.xlu0 %236
    %238 = vset.pattern.permute.xlu0 0
    %239 = vperm.xlu0 %238, %v121
    %v240 = vpop.permute.xlu0 %239
    %241 = vset.pattern.permute.xlu0 0
    %242 = vperm.xlu0 %241, %v122
    %v243 = vpop.permute.xlu0 %242
    %244 = vset.pattern.permute.xlu0 0
    %245 = vperm.xlu0 %244, %v123
    %v246 = vpop.permute.xlu0 %245
    %247 = vset.pattern.permute.xlu0 0
    %248 = vperm.xlu0 %247, %v124
    %v249 = vpop.permute.xlu0 %248
    %250 = vset.pattern.permute.xlu0 0
    %251 = vperm.xlu0 %250, %v125
    %v252 = vpop.permute.xlu0 %251
    %253 = vset.pattern.permute.xlu0 0
    %254 = vperm.xlu0 %253, %v126
    %v255 = vpop.permute.xlu0 %254
    %256 = vset.pattern.permute.xlu0 0
    %257 = vperm.xlu0 %256, %v127
    %v258 = vpop.permute.xlu0 %257
    %259 = vset.pattern.permute.xlu0 0
    %260 = vperm.xlu0 %259, %v128
    %v261 = vpop.permute.xlu0 %260
    %262 = vset.pattern.permute.xlu0 0
    %263 = vperm.xlu0 %262, %v129
    %v264 = vpop.permute.xlu0 %263
    %265 = vset.pattern.permute.xlu0 0
    %266 = vperm.xlu0 %265, %v130
    %v267 = vpop.permute.xlu0 %266
    %268 = vset.pattern.permute.xlu0 0
    %269 = vperm.xlu0 %268, %v131
    %v270 = vpop.permute.xlu0 %269
    %271 = vset.pattern.permute.xlu0 0
    %272 = vperm.xlu0 %271, %v132
    %v273 = vpop.permute.xlu0 %272
    %274 = vset.pattern.permute.xlu0 0
    %275 = vperm.xlu0 %274, %v133
    %v276 = vpop.permute.xlu0 %275
    %277 = vset.pattern.permute.xlu0 0
    %278 = vperm.xlu0 %277, %v134
    %v279 = vpop.permute.xlu0 %278
    %280 = vset.pattern.permute.xlu0 0
    %281 = vperm.xlu0 %280, %v135
    %v282 = vpop.permute.xlu0 %281
    %283 = vset.pattern.permute.xlu0 0
    %284 = vperm.xlu0 %283, %v136
    %v285 = vpop.permute.xlu0 %284
    %286 = vset.pattern.permute.xlu0 0
    %287 = vperm.xlu0 %286, %v137
    %v288 = vpop.permute.xlu0 %287
    %289 = vset.pattern.permute.xlu0 0
    %290 = vperm.xlu0 %289, %v138
    %v291 = vpop.permute.xlu0 %290
    %292 = vset.pattern.permute.xlu0 0
    %293 = vperm.xlu0 %292, %v139
    %v294 = vpop.permute.xlu0 %293
    %295 = vset.pattern.permute.xlu0 0
    %296 = vperm.xlu0 %295, %v140
    %v297 = vpop.permute.xlu0 %296
    %298 = vset.pattern.permute.xlu0 0
    %299 = vperm.xlu0 %298, %v141
    %v300 = vpop.permute.xlu0 %299
    %301 = vset.pattern.permute.xlu0 0
    %302 = vperm.xlu0 %301, %v142
    %v303 = vpop.permute.xlu0 %302
    %304 = vset.pattern.permute.xlu0 0
    %305 = vperm.xlu0 %304, %v143
    %v306 = vpop.permute.xlu0 %305
    %307 = vset.pattern.permute.xlu0 0
    %308 = vperm.xlu0 %307, %v144
    %v309 = vpop.permute.xlu0 %308
    %310 = vset.pattern.permute.xlu0 0
    %311 = vperm.xlu0 %310, %v145
    %v312 = vpop.permute.xlu0 %311
    %313 = vset.pattern.permute.xlu0 0
    %314 = vperm.xlu0 %313, %v146
    %v315 = vpop.permute.xlu0 %314
    %316 = vset.pattern.permute.xlu0 0
    %317 = vperm.xlu0 %316, %v147
    %v318 = vpop.permute.xlu0 %317
    %319 = vset.pattern.permute.xlu0 0
    %320 = vperm.xlu0 %319, %v148
    %v321 = vpop.permute.xlu0 %320
    %322 = vset.pattern.permute.xlu0 0
    %323 = vperm.xlu0 %322, %v149
    %v324 = vpop.permute.xlu0 %323
    %325 = vset.pattern.permute.xlu0 0
    %326 = vperm.xlu0 %325, %v150
    %v327 = vpop.permute.xlu0 %326
    %328 = vset.pattern.permute.xlu0 0
    %329 = vperm.xlu0 %328, %v151
    %v330 = vpop.permute.xlu0 %329
    %331 = vset.pattern.permute.xlu0 0
    %332 = vperm.xlu0 %331, %v152
    %v333 = vpop.permute.xlu0 %332
    %334 = vset.pattern.permute.xlu0 0
    %335 = vperm.xlu0 %334, %v153
    %v336 = vpop.permute.xlu0 %335
    %337 = vset.pattern.permute.xlu0 0
    %338 = vperm.xlu0 %337, %v154
    %v339 = vpop.permute.xlu0 %338
    %340 = vset.pattern.permute.xlu0 0
    %341 = vperm.xlu0 %340, %v155
    %v342 = vpop.permute.xlu0 %341
    %343 = vset.pattern.permute.xlu0 0
    %344 = vperm.xlu0 %343, %v156
    %v345 = vpop.permute.xlu0 %344
    %346 = vset.pattern.permute.xlu0 0
    %347 = vperm.xlu0 %346, %v157
    %v348 = vpop.permute.xlu0 %347
    %349 = vset.pattern.permute.xlu0 0
    %350 = vperm.xlu0 %349, %v158
    %v351 = vpop.permute.xlu0 %350
    %352 = vset.pattern.permute.xlu0 0
    %353 = vperm.xlu0 %352, %v159
    %v354 = vpop.permute.xlu0 %353
    %355 = vset.pattern.permute.xlu0 0
    %356 = vperm.xlu0 %355, %v160
    %v357 = vpop.permute.xlu0 %356
    %358 = vset.pattern.permute.xlu0 0
    %359 = vperm.xlu0 %358, %v161
    %v360 = vpop.permute.xlu0 %359
    %361 = vset.pattern.permute.xlu0 0
    %362 = vperm.xlu0 %361, %v162
    %v363 = vpop.permute.xlu0 %362
    %vm364 = vcmp.eq.s32.totalorder %v164, %v174
    %vm365 = vcmp.eq.s32.totalorder %v165, %v174
    %vm366 = vcmp.eq.s32.totalorder %v166, %v174
    %vm367 = vcmp.eq.s32.totalorder %v167, %v174
    %vm368 = vcmp.eq.s32.totalorder %v168, %v174
    %vm369 = vcmp.eq.s32.totalorder %v169, %v174
    %vm370 = vcmp.eq.s32.totalorder %v170, %v174
    %vm371 = vcmp.eq.s32.totalorder %v171, %v174
    %vm372 = vcmp.eq.s32.totalorder %v164, %v177
    %vm373 = vcmp.eq.s32.totalorder %v165, %v177
    %vm374 = vcmp.eq.s32.totalorder %v166, %v177
    %vm375 = vcmp.eq.s32.totalorder %v167, %v177
    %vm376 = vcmp.eq.s32.totalorder %v168, %v177
    %vm377 = vcmp.eq.s32.totalorder %v169, %v177
    %vm378 = vcmp.eq.s32.totalorder %v170, %v177
    %vm379 = vcmp.eq.s32.totalorder %v171, %v177
    %vm380 = vcmp.eq.s32.totalorder %v164, %v180
    %vm381 = vcmp.eq.s32.totalorder %v165, %v180
    %vm382 = vcmp.eq.s32.totalorder %v166, %v180
    %vm383 = vcmp.eq.s32.totalorder %v167, %v180
    %vm384 = vcmp.eq.s32.totalorder %v168, %v180
    %vm385 = vcmp.eq.s32.totalorder %v169, %v180
    %vm386 = vcmp.eq.s32.totalorder %v170, %v180
    %vm387 = vcmp.eq.s32.totalorder %v171, %v180
    %vm388 = vcmp.eq.s32.totalorder %v164, %v183
    %vm389 = vcmp.eq.s32.totalorder %v165, %v183
    %vm390 = vcmp.eq.s32.totalorder %v166, %v183
    %vm391 = vcmp.eq.s32.totalorder %v167, %v183
    %vm392 = vcmp.eq.s32.totalorder %v168, %v183
    %vm393 = vcmp.eq.s32.totalorder %v169, %v183
    %vm394 = vcmp.eq.s32.totalorder %v170, %v183
    %vm395 = vcmp.eq.s32.totalorder %v171, %v183
    %vm396 = vcmp.eq.s32.totalorder %v164, %v186
    %vm397 = vcmp.eq.s32.totalorder %v165, %v186
    %vm398 = vcmp.eq.s32.totalorder %v166, %v186
    %vm399 = vcmp.eq.s32.totalorder %v167, %v186
    %vm400 = vcmp.eq.s32.totalorder %v168, %v186
    %vm401 = vcmp.eq.s32.totalorder %v169, %v186
    %vm402 = vcmp.eq.s32.totalorder %v170, %v186
    %vm403 = vcmp.eq.s32.totalorder %v171, %v186
    %vm404 = vcmp.eq.s32.totalorder %v164, %v189
    %vm405 = vcmp.eq.s32.totalorder %v165, %v189
    %vm406 = vcmp.eq.s32.totalorder %v166, %v189
    %vm407 = vcmp.eq.s32.totalorder %v167, %v189
    %vm408 = vcmp.eq.s32.totalorder %v168, %v189
    %vm409 = vcmp.eq.s32.totalorder %v169, %v189
    %vm410 = vcmp.eq.s32.totalorder %v170, %v189
    %vm411 = vcmp.eq.s32.totalorder %v171, %v189
    %vm412 = vcmp.eq.s32.totalorder %v164, %v192
    %vm413 = vcmp.eq.s32.totalorder %v165, %v192
    %vm414 = vcmp.eq.s32.totalorder %v166, %v192
    %vm415 = vcmp.eq.s32.totalorder %v167, %v192
    %vm416 = vcmp.eq.s32.totalorder %v168, %v192
    %vm417 = vcmp.eq.s32.totalorder %v169, %v192
    %vm418 = vcmp.eq.s32.totalorder %v170, %v192
    %vm419 = vcmp.eq.s32.totalorder %v171, %v192
    %vm420 = vcmp.eq.s32.totalorder %v164, %v195
    %vm421 = vcmp.eq.s32.totalorder %v165, %v195
    %vm422 = vcmp.eq.s32.totalorder %v166, %v195
    %vm423 = vcmp.eq.s32.totalorder %v167, %v195
    %vm424 = vcmp.eq.s32.totalorder %v168, %v195
    %vm425 = vcmp.eq.s32.totalorder %v169, %v195
    %vm426 = vcmp.eq.s32.totalorder %v170, %v195
    %vm427 = vcmp.eq.s32.totalorder %v171, %v195
    %vm428 = vcmp.eq.s32.totalorder %v164, %v198
    %vm429 = vcmp.eq.s32.totalorder %v165, %v198
    %vm430 = vcmp.eq.s32.totalorder %v166, %v198
    %vm431 = vcmp.eq.s32.totalorder %v167, %v198
    %vm432 = vcmp.eq.s32.totalorder %v168, %v198
    %vm433 = vcmp.eq.s32.totalorder %v169, %v198
    %vm434 = vcmp.eq.s32.totalorder %v170, %v198
    %vm435 = vcmp.eq.s32.totalorder %v171, %v198
    %vm436 = vcmp.eq.s32.totalorder %v164, %v201
    %vm437 = vcmp.eq.s32.totalorder %v165, %v201
    %vm438 = vcmp.eq.s32.totalorder %v166, %v201
    %vm439 = vcmp.eq.s32.totalorder %v167, %v201
    %vm440 = vcmp.eq.s32.totalorder %v168, %v201
    %vm441 = vcmp.eq.s32.totalorder %v169, %v201
    %vm442 = vcmp.eq.s32.totalorder %v170, %v201
    %vm443 = vcmp.eq.s32.totalorder %v171, %v201
    %vm444 = vcmp.eq.s32.totalorder %v164, %v204
    %vm445 = vcmp.eq.s32.totalorder %v165, %v204
    %vm446 = vcmp.eq.s32.totalorder %v166, %v204
    %vm447 = vcmp.eq.s32.totalorder %v167, %v204
    %vm448 = vcmp.eq.s32.totalorder %v168, %v204
    %vm449 = vcmp.eq.s32.totalorder %v169, %v204
    %vm450 = vcmp.eq.s32.totalorder %v170, %v204
    %vm451 = vcmp.eq.s32.totalorder %v171, %v204
    %vm452 = vcmp.eq.s32.totalorder %v164, %v207
    %vm453 = vcmp.eq.s32.totalorder %v165, %v207
    %vm454 = vcmp.eq.s32.totalorder %v166, %v207
    %vm455 = vcmp.eq.s32.totalorder %v167, %v207
    %vm456 = vcmp.eq.s32.totalorder %v168, %v207
    %vm457 = vcmp.eq.s32.totalorder %v169, %v207
    %vm458 = vcmp.eq.s32.totalorder %v170, %v207
    %vm459 = vcmp.eq.s32.totalorder %v171, %v207
    %vm460 = vcmp.eq.s32.totalorder %v164, %v210
    %vm461 = vcmp.eq.s32.totalorder %v165, %v210
    %vm462 = vcmp.eq.s32.totalorder %v166, %v210
    %vm463 = vcmp.eq.s32.totalorder %v167, %v210
    %vm464 = vcmp.eq.s32.totalorder %v168, %v210
    %vm465 = vcmp.eq.s32.totalorder %v169, %v210
    %vm466 = vcmp.eq.s32.totalorder %v170, %v210
    %vm467 = vcmp.eq.s32.totalorder %v171, %v210
    %vm468 = vcmp.eq.s32.totalorder %v164, %v213
    %vm469 = vcmp.eq.s32.totalorder %v165, %v213
    %vm470 = vcmp.eq.s32.totalorder %v166, %v213
    %vm471 = vcmp.eq.s32.totalorder %v167, %v213
    %vm472 = vcmp.eq.s32.totalorder %v168, %v213
    %vm473 = vcmp.eq.s32.totalorder %v169, %v213
    %vm474 = vcmp.eq.s32.totalorder %v170, %v213
    %vm475 = vcmp.eq.s32.totalorder %v171, %v213
    %vm476 = vcmp.eq.s32.totalorder %v164, %v216
    %vm477 = vcmp.eq.s32.totalorder %v165, %v216
    %vm478 = vcmp.eq.s32.totalorder %v166, %v216
    %vm479 = vcmp.eq.s32.totalorder %v167, %v216
    %vm480 = vcmp.eq.s32.totalorder %v168, %v216
    %vm481 = vcmp.eq.s32.totalorder %v169, %v216
    %vm482 = vcmp.eq.s32.totalorder %v170, %v216
    %vm483 = vcmp.eq.s32.totalorder %v171, %v216
    %vm484 = vcmp.eq.s32.totalorder %v164, %v219
    %vm485 = vcmp.eq.s32.totalorder %v165, %v219
    %vm486 = vcmp.eq.s32.totalorder %v166, %v219
    %vm487 = vcmp.eq.s32.totalorder %v167, %v219
    %vm488 = vcmp.eq.s32.totalorder %v168, %v219
    %vm489 = vcmp.eq.s32.totalorder %v169, %v219
    %vm490 = vcmp.eq.s32.totalorder %v170, %v219
    %vm491 = vcmp.eq.s32.totalorder %v171, %v219
    %vm492 = vcmp.eq.s32.totalorder %v164, %v222
    %vm493 = vcmp.eq.s32.totalorder %v165, %v222
    %vm494 = vcmp.eq.s32.totalorder %v166, %v222
    %vm495 = vcmp.eq.s32.totalorder %v167, %v222
    %vm496 = vcmp.eq.s32.totalorder %v168, %v222
    %vm497 = vcmp.eq.s32.totalorder %v169, %v222
    %vm498 = vcmp.eq.s32.totalorder %v170, %v222
    %vm499 = vcmp.eq.s32.totalorder %v171, %v222
    %vm500 = vcmp.eq.s32.totalorder %v164, %v225
    %vm501 = vcmp.eq.s32.totalorder %v165, %v225
    %vm502 = vcmp.eq.s32.totalorder %v166, %v225
    %vm503 = vcmp.eq.s32.totalorder %v167, %v225
    %vm504 = vcmp.eq.s32.totalorder %v168, %v225
    %vm505 = vcmp.eq.s32.totalorder %v169, %v225
    %vm506 = vcmp.eq.s32.totalorder %v170, %v225
    %vm507 = vcmp.eq.s32.totalorder %v171, %v225
    %vm508 = vcmp.eq.s32.totalorder %v164, %v228
    %vm509 = vcmp.eq.s32.totalorder %v165, %v228
    %vm510 = vcmp.eq.s32.totalorder %v166, %v228
    %vm511 = vcmp.eq.s32.totalorder %v167, %v228
    %vm512 = vcmp.eq.s32.totalorder %v168, %v228
    %vm513 = vcmp.eq.s32.totalorder %v169, %v228
    %vm514 = vcmp.eq.s32.totalorder %v170, %v228
    %vm515 = vcmp.eq.s32.totalorder %v171, %v228
    %vm516 = vcmp.eq.s32.totalorder %v164, %v231
    %vm517 = vcmp.eq.s32.totalorder %v165, %v231
    %vm518 = vcmp.eq.s32.totalorder %v166, %v231
    %vm519 = vcmp.eq.s32.totalorder %v167, %v231
    %vm520 = vcmp.eq.s32.totalorder %v168, %v231
    %vm521 = vcmp.eq.s32.totalorder %v169, %v231
    %vm522 = vcmp.eq.s32.totalorder %v170, %v231
    %vm523 = vcmp.eq.s32.totalorder %v171, %v231
    %vm524 = vcmp.eq.s32.totalorder %v164, %v234
    %vm525 = vcmp.eq.s32.totalorder %v165, %v234
    %vm526 = vcmp.eq.s32.totalorder %v166, %v234
    %vm527 = vcmp.eq.s32.totalorder %v167, %v234
    %vm528 = vcmp.eq.s32.totalorder %v168, %v234
    %vm529 = vcmp.eq.s32.totalorder %v169, %v234
    %vm530 = vcmp.eq.s32.totalorder %v170, %v234
    %vm531 = vcmp.eq.s32.totalorder %v171, %v234
    %vm532 = vcmp.eq.s32.totalorder %v164, %v237
    %vm533 = vcmp.eq.s32.totalorder %v165, %v237
    %vm534 = vcmp.eq.s32.totalorder %v166, %v237
    %vm535 = vcmp.eq.s32.totalorder %v167, %v237
    %vm536 = vcmp.eq.s32.totalorder %v168, %v237
    %vm537 = vcmp.eq.s32.totalorder %v169, %v237
    %vm538 = vcmp.eq.s32.totalorder %v170, %v237
    %vm539 = vcmp.eq.s32.totalorder %v171, %v237
    %vm540 = vcmp.eq.s32.totalorder %v164, %v240
    %vm541 = vcmp.eq.s32.totalorder %v165, %v240
    %vm542 = vcmp.eq.s32.totalorder %v166, %v240
    %vm543 = vcmp.eq.s32.totalorder %v167, %v240
    %vm544 = vcmp.eq.s32.totalorder %v168, %v240
    %vm545 = vcmp.eq.s32.totalorder %v169, %v240
    %vm546 = vcmp.eq.s32.totalorder %v170, %v240
    %vm547 = vcmp.eq.s32.totalorder %v171, %v240
    %vm548 = vcmp.eq.s32.totalorder %v164, %v243
    %vm549 = vcmp.eq.s32.totalorder %v165, %v243
    %vm550 = vcmp.eq.s32.totalorder %v166, %v243
    %vm551 = vcmp.eq.s32.totalorder %v167, %v243
    %vm552 = vcmp.eq.s32.totalorder %v168, %v243
    %vm553 = vcmp.eq.s32.totalorder %v169, %v243
    %vm554 = vcmp.eq.s32.totalorder %v170, %v243
    %vm555 = vcmp.eq.s32.totalorder %v171, %v243
    %vm556 = vcmp.eq.s32.totalorder %v164, %v246
    %vm557 = vcmp.eq.s32.totalorder %v165, %v246
    %vm558 = vcmp.eq.s32.totalorder %v166, %v246
    %vm559 = vcmp.eq.s32.totalorder %v167, %v246
    %vm560 = vcmp.eq.s32.totalorder %v168, %v246
    %vm561 = vcmp.eq.s32.totalorder %v169, %v246
    %vm562 = vcmp.eq.s32.totalorder %v170, %v246
    %vm563 = vcmp.eq.s32.totalorder %v171, %v246
    %vm564 = vcmp.eq.s32.totalorder %v164, %v249
    %vm565 = vcmp.eq.s32.totalorder %v165, %v249
    %vm566 = vcmp.eq.s32.totalorder %v166, %v249
    %vm567 = vcmp.eq.s32.totalorder %v167, %v249
    %vm568 = vcmp.eq.s32.totalorder %v168, %v249
    %vm569 = vcmp.eq.s32.totalorder %v169, %v249
    %vm570 = vcmp.eq.s32.totalorder %v170, %v249
    %vm571 = vcmp.eq.s32.totalorder %v171, %v249
    %vm572 = vcmp.eq.s32.totalorder %v164, %v252
    %vm573 = vcmp.eq.s32.totalorder %v165, %v252
    %vm574 = vcmp.eq.s32.totalorder %v166, %v252
    %vm575 = vcmp.eq.s32.totalorder %v167, %v252
    %vm576 = vcmp.eq.s32.totalorder %v168, %v252
    %vm577 = vcmp.eq.s32.totalorder %v169, %v252
    %vm578 = vcmp.eq.s32.totalorder %v170, %v252
    %vm579 = vcmp.eq.s32.totalorder %v171, %v252
    %vm580 = vcmp.eq.s32.totalorder %v164, %v255
    %vm581 = vcmp.eq.s32.totalorder %v165, %v255
    %vm582 = vcmp.eq.s32.totalorder %v166, %v255
    %vm583 = vcmp.eq.s32.totalorder %v167, %v255
    %vm584 = vcmp.eq.s32.totalorder %v168, %v255
    %vm585 = vcmp.eq.s32.totalorder %v169, %v255
    %vm586 = vcmp.eq.s32.totalorder %v170, %v255
    %vm587 = vcmp.eq.s32.totalorder %v171, %v255
    %vm588 = vcmp.eq.s32.totalorder %v164, %v258
    %vm589 = vcmp.eq.s32.totalorder %v165, %v258
    %vm590 = vcmp.eq.s32.totalorder %v166, %v258
    %vm591 = vcmp.eq.s32.totalorder %v167, %v258
    %vm592 = vcmp.eq.s32.totalorder %v168, %v258
    %vm593 = vcmp.eq.s32.totalorder %v169, %v258
    %vm594 = vcmp.eq.s32.totalorder %v170, %v258
    %vm595 = vcmp.eq.s32.totalorder %v171, %v258
    %vm596 = vcmp.eq.s32.totalorder %v164, %v261
    %vm597 = vcmp.eq.s32.totalorder %v165, %v261
    %vm598 = vcmp.eq.s32.totalorder %v166, %v261
    %vm599 = vcmp.eq.s32.totalorder %v167, %v261
    %vm600 = vcmp.eq.s32.totalorder %v168, %v261
    %vm601 = vcmp.eq.s32.totalorder %v169, %v261
    %vm602 = vcmp.eq.s32.totalorder %v170, %v261
    %vm603 = vcmp.eq.s32.totalorder %v171, %v261
    %vm604 = vcmp.eq.s32.totalorder %v164, %v264
    %vm605 = vcmp.eq.s32.totalorder %v165, %v264
    %vm606 = vcmp.eq.s32.totalorder %v166, %v264
    %vm607 = vcmp.eq.s32.totalorder %v167, %v264
    %vm608 = vcmp.eq.s32.totalorder %v168, %v264
    %vm609 = vcmp.eq.s32.totalorder %v169, %v264
    %vm610 = vcmp.eq.s32.totalorder %v170, %v264
    %vm611 = vcmp.eq.s32.totalorder %v171, %v264
    %vm612 = vcmp.eq.s32.totalorder %v164, %v267
    %vm613 = vcmp.eq.s32.totalorder %v165, %v267
    %vm614 = vcmp.eq.s32.totalorder %v166, %v267
    %vm615 = vcmp.eq.s32.totalorder %v167, %v267
    %vm616 = vcmp.eq.s32.totalorder %v168, %v267
    %vm617 = vcmp.eq.s32.totalorder %v169, %v267
    %vm618 = vcmp.eq.s32.totalorder %v170, %v267
    %vm619 = vcmp.eq.s32.totalorder %v171, %v267
    %vm620 = vcmp.eq.s32.totalorder %v164, %v270
    %vm621 = vcmp.eq.s32.totalorder %v165, %v270
    %vm622 = vcmp.eq.s32.totalorder %v166, %v270
    %vm623 = vcmp.eq.s32.totalorder %v167, %v270
    %vm624 = vcmp.eq.s32.totalorder %v168, %v270
    %vm625 = vcmp.eq.s32.totalorder %v169, %v270
    %vm626 = vcmp.eq.s32.totalorder %v170, %v270
    %vm627 = vcmp.eq.s32.totalorder %v171, %v270
    %vm628 = vcmp.eq.s32.totalorder %v164, %v273
    %vm629 = vcmp.eq.s32.totalorder %v165, %v273
    %vm630 = vcmp.eq.s32.totalorder %v166, %v273
    %vm631 = vcmp.eq.s32.totalorder %v167, %v273
    %vm632 = vcmp.eq.s32.totalorder %v168, %v273
    %vm633 = vcmp.eq.s32.totalorder %v169, %v273
    %vm634 = vcmp.eq.s32.totalorder %v170, %v273
    %vm635 = vcmp.eq.s32.totalorder %v171, %v273
    %vm636 = vcmp.eq.s32.totalorder %v164, %v276
    %vm637 = vcmp.eq.s32.totalorder %v165, %v276
    %vm638 = vcmp.eq.s32.totalorder %v166, %v276
    %vm639 = vcmp.eq.s32.totalorder %v167, %v276
    %vm640 = vcmp.eq.s32.totalorder %v168, %v276
    %vm641 = vcmp.eq.s32.totalorder %v169, %v276
    %vm642 = vcmp.eq.s32.totalorder %v170, %v276
    %vm643 = vcmp.eq.s32.totalorder %v171, %v276
    %vm644 = vcmp.eq.s32.totalorder %v164, %v279
    %vm645 = vcmp.eq.s32.totalorder %v165, %v279
    %vm646 = vcmp.eq.s32.totalorder %v166, %v279
    %vm647 = vcmp.eq.s32.totalorder %v167, %v279
    %vm648 = vcmp.eq.s32.totalorder %v168, %v279
    %vm649 = vcmp.eq.s32.totalorder %v169, %v279
    %vm650 = vcmp.eq.s32.totalorder %v170, %v279
    %vm651 = vcmp.eq.s32.totalorder %v171, %v279
    %vm652 = vcmp.eq.s32.totalorder %v164, %v282
    %vm653 = vcmp.eq.s32.totalorder %v165, %v282
    %vm654 = vcmp.eq.s32.totalorder %v166, %v282
    %vm655 = vcmp.eq.s32.totalorder %v167, %v282
    %vm656 = vcmp.eq.s32.totalorder %v168, %v282
    %vm657 = vcmp.eq.s32.totalorder %v169, %v282
    %vm658 = vcmp.eq.s32.totalorder %v170, %v282
    %vm659 = vcmp.eq.s32.totalorder %v171, %v282
    %vm660 = vcmp.eq.s32.totalorder %v164, %v285
    %vm661 = vcmp.eq.s32.totalorder %v165, %v285
    %vm662 = vcmp.eq.s32.totalorder %v166, %v285
    %vm663 = vcmp.eq.s32.totalorder %v167, %v285
    %vm664 = vcmp.eq.s32.totalorder %v168, %v285
    %vm665 = vcmp.eq.s32.totalorder %v169, %v285
    %vm666 = vcmp.eq.s32.totalorder %v170, %v285
    %vm667 = vcmp.eq.s32.totalorder %v171, %v285
    %vm668 = vcmp.eq.s32.totalorder %v164, %v288
    %vm669 = vcmp.eq.s32.totalorder %v165, %v288
    %vm670 = vcmp.eq.s32.totalorder %v166, %v288
    %vm671 = vcmp.eq.s32.totalorder %v167, %v288
    %vm672 = vcmp.eq.s32.totalorder %v168, %v288
    %vm673 = vcmp.eq.s32.totalorder %v169, %v288
    %vm674 = vcmp.eq.s32.totalorder %v170, %v288
    %vm675 = vcmp.eq.s32.totalorder %v171, %v288
    %vm676 = vcmp.eq.s32.totalorder %v164, %v291
    %vm677 = vcmp.eq.s32.totalorder %v165, %v291
    %vm678 = vcmp.eq.s32.totalorder %v166, %v291
    %vm679 = vcmp.eq.s32.totalorder %v167, %v291
    %vm680 = vcmp.eq.s32.totalorder %v168, %v291
    %vm681 = vcmp.eq.s32.totalorder %v169, %v291
    %vm682 = vcmp.eq.s32.totalorder %v170, %v291
    %vm683 = vcmp.eq.s32.totalorder %v171, %v291
    %vm684 = vcmp.eq.s32.totalorder %v164, %v294
    %vm685 = vcmp.eq.s32.totalorder %v165, %v294
    %vm686 = vcmp.eq.s32.totalorder %v166, %v294
    %vm687 = vcmp.eq.s32.totalorder %v167, %v294
    %vm688 = vcmp.eq.s32.totalorder %v168, %v294
    %vm689 = vcmp.eq.s32.totalorder %v169, %v294
    %vm690 = vcmp.eq.s32.totalorder %v170, %v294
    %vm691 = vcmp.eq.s32.totalorder %v171, %v294
    %vm692 = vcmp.eq.s32.totalorder %v164, %v297
    %vm693 = vcmp.eq.s32.totalorder %v165, %v297
    %vm694 = vcmp.eq.s32.totalorder %v166, %v297
    %vm695 = vcmp.eq.s32.totalorder %v167, %v297
    %vm696 = vcmp.eq.s32.totalorder %v168, %v297
    %vm697 = vcmp.eq.s32.totalorder %v169, %v297
    %vm698 = vcmp.eq.s32.totalorder %v170, %v297
    %vm699 = vcmp.eq.s32.totalorder %v171, %v297
    %vm700 = vcmp.eq.s32.totalorder %v164, %v300
    %vm701 = vcmp.eq.s32.totalorder %v165, %v300
    %vm702 = vcmp.eq.s32.totalorder %v166, %v300
    %vm703 = vcmp.eq.s32.totalorder %v167, %v300
    %vm704 = vcmp.eq.s32.totalorder %v168, %v300
    %vm705 = vcmp.eq.s32.totalorder %v169, %v300
    %vm706 = vcmp.eq.s32.totalorder %v170, %v300
    %vm707 = vcmp.eq.s32.totalorder %v171, %v300
    %vm708 = vcmp.eq.s32.totalorder %v164, %v303
    %vm709 = vcmp.eq.s32.totalorder %v165, %v303
    %vm710 = vcmp.eq.s32.totalorder %v166, %v303
    %vm711 = vcmp.eq.s32.totalorder %v167, %v303
    %vm712 = vcmp.eq.s32.totalorder %v168, %v303
    %vm713 = vcmp.eq.s32.totalorder %v169, %v303
    %vm714 = vcmp.eq.s32.totalorder %v170, %v303
    %vm715 = vcmp.eq.s32.totalorder %v171, %v303
    %vm716 = vcmp.eq.s32.totalorder %v164, %v306
    %vm717 = vcmp.eq.s32.totalorder %v165, %v306
    %vm718 = vcmp.eq.s32.totalorder %v166, %v306
    %vm719 = vcmp.eq.s32.totalorder %v167, %v306
    %vm720 = vcmp.eq.s32.totalorder %v168, %v306
    %vm721 = vcmp.eq.s32.totalorder %v169, %v306
    %vm722 = vcmp.eq.s32.totalorder %v170, %v306
    %vm723 = vcmp.eq.s32.totalorder %v171, %v306
    %vm724 = vcmp.eq.s32.totalorder %v164, %v309
    %vm725 = vcmp.eq.s32.totalorder %v165, %v309
    %vm726 = vcmp.eq.s32.totalorder %v166, %v309
    %vm727 = vcmp.eq.s32.totalorder %v167, %v309
    %vm728 = vcmp.eq.s32.totalorder %v168, %v309
    %vm729 = vcmp.eq.s32.totalorder %v169, %v309
    %vm730 = vcmp.eq.s32.totalorder %v170, %v309
    %vm731 = vcmp.eq.s32.totalorder %v171, %v309
    %vm732 = vcmp.eq.s32.totalorder %v164, %v312
    %vm733 = vcmp.eq.s32.totalorder %v165, %v312
    %vm734 = vcmp.eq.s32.totalorder %v166, %v312
    %vm735 = vcmp.eq.s32.totalorder %v167, %v312
    %vm736 = vcmp.eq.s32.totalorder %v168, %v312
    %vm737 = vcmp.eq.s32.totalorder %v169, %v312
    %vm738 = vcmp.eq.s32.totalorder %v170, %v312
    %vm739 = vcmp.eq.s32.totalorder %v171, %v312
    %vm740 = vcmp.eq.s32.totalorder %v164, %v315
    %vm741 = vcmp.eq.s32.totalorder %v165, %v315
    %vm742 = vcmp.eq.s32.totalorder %v166, %v315
    %vm743 = vcmp.eq.s32.totalorder %v167, %v315
    %vm744 = vcmp.eq.s32.totalorder %v168, %v315
    %vm745 = vcmp.eq.s32.totalorder %v169, %v315
    %vm746 = vcmp.eq.s32.totalorder %v170, %v315
    %vm747 = vcmp.eq.s32.totalorder %v171, %v315
    %vm748 = vcmp.eq.s32.totalorder %v164, %v318
    %vm749 = vcmp.eq.s32.totalorder %v165, %v318
    %vm750 = vcmp.eq.s32.totalorder %v166, %v318
    %vm751 = vcmp.eq.s32.totalorder %v167, %v318
    %vm752 = vcmp.eq.s32.totalorder %v168, %v318
    %vm753 = vcmp.eq.s32.totalorder %v169, %v318
    %vm754 = vcmp.eq.s32.totalorder %v170, %v318
    %vm755 = vcmp.eq.s32.totalorder %v171, %v318
    %vm756 = vcmp.eq.s32.totalorder %v164, %v321
    %vm757 = vcmp.eq.s32.totalorder %v165, %v321
    %vm758 = vcmp.eq.s32.totalorder %v166, %v321
    %vm759 = vcmp.eq.s32.totalorder %v167, %v321
    %vm760 = vcmp.eq.s32.totalorder %v168, %v321
    %vm761 = vcmp.eq.s32.totalorder %v169, %v321
    %vm762 = vcmp.eq.s32.totalorder %v170, %v321
    %vm763 = vcmp.eq.s32.totalorder %v171, %v321
    %vm764 = vcmp.eq.s32.totalorder %v164, %v324
    %vm765 = vcmp.eq.s32.totalorder %v165, %v324
    %vm766 = vcmp.eq.s32.totalorder %v166, %v324
    %vm767 = vcmp.eq.s32.totalorder %v167, %v324
    %vm768 = vcmp.eq.s32.totalorder %v168, %v324
    %vm769 = vcmp.eq.s32.totalorder %v169, %v324
    %vm770 = vcmp.eq.s32.totalorder %v170, %v324
    %vm771 = vcmp.eq.s32.totalorder %v171, %v324
    %vm772 = vcmp.eq.s32.totalorder %v164, %v327
    %vm773 = vcmp.eq.s32.totalorder %v165, %v327
    %vm774 = vcmp.eq.s32.totalorder %v166, %v327
    %vm775 = vcmp.eq.s32.totalorder %v167, %v327
    %vm776 = vcmp.eq.s32.totalorder %v168, %v327
    %vm777 = vcmp.eq.s32.totalorder %v169, %v327
    %vm778 = vcmp.eq.s32.totalorder %v170, %v327
    %vm779 = vcmp.eq.s32.totalorder %v171, %v327
    %vm780 = vcmp.eq.s32.totalorder %v164, %v330
    %vm781 = vcmp.eq.s32.totalorder %v165, %v330
    %vm782 = vcmp.eq.s32.totalorder %v166, %v330
    %vm783 = vcmp.eq.s32.totalorder %v167, %v330
    %vm784 = vcmp.eq.s32.totalorder %v168, %v330
    %vm785 = vcmp.eq.s32.totalorder %v169, %v330
    %vm786 = vcmp.eq.s32.totalorder %v170, %v330
    %vm787 = vcmp.eq.s32.totalorder %v171, %v330
    %vm788 = vcmp.eq.s32.totalorder %v164, %v333
    %vm789 = vcmp.eq.s32.totalorder %v165, %v333
    %vm790 = vcmp.eq.s32.totalorder %v166, %v333
    %vm791 = vcmp.eq.s32.totalorder %v167, %v333
    %vm792 = vcmp.eq.s32.totalorder %v168, %v333
    %vm793 = vcmp.eq.s32.totalorder %v169, %v333
    %vm794 = vcmp.eq.s32.totalorder %v170, %v333
    %vm795 = vcmp.eq.s32.totalorder %v171, %v333
    %vm796 = vcmp.eq.s32.totalorder %v164, %v336
    %vm797 = vcmp.eq.s32.totalorder %v165, %v336
    %vm798 = vcmp.eq.s32.totalorder %v166, %v336
    %vm799 = vcmp.eq.s32.totalorder %v167, %v336
    %vm800 = vcmp.eq.s32.totalorder %v168, %v336
    %vm801 = vcmp.eq.s32.totalorder %v169, %v336
    %vm802 = vcmp.eq.s32.totalorder %v170, %v336
    %vm803 = vcmp.eq.s32.totalorder %v171, %v336
    %vm804 = vcmp.eq.s32.totalorder %v164, %v339
    %vm805 = vcmp.eq.s32.totalorder %v165, %v339
    %vm806 = vcmp.eq.s32.totalorder %v166, %v339
    %vm807 = vcmp.eq.s32.totalorder %v167, %v339
    %vm808 = vcmp.eq.s32.totalorder %v168, %v339
    %vm809 = vcmp.eq.s32.totalorder %v169, %v339
    %vm810 = vcmp.eq.s32.totalorder %v170, %v339
    %vm811 = vcmp.eq.s32.totalorder %v171, %v339
    %vm812 = vcmp.eq.s32.totalorder %v164, %v342
    %vm813 = vcmp.eq.s32.totalorder %v165, %v342
    %vm814 = vcmp.eq.s32.totalorder %v166, %v342
    %vm815 = vcmp.eq.s32.totalorder %v167, %v342
    %vm816 = vcmp.eq.s32.totalorder %v168, %v342
    %vm817 = vcmp.eq.s32.totalorder %v169, %v342
    %vm818 = vcmp.eq.s32.totalorder %v170, %v342
    %vm819 = vcmp.eq.s32.totalorder %v171, %v342
    %vm820 = vcmp.eq.s32.totalorder %v164, %v345
    %vm821 = vcmp.eq.s32.totalorder %v165, %v345
    %vm822 = vcmp.eq.s32.totalorder %v166, %v345
    %vm823 = vcmp.eq.s32.totalorder %v167, %v345
    %vm824 = vcmp.eq.s32.totalorder %v168, %v345
    %vm825 = vcmp.eq.s32.totalorder %v169, %v345
    %vm826 = vcmp.eq.s32.totalorder %v170, %v345
    %vm827 = vcmp.eq.s32.totalorder %v171, %v345
    %vm828 = vcmp.eq.s32.totalorder %v164, %v348
    %vm829 = vcmp.eq.s32.totalorder %v165, %v348
    %vm830 = vcmp.eq.s32.totalorder %v166, %v348
    %vm831 = vcmp.eq.s32.totalorder %v167, %v348
    %vm832 = vcmp.eq.s32.totalorder %v168, %v348
    %vm833 = vcmp.eq.s32.totalorder %v169, %v348
    %vm834 = vcmp.eq.s32.totalorder %v170, %v348
    %vm835 = vcmp.eq.s32.totalorder %v171, %v348
    %vm836 = vcmp.eq.s32.totalorder %v164, %v351
    %vm837 = vcmp.eq.s32.totalorder %v165, %v351
    %vm838 = vcmp.eq.s32.totalorder %v166, %v351
    %vm839 = vcmp.eq.s32.totalorder %v167, %v351
    %vm840 = vcmp.eq.s32.totalorder %v168, %v351
    %vm841 = vcmp.eq.s32.totalorder %v169, %v351
    %vm842 = vcmp.eq.s32.totalorder %v170, %v351
    %vm843 = vcmp.eq.s32.totalorder %v171, %v351
    %vm844 = vcmp.eq.s32.totalorder %v164, %v354
    %vm845 = vcmp.eq.s32.totalorder %v165, %v354
    %vm846 = vcmp.eq.s32.totalorder %v166, %v354
    %vm847 = vcmp.eq.s32.totalorder %v167, %v354
    %vm848 = vcmp.eq.s32.totalorder %v168, %v354
    %vm849 = vcmp.eq.s32.totalorder %v169, %v354
    %vm850 = vcmp.eq.s32.totalorder %v170, %v354
    %vm851 = vcmp.eq.s32.totalorder %v171, %v354
    %vm852 = vcmp.eq.s32.totalorder %v164, %v357
    %vm853 = vcmp.eq.s32.totalorder %v165, %v357
    %vm854 = vcmp.eq.s32.totalorder %v166, %v357
    %vm855 = vcmp.eq.s32.totalorder %v167, %v357
    %vm856 = vcmp.eq.s32.totalorder %v168, %v357
    %vm857 = vcmp.eq.s32.totalorder %v169, %v357
    %vm858 = vcmp.eq.s32.totalorder %v170, %v357
    %vm859 = vcmp.eq.s32.totalorder %v171, %v357
    %vm860 = vcmp.eq.s32.totalorder %v164, %v360
    %vm861 = vcmp.eq.s32.totalorder %v165, %v360
    %vm862 = vcmp.eq.s32.totalorder %v166, %v360
    %vm863 = vcmp.eq.s32.totalorder %v167, %v360
    %vm864 = vcmp.eq.s32.totalorder %v168, %v360
    %vm865 = vcmp.eq.s32.totalorder %v169, %v360
    %vm866 = vcmp.eq.s32.totalorder %v170, %v360
    %vm867 = vcmp.eq.s32.totalorder %v171, %v360
    %vm868 = vcmp.eq.s32.totalorder %v164, %v363
    %vm869 = vcmp.eq.s32.totalorder %v165, %v363
    %vm870 = vcmp.eq.s32.totalorder %v166, %v363
    %vm871 = vcmp.eq.s32.totalorder %v167, %v363
    %vm872 = vcmp.eq.s32.totalorder %v168, %v363
    %vm873 = vcmp.eq.s32.totalorder %v169, %v363
    %vm874 = vcmp.eq.s32.totalorder %v170, %v363
    %vm875 = vcmp.eq.s32.totalorder %v171, %v363
    %v876 = vsel %vm364, 1.0, 0.0
    %v877 = vsel %vm365, 1.0, 0.0
    %v878 = vsel %vm366, 1.0, 0.0
    %v879 = vsel %vm367, 1.0, 0.0
    %v880 = vsel %vm368, 1.0, 0.0
    %v881 = vsel %vm369, 1.0, 0.0
    %v882 = vsel %vm370, 1.0, 0.0
    %v883 = vsel %vm371, 1.0, 0.0
    %v884 = vsel %vm372, 1.0, 0.0
    %v885 = vsel %vm373, 1.0, 0.0
    %v886 = vsel %vm374, 1.0, 0.0
    %v887 = vsel %vm375, 1.0, 0.0
    %v888 = vsel %vm376, 1.0, 0.0
    %v889 = vsel %vm377, 1.0, 0.0
    %v890 = vsel %vm378, 1.0, 0.0
    %v891 = vsel %vm379, 1.0, 0.0
    %v892 = vsel %vm380, 1.0, 0.0
    %v893 = vsel %vm381, 1.0, 0.0
    %v894 = vsel %vm382, 1.0, 0.0
    %v895 = vsel %vm383, 1.0, 0.0
    %v896 = vsel %vm384, 1.0, 0.0
    %v897 = vsel %vm385, 1.0, 0.0
    %v898 = vsel %vm386, 1.0, 0.0
    %v899 = vsel %vm387, 1.0, 0.0
    %v900 = vsel %vm388, 1.0, 0.0
    %v901 = vsel %vm389, 1.0, 0.0
    %v902 = vsel %vm390, 1.0, 0.0
    %v903 = vsel %vm391, 1.0, 0.0
    %v904 = vsel %vm392, 1.0, 0.0
    %v905 = vsel %vm393, 1.0, 0.0
    %v906 = vsel %vm394, 1.0, 0.0
    %v907 = vsel %vm395, 1.0, 0.0
    %v908 = vsel %vm396, 1.0, 0.0
    %v909 = vsel %vm397, 1.0, 0.0
    %v910 = vsel %vm398, 1.0, 0.0
    %v911 = vsel %vm399, 1.0, 0.0
    %v912 = vsel %vm400, 1.0, 0.0
    %v913 = vsel %vm401, 1.0, 0.0
    %v914 = vsel %vm402, 1.0, 0.0
    %v915 = vsel %vm403, 1.0, 0.0
    %v916 = vsel %vm404, 1.0, 0.0
    %v917 = vsel %vm405, 1.0, 0.0
    %v918 = vsel %vm406, 1.0, 0.0
    %v919 = vsel %vm407, 1.0, 0.0
    %v920 = vsel %vm408, 1.0, 0.0
    %v921 = vsel %vm409, 1.0, 0.0
    %v922 = vsel %vm410, 1.0, 0.0
    %v923 = vsel %vm411, 1.0, 0.0
    %v924 = vsel %vm412, 1.0, 0.0
    %v925 = vsel %vm413, 1.0, 0.0
    %v926 = vsel %vm414, 1.0, 0.0
    %v927 = vsel %vm415, 1.0, 0.0
    %v928 = vsel %vm416, 1.0, 0.0
    %v929 = vsel %vm417, 1.0, 0.0
    %v930 = vsel %vm418, 1.0, 0.0
    %v931 = vsel %vm419, 1.0, 0.0
    %v932 = vsel %vm420, 1.0, 0.0
    %v933 = vsel %vm421, 1.0, 0.0
    %v934 = vsel %vm422, 1.0, 0.0
    %v935 = vsel %vm423, 1.0, 0.0
    %v936 = vsel %vm424, 1.0, 0.0
    %v937 = vsel %vm425, 1.0, 0.0
    %v938 = vsel %vm426, 1.0, 0.0
    %v939 = vsel %vm427, 1.0, 0.0
    %v940 = vsel %vm428, 1.0, 0.0
    %v941 = vsel %vm429, 1.0, 0.0
    %v942 = vsel %vm430, 1.0, 0.0
    %v943 = vsel %vm431, 1.0, 0.0
    %v944 = vsel %vm432, 1.0, 0.0
    %v945 = vsel %vm433, 1.0, 0.0
    %v946 = vsel %vm434, 1.0, 0.0
    %v947 = vsel %vm435, 1.0, 0.0
    %v948 = vsel %vm436, 1.0, 0.0
    %v949 = vsel %vm437, 1.0, 0.0
    %v950 = vsel %vm438, 1.0, 0.0
    %v951 = vsel %vm439, 1.0, 0.0
    %v952 = vsel %vm440, 1.0, 0.0
    %v953 = vsel %vm441, 1.0, 0.0
    %v954 = vsel %vm442, 1.0, 0.0
    %v955 = vsel %vm443, 1.0, 0.0
    %v956 = vsel %vm444, 1.0, 0.0
    %v957 = vsel %vm445, 1.0, 0.0
    %v958 = vsel %vm446, 1.0, 0.0
    %v959 = vsel %vm447, 1.0, 0.0
    %v960 = vsel %vm448, 1.0, 0.0
    %v961 = vsel %vm449, 1.0, 0.0
    %v962 = vsel %vm450, 1.0, 0.0
    %v963 = vsel %vm451, 1.0, 0.0
    %v964 = vsel %vm452, 1.0, 0.0
    %v965 = vsel %vm453, 1.0, 0.0
    %v966 = vsel %vm454, 1.0, 0.0
    %v967 = vsel %vm455, 1.0, 0.0
    %v968 = vsel %vm456, 1.0, 0.0
    %v969 = vsel %vm457, 1.0, 0.0
    %v970 = vsel %vm458, 1.0, 0.0
    %v971 = vsel %vm459, 1.0, 0.0
    %v972 = vsel %vm460, 1.0, 0.0
    %v973 = vsel %vm461, 1.0, 0.0
    %v974 = vsel %vm462, 1.0, 0.0
    %v975 = vsel %vm463, 1.0, 0.0
    %v976 = vsel %vm464, 1.0, 0.0
    %v977 = vsel %vm465, 1.0, 0.0
    %v978 = vsel %vm466, 1.0, 0.0
    %v979 = vsel %vm467, 1.0, 0.0
    %v980 = vsel %vm468, 1.0, 0.0
    %v981 = vsel %vm469, 1.0, 0.0
    %v982 = vsel %vm470, 1.0, 0.0
    %v983 = vsel %vm471, 1.0, 0.0
    %v984 = vsel %vm472, 1.0, 0.0
    %v985 = vsel %vm473, 1.0, 0.0
    %v986 = vsel %vm474, 1.0, 0.0
    %v987 = vsel %vm475, 1.0, 0.0
    %v988 = vsel %vm476, 1.0, 0.0
    %v989 = vsel %vm477, 1.0, 0.0
    %v990 = vsel %vm478, 1.0, 0.0
    %v991 = vsel %vm479, 1.0, 0.0
    %v992 = vsel %vm480, 1.0, 0.0
    %v993 = vsel %vm481, 1.0, 0.0
    %v994 = vsel %vm482, 1.0, 0.0
    %v995 = vsel %vm483, 1.0, 0.0
    %v996 = vsel %vm484, 1.0, 0.0
    %v997 = vsel %vm485, 1.0, 0.0
    %v998 = vsel %vm486, 1.0, 0.0
    %v999 = vsel %vm487, 1.0, 0.0
    %v1000 = vsel %vm488, 1.0, 0.0
    %v1001 = vsel %vm489, 1.0, 0.0
    %v1002 = vsel %vm490, 1.0, 0.0
    %v1003 = vsel %vm491, 1.0, 0.0
    %v1004 = vsel %vm492, 1.0, 0.0
    %v1005 = vsel %vm493, 1.0, 0.0
    %v1006 = vsel %vm494, 1.0, 0.0
    %v1007 = vsel %vm495, 1.0, 0.0
    %v1008 = vsel %vm496, 1.0, 0.0
    %v1009 = vsel %vm497, 1.0, 0.0
    %v1010 = vsel %vm498, 1.0, 0.0
    %v1011 = vsel %vm499, 1.0, 0.0
    %v1012 = vsel %vm500, 1.0, 0.0
    %v1013 = vsel %vm501, 1.0, 0.0
    %v1014 = vsel %vm502, 1.0, 0.0
    %v1015 = vsel %vm503, 1.0, 0.0
    %v1016 = vsel %vm504, 1.0, 0.0
    %v1017 = vsel %vm505, 1.0, 0.0
    %v1018 = vsel %vm506, 1.0, 0.0
    %v1019 = vsel %vm507, 1.0, 0.0
    %v1020 = vsel %vm508, 1.0, 0.0
    %v1021 = vsel %vm509, 1.0, 0.0
    %v1022 = vsel %vm510, 1.0, 0.0
    %v1023 = vsel %vm511, 1.0, 0.0
    %v1024 = vsel %vm512, 1.0, 0.0
    %v1025 = vsel %vm513, 1.0, 0.0
    %v1026 = vsel %vm514, 1.0, 0.0
    %v1027 = vsel %vm515, 1.0, 0.0
    %v1028 = vsel %vm516, 1.0, 0.0
    %v1029 = vsel %vm517, 1.0, 0.0
    %v1030 = vsel %vm518, 1.0, 0.0
    %v1031 = vsel %vm519, 1.0, 0.0
    %v1032 = vsel %vm520, 1.0, 0.0
    %v1033 = vsel %vm521, 1.0, 0.0
    %v1034 = vsel %vm522, 1.0, 0.0
    %v1035 = vsel %vm523, 1.0, 0.0
    %v1036 = vsel %vm524, 1.0, 0.0
    %v1037 = vsel %vm525, 1.0, 0.0
    %v1038 = vsel %vm526, 1.0, 0.0
    %v1039 = vsel %vm527, 1.0, 0.0
    %v1040 = vsel %vm528, 1.0, 0.0
    %v1041 = vsel %vm529, 1.0, 0.0
    %v1042 = vsel %vm530, 1.0, 0.0
    %v1043 = vsel %vm531, 1.0, 0.0
    %v1044 = vsel %vm532, 1.0, 0.0
    %v1045 = vsel %vm533, 1.0, 0.0
    %v1046 = vsel %vm534, 1.0, 0.0
    %v1047 = vsel %vm535, 1.0, 0.0
    %v1048 = vsel %vm536, 1.0, 0.0
    %v1049 = vsel %vm537, 1.0, 0.0
    %v1050 = vsel %vm538, 1.0, 0.0
    %v1051 = vsel %vm539, 1.0, 0.0
    %v1052 = vsel %vm540, 1.0, 0.0
    %v1053 = vsel %vm541, 1.0, 0.0
    %v1054 = vsel %vm542, 1.0, 0.0
    %v1055 = vsel %vm543, 1.0, 0.0
    %v1056 = vsel %vm544, 1.0, 0.0
    %v1057 = vsel %vm545, 1.0, 0.0
    %v1058 = vsel %vm546, 1.0, 0.0
    %v1059 = vsel %vm547, 1.0, 0.0
    %v1060 = vsel %vm548, 1.0, 0.0
    %v1061 = vsel %vm549, 1.0, 0.0
    %v1062 = vsel %vm550, 1.0, 0.0
    %v1063 = vsel %vm551, 1.0, 0.0
    %v1064 = vsel %vm552, 1.0, 0.0
    %v1065 = vsel %vm553, 1.0, 0.0
    %v1066 = vsel %vm554, 1.0, 0.0
    %v1067 = vsel %vm555, 1.0, 0.0
    %v1068 = vsel %vm556, 1.0, 0.0
    %v1069 = vsel %vm557, 1.0, 0.0
    %v1070 = vsel %vm558, 1.0, 0.0
    %v1071 = vsel %vm559, 1.0, 0.0
    %v1072 = vsel %vm560, 1.0, 0.0
    %v1073 = vsel %vm561, 1.0, 0.0
    %v1074 = vsel %vm562, 1.0, 0.0
    %v1075 = vsel %vm563, 1.0, 0.0
    %v1076 = vsel %vm564, 1.0, 0.0
    %v1077 = vsel %vm565, 1.0, 0.0
    %v1078 = vsel %vm566, 1.0, 0.0
    %v1079 = vsel %vm567, 1.0, 0.0
    %v1080 = vsel %vm568, 1.0, 0.0
    %v1081 = vsel %vm569, 1.0, 0.0
    %v1082 = vsel %vm570, 1.0, 0.0
    %v1083 = vsel %vm571, 1.0, 0.0
    %v1084 = vsel %vm572, 1.0, 0.0
    %v1085 = vsel %vm573, 1.0, 0.0
    %v1086 = vsel %vm574, 1.0, 0.0
    %v1087 = vsel %vm575, 1.0, 0.0
    %v1088 = vsel %vm576, 1.0, 0.0
    %v1089 = vsel %vm577, 1.0, 0.0
    %v1090 = vsel %vm578, 1.0, 0.0
    %v1091 = vsel %vm579, 1.0, 0.0
    %v1092 = vsel %vm580, 1.0, 0.0
    %v1093 = vsel %vm581, 1.0, 0.0
    %v1094 = vsel %vm582, 1.0, 0.0
    %v1095 = vsel %vm583, 1.0, 0.0
    %v1096 = vsel %vm584, 1.0, 0.0
    %v1097 = vsel %vm585, 1.0, 0.0
    %v1098 = vsel %vm586, 1.0, 0.0
    %v1099 = vsel %vm587, 1.0, 0.0
    %v1100 = vsel %vm588, 1.0, 0.0
    %v1101 = vsel %vm589, 1.0, 0.0
    %v1102 = vsel %vm590, 1.0, 0.0
    %v1103 = vsel %vm591, 1.0, 0.0
    %v1104 = vsel %vm592, 1.0, 0.0
    %v1105 = vsel %vm593, 1.0, 0.0
    %v1106 = vsel %vm594, 1.0, 0.0
    %v1107 = vsel %vm595, 1.0, 0.0
    %v1108 = vsel %vm596, 1.0, 0.0
    %v1109 = vsel %vm597, 1.0, 0.0
    %v1110 = vsel %vm598, 1.0, 0.0
    %v1111 = vsel %vm599, 1.0, 0.0
    %v1112 = vsel %vm600, 1.0, 0.0
    %v1113 = vsel %vm601, 1.0, 0.0
    %v1114 = vsel %vm602, 1.0, 0.0
    %v1115 = vsel %vm603, 1.0, 0.0
    %v1116 = vsel %vm604, 1.0, 0.0
    %v1117 = vsel %vm605, 1.0, 0.0
    %v1118 = vsel %vm606, 1.0, 0.0
    %v1119 = vsel %vm607, 1.0, 0.0
    %v1120 = vsel %vm608, 1.0, 0.0
    %v1121 = vsel %vm609, 1.0, 0.0
    %v1122 = vsel %vm610, 1.0, 0.0
    %v1123 = vsel %vm611, 1.0, 0.0
    %v1124 = vsel %vm612, 1.0, 0.0
    %v1125 = vsel %vm613, 1.0, 0.0
    %v1126 = vsel %vm614, 1.0, 0.0
    %v1127 = vsel %vm615, 1.0, 0.0
    %v1128 = vsel %vm616, 1.0, 0.0
    %v1129 = vsel %vm617, 1.0, 0.0
    %v1130 = vsel %vm618, 1.0, 0.0
    %v1131 = vsel %vm619, 1.0, 0.0
    %v1132 = vsel %vm620, 1.0, 0.0
    %v1133 = vsel %vm621, 1.0, 0.0
    %v1134 = vsel %vm622, 1.0, 0.0
    %v1135 = vsel %vm623, 1.0, 0.0
    %v1136 = vsel %vm624, 1.0, 0.0
    %v1137 = vsel %vm625, 1.0, 0.0
    %v1138 = vsel %vm626, 1.0, 0.0
    %v1139 = vsel %vm627, 1.0, 0.0
    %v1140 = vsel %vm628, 1.0, 0.0
    %v1141 = vsel %vm629, 1.0, 0.0
    %v1142 = vsel %vm630, 1.0, 0.0
    %v1143 = vsel %vm631, 1.0, 0.0
    %v1144 = vsel %vm632, 1.0, 0.0
    %v1145 = vsel %vm633, 1.0, 0.0
    %v1146 = vsel %vm634, 1.0, 0.0
    %v1147 = vsel %vm635, 1.0, 0.0
    %v1148 = vsel %vm636, 1.0, 0.0
    %v1149 = vsel %vm637, 1.0, 0.0
    %v1150 = vsel %vm638, 1.0, 0.0
    %v1151 = vsel %vm639, 1.0, 0.0
    %v1152 = vsel %vm640, 1.0, 0.0
    %v1153 = vsel %vm641, 1.0, 0.0
    %v1154 = vsel %vm642, 1.0, 0.0
    %v1155 = vsel %vm643, 1.0, 0.0
    %v1156 = vsel %vm644, 1.0, 0.0
    %v1157 = vsel %vm645, 1.0, 0.0
    %v1158 = vsel %vm646, 1.0, 0.0
    %v1159 = vsel %vm647, 1.0, 0.0
    %v1160 = vsel %vm648, 1.0, 0.0
    %v1161 = vsel %vm649, 1.0, 0.0
    %v1162 = vsel %vm650, 1.0, 0.0
    %v1163 = vsel %vm651, 1.0, 0.0
    %v1164 = vsel %vm652, 1.0, 0.0
    %v1165 = vsel %vm653, 1.0, 0.0
    %v1166 = vsel %vm654, 1.0, 0.0
    %v1167 = vsel %vm655, 1.0, 0.0
    %v1168 = vsel %vm656, 1.0, 0.0
    %v1169 = vsel %vm657, 1.0, 0.0
    %v1170 = vsel %vm658, 1.0, 0.0
    %v1171 = vsel %vm659, 1.0, 0.0
    %v1172 = vsel %vm660, 1.0, 0.0
    %v1173 = vsel %vm661, 1.0, 0.0
    %v1174 = vsel %vm662, 1.0, 0.0
    %v1175 = vsel %vm663, 1.0, 0.0
    %v1176 = vsel %vm664, 1.0, 0.0
    %v1177 = vsel %vm665, 1.0, 0.0
    %v1178 = vsel %vm666, 1.0, 0.0
    %v1179 = vsel %vm667, 1.0, 0.0
    %v1180 = vsel %vm668, 1.0, 0.0
    %v1181 = vsel %vm669, 1.0, 0.0
    %v1182 = vsel %vm670, 1.0, 0.0
    %v1183 = vsel %vm671, 1.0, 0.0
    %v1184 = vsel %vm672, 1.0, 0.0
    %v1185 = vsel %vm673, 1.0, 0.0
    %v1186 = vsel %vm674, 1.0, 0.0
    %v1187 = vsel %vm675, 1.0, 0.0
    %v1188 = vsel %vm676, 1.0, 0.0
    %v1189 = vsel %vm677, 1.0, 0.0
    %v1190 = vsel %vm678, 1.0, 0.0
    %v1191 = vsel %vm679, 1.0, 0.0
    %v1192 = vsel %vm680, 1.0, 0.0
    %v1193 = vsel %vm681, 1.0, 0.0
    %v1194 = vsel %vm682, 1.0, 0.0
    %v1195 = vsel %vm683, 1.0, 0.0
    %v1196 = vsel %vm684, 1.0, 0.0
    %v1197 = vsel %vm685, 1.0, 0.0
    %v1198 = vsel %vm686, 1.0, 0.0
    %v1199 = vsel %vm687, 1.0, 0.0
    %v1200 = vsel %vm688, 1.0, 0.0
    %v1201 = vsel %vm689, 1.0, 0.0
    %v1202 = vsel %vm690, 1.0, 0.0
    %v1203 = vsel %vm691, 1.0, 0.0
    %v1204 = vsel %vm692, 1.0, 0.0
    %v1205 = vsel %vm693, 1.0, 0.0
    %v1206 = vsel %vm694, 1.0, 0.0
    %v1207 = vsel %vm695, 1.0, 0.0
    %v1208 = vsel %vm696, 1.0, 0.0
    %v1209 = vsel %vm697, 1.0, 0.0
    %v1210 = vsel %vm698, 1.0, 0.0
    %v1211 = vsel %vm699, 1.0, 0.0
    %v1212 = vsel %vm700, 1.0, 0.0
    %v1213 = vsel %vm701, 1.0, 0.0
    %v1214 = vsel %vm702, 1.0, 0.0
    %v1215 = vsel %vm703, 1.0, 0.0
    %v1216 = vsel %vm704, 1.0, 0.0
    %v1217 = vsel %vm705, 1.0, 0.0
    %v1218 = vsel %vm706, 1.0, 0.0
    %v1219 = vsel %vm707, 1.0, 0.0
    %v1220 = vsel %vm708, 1.0, 0.0
    %v1221 = vsel %vm709, 1.0, 0.0
    %v1222 = vsel %vm710, 1.0, 0.0
    %v1223 = vsel %vm711, 1.0, 0.0
    %v1224 = vsel %vm712, 1.0, 0.0
    %v1225 = vsel %vm713, 1.0, 0.0
    %v1226 = vsel %vm714, 1.0, 0.0
    %v1227 = vsel %vm715, 1.0, 0.0
    %v1228 = vsel %vm716, 1.0, 0.0
    %v1229 = vsel %vm717, 1.0, 0.0
    %v1230 = vsel %vm718, 1.0, 0.0
    %v1231 = vsel %vm719, 1.0, 0.0
    %v1232 = vsel %vm720, 1.0, 0.0
    %v1233 = vsel %vm721, 1.0, 0.0
    %v1234 = vsel %vm722, 1.0, 0.0
    %v1235 = vsel %vm723, 1.0, 0.0
    %v1236 = vsel %vm724, 1.0, 0.0
    %v1237 = vsel %vm725, 1.0, 0.0
    %v1238 = vsel %vm726, 1.0, 0.0
    %v1239 = vsel %vm727, 1.0, 0.0
    %v1240 = vsel %vm728, 1.0, 0.0
    %v1241 = vsel %vm729, 1.0, 0.0
    %v1242 = vsel %vm730, 1.0, 0.0
    %v1243 = vsel %vm731, 1.0, 0.0
    %v1244 = vsel %vm732, 1.0, 0.0
    %v1245 = vsel %vm733, 1.0, 0.0
    %v1246 = vsel %vm734, 1.0, 0.0
    %v1247 = vsel %vm735, 1.0, 0.0
    %v1248 = vsel %vm736, 1.0, 0.0
    %v1249 = vsel %vm737, 1.0, 0.0
    %v1250 = vsel %vm738, 1.0, 0.0
    %v1251 = vsel %vm739, 1.0, 0.0
    %v1252 = vsel %vm740, 1.0, 0.0
    %v1253 = vsel %vm741, 1.0, 0.0
    %v1254 = vsel %vm742, 1.0, 0.0
    %v1255 = vsel %vm743, 1.0, 0.0
    %v1256 = vsel %vm744, 1.0, 0.0
    %v1257 = vsel %vm745, 1.0, 0.0
    %v1258 = vsel %vm746, 1.0, 0.0
    %v1259 = vsel %vm747, 1.0, 0.0
    %v1260 = vsel %vm748, 1.0, 0.0
    %v1261 = vsel %vm749, 1.0, 0.0
    %v1262 = vsel %vm750, 1.0, 0.0
    %v1263 = vsel %vm751, 1.0, 0.0
    %v1264 = vsel %vm752, 1.0, 0.0
    %v1265 = vsel %vm753, 1.0, 0.0
    %v1266 = vsel %vm754, 1.0, 0.0
    %v1267 = vsel %vm755, 1.0, 0.0
    %v1268 = vsel %vm756, 1.0, 0.0
    %v1269 = vsel %vm757, 1.0, 0.0
    %v1270 = vsel %vm758, 1.0, 0.0
    %v1271 = vsel %vm759, 1.0, 0.0
    %v1272 = vsel %vm760, 1.0, 0.0
    %v1273 = vsel %vm761, 1.0, 0.0
    %v1274 = vsel %vm762, 1.0, 0.0
    %v1275 = vsel %vm763, 1.0, 0.0
    %v1276 = vsel %vm764, 1.0, 0.0
    %v1277 = vsel %vm765, 1.0, 0.0
    %v1278 = vsel %vm766, 1.0, 0.0
    %v1279 = vsel %vm767, 1.0, 0.0
    %v1280 = vsel %vm768, 1.0, 0.0
    %v1281 = vsel %vm769, 1.0, 0.0
    %v1282 = vsel %vm770, 1.0, 0.0
    %v1283 = vsel %vm771, 1.0, 0.0
    %v1284 = vsel %vm772, 1.0, 0.0
    %v1285 = vsel %vm773, 1.0, 0.0
    %v1286 = vsel %vm774, 1.0, 0.0
    %v1287 = vsel %vm775, 1.0, 0.0
    %v1288 = vsel %vm776, 1.0, 0.0
    %v1289 = vsel %vm777, 1.0, 0.0
    %v1290 = vsel %vm778, 1.0, 0.0
    %v1291 = vsel %vm779, 1.0, 0.0
    %v1292 = vsel %vm780, 1.0, 0.0
    %v1293 = vsel %vm781, 1.0, 0.0
    %v1294 = vsel %vm782, 1.0, 0.0
    %v1295 = vsel %vm783, 1.0, 0.0
    %v1296 = vsel %vm784, 1.0, 0.0
    %v1297 = vsel %vm785, 1.0, 0.0
    %v1298 = vsel %vm786, 1.0, 0.0
    %v1299 = vsel %vm787, 1.0, 0.0
    %v1300 = vsel %vm788, 1.0, 0.0
    %v1301 = vsel %vm789, 1.0, 0.0
    %v1302 = vsel %vm790, 1.0, 0.0
    %v1303 = vsel %vm791, 1.0, 0.0
    %v1304 = vsel %vm792, 1.0, 0.0
    %v1305 = vsel %vm793, 1.0, 0.0
    %v1306 = vsel %vm794, 1.0, 0.0
    %v1307 = vsel %vm795, 1.0, 0.0
    %v1308 = vsel %vm796, 1.0, 0.0
    %v1309 = vsel %vm797, 1.0, 0.0
    %v1310 = vsel %vm798, 1.0, 0.0
    %v1311 = vsel %vm799, 1.0, 0.0
    %v1312 = vsel %vm800, 1.0, 0.0
    %v1313 = vsel %vm801, 1.0, 0.0
    %v1314 = vsel %vm802, 1.0, 0.0
    %v1315 = vsel %vm803, 1.0, 0.0
    %v1316 = vsel %vm804, 1.0, 0.0
    %v1317 = vsel %vm805, 1.0, 0.0
    %v1318 = vsel %vm806, 1.0, 0.0
    %v1319 = vsel %vm807, 1.0, 0.0
    %v1320 = vsel %vm808, 1.0, 0.0
    %v1321 = vsel %vm809, 1.0, 0.0
    %v1322 = vsel %vm810, 1.0, 0.0
    %v1323 = vsel %vm811, 1.0, 0.0
    %v1324 = vsel %vm812, 1.0, 0.0
    %v1325 = vsel %vm813, 1.0, 0.0
    %v1326 = vsel %vm814, 1.0, 0.0
    %v1327 = vsel %vm815, 1.0, 0.0
    %v1328 = vsel %vm816, 1.0, 0.0
    %v1329 = vsel %vm817, 1.0, 0.0
    %v1330 = vsel %vm818, 1.0, 0.0
    %v1331 = vsel %vm819, 1.0, 0.0
    %v1332 = vsel %vm820, 1.0, 0.0
    %v1333 = vsel %vm821, 1.0, 0.0
    %v1334 = vsel %vm822, 1.0, 0.0
    %v1335 = vsel %vm823, 1.0, 0.0
    %v1336 = vsel %vm824, 1.0, 0.0
    %v1337 = vsel %vm825, 1.0, 0.0
    %v1338 = vsel %vm826, 1.0, 0.0
    %v1339 = vsel %vm827, 1.0, 0.0
    %v1340 = vsel %vm828, 1.0, 0.0
    %v1341 = vsel %vm829, 1.0, 0.0
    %v1342 = vsel %vm830, 1.0, 0.0
    %v1343 = vsel %vm831, 1.0, 0.0
    %v1344 = vsel %vm832, 1.0, 0.0
    %v1345 = vsel %vm833, 1.0, 0.0
    %v1346 = vsel %vm834, 1.0, 0.0
    %v1347 = vsel %vm835, 1.0, 0.0
    %v1348 = vsel %vm836, 1.0, 0.0
    %v1349 = vsel %vm837, 1.0, 0.0
    %v1350 = vsel %vm838, 1.0, 0.0
    %v1351 = vsel %vm839, 1.0, 0.0
    %v1352 = vsel %vm840, 1.0, 0.0
    %v1353 = vsel %vm841, 1.0, 0.0
    %v1354 = vsel %vm842, 1.0, 0.0
    %v1355 = vsel %vm843, 1.0, 0.0
    %v1356 = vsel %vm844, 1.0, 0.0
    %v1357 = vsel %vm845, 1.0, 0.0
    %v1358 = vsel %vm846, 1.0, 0.0
    %v1359 = vsel %vm847, 1.0, 0.0
    %v1360 = vsel %vm848, 1.0, 0.0
    %v1361 = vsel %vm849, 1.0, 0.0
    %v1362 = vsel %vm850, 1.0, 0.0
    %v1363 = vsel %vm851, 1.0, 0.0
    %v1364 = vsel %vm852, 1.0, 0.0
    %v1365 = vsel %vm853, 1.0, 0.0
    %v1366 = vsel %vm854, 1.0, 0.0
    %v1367 = vsel %vm855, 1.0, 0.0
    %v1368 = vsel %vm856, 1.0, 0.0
    %v1369 = vsel %vm857, 1.0, 0.0
    %v1370 = vsel %vm858, 1.0, 0.0
    %v1371 = vsel %vm859, 1.0, 0.0
    %v1372 = vsel %vm860, 1.0, 0.0
    %v1373 = vsel %vm861, 1.0, 0.0
    %v1374 = vsel %vm862, 1.0, 0.0
    %v1375 = vsel %vm863, 1.0, 0.0
    %v1376 = vsel %vm864, 1.0, 0.0
    %v1377 = vsel %vm865, 1.0, 0.0
    %v1378 = vsel %vm866, 1.0, 0.0
    %v1379 = vsel %vm867, 1.0, 0.0
    %v1380 = vsel %vm868, 1.0, 0.0
    %v1381 = vsel %vm869, 1.0, 0.0
    %v1382 = vsel %vm870, 1.0, 0.0
    %v1383 = vsel %vm871, 1.0, 0.0
    %v1384 = vsel %vm872, 1.0, 0.0
    %v1385 = vsel %vm873, 1.0, 0.0
    %v1386 = vsel %vm874, 1.0, 0.0
    %v1387 = vsel %vm875, 1.0, 0.0
    %v1388 = vpack.c.bf16 %v884, %v876
    %v1389 = vpack.c.bf16 %v885, %v877
    %v1390 = vpack.c.bf16 %v886, %v878
    %v1391 = vpack.c.bf16 %v887, %v879
    %v1392 = vpack.c.bf16 %v888, %v880
    %v1393 = vpack.c.bf16 %v889, %v881
    %v1394 = vpack.c.bf16 %v890, %v882
    %v1395 = vpack.c.bf16 %v891, %v883
    %v1396 = vpack.c.bf16 %v900, %v892
    %v1397 = vpack.c.bf16 %v901, %v893
    %v1398 = vpack.c.bf16 %v902, %v894
    %v1399 = vpack.c.bf16 %v903, %v895
    %v1400 = vpack.c.bf16 %v904, %v896
    %v1401 = vpack.c.bf16 %v905, %v897
    %v1402 = vpack.c.bf16 %v906, %v898
    %v1403 = vpack.c.bf16 %v907, %v899
    %v1404 = vpack.c.bf16 %v916, %v908
    %v1405 = vpack.c.bf16 %v917, %v909
    %v1406 = vpack.c.bf16 %v918, %v910
    %v1407 = vpack.c.bf16 %v919, %v911
    %v1408 = vpack.c.bf16 %v920, %v912
    %v1409 = vpack.c.bf16 %v921, %v913
    %v1410 = vpack.c.bf16 %v922, %v914
    %v1411 = vpack.c.bf16 %v923, %v915
    %v1412 = vpack.c.bf16 %v932, %v924
    %v1413 = vpack.c.bf16 %v933, %v925
    %v1414 = vpack.c.bf16 %v934, %v926
    %v1415 = vpack.c.bf16 %v935, %v927
    %v1416 = vpack.c.bf16 %v936, %v928
    %v1417 = vpack.c.bf16 %v937, %v929
    %v1418 = vpack.c.bf16 %v938, %v930
    %v1419 = vpack.c.bf16 %v939, %v931
    %v1420 = vpack.c.bf16 %v948, %v940
    %v1421 = vpack.c.bf16 %v949, %v941
    %v1422 = vpack.c.bf16 %v950, %v942
    %v1423 = vpack.c.bf16 %v951, %v943
    %v1424 = vpack.c.bf16 %v952, %v944
    %v1425 = vpack.c.bf16 %v953, %v945
    %v1426 = vpack.c.bf16 %v954, %v946
    %v1427 = vpack.c.bf16 %v955, %v947
    %v1428 = vpack.c.bf16 %v964, %v956
    %v1429 = vpack.c.bf16 %v965, %v957
    %v1430 = vpack.c.bf16 %v966, %v958
    %v1431 = vpack.c.bf16 %v967, %v959
    %v1432 = vpack.c.bf16 %v968, %v960
    %v1433 = vpack.c.bf16 %v969, %v961
    %v1434 = vpack.c.bf16 %v970, %v962
    %v1435 = vpack.c.bf16 %v971, %v963
    %v1436 = vpack.c.bf16 %v980, %v972
    %v1437 = vpack.c.bf16 %v981, %v973
    %v1438 = vpack.c.bf16 %v982, %v974
    %v1439 = vpack.c.bf16 %v983, %v975
    %v1440 = vpack.c.bf16 %v984, %v976
    %v1441 = vpack.c.bf16 %v985, %v977
    %v1442 = vpack.c.bf16 %v986, %v978
    %v1443 = vpack.c.bf16 %v987, %v979
    %v1444 = vpack.c.bf16 %v996, %v988
    %v1445 = vpack.c.bf16 %v997, %v989
    %v1446 = vpack.c.bf16 %v998, %v990
    %v1447 = vpack.c.bf16 %v999, %v991
    %v1448 = vpack.c.bf16 %v1000, %v992
    %v1449 = vpack.c.bf16 %v1001, %v993
    %v1450 = vpack.c.bf16 %v1002, %v994
    %v1451 = vpack.c.bf16 %v1003, %v995
    %v1452 = vpack.c.bf16 %v1012, %v1004
    %v1453 = vpack.c.bf16 %v1013, %v1005
    %v1454 = vpack.c.bf16 %v1014, %v1006
    %v1455 = vpack.c.bf16 %v1015, %v1007
    %v1456 = vpack.c.bf16 %v1016, %v1008
    %v1457 = vpack.c.bf16 %v1017, %v1009
    %v1458 = vpack.c.bf16 %v1018, %v1010
    %v1459 = vpack.c.bf16 %v1019, %v1011
    %v1460 = vpack.c.bf16 %v1028, %v1020
    %v1461 = vpack.c.bf16 %v1029, %v1021
    %v1462 = vpack.c.bf16 %v1030, %v1022
    %v1463 = vpack.c.bf16 %v1031, %v1023
    %v1464 = vpack.c.bf16 %v1032, %v1024
    %v1465 = vpack.c.bf16 %v1033, %v1025
    %v1466 = vpack.c.bf16 %v1034, %v1026
    %v1467 = vpack.c.bf16 %v1035, %v1027
    %v1468 = vpack.c.bf16 %v1044, %v1036
    %v1469 = vpack.c.bf16 %v1045, %v1037
    %v1470 = vpack.c.bf16 %v1046, %v1038
    %v1471 = vpack.c.bf16 %v1047, %v1039
    %v1472 = vpack.c.bf16 %v1048, %v1040
    %v1473 = vpack.c.bf16 %v1049, %v1041
    %v1474 = vpack.c.bf16 %v1050, %v1042
    %v1475 = vpack.c.bf16 %v1051, %v1043
    %v1476 = vpack.c.bf16 %v1060, %v1052
    %v1477 = vpack.c.bf16 %v1061, %v1053
    %v1478 = vpack.c.bf16 %v1062, %v1054
    %v1479 = vpack.c.bf16 %v1063, %v1055
    %v1480 = vpack.c.bf16 %v1064, %v1056
    %v1481 = vpack.c.bf16 %v1065, %v1057
    %v1482 = vpack.c.bf16 %v1066, %v1058
    %v1483 = vpack.c.bf16 %v1067, %v1059
    %v1484 = vpack.c.bf16 %v1076, %v1068
    %v1485 = vpack.c.bf16 %v1077, %v1069
    %v1486 = vpack.c.bf16 %v1078, %v1070
    %v1487 = vpack.c.bf16 %v1079, %v1071
    %v1488 = vpack.c.bf16 %v1080, %v1072
    %v1489 = vpack.c.bf16 %v1081, %v1073
    %v1490 = vpack.c.bf16 %v1082, %v1074
    %v1491 = vpack.c.bf16 %v1083, %v1075
    %v1492 = vpack.c.bf16 %v1092, %v1084
    %v1493 = vpack.c.bf16 %v1093, %v1085
    %v1494 = vpack.c.bf16 %v1094, %v1086
    %v1495 = vpack.c.bf16 %v1095, %v1087
    %v1496 = vpack.c.bf16 %v1096, %v1088
    %v1497 = vpack.c.bf16 %v1097, %v1089
    %v1498 = vpack.c.bf16 %v1098, %v1090
    %v1499 = vpack.c.bf16 %v1099, %v1091
    %v1500 = vpack.c.bf16 %v1108, %v1100
    %v1501 = vpack.c.bf16 %v1109, %v1101
    %v1502 = vpack.c.bf16 %v1110, %v1102
    %v1503 = vpack.c.bf16 %v1111, %v1103
    %v1504 = vpack.c.bf16 %v1112, %v1104
    %v1505 = vpack.c.bf16 %v1113, %v1105
    %v1506 = vpack.c.bf16 %v1114, %v1106
    %v1507 = vpack.c.bf16 %v1115, %v1107
    %v1508 = vpack.c.bf16 %v1124, %v1116
    %v1509 = vpack.c.bf16 %v1125, %v1117
    %v1510 = vpack.c.bf16 %v1126, %v1118
    %v1511 = vpack.c.bf16 %v1127, %v1119
    %v1512 = vpack.c.bf16 %v1128, %v1120
    %v1513 = vpack.c.bf16 %v1129, %v1121
    %v1514 = vpack.c.bf16 %v1130, %v1122
    %v1515 = vpack.c.bf16 %v1131, %v1123
    %v1516 = vpack.c.bf16 %v1140, %v1132
    %v1517 = vpack.c.bf16 %v1141, %v1133
    %v1518 = vpack.c.bf16 %v1142, %v1134
    %v1519 = vpack.c.bf16 %v1143, %v1135
    %v1520 = vpack.c.bf16 %v1144, %v1136
    %v1521 = vpack.c.bf16 %v1145, %v1137
    %v1522 = vpack.c.bf16 %v1146, %v1138
    %v1523 = vpack.c.bf16 %v1147, %v1139
    %v1524 = vpack.c.bf16 %v1156, %v1148
    %v1525 = vpack.c.bf16 %v1157, %v1149
    %v1526 = vpack.c.bf16 %v1158, %v1150
    %v1527 = vpack.c.bf16 %v1159, %v1151
    %v1528 = vpack.c.bf16 %v1160, %v1152
    %v1529 = vpack.c.bf16 %v1161, %v1153
    %v1530 = vpack.c.bf16 %v1162, %v1154
    %v1531 = vpack.c.bf16 %v1163, %v1155
    %v1532 = vpack.c.bf16 %v1172, %v1164
    %v1533 = vpack.c.bf16 %v1173, %v1165
    %v1534 = vpack.c.bf16 %v1174, %v1166
    %v1535 = vpack.c.bf16 %v1175, %v1167
    %v1536 = vpack.c.bf16 %v1176, %v1168
    %v1537 = vpack.c.bf16 %v1177, %v1169
    %v1538 = vpack.c.bf16 %v1178, %v1170
    %v1539 = vpack.c.bf16 %v1179, %v1171
    %v1540 = vpack.c.bf16 %v1188, %v1180
    %v1541 = vpack.c.bf16 %v1189, %v1181
    %v1542 = vpack.c.bf16 %v1190, %v1182
    %v1543 = vpack.c.bf16 %v1191, %v1183
    %v1544 = vpack.c.bf16 %v1192, %v1184
    %v1545 = vpack.c.bf16 %v1193, %v1185
    %v1546 = vpack.c.bf16 %v1194, %v1186
    %v1547 = vpack.c.bf16 %v1195, %v1187
    %v1548 = vpack.c.bf16 %v1204, %v1196
    %v1549 = vpack.c.bf16 %v1205, %v1197
    %v1550 = vpack.c.bf16 %v1206, %v1198
    %v1551 = vpack.c.bf16 %v1207, %v1199
    %v1552 = vpack.c.bf16 %v1208, %v1200
    %v1553 = vpack.c.bf16 %v1209, %v1201
    %v1554 = vpack.c.bf16 %v1210, %v1202
    %v1555 = vpack.c.bf16 %v1211, %v1203
    %v1556 = vpack.c.bf16 %v1220, %v1212
    %v1557 = vpack.c.bf16 %v1221, %v1213
    %v1558 = vpack.c.bf16 %v1222, %v1214
    %v1559 = vpack.c.bf16 %v1223, %v1215
    %v1560 = vpack.c.bf16 %v1224, %v1216
    %v1561 = vpack.c.bf16 %v1225, %v1217
    %v1562 = vpack.c.bf16 %v1226, %v1218
    %v1563 = vpack.c.bf16 %v1227, %v1219
    %v1564 = vpack.c.bf16 %v1236, %v1228
    %v1565 = vpack.c.bf16 %v1237, %v1229
    %v1566 = vpack.c.bf16 %v1238, %v1230
    %v1567 = vpack.c.bf16 %v1239, %v1231
    %v1568 = vpack.c.bf16 %v1240, %v1232
    %v1569 = vpack.c.bf16 %v1241, %v1233
    %v1570 = vpack.c.bf16 %v1242, %v1234
    %v1571 = vpack.c.bf16 %v1243, %v1235
    %v1572 = vpack.c.bf16 %v1252, %v1244
    %v1573 = vpack.c.bf16 %v1253, %v1245
    %v1574 = vpack.c.bf16 %v1254, %v1246
    %v1575 = vpack.c.bf16 %v1255, %v1247
    %v1576 = vpack.c.bf16 %v1256, %v1248
    %v1577 = vpack.c.bf16 %v1257, %v1249
    %v1578 = vpack.c.bf16 %v1258, %v1250
    %v1579 = vpack.c.bf16 %v1259, %v1251
    %v1580 = vpack.c.bf16 %v1268, %v1260
    %v1581 = vpack.c.bf16 %v1269, %v1261
    %v1582 = vpack.c.bf16 %v1270, %v1262
    %v1583 = vpack.c.bf16 %v1271, %v1263
    %v1584 = vpack.c.bf16 %v1272, %v1264
    %v1585 = vpack.c.bf16 %v1273, %v1265
    %v1586 = vpack.c.bf16 %v1274, %v1266
    %v1587 = vpack.c.bf16 %v1275, %v1267
    %v1588 = vpack.c.bf16 %v1284, %v1276
    %v1589 = vpack.c.bf16 %v1285, %v1277
    %v1590 = vpack.c.bf16 %v1286, %v1278
    %v1591 = vpack.c.bf16 %v1287, %v1279
    %v1592 = vpack.c.bf16 %v1288, %v1280
    %v1593 = vpack.c.bf16 %v1289, %v1281
    %v1594 = vpack.c.bf16 %v1290, %v1282
    %v1595 = vpack.c.bf16 %v1291, %v1283
    %v1596 = vpack.c.bf16 %v1300, %v1292
    %v1597 = vpack.c.bf16 %v1301, %v1293
    %v1598 = vpack.c.bf16 %v1302, %v1294
    %v1599 = vpack.c.bf16 %v1303, %v1295
    %v1600 = vpack.c.bf16 %v1304, %v1296
    %v1601 = vpack.c.bf16 %v1305, %v1297
    %v1602 = vpack.c.bf16 %v1306, %v1298
    %v1603 = vpack.c.bf16 %v1307, %v1299
    %v1604 = vpack.c.bf16 %v1316, %v1308
    %v1605 = vpack.c.bf16 %v1317, %v1309
    %v1606 = vpack.c.bf16 %v1318, %v1310
    %v1607 = vpack.c.bf16 %v1319, %v1311
    %v1608 = vpack.c.bf16 %v1320, %v1312
    %v1609 = vpack.c.bf16 %v1321, %v1313
    %v1610 = vpack.c.bf16 %v1322, %v1314
    %v1611 = vpack.c.bf16 %v1323, %v1315
    %v1612 = vpack.c.bf16 %v1332, %v1324
    %v1613 = vpack.c.bf16 %v1333, %v1325
    %v1614 = vpack.c.bf16 %v1334, %v1326
    %v1615 = vpack.c.bf16 %v1335, %v1327
    %v1616 = vpack.c.bf16 %v1336, %v1328
    %v1617 = vpack.c.bf16 %v1337, %v1329
    %v1618 = vpack.c.bf16 %v1338, %v1330
    %v1619 = vpack.c.bf16 %v1339, %v1331
    %v1620 = vpack.c.bf16 %v1348, %v1340
    %v1621 = vpack.c.bf16 %v1349, %v1341
    %v1622 = vpack.c.bf16 %v1350, %v1342
    %v1623 = vpack.c.bf16 %v1351, %v1343
    %v1624 = vpack.c.bf16 %v1352, %v1344
    %v1625 = vpack.c.bf16 %v1353, %v1345
    %v1626 = vpack.c.bf16 %v1354, %v1346
    %v1627 = vpack.c.bf16 %v1355, %v1347
    %v1628 = vpack.c.bf16 %v1364, %v1356
    %v1629 = vpack.c.bf16 %v1365, %v1357
    %v1630 = vpack.c.bf16 %v1366, %v1358
    %v1631 = vpack.c.bf16 %v1367, %v1359
    %v1632 = vpack.c.bf16 %v1368, %v1360
    %v1633 = vpack.c.bf16 %v1369, %v1361
    %v1634 = vpack.c.bf16 %v1370, %v1362
    %v1635 = vpack.c.bf16 %v1371, %v1363
    %v1636 = vpack.c.bf16 %v1380, %v1372
    %v1637 = vpack.c.bf16 %v1381, %v1373
    %v1638 = vpack.c.bf16 %v1382, %v1374
    %v1639 = vpack.c.bf16 %v1383, %v1375
    %v1640 = vpack.c.bf16 %v1384, %v1376
    %v1641 = vpack.c.bf16 %v1385, %v1377
    %v1642 = vpack.c.bf16 %v1386, %v1378
    %v1643 = vpack.c.bf16 %v1387, %v1379
    %v1644 = vld [vmem:[%s1] sm:$0xf]
    %v1645 = vld [vmem:[%s1 + $0x4] sm:$0xf]
    %v1646 = vld [vmem:[%s1 + $0x8] sm:$0xf]
    %v1647 = vld [vmem:[%s1 + $0xc] sm:$0xf]
    %v1648 = vld [vmem:[%s1 + $0x10] sm:$0xf]
    %v1649 = vld [vmem:[%s1 + $0x14] sm:$0xf]
    %v1650 = vld [vmem:[%s1 + $0x18] sm:$0xf]
    %v1651 = vld [vmem:[%s1 + $0x1c] sm:$0xf]
    %v1652 = vld [vmem:[%s1 + $0x20] sm:$0xf]
    %v1653 = vld [vmem:[%s1 + $0x24] sm:$0xf]
    %v1654 = vld [vmem:[%s1 + $0x28] sm:$0xf]
    %v1655 = vld [vmem:[%s1 + $0x2c] sm:$0xf]
    %v1656 = vld [vmem:[%s1 + $0x30] sm:$0xf]
    %v1657 = vld [vmem:[%s1 + $0x34] sm:$0xf]
    %v1658 = vld [vmem:[%s1 + $0x38] sm:$0xf]
    %v1659 = vld [vmem:[%s1 + $0x3c] sm:$0xf]
    %v1660 = vld [vmem:[%s1 + $0x40] sm:$0xf]
    %v1661 = vld [vmem:[%s1 + $0x44] sm:$0xf]
    %v1662 = vld [vmem:[%s1 + $0x48] sm:$0xf]
    %v1663 = vld [vmem:[%s1 + $0x4c] sm:$0xf]
    %v1664 = vld [vmem:[%s1 + $0x50] sm:$0xf]
    %v1665 = vld [vmem:[%s1 + $0x54] sm:$0xf]
    %v1666 = vld [vmem:[%s1 + $0x58] sm:$0xf]
    %v1667 = vld [vmem:[%s1 + $0x5c] sm:$0xf]
    %v1668 = vld [vmem:[%s1 + $0x60] sm:$0xf]
    %v1669 = vld [vmem:[%s1 + $0x64] sm:$0xf]
    %v1670 = vld [vmem:[%s1 + $0x68] sm:$0xf]
    %v1671 = vld [vmem:[%s1 + $0x6c] sm:$0xf]
    %v1672 = vld [vmem:[%s1 + $0x70] sm:$0xf]
    %v1673 = vld [vmem:[%s1 + $0x74] sm:$0xf]
    %v1674 = vld [vmem:[%s1 + $0x78] sm:$0xf]
    %v1675 = vld [vmem:[%s1 + $0x7c] sm:$0xf]
    %v1676 = vld [vmem:[%s1 + $0x80] sm:$0xf]
    %v1677 = vld [vmem:[%s1 + $0x84] sm:$0xf]
    %v1678 = vld [vmem:[%s1 + $0x88] sm:$0xf]
    %v1679 = vld [vmem:[%s1 + $0x8c] sm:$0xf]
    %v1680 = vld [vmem:[%s1 + $0x90] sm:$0xf]
    %v1681 = vld [vmem:[%s1 + $0x94] sm:$0xf]
    %v1682 = vld [vmem:[%s1 + $0x98] sm:$0xf]
    %v1683 = vld [vmem:[%s1 + $0x9c] sm:$0xf]
    %v1684 = vld [vmem:[%s1 + $0xa0] sm:$0xf]
    %v1685 = vld [vmem:[%s1 + $0xa4] sm:$0xf]
    %v1686 = vld [vmem:[%s1 + $0xa8] sm:$0xf]
    %v1687 = vld [vmem:[%s1 + $0xac] sm:$0xf]
    %v1688 = vld [vmem:[%s1 + $0xb0] sm:$0xf]
    %v1689 = vld [vmem:[%s1 + $0xb4] sm:$0xf]
    %v1690 = vld [vmem:[%s1 + $0xb8] sm:$0xf]
    %v1691 = vld [vmem:[%s1 + $0xbc] sm:$0xf]
    %v1692 = vld [vmem:[%s1 + $0xc0] sm:$0xf]
    %v1693 = vld [vmem:[%s1 + $0xc4] sm:$0xf]
    %v1694 = vld [vmem:[%s1 + $0xc8] sm:$0xf]
    %v1695 = vld [vmem:[%s1 + $0xcc] sm:$0xf]
    %v1696 = vld [vmem:[%s1 + $0xd0] sm:$0xf]
    %v1697 = vld [vmem:[%s1 + $0xd4] sm:$0xf]
    %v1698 = vld [vmem:[%s1 + $0xd8] sm:$0xf]
    %v1699 = vld [vmem:[%s1 + $0xdc] sm:$0xf]
    %v1700 = vld [vmem:[%s1 + $0xe0] sm:$0xf]
    %v1701 = vld [vmem:[%s1 + $0xe4] sm:$0xf]
    %v1702 = vld [vmem:[%s1 + $0xe8] sm:$0xf]
    %v1703 = vld [vmem:[%s1 + $0xec] sm:$0xf]
    %v1704 = vld [vmem:[%s1 + $0xf0] sm:$0xf]
    %v1705 = vld [vmem:[%s1 + $0xf4] sm:$0xf]
    %v1706 = vld [vmem:[%s1 + $0xf8] sm:$0xf]
    %v1707 = vld [vmem:[%s1 + $0xfc] sm:$0xf]
    %v1708 = vld [vmem:[%s1 + $0x100] sm:$0xf]
    %v1709 = vld [vmem:[%s1 + $0x104] sm:$0xf]
    %v1710 = vld [vmem:[%s1 + $0x108] sm:$0xf]
    %v1711 = vld [vmem:[%s1 + $0x10c] sm:$0xf]
    %v1712 = vld [vmem:[%s1 + $0x110] sm:$0xf]
    %v1713 = vld [vmem:[%s1 + $0x114] sm:$0xf]
    %v1714 = vld [vmem:[%s1 + $0x118] sm:$0xf]
    %v1715 = vld [vmem:[%s1 + $0x11c] sm:$0xf]
    %v1716 = vld [vmem:[%s1 + $0x120] sm:$0xf]
    %v1717 = vld [vmem:[%s1 + $0x124] sm:$0xf]
    %v1718 = vld [vmem:[%s1 + $0x128] sm:$0xf]
    %v1719 = vld [vmem:[%s1 + $0x12c] sm:$0xf]
    %v1720 = vld [vmem:[%s1 + $0x130] sm:$0xf]
    %v1721 = vld [vmem:[%s1 + $0x134] sm:$0xf]
    %v1722 = vld [vmem:[%s1 + $0x138] sm:$0xf]
    %v1723 = vld [vmem:[%s1 + $0x13c] sm:$0xf]
    %v1724 = vld [vmem:[%s1 + $0x140] sm:$0xf]
    %v1725 = vld [vmem:[%s1 + $0x144] sm:$0xf]
    %v1726 = vld [vmem:[%s1 + $0x148] sm:$0xf]
    %v1727 = vld [vmem:[%s1 + $0x14c] sm:$0xf]
    %v1728 = vld [vmem:[%s1 + $0x150] sm:$0xf]
    %v1729 = vld [vmem:[%s1 + $0x154] sm:$0xf]
    %v1730 = vld [vmem:[%s1 + $0x158] sm:$0xf]
    %v1731 = vld [vmem:[%s1 + $0x15c] sm:$0xf]
    %v1732 = vld [vmem:[%s1 + $0x160] sm:$0xf]
    %v1733 = vld [vmem:[%s1 + $0x164] sm:$0xf]
    %v1734 = vld [vmem:[%s1 + $0x168] sm:$0xf]
    %v1735 = vld [vmem:[%s1 + $0x16c] sm:$0xf]
    %v1736 = vld [vmem:[%s1 + $0x170] sm:$0xf]
    %v1737 = vld [vmem:[%s1 + $0x174] sm:$0xf]
    %v1738 = vld [vmem:[%s1 + $0x178] sm:$0xf]
    %v1739 = vld [vmem:[%s1 + $0x17c] sm:$0xf]
    %v1740 = vld [vmem:[%s1 + $0x180] sm:$0xf]
    %v1741 = vld [vmem:[%s1 + $0x184] sm:$0xf]
    %v1742 = vld [vmem:[%s1 + $0x188] sm:$0xf]
    %v1743 = vld [vmem:[%s1 + $0x18c] sm:$0xf]
    %v1744 = vld [vmem:[%s1 + $0x190] sm:$0xf]
    %v1745 = vld [vmem:[%s1 + $0x194] sm:$0xf]
    %v1746 = vld [vmem:[%s1 + $0x198] sm:$0xf]
    %v1747 = vld [vmem:[%s1 + $0x19c] sm:$0xf]
    %v1748 = vld [vmem:[%s1 + $0x1a0] sm:$0xf]
    %v1749 = vld [vmem:[%s1 + $0x1a4] sm:$0xf]
    %v1750 = vld [vmem:[%s1 + $0x1a8] sm:$0xf]
    %v1751 = vld [vmem:[%s1 + $0x1ac] sm:$0xf]
    %v1752 = vld [vmem:[%s1 + $0x1b0] sm:$0xf]
    %v1753 = vld [vmem:[%s1 + $0x1b4] sm:$0xf]
    %v1754 = vld [vmem:[%s1 + $0x1b8] sm:$0xf]
    %v1755 = vld [vmem:[%s1 + $0x1bc] sm:$0xf]
    %v1756 = vld [vmem:[%s1 + $0x1c0] sm:$0xf]
    %v1757 = vld [vmem:[%s1 + $0x1c4] sm:$0xf]
    %v1758 = vld [vmem:[%s1 + $0x1c8] sm:$0xf]
    %v1759 = vld [vmem:[%s1 + $0x1cc] sm:$0xf]
    %v1760 = vld [vmem:[%s1 + $0x1d0] sm:$0xf]
    %v1761 = vld [vmem:[%s1 + $0x1d4] sm:$0xf]
    %v1762 = vld [vmem:[%s1 + $0x1d8] sm:$0xf]
    %v1763 = vld [vmem:[%s1 + $0x1dc] sm:$0xf]
    %v1764 = vld [vmem:[%s1 + $0x1e0] sm:$0xf]
    %v1765 = vld [vmem:[%s1 + $0x1e4] sm:$0xf]
    %v1766 = vld [vmem:[%s1 + $0x1e8] sm:$0xf]
    %v1767 = vld [vmem:[%s1 + $0x1ec] sm:$0xf]
    %v1768 = vld [vmem:[%s1 + $0x1f0] sm:$0xf]
    %v1769 = vld [vmem:[%s1 + $0x1f4] sm:$0xf]
    %v1770 = vld [vmem:[%s1 + $0x1f8] sm:$0xf]
    %v1771 = vld [vmem:[%s1 + $0x1fc] sm:$0xf]
    %v1900 = vunpack.c.l.b16 %v1644
    %v1901 = vunpack.c.l.b16 %v1645
    %v1902 = vunpack.c.l.b16 %v1646
    %v1903 = vunpack.c.l.b16 %v1647
    %v1904 = vunpack.c.l.b16 %v1648
    %v1905 = vunpack.c.l.b16 %v1649
    %v1906 = vunpack.c.l.b16 %v1650
    %v1907 = vunpack.c.l.b16 %v1651
    %v1908 = vunpack.c.l.b16 %v1652
    %v1909 = vunpack.c.l.b16 %v1653
    %v1910 = vunpack.c.l.b16 %v1654
    %v1911 = vunpack.c.l.b16 %v1655
    %v1912 = vunpack.c.l.b16 %v1656
    %v1913 = vunpack.c.l.b16 %v1657
    %v1914 = vunpack.c.l.b16 %v1658
    %v1915 = vunpack.c.l.b16 %v1659
    %v1916 = vunpack.c.l.b16 %v1660
    %v1917 = vunpack.c.l.b16 %v1661
    %v1918 = vunpack.c.l.b16 %v1662
    %v1919 = vunpack.c.l.b16 %v1663
    %v1920 = vunpack.c.l.b16 %v1664
    %v1921 = vunpack.c.l.b16 %v1665
    %v1922 = vunpack.c.l.b16 %v1666
    %v1923 = vunpack.c.l.b16 %v1667
    %v1924 = vunpack.c.l.b16 %v1668
    %v1925 = vunpack.c.l.b16 %v1669
    %v1926 = vunpack.c.l.b16 %v1670
    %v1927 = vunpack.c.l.b16 %v1671
    %v1928 = vunpack.c.l.b16 %v1672
    %v1929 = vunpack.c.l.b16 %v1673
    %v1930 = vunpack.c.l.b16 %v1674
    %v1931 = vunpack.c.l.b16 %v1675
    %v1932 = vunpack.c.l.b16 %v1676
    %v1933 = vunpack.c.l.b16 %v1677
    %v1934 = vunpack.c.l.b16 %v1678
    %v1935 = vunpack.c.l.b16 %v1679
    %v1936 = vunpack.c.l.b16 %v1680
    %v1937 = vunpack.c.l.b16 %v1681
    %v1938 = vunpack.c.l.b16 %v1682
    %v1939 = vunpack.c.l.b16 %v1683
    %v1940 = vunpack.c.l.b16 %v1684
    %v1941 = vunpack.c.l.b16 %v1685
    %v1942 = vunpack.c.l.b16 %v1686
    %v1943 = vunpack.c.l.b16 %v1687
    %v1944 = vunpack.c.l.b16 %v1688
    %v1945 = vunpack.c.l.b16 %v1689
    %v1946 = vunpack.c.l.b16 %v1690
    %v1947 = vunpack.c.l.b16 %v1691
    %v1948 = vunpack.c.l.b16 %v1692
    %v1949 = vunpack.c.l.b16 %v1693
    %v1950 = vunpack.c.l.b16 %v1694
    %v1951 = vunpack.c.l.b16 %v1695
    %v1952 = vunpack.c.l.b16 %v1696
    %v1953 = vunpack.c.l.b16 %v1697
    %v1954 = vunpack.c.l.b16 %v1698
    %v1955 = vunpack.c.l.b16 %v1699
    %v1956 = vunpack.c.l.b16 %v1700
    %v1957 = vunpack.c.l.b16 %v1701
    %v1958 = vunpack.c.l.b16 %v1702
    %v1959 = vunpack.c.l.b16 %v1703
    %v1960 = vunpack.c.l.b16 %v1704
    %v1961 = vunpack.c.l.b16 %v1705
    %v1962 = vunpack.c.l.b16 %v1706
    %v1963 = vunpack.c.l.b16 %v1707
    %v1964 = vunpack.c.l.b16 %v1708
    %v1965 = vunpack.c.l.b16 %v1709
    %v1966 = vunpack.c.l.b16 %v1710
    %v1967 = vunpack.c.l.b16 %v1711
    %v1968 = vunpack.c.l.b16 %v1712
    %v1969 = vunpack.c.l.b16 %v1713
    %v1970 = vunpack.c.l.b16 %v1714
    %v1971 = vunpack.c.l.b16 %v1715
    %v1972 = vunpack.c.l.b16 %v1716
    %v1973 = vunpack.c.l.b16 %v1717
    %v1974 = vunpack.c.l.b16 %v1718
    %v1975 = vunpack.c.l.b16 %v1719
    %v1976 = vunpack.c.l.b16 %v1720
    %v1977 = vunpack.c.l.b16 %v1721
    %v1978 = vunpack.c.l.b16 %v1722
    %v1979 = vunpack.c.l.b16 %v1723
    %v1980 = vunpack.c.l.b16 %v1724
    %v1981 = vunpack.c.l.b16 %v1725
    %v1982 = vunpack.c.l.b16 %v1726
    %v1983 = vunpack.c.l.b16 %v1727
    %v1984 = vunpack.c.l.b16 %v1728
    %v1985 = vunpack.c.l.b16 %v1729
    %v1986 = vunpack.c.l.b16 %v1730
    %v1987 = vunpack.c.l.b16 %v1731
    %v1988 = vunpack.c.l.b16 %v1732
    %v1989 = vunpack.c.l.b16 %v1733
    %v1990 = vunpack.c.l.b16 %v1734
    %v1991 = vunpack.c.l.b16 %v1735
    %v1992 = vunpack.c.l.b16 %v1736
    %v1993 = vunpack.c.l.b16 %v1737
    %v1994 = vunpack.c.l.b16 %v1738
    %v1995 = vunpack.c.l.b16 %v1739
    %v1996 = vunpack.c.l.b16 %v1740
    %v1997 = vunpack.c.l.b16 %v1741
    %v1998 = vunpack.c.l.b16 %v1742
    %v1999 = vunpack.c.l.b16 %v1743
    %v2000 = vunpack.c.l.b16 %v1744
    %v2001 = vunpack.c.l.b16 %v1745
    %v2002 = vunpack.c.l.b16 %v1746
    %v2003 = vunpack.c.l.b16 %v1747
    %v2004 = vunpack.c.l.b16 %v1748
    %v2005 = vunpack.c.l.b16 %v1749
    %v2006 = vunpack.c.l.b16 %v1750
    %v2007 = vunpack.c.l.b16 %v1751
    %v2008 = vunpack.c.l.b16 %v1752
    %v2009 = vunpack.c.l.b16 %v1753
    %v2010 = vunpack.c.l.b16 %v1754
    %v2011 = vunpack.c.l.b16 %v1755
    %v2012 = vunpack.c.l.b16 %v1756
    %v2013 = vunpack.c.l.b16 %v1757
    %v2014 = vunpack.c.l.b16 %v1758
    %v2015 = vunpack.c.l.b16 %v1759
    %v2016 = vunpack.c.l.b16 %v1760
    %v2017 = vunpack.c.l.b16 %v1761
    %v2018 = vunpack.c.l.b16 %v1762
    %v2019 = vunpack.c.l.b16 %v1763
    %v2020 = vunpack.c.l.b16 %v1764
    %v2021 = vunpack.c.l.b16 %v1765
    %v2022 = vunpack.c.l.b16 %v1766
    %v2023 = vunpack.c.l.b16 %v1767
    %v2024 = vunpack.c.l.b16 %v1768
    %v2025 = vunpack.c.l.b16 %v1769
    %v2026 = vunpack.c.l.b16 %v1770
    %v2027 = vunpack.c.l.b16 %v1771
    %v2028 = vpack.c.b16 %v1901, %v1900
    %v2029 = vpack.c.b16 %v1903, %v1902
    %v2030 = vpack.c.b16 %v1905, %v1904
    %v2031 = vpack.c.b16 %v1907, %v1906
    %v2032 = vpack.c.b16 %v1909, %v1908
    %v2033 = vpack.c.b16 %v1911, %v1910
    %v2034 = vpack.c.b16 %v1913, %v1912
    %v2035 = vpack.c.b16 %v1915, %v1914
    %v2036 = vpack.c.b16 %v1917, %v1916
    %v2037 = vpack.c.b16 %v1919, %v1918
    %v2038 = vpack.c.b16 %v1921, %v1920
    %v2039 = vpack.c.b16 %v1923, %v1922
    %v2040 = vpack.c.b16 %v1925, %v1924
    %v2041 = vpack.c.b16 %v1927, %v1926
    %v2042 = vpack.c.b16 %v1929, %v1928
    %v2043 = vpack.c.b16 %v1931, %v1930
    %v2044 = vpack.c.b16 %v1933, %v1932
    %v2045 = vpack.c.b16 %v1935, %v1934
    %v2046 = vpack.c.b16 %v1937, %v1936
    %v2047 = vpack.c.b16 %v1939, %v1938
    %v2048 = vpack.c.b16 %v1941, %v1940
    %v2049 = vpack.c.b16 %v1943, %v1942
    %v2050 = vpack.c.b16 %v1945, %v1944
    %v2051 = vpack.c.b16 %v1947, %v1946
    %v2052 = vpack.c.b16 %v1949, %v1948
    %v2053 = vpack.c.b16 %v1951, %v1950
    %v2054 = vpack.c.b16 %v1953, %v1952
    %v2055 = vpack.c.b16 %v1955, %v1954
    %v2056 = vpack.c.b16 %v1957, %v1956
    %v2057 = vpack.c.b16 %v1959, %v1958
    %v2058 = vpack.c.b16 %v1961, %v1960
    %v2059 = vpack.c.b16 %v1963, %v1962
    %v2060 = vpack.c.b16 %v1965, %v1964
    %v2061 = vpack.c.b16 %v1967, %v1966
    %v2062 = vpack.c.b16 %v1969, %v1968
    %v2063 = vpack.c.b16 %v1971, %v1970
    %v2064 = vpack.c.b16 %v1973, %v1972
    %v2065 = vpack.c.b16 %v1975, %v1974
    %v2066 = vpack.c.b16 %v1977, %v1976
    %v2067 = vpack.c.b16 %v1979, %v1978
    %v2068 = vpack.c.b16 %v1981, %v1980
    %v2069 = vpack.c.b16 %v1983, %v1982
    %v2070 = vpack.c.b16 %v1985, %v1984
    %v2071 = vpack.c.b16 %v1987, %v1986
    %v2072 = vpack.c.b16 %v1989, %v1988
    %v2073 = vpack.c.b16 %v1991, %v1990
    %v2074 = vpack.c.b16 %v1993, %v1992
    %v2075 = vpack.c.b16 %v1995, %v1994
    %v2076 = vpack.c.b16 %v1997, %v1996
    %v2077 = vpack.c.b16 %v1999, %v1998
    %v2078 = vpack.c.b16 %v2001, %v2000
    %v2079 = vpack.c.b16 %v2003, %v2002
    %v2080 = vpack.c.b16 %v2005, %v2004
    %v2081 = vpack.c.b16 %v2007, %v2006
    %v2082 = vpack.c.b16 %v2009, %v2008
    %v2083 = vpack.c.b16 %v2011, %v2010
    %v2084 = vpack.c.b16 %v2013, %v2012
    %v2085 = vpack.c.b16 %v2015, %v2014
    %v2086 = vpack.c.b16 %v2017, %v2016
    %v2087 = vpack.c.b16 %v2019, %v2018
    %v2088 = vpack.c.b16 %v2021, %v2020
    %v2089 = vpack.c.b16 %v2023, %v2022
    %v2090 = vpack.c.b16 %v2025, %v2024
    %v2091 = vpack.c.b16 %v2027, %v2026
    %2156 = vmatpush.bf16.msra.mxu0 %v2035
    %2157 = vmatpush.bf16.msra.mxu0 %v2034
    %2158 = vmatpush.bf16.msra.mxu0 %v2033
    %2159 = vmatpush.bf16.msra.mxu0 %v2032
    %2160 = vmatpush.bf16.msra.mxu0 %v2031
    %2161 = vmatpush.bf16.msra.mxu0 %v2030
    %2162 = vmatpush.bf16.msra.mxu0 %v2029
    %2163 = vmatpush.bf16.msra.mxu0 %v2028
    %2164 = vmatmul.bf16.gmra.mxu0 %v1388
    %v2165 = vpop.f32.mrf.mxu0
    %v2166 = vadd.f32 0.0, %v2165
    %v2167 = vpop.f32.mrf.mxu0
    %v2168 = vadd.f32 0.0, %v2167
    %2169 = vmatmul.bf16.gmra.mxu0 %v1396
    %v2170 = vpop.f32.mrf.mxu0
    %v2171 = vadd.f32 0.0, %v2170
    %v2172 = vpop.f32.mrf.mxu0
    %v2173 = vadd.f32 0.0, %v2172
    %2174 = vmatmul.bf16.gmra.mxu0 %v1404
    %v2175 = vpop.f32.mrf.mxu0
    %v2176 = vadd.f32 0.0, %v2175
    %v2177 = vpop.f32.mrf.mxu0
    %v2178 = vadd.f32 0.0, %v2177
    %2179 = vmatmul.bf16.gmra.mxu0 %v1412
    %v2180 = vpop.f32.mrf.mxu0
    %v2181 = vadd.f32 0.0, %v2180
    %v2182 = vpop.f32.mrf.mxu0
    %v2183 = vadd.f32 0.0, %v2182
    %2184 = vmatmul.bf16.gmra.mxu0 %v1420
    %v2185 = vpop.f32.mrf.mxu0
    %v2186 = vadd.f32 0.0, %v2185
    %v2187 = vpop.f32.mrf.mxu0
    %v2188 = vadd.f32 0.0, %v2187
    %2189 = vmatmul.bf16.gmra.mxu0 %v1428
    %v2190 = vpop.f32.mrf.mxu0
    %v2191 = vadd.f32 0.0, %v2190
    %v2192 = vpop.f32.mrf.mxu0
    %v2193 = vadd.f32 0.0, %v2192
    %2194 = vmatmul.bf16.gmra.mxu0 %v1436
    %v2195 = vpop.f32.mrf.mxu0
    %v2196 = vadd.f32 0.0, %v2195
    %v2197 = vpop.f32.mrf.mxu0
    %v2198 = vadd.f32 0.0, %v2197
    %2199 = vmatmul.bf16.gmra.mxu0 %v1444
    %v2200 = vpop.f32.mrf.mxu0
    %v2201 = vadd.f32 0.0, %v2200
    %v2202 = vpop.f32.mrf.mxu0
    %v2203 = vadd.f32 0.0, %v2202
    %2204 = vmatmul.bf16.gmra.mxu0 %v1452
    %v2205 = vpop.f32.mrf.mxu0
    %v2206 = vadd.f32 0.0, %v2205
    %v2207 = vpop.f32.mrf.mxu0
    %v2208 = vadd.f32 0.0, %v2207
    %2209 = vmatmul.bf16.gmra.mxu0 %v1460
    %v2210 = vpop.f32.mrf.mxu0
    %v2211 = vadd.f32 0.0, %v2210
    %v2212 = vpop.f32.mrf.mxu0
    %v2213 = vadd.f32 0.0, %v2212
    %2214 = vmatmul.bf16.gmra.mxu0 %v1468
    %v2215 = vpop.f32.mrf.mxu0
    %v2216 = vadd.f32 0.0, %v2215
    %v2217 = vpop.f32.mrf.mxu0
    %v2218 = vadd.f32 0.0, %v2217
    %2219 = vmatmul.bf16.gmra.mxu0 %v1476
    %v2220 = vpop.f32.mrf.mxu0
    %v2221 = vadd.f32 0.0, %v2220
    %v2222 = vpop.f32.mrf.mxu0
    %v2223 = vadd.f32 0.0, %v2222
    %2224 = vmatmul.bf16.gmra.mxu0 %v1484
    %v2225 = vpop.f32.mrf.mxu0
    %v2226 = vadd.f32 0.0, %v2225
    %v2227 = vpop.f32.mrf.mxu0
    %v2228 = vadd.f32 0.0, %v2227
    %2229 = vmatmul.bf16.gmra.mxu0 %v1492
    %v2230 = vpop.f32.mrf.mxu0
    %v2231 = vadd.f32 0.0, %v2230
    %v2232 = vpop.f32.mrf.mxu0
    %v2233 = vadd.f32 0.0, %v2232
    %2234 = vmatmul.bf16.gmra.mxu0 %v1500
    %v2235 = vpop.f32.mrf.mxu0
    %v2236 = vadd.f32 0.0, %v2235
    %v2237 = vpop.f32.mrf.mxu0
    %v2238 = vadd.f32 0.0, %v2237
    %2239 = vmatmul.bf16.gmra.mxu0 %v1508
    %v2240 = vpop.f32.mrf.mxu0
    %v2241 = vadd.f32 0.0, %v2240
    %v2242 = vpop.f32.mrf.mxu0
    %v2243 = vadd.f32 0.0, %v2242
    %2244 = vmatmul.bf16.gmra.mxu0 %v1516
    %v2245 = vpop.f32.mrf.mxu0
    %v2246 = vadd.f32 0.0, %v2245
    %v2247 = vpop.f32.mrf.mxu0
    %v2248 = vadd.f32 0.0, %v2247
    %2249 = vmatmul.bf16.gmra.mxu0 %v1524
    %v2250 = vpop.f32.mrf.mxu0
    %v2251 = vadd.f32 0.0, %v2250
    %v2252 = vpop.f32.mrf.mxu0
    %v2253 = vadd.f32 0.0, %v2252
    %2254 = vmatmul.bf16.gmra.mxu0 %v1532
    %v2255 = vpop.f32.mrf.mxu0
    %v2256 = vadd.f32 0.0, %v2255
    %v2257 = vpop.f32.mrf.mxu0
    %v2258 = vadd.f32 0.0, %v2257
    %2259 = vmatmul.bf16.gmra.mxu0 %v1540
    %v2260 = vpop.f32.mrf.mxu0
    %v2261 = vadd.f32 0.0, %v2260
    %v2262 = vpop.f32.mrf.mxu0
    %v2263 = vadd.f32 0.0, %v2262
    %2264 = vmatmul.bf16.gmra.mxu0 %v1548
    %v2265 = vpop.f32.mrf.mxu0
    %v2266 = vadd.f32 0.0, %v2265
    %v2267 = vpop.f32.mrf.mxu0
    %v2268 = vadd.f32 0.0, %v2267
    %2269 = vmatmul.bf16.gmra.mxu0 %v1556
    %v2270 = vpop.f32.mrf.mxu0
    %v2271 = vadd.f32 0.0, %v2270
    %v2272 = vpop.f32.mrf.mxu0
    %v2273 = vadd.f32 0.0, %v2272
    %2274 = vmatmul.bf16.gmra.mxu0 %v1564
    %v2275 = vpop.f32.mrf.mxu0
    %v2276 = vadd.f32 0.0, %v2275
    %v2277 = vpop.f32.mrf.mxu0
    %v2278 = vadd.f32 0.0, %v2277
    %2279 = vmatmul.bf16.gmra.mxu0 %v1572
    %v2280 = vpop.f32.mrf.mxu0
    %v2281 = vadd.f32 0.0, %v2280
    %v2282 = vpop.f32.mrf.mxu0
    %v2283 = vadd.f32 0.0, %v2282
    %2284 = vmatmul.bf16.gmra.mxu0 %v1580
    %v2285 = vpop.f32.mrf.mxu0
    %v2286 = vadd.f32 0.0, %v2285
    %v2287 = vpop.f32.mrf.mxu0
    %v2288 = vadd.f32 0.0, %v2287
    %2289 = vmatmul.bf16.gmra.mxu0 %v1588
    %v2290 = vpop.f32.mrf.mxu0
    %v2291 = vadd.f32 0.0, %v2290
    %v2292 = vpop.f32.mrf.mxu0
    %v2293 = vadd.f32 0.0, %v2292
    %2294 = vmatmul.bf16.gmra.mxu0 %v1596
    %v2295 = vpop.f32.mrf.mxu0
    %v2296 = vadd.f32 0.0, %v2295
    %v2297 = vpop.f32.mrf.mxu0
    %v2298 = vadd.f32 0.0, %v2297
    %2299 = vmatmul.bf16.gmra.mxu0 %v1604
    %v2300 = vpop.f32.mrf.mxu0
    %v2301 = vadd.f32 0.0, %v2300
    %v2302 = vpop.f32.mrf.mxu0
    %v2303 = vadd.f32 0.0, %v2302
    %2304 = vmatmul.bf16.gmra.mxu0 %v1612
    %v2305 = vpop.f32.mrf.mxu0
    %v2306 = vadd.f32 0.0, %v2305
    %v2307 = vpop.f32.mrf.mxu0
    %v2308 = vadd.f32 0.0, %v2307
    %2309 = vmatmul.bf16.gmra.mxu0 %v1620
    %v2310 = vpop.f32.mrf.mxu0
    %v2311 = vadd.f32 0.0, %v2310
    %v2312 = vpop.f32.mrf.mxu0
    %v2313 = vadd.f32 0.0, %v2312
    %2314 = vmatmul.bf16.gmra.mxu0 %v1628
    %v2315 = vpop.f32.mrf.mxu0
    %v2316 = vadd.f32 0.0, %v2315
    %v2317 = vpop.f32.mrf.mxu0
    %v2318 = vadd.f32 0.0, %v2317
    %2319 = vmatmul.bf16.gmra.mxu0 %v1636
    %v2320 = vpop.f32.mrf.mxu0
    %v2321 = vadd.f32 0.0, %v2320
    %v2322 = vpop.f32.mrf.mxu0
    %v2323 = vadd.f32 0.0, %v2322
    %2324 = vdwg.mxu0
    %2325 = vmatpush.bf16.msra.mxu0 %v2043
    %2326 = vmatpush.bf16.msra.mxu0 %v2042
    %2327 = vmatpush.bf16.msra.mxu0 %v2041
    %2328 = vmatpush.bf16.msra.mxu0 %v2040
    %2329 = vmatpush.bf16.msra.mxu0 %v2039
    %2330 = vmatpush.bf16.msra.mxu0 %v2038
    %2331 = vmatpush.bf16.msra.mxu0 %v2037
    %2332 = vmatpush.bf16.msra.mxu0 %v2036
    %2333 = vmatmul.bf16.gmra.mxu0 %v1389
    %v2334 = vpop.f32.mrf.mxu0
    %v2335 = vadd.f32 %v2166, %v2334
    %v2336 = vpop.f32.mrf.mxu0
    %v2337 = vadd.f32 %v2168, %v2336
    %2338 = vmatmul.bf16.gmra.mxu0 %v1397
    %v2339 = vpop.f32.mrf.mxu0
    %v2340 = vadd.f32 %v2171, %v2339
    %v2341 = vpop.f32.mrf.mxu0
    %v2342 = vadd.f32 %v2173, %v2341
    %2343 = vmatmul.bf16.gmra.mxu0 %v1405
    %v2344 = vpop.f32.mrf.mxu0
    %v2345 = vadd.f32 %v2176, %v2344
    %v2346 = vpop.f32.mrf.mxu0
    %v2347 = vadd.f32 %v2178, %v2346
    %2348 = vmatmul.bf16.gmra.mxu0 %v1413
    %v2349 = vpop.f32.mrf.mxu0
    %v2350 = vadd.f32 %v2181, %v2349
    %v2351 = vpop.f32.mrf.mxu0
    %v2352 = vadd.f32 %v2183, %v2351
    %2353 = vmatmul.bf16.gmra.mxu0 %v1421
    %v2354 = vpop.f32.mrf.mxu0
    %v2355 = vadd.f32 %v2186, %v2354
    %v2356 = vpop.f32.mrf.mxu0
    %v2357 = vadd.f32 %v2188, %v2356
    %2358 = vmatmul.bf16.gmra.mxu0 %v1429
    %v2359 = vpop.f32.mrf.mxu0
    %v2360 = vadd.f32 %v2191, %v2359
    %v2361 = vpop.f32.mrf.mxu0
    %v2362 = vadd.f32 %v2193, %v2361
    %2363 = vmatmul.bf16.gmra.mxu0 %v1437
    %v2364 = vpop.f32.mrf.mxu0
    %v2365 = vadd.f32 %v2196, %v2364
    %v2366 = vpop.f32.mrf.mxu0
    %v2367 = vadd.f32 %v2198, %v2366
    %2368 = vmatmul.bf16.gmra.mxu0 %v1445
    %v2369 = vpop.f32.mrf.mxu0
    %v2370 = vadd.f32 %v2201, %v2369
    %v2371 = vpop.f32.mrf.mxu0
    %v2372 = vadd.f32 %v2203, %v2371
    %2373 = vmatmul.bf16.gmra.mxu0 %v1453
    %v2374 = vpop.f32.mrf.mxu0
    %v2375 = vadd.f32 %v2206, %v2374
    %v2376 = vpop.f32.mrf.mxu0
    %v2377 = vadd.f32 %v2208, %v2376
    %2378 = vmatmul.bf16.gmra.mxu0 %v1461
    %v2379 = vpop.f32.mrf.mxu0
    %v2380 = vadd.f32 %v2211, %v2379
    %v2381 = vpop.f32.mrf.mxu0
    %v2382 = vadd.f32 %v2213, %v2381
    %2383 = vmatmul.bf16.gmra.mxu0 %v1469
    %v2384 = vpop.f32.mrf.mxu0
    %v2385 = vadd.f32 %v2216, %v2384
    %v2386 = vpop.f32.mrf.mxu0
    %v2387 = vadd.f32 %v2218, %v2386
    %2388 = vmatmul.bf16.gmra.mxu0 %v1477
    %v2389 = vpop.f32.mrf.mxu0
    %v2390 = vadd.f32 %v2221, %v2389
    %v2391 = vpop.f32.mrf.mxu0
    %v2392 = vadd.f32 %v2223, %v2391
    %2393 = vmatmul.bf16.gmra.mxu0 %v1485
    %v2394 = vpop.f32.mrf.mxu0
    %v2395 = vadd.f32 %v2226, %v2394
    %v2396 = vpop.f32.mrf.mxu0
    %v2397 = vadd.f32 %v2228, %v2396
    %2398 = vmatmul.bf16.gmra.mxu0 %v1493
    %v2399 = vpop.f32.mrf.mxu0
    %v2400 = vadd.f32 %v2231, %v2399
    %v2401 = vpop.f32.mrf.mxu0
    %v2402 = vadd.f32 %v2233, %v2401
    %2403 = vmatmul.bf16.gmra.mxu0 %v1501
    %v2404 = vpop.f32.mrf.mxu0
    %v2405 = vadd.f32 %v2236, %v2404
    %v2406 = vpop.f32.mrf.mxu0
    %v2407 = vadd.f32 %v2238, %v2406
    %2408 = vmatmul.bf16.gmra.mxu0 %v1509
    %v2409 = vpop.f32.mrf.mxu0
    %v2410 = vadd.f32 %v2241, %v2409
    %v2411 = vpop.f32.mrf.mxu0
    %v2412 = vadd.f32 %v2243, %v2411
    %2413 = vmatmul.bf16.gmra.mxu0 %v1517
    %v2414 = vpop.f32.mrf.mxu0
    %v2415 = vadd.f32 %v2246, %v2414
    %v2416 = vpop.f32.mrf.mxu0
    %v2417 = vadd.f32 %v2248, %v2416
    %2418 = vmatmul.bf16.gmra.mxu0 %v1525
    %v2419 = vpop.f32.mrf.mxu0
    %v2420 = vadd.f32 %v2251, %v2419
    %v2421 = vpop.f32.mrf.mxu0
    %v2422 = vadd.f32 %v2253, %v2421
    %2423 = vmatmul.bf16.gmra.mxu0 %v1533
    %v2424 = vpop.f32.mrf.mxu0
    %v2425 = vadd.f32 %v2256, %v2424
    %v2426 = vpop.f32.mrf.mxu0
    %v2427 = vadd.f32 %v2258, %v2426
    %2428 = vmatmul.bf16.gmra.mxu0 %v1541
    %v2429 = vpop.f32.mrf.mxu0
    %v2430 = vadd.f32 %v2261, %v2429
    %v2431 = vpop.f32.mrf.mxu0
    %v2432 = vadd.f32 %v2263, %v2431
    %2433 = vmatmul.bf16.gmra.mxu0 %v1549
    %v2434 = vpop.f32.mrf.mxu0
    %v2435 = vadd.f32 %v2266, %v2434
    %v2436 = vpop.f32.mrf.mxu0
    %v2437 = vadd.f32 %v2268, %v2436
    %2438 = vmatmul.bf16.gmra.mxu0 %v1557
    %v2439 = vpop.f32.mrf.mxu0
    %v2440 = vadd.f32 %v2271, %v2439
    %v2441 = vpop.f32.mrf.mxu0
    %v2442 = vadd.f32 %v2273, %v2441
    %2443 = vmatmul.bf16.gmra.mxu0 %v1565
    %v2444 = vpop.f32.mrf.mxu0
    %v2445 = vadd.f32 %v2276, %v2444
    %v2446 = vpop.f32.mrf.mxu0
    %v2447 = vadd.f32 %v2278, %v2446
    %2448 = vmatmul.bf16.gmra.mxu0 %v1573
    %v2449 = vpop.f32.mrf.mxu0
    %v2450 = vadd.f32 %v2281, %v2449
    %v2451 = vpop.f32.mrf.mxu0
    %v2452 = vadd.f32 %v2283, %v2451
    %2453 = vmatmul.bf16.gmra.mxu0 %v1581
    %v2454 = vpop.f32.mrf.mxu0
    %v2455 = vadd.f32 %v2286, %v2454
    %v2456 = vpop.f32.mrf.mxu0
    %v2457 = vadd.f32 %v2288, %v2456
    %2458 = vmatmul.bf16.gmra.mxu0 %v1589
    %v2459 = vpop.f32.mrf.mxu0
    %v2460 = vadd.f32 %v2291, %v2459
    %v2461 = vpop.f32.mrf.mxu0
    %v2462 = vadd.f32 %v2293, %v2461
    %2463 = vmatmul.bf16.gmra.mxu0 %v1597
    %v2464 = vpop.f32.mrf.mxu0
    %v2465 = vadd.f32 %v2296, %v2464
    %v2466 = vpop.f32.mrf.mxu0
    %v2467 = vadd.f32 %v2298, %v2466
    %2468 = vmatmul.bf16.gmra.mxu0 %v1605
    %v2469 = vpop.f32.mrf.mxu0
    %v2470 = vadd.f32 %v2301, %v2469
    %v2471 = vpop.f32.mrf.mxu0
    %v2472 = vadd.f32 %v2303, %v2471
    %2473 = vmatmul.bf16.gmra.mxu0 %v1613
    %v2474 = vpop.f32.mrf.mxu0
    %v2475 = vadd.f32 %v2306, %v2474
    %v2476 = vpop.f32.mrf.mxu0
    %v2477 = vadd.f32 %v2308, %v2476
    %2478 = vmatmul.bf16.gmra.mxu0 %v1621
    %v2479 = vpop.f32.mrf.mxu0
    %v2480 = vadd.f32 %v2311, %v2479
    %v2481 = vpop.f32.mrf.mxu0
    %v2482 = vadd.f32 %v2313, %v2481
    %2483 = vmatmul.bf16.gmra.mxu0 %v1629
    %v2484 = vpop.f32.mrf.mxu0
    %v2485 = vadd.f32 %v2316, %v2484
    %v2486 = vpop.f32.mrf.mxu0
    %v2487 = vadd.f32 %v2318, %v2486
    %2488 = vmatmul.bf16.gmra.mxu0 %v1637
    %v2489 = vpop.f32.mrf.mxu0
    %v2490 = vadd.f32 %v2321, %v2489
    %v2491 = vpop.f32.mrf.mxu0
    %v2492 = vadd.f32 %v2323, %v2491
    %2493 = vdwg.mxu0
    %2494 = vmatpush.bf16.msra.mxu0 %v2051
    %2495 = vmatpush.bf16.msra.mxu0 %v2050
    %2496 = vmatpush.bf16.msra.mxu0 %v2049
    %2497 = vmatpush.bf16.msra.mxu0 %v2048
    %2498 = vmatpush.bf16.msra.mxu0 %v2047
    %2499 = vmatpush.bf16.msra.mxu0 %v2046
    %2500 = vmatpush.bf16.msra.mxu0 %v2045
    %2501 = vmatpush.bf16.msra.mxu0 %v2044
    %2502 = vmatmul.bf16.gmra.mxu0 %v1390
    %v2503 = vpop.f32.mrf.mxu0
    %v2504 = vadd.f32 %v2335, %v2503
    %v2505 = vpop.f32.mrf.mxu0
    %v2506 = vadd.f32 %v2337, %v2505
    %2507 = vmatmul.bf16.gmra.mxu0 %v1398
    %v2508 = vpop.f32.mrf.mxu0
    %v2509 = vadd.f32 %v2340, %v2508
    %v2510 = vpop.f32.mrf.mxu0
    %v2511 = vadd.f32 %v2342, %v2510
    %2512 = vmatmul.bf16.gmra.mxu0 %v1406
    %v2513 = vpop.f32.mrf.mxu0
    %v2514 = vadd.f32 %v2345, %v2513
    %v2515 = vpop.f32.mrf.mxu0
    %v2516 = vadd.f32 %v2347, %v2515
    %2517 = vmatmul.bf16.gmra.mxu0 %v1414
    %v2518 = vpop.f32.mrf.mxu0
    %v2519 = vadd.f32 %v2350, %v2518
    %v2520 = vpop.f32.mrf.mxu0
    %v2521 = vadd.f32 %v2352, %v2520
    %2522 = vmatmul.bf16.gmra.mxu0 %v1422
    %v2523 = vpop.f32.mrf.mxu0
    %v2524 = vadd.f32 %v2355, %v2523
    %v2525 = vpop.f32.mrf.mxu0
    %v2526 = vadd.f32 %v2357, %v2525
    %2527 = vmatmul.bf16.gmra.mxu0 %v1430
    %v2528 = vpop.f32.mrf.mxu0
    %v2529 = vadd.f32 %v2360, %v2528
    %v2530 = vpop.f32.mrf.mxu0
    %v2531 = vadd.f32 %v2362, %v2530
    %2532 = vmatmul.bf16.gmra.mxu0 %v1438
    %v2533 = vpop.f32.mrf.mxu0
    %v2534 = vadd.f32 %v2365, %v2533
    %v2535 = vpop.f32.mrf.mxu0
    %v2536 = vadd.f32 %v2367, %v2535
    %2537 = vmatmul.bf16.gmra.mxu0 %v1446
    %v2538 = vpop.f32.mrf.mxu0
    %v2539 = vadd.f32 %v2370, %v2538
    %v2540 = vpop.f32.mrf.mxu0
    %v2541 = vadd.f32 %v2372, %v2540
    %2542 = vmatmul.bf16.gmra.mxu0 %v1454
    %v2543 = vpop.f32.mrf.mxu0
    %v2544 = vadd.f32 %v2375, %v2543
    %v2545 = vpop.f32.mrf.mxu0
    %v2546 = vadd.f32 %v2377, %v2545
    %2547 = vmatmul.bf16.gmra.mxu0 %v1462
    %v2548 = vpop.f32.mrf.mxu0
    %v2549 = vadd.f32 %v2380, %v2548
    %v2550 = vpop.f32.mrf.mxu0
    %v2551 = vadd.f32 %v2382, %v2550
    %2552 = vmatmul.bf16.gmra.mxu0 %v1470
    %v2553 = vpop.f32.mrf.mxu0
    %v2554 = vadd.f32 %v2385, %v2553
    %v2555 = vpop.f32.mrf.mxu0
    %v2556 = vadd.f32 %v2387, %v2555
    %2557 = vmatmul.bf16.gmra.mxu0 %v1478
    %v2558 = vpop.f32.mrf.mxu0
    %v2559 = vadd.f32 %v2390, %v2558
    %v2560 = vpop.f32.mrf.mxu0
    %v2561 = vadd.f32 %v2392, %v2560
    %2562 = vmatmul.bf16.gmra.mxu0 %v1486
    %v2563 = vpop.f32.mrf.mxu0
    %v2564 = vadd.f32 %v2395, %v2563
    %v2565 = vpop.f32.mrf.mxu0
    %v2566 = vadd.f32 %v2397, %v2565
    %2567 = vmatmul.bf16.gmra.mxu0 %v1494
    %v2568 = vpop.f32.mrf.mxu0
    %v2569 = vadd.f32 %v2400, %v2568
    %v2570 = vpop.f32.mrf.mxu0
    %v2571 = vadd.f32 %v2402, %v2570
    %2572 = vmatmul.bf16.gmra.mxu0 %v1502
    %v2573 = vpop.f32.mrf.mxu0
    %v2574 = vadd.f32 %v2405, %v2573
    %v2575 = vpop.f32.mrf.mxu0
    %v2576 = vadd.f32 %v2407, %v2575
    %2577 = vmatmul.bf16.gmra.mxu0 %v1510
    %v2578 = vpop.f32.mrf.mxu0
    %v2579 = vadd.f32 %v2410, %v2578
    %v2580 = vpop.f32.mrf.mxu0
    %v2581 = vadd.f32 %v2412, %v2580
    %2582 = vmatmul.bf16.gmra.mxu0 %v1518
    %v2583 = vpop.f32.mrf.mxu0
    %v2584 = vadd.f32 %v2415, %v2583
    %v2585 = vpop.f32.mrf.mxu0
    %v2586 = vadd.f32 %v2417, %v2585
    %2587 = vmatmul.bf16.gmra.mxu0 %v1526
    %v2588 = vpop.f32.mrf.mxu0
    %v2589 = vadd.f32 %v2420, %v2588
    %v2590 = vpop.f32.mrf.mxu0
    %v2591 = vadd.f32 %v2422, %v2590
    %2592 = vmatmul.bf16.gmra.mxu0 %v1534
    %v2593 = vpop.f32.mrf.mxu0
    %v2594 = vadd.f32 %v2425, %v2593
    %v2595 = vpop.f32.mrf.mxu0
    %v2596 = vadd.f32 %v2427, %v2595
    %2597 = vmatmul.bf16.gmra.mxu0 %v1542
    %v2598 = vpop.f32.mrf.mxu0
    %v2599 = vadd.f32 %v2430, %v2598
    %v2600 = vpop.f32.mrf.mxu0
    %v2601 = vadd.f32 %v2432, %v2600
    %2602 = vmatmul.bf16.gmra.mxu0 %v1550
    %v2603 = vpop.f32.mrf.mxu0
    %v2604 = vadd.f32 %v2435, %v2603
    %v2605 = vpop.f32.mrf.mxu0
    %v2606 = vadd.f32 %v2437, %v2605
    %2607 = vmatmul.bf16.gmra.mxu0 %v1558
    %v2608 = vpop.f32.mrf.mxu0
    %v2609 = vadd.f32 %v2440, %v2608
    %v2610 = vpop.f32.mrf.mxu0
    %v2611 = vadd.f32 %v2442, %v2610
    %2612 = vmatmul.bf16.gmra.mxu0 %v1566
    %v2613 = vpop.f32.mrf.mxu0
    %v2614 = vadd.f32 %v2445, %v2613
    %v2615 = vpop.f32.mrf.mxu0
    %v2616 = vadd.f32 %v2447, %v2615
    %2617 = vmatmul.bf16.gmra.mxu0 %v1574
    %v2618 = vpop.f32.mrf.mxu0
    %v2619 = vadd.f32 %v2450, %v2618
    %v2620 = vpop.f32.mrf.mxu0
    %v2621 = vadd.f32 %v2452, %v2620
    %2622 = vmatmul.bf16.gmra.mxu0 %v1582
    %v2623 = vpop.f32.mrf.mxu0
    %v2624 = vadd.f32 %v2455, %v2623
    %v2625 = vpop.f32.mrf.mxu0
    %v2626 = vadd.f32 %v2457, %v2625
    %2627 = vmatmul.bf16.gmra.mxu0 %v1590
    %v2628 = vpop.f32.mrf.mxu0
    %v2629 = vadd.f32 %v2460, %v2628
    %v2630 = vpop.f32.mrf.mxu0
    %v2631 = vadd.f32 %v2462, %v2630
    %2632 = vmatmul.bf16.gmra.mxu0 %v1598
    %v2633 = vpop.f32.mrf.mxu0
    %v2634 = vadd.f32 %v2465, %v2633
    %v2635 = vpop.f32.mrf.mxu0
    %v2636 = vadd.f32 %v2467, %v2635
    %2637 = vmatmul.bf16.gmra.mxu0 %v1606
    %v2638 = vpop.f32.mrf.mxu0
    %v2639 = vadd.f32 %v2470, %v2638
    %v2640 = vpop.f32.mrf.mxu0
    %v2641 = vadd.f32 %v2472, %v2640
    %2642 = vmatmul.bf16.gmra.mxu0 %v1614
    %v2643 = vpop.f32.mrf.mxu0
    %v2644 = vadd.f32 %v2475, %v2643
    %v2645 = vpop.f32.mrf.mxu0
    %v2646 = vadd.f32 %v2477, %v2645
    %2647 = vmatmul.bf16.gmra.mxu0 %v1622
    %v2648 = vpop.f32.mrf.mxu0
    %v2649 = vadd.f32 %v2480, %v2648
    %v2650 = vpop.f32.mrf.mxu0
    %v2651 = vadd.f32 %v2482, %v2650
    %2652 = vmatmul.bf16.gmra.mxu0 %v1630
    %v2653 = vpop.f32.mrf.mxu0
    %v2654 = vadd.f32 %v2485, %v2653
    %v2655 = vpop.f32.mrf.mxu0
    %v2656 = vadd.f32 %v2487, %v2655
    %2657 = vmatmul.bf16.gmra.mxu0 %v1638
    %v2658 = vpop.f32.mrf.mxu0
    %v2659 = vadd.f32 %v2490, %v2658
    %v2660 = vpop.f32.mrf.mxu0
    %v2661 = vadd.f32 %v2492, %v2660
    %2662 = vdwg.mxu0
    %2663 = vmatpush.bf16.msra.mxu0 %v2059
    %2664 = vmatpush.bf16.msra.mxu0 %v2058
    %2665 = vmatpush.bf16.msra.mxu0 %v2057
    %2666 = vmatpush.bf16.msra.mxu0 %v2056
    %2667 = vmatpush.bf16.msra.mxu0 %v2055
    %2668 = vmatpush.bf16.msra.mxu0 %v2054
    %2669 = vmatpush.bf16.msra.mxu0 %v2053
    %2670 = vmatpush.bf16.msra.mxu0 %v2052
    %2671 = vmatmul.bf16.gmra.mxu0 %v1391
    %v2672 = vpop.f32.mrf.mxu0
    %v2673 = vadd.f32 %v2504, %v2672
    %v2674 = vpop.f32.mrf.mxu0
    %v2675 = vadd.f32 %v2506, %v2674
    %2676 = vmatmul.bf16.gmra.mxu0 %v1399
    %v2677 = vpop.f32.mrf.mxu0
    %v2678 = vadd.f32 %v2509, %v2677
    %v2679 = vpop.f32.mrf.mxu0
    %v2680 = vadd.f32 %v2511, %v2679
    %2681 = vmatmul.bf16.gmra.mxu0 %v1407
    %v2682 = vpop.f32.mrf.mxu0
    %v2683 = vadd.f32 %v2514, %v2682
    %v2684 = vpop.f32.mrf.mxu0
    %v2685 = vadd.f32 %v2516, %v2684
    %2686 = vmatmul.bf16.gmra.mxu0 %v1415
    %v2687 = vpop.f32.mrf.mxu0
    %v2688 = vadd.f32 %v2519, %v2687
    %v2689 = vpop.f32.mrf.mxu0
    %v2690 = vadd.f32 %v2521, %v2689
    %2691 = vmatmul.bf16.gmra.mxu0 %v1423
    %v2692 = vpop.f32.mrf.mxu0
    %v2693 = vadd.f32 %v2524, %v2692
    %v2694 = vpop.f32.mrf.mxu0
    %v2695 = vadd.f32 %v2526, %v2694
    %2696 = vmatmul.bf16.gmra.mxu0 %v1431
    %v2697 = vpop.f32.mrf.mxu0
    %v2698 = vadd.f32 %v2529, %v2697
    %v2699 = vpop.f32.mrf.mxu0
    %v2700 = vadd.f32 %v2531, %v2699
    %2701 = vmatmul.bf16.gmra.mxu0 %v1439
    %v2702 = vpop.f32.mrf.mxu0
    %v2703 = vadd.f32 %v2534, %v2702
    %v2704 = vpop.f32.mrf.mxu0
    %v2705 = vadd.f32 %v2536, %v2704
    %2706 = vmatmul.bf16.gmra.mxu0 %v1447
    %v2707 = vpop.f32.mrf.mxu0
    %v2708 = vadd.f32 %v2539, %v2707
    %v2709 = vpop.f32.mrf.mxu0
    %v2710 = vadd.f32 %v2541, %v2709
    %2711 = vmatmul.bf16.gmra.mxu0 %v1455
    %v2712 = vpop.f32.mrf.mxu0
    %v2713 = vadd.f32 %v2544, %v2712
    %v2714 = vpop.f32.mrf.mxu0
    %v2715 = vadd.f32 %v2546, %v2714
    %2716 = vmatmul.bf16.gmra.mxu0 %v1463
    %v2717 = vpop.f32.mrf.mxu0
    %v2718 = vadd.f32 %v2549, %v2717
    %v2719 = vpop.f32.mrf.mxu0
    %v2720 = vadd.f32 %v2551, %v2719
    %2721 = vmatmul.bf16.gmra.mxu0 %v1471
    %v2722 = vpop.f32.mrf.mxu0
    %v2723 = vadd.f32 %v2554, %v2722
    %v2724 = vpop.f32.mrf.mxu0
    %v2725 = vadd.f32 %v2556, %v2724
    %2726 = vmatmul.bf16.gmra.mxu0 %v1479
    %v2727 = vpop.f32.mrf.mxu0
    %v2728 = vadd.f32 %v2559, %v2727
    %v2729 = vpop.f32.mrf.mxu0
    %v2730 = vadd.f32 %v2561, %v2729
    %2731 = vmatmul.bf16.gmra.mxu0 %v1487
    %v2732 = vpop.f32.mrf.mxu0
    %v2733 = vadd.f32 %v2564, %v2732
    %v2734 = vpop.f32.mrf.mxu0
    %v2735 = vadd.f32 %v2566, %v2734
    %2736 = vmatmul.bf16.gmra.mxu0 %v1495
    %v2737 = vpop.f32.mrf.mxu0
    %v2738 = vadd.f32 %v2569, %v2737
    %v2739 = vpop.f32.mrf.mxu0
    %v2740 = vadd.f32 %v2571, %v2739
    %2741 = vmatmul.bf16.gmra.mxu0 %v1503
    %v2742 = vpop.f32.mrf.mxu0
    %v2743 = vadd.f32 %v2574, %v2742
    %v2744 = vpop.f32.mrf.mxu0
    %v2745 = vadd.f32 %v2576, %v2744
    %2746 = vmatmul.bf16.gmra.mxu0 %v1511
    %v2747 = vpop.f32.mrf.mxu0
    %v2748 = vadd.f32 %v2579, %v2747
    %v2749 = vpop.f32.mrf.mxu0
    %v2750 = vadd.f32 %v2581, %v2749
    %2751 = vmatmul.bf16.gmra.mxu0 %v1519
    %v2752 = vpop.f32.mrf.mxu0
    %v2753 = vadd.f32 %v2584, %v2752
    %v2754 = vpop.f32.mrf.mxu0
    %v2755 = vadd.f32 %v2586, %v2754
    %2756 = vmatmul.bf16.gmra.mxu0 %v1527
    %v2757 = vpop.f32.mrf.mxu0
    %v2758 = vadd.f32 %v2589, %v2757
    %v2759 = vpop.f32.mrf.mxu0
    %v2760 = vadd.f32 %v2591, %v2759
    %2761 = vmatmul.bf16.gmra.mxu0 %v1535
    %v2762 = vpop.f32.mrf.mxu0
    %v2763 = vadd.f32 %v2594, %v2762
    %v2764 = vpop.f32.mrf.mxu0
    %v2765 = vadd.f32 %v2596, %v2764
    %2766 = vmatmul.bf16.gmra.mxu0 %v1543
    %v2767 = vpop.f32.mrf.mxu0
    %v2768 = vadd.f32 %v2599, %v2767
    %v2769 = vpop.f32.mrf.mxu0
    %v2770 = vadd.f32 %v2601, %v2769
    %2771 = vmatmul.bf16.gmra.mxu0 %v1551
    %v2772 = vpop.f32.mrf.mxu0
    %v2773 = vadd.f32 %v2604, %v2772
    %v2774 = vpop.f32.mrf.mxu0
    %v2775 = vadd.f32 %v2606, %v2774
    %2776 = vmatmul.bf16.gmra.mxu0 %v1559
    %v2777 = vpop.f32.mrf.mxu0
    %v2778 = vadd.f32 %v2609, %v2777
    %v2779 = vpop.f32.mrf.mxu0
    %v2780 = vadd.f32 %v2611, %v2779
    %2781 = vmatmul.bf16.gmra.mxu0 %v1567
    %v2782 = vpop.f32.mrf.mxu0
    %v2783 = vadd.f32 %v2614, %v2782
    %v2784 = vpop.f32.mrf.mxu0
    %v2785 = vadd.f32 %v2616, %v2784
    %2786 = vmatmul.bf16.gmra.mxu0 %v1575
    %v2787 = vpop.f32.mrf.mxu0
    %v2788 = vadd.f32 %v2619, %v2787
    %v2789 = vpop.f32.mrf.mxu0
    %v2790 = vadd.f32 %v2621, %v2789
    %2791 = vmatmul.bf16.gmra.mxu0 %v1583
    %v2792 = vpop.f32.mrf.mxu0
    %v2793 = vadd.f32 %v2624, %v2792
    %v2794 = vpop.f32.mrf.mxu0
    %v2795 = vadd.f32 %v2626, %v2794
    %2796 = vmatmul.bf16.gmra.mxu0 %v1591
    %v2797 = vpop.f32.mrf.mxu0
    %v2798 = vadd.f32 %v2629, %v2797
    %v2799 = vpop.f32.mrf.mxu0
    %v2800 = vadd.f32 %v2631, %v2799
    %2801 = vmatmul.bf16.gmra.mxu0 %v1599
    %v2802 = vpop.f32.mrf.mxu0
    %v2803 = vadd.f32 %v2634, %v2802
    %v2804 = vpop.f32.mrf.mxu0
    %v2805 = vadd.f32 %v2636, %v2804
    %2806 = vmatmul.bf16.gmra.mxu0 %v1607
    %v2807 = vpop.f32.mrf.mxu0
    %v2808 = vadd.f32 %v2639, %v2807
    %v2809 = vpop.f32.mrf.mxu0
    %v2810 = vadd.f32 %v2641, %v2809
    %2811 = vmatmul.bf16.gmra.mxu0 %v1615
    %v2812 = vpop.f32.mrf.mxu0
    %v2813 = vadd.f32 %v2644, %v2812
    %v2814 = vpop.f32.mrf.mxu0
    %v2815 = vadd.f32 %v2646, %v2814
    %2816 = vmatmul.bf16.gmra.mxu0 %v1623
    %v2817 = vpop.f32.mrf.mxu0
    %v2818 = vadd.f32 %v2649, %v2817
    %v2819 = vpop.f32.mrf.mxu0
    %v2820 = vadd.f32 %v2651, %v2819
    %2821 = vmatmul.bf16.gmra.mxu0 %v1631
    %v2822 = vpop.f32.mrf.mxu0
    %v2823 = vadd.f32 %v2654, %v2822
    %v2824 = vpop.f32.mrf.mxu0
    %v2825 = vadd.f32 %v2656, %v2824
    %2826 = vmatmul.bf16.gmra.mxu0 %v1639
    %v2827 = vpop.f32.mrf.mxu0
    %v2828 = vadd.f32 %v2659, %v2827
    %v2829 = vpop.f32.mrf.mxu0
    %v2830 = vadd.f32 %v2661, %v2829
    %2831 = vdwg.mxu0
    %2832 = vmatpush.bf16.msra.mxu0 %v2067
    %2833 = vmatpush.bf16.msra.mxu0 %v2066
    %2834 = vmatpush.bf16.msra.mxu0 %v2065
    %2835 = vmatpush.bf16.msra.mxu0 %v2064
    %2836 = vmatpush.bf16.msra.mxu0 %v2063
    %2837 = vmatpush.bf16.msra.mxu0 %v2062
    %2838 = vmatpush.bf16.msra.mxu0 %v2061
    %2839 = vmatpush.bf16.msra.mxu0 %v2060
    %2840 = vmatmul.bf16.gmra.mxu0 %v1392
    %v2841 = vpop.f32.mrf.mxu0
    %v2842 = vadd.f32 %v2673, %v2841
    %v2843 = vpop.f32.mrf.mxu0
    %v2844 = vadd.f32 %v2675, %v2843
    %2845 = vmatmul.bf16.gmra.mxu0 %v1400
    %v2846 = vpop.f32.mrf.mxu0
    %v2847 = vadd.f32 %v2678, %v2846
    %v2848 = vpop.f32.mrf.mxu0
    %v2849 = vadd.f32 %v2680, %v2848
    %2850 = vmatmul.bf16.gmra.mxu0 %v1408
    %v2851 = vpop.f32.mrf.mxu0
    %v2852 = vadd.f32 %v2683, %v2851
    %v2853 = vpop.f32.mrf.mxu0
    %v2854 = vadd.f32 %v2685, %v2853
    %2855 = vmatmul.bf16.gmra.mxu0 %v1416
    %v2856 = vpop.f32.mrf.mxu0
    %v2857 = vadd.f32 %v2688, %v2856
    %v2858 = vpop.f32.mrf.mxu0
    %v2859 = vadd.f32 %v2690, %v2858
    %2860 = vmatmul.bf16.gmra.mxu0 %v1424
    %v2861 = vpop.f32.mrf.mxu0
    %v2862 = vadd.f32 %v2693, %v2861
    %v2863 = vpop.f32.mrf.mxu0
    %v2864 = vadd.f32 %v2695, %v2863
    %2865 = vmatmul.bf16.gmra.mxu0 %v1432
    %v2866 = vpop.f32.mrf.mxu0
    %v2867 = vadd.f32 %v2698, %v2866
    %v2868 = vpop.f32.mrf.mxu0
    %v2869 = vadd.f32 %v2700, %v2868
    %2870 = vmatmul.bf16.gmra.mxu0 %v1440
    %v2871 = vpop.f32.mrf.mxu0
    %v2872 = vadd.f32 %v2703, %v2871
    %v2873 = vpop.f32.mrf.mxu0
    %v2874 = vadd.f32 %v2705, %v2873
    %2875 = vmatmul.bf16.gmra.mxu0 %v1448
    %v2876 = vpop.f32.mrf.mxu0
    %v2877 = vadd.f32 %v2708, %v2876
    %v2878 = vpop.f32.mrf.mxu0
    %v2879 = vadd.f32 %v2710, %v2878
    %2880 = vmatmul.bf16.gmra.mxu0 %v1456
    %v2881 = vpop.f32.mrf.mxu0
    %v2882 = vadd.f32 %v2713, %v2881
    %v2883 = vpop.f32.mrf.mxu0
    %v2884 = vadd.f32 %v2715, %v2883
    %2885 = vmatmul.bf16.gmra.mxu0 %v1464
    %v2886 = vpop.f32.mrf.mxu0
    %v2887 = vadd.f32 %v2718, %v2886
    %v2888 = vpop.f32.mrf.mxu0
    %v2889 = vadd.f32 %v2720, %v2888
    %2890 = vmatmul.bf16.gmra.mxu0 %v1472
    %v2891 = vpop.f32.mrf.mxu0
    %v2892 = vadd.f32 %v2723, %v2891
    %v2893 = vpop.f32.mrf.mxu0
    %v2894 = vadd.f32 %v2725, %v2893
    %2895 = vmatmul.bf16.gmra.mxu0 %v1480
    %v2896 = vpop.f32.mrf.mxu0
    %v2897 = vadd.f32 %v2728, %v2896
    %v2898 = vpop.f32.mrf.mxu0
    %v2899 = vadd.f32 %v2730, %v2898
    %2900 = vmatmul.bf16.gmra.mxu0 %v1488
    %v2901 = vpop.f32.mrf.mxu0
    %v2902 = vadd.f32 %v2733, %v2901
    %v2903 = vpop.f32.mrf.mxu0
    %v2904 = vadd.f32 %v2735, %v2903
    %2905 = vmatmul.bf16.gmra.mxu0 %v1496
    %v2906 = vpop.f32.mrf.mxu0
    %v2907 = vadd.f32 %v2738, %v2906
    %v2908 = vpop.f32.mrf.mxu0
    %v2909 = vadd.f32 %v2740, %v2908
    %2910 = vmatmul.bf16.gmra.mxu0 %v1504
    %v2911 = vpop.f32.mrf.mxu0
    %v2912 = vadd.f32 %v2743, %v2911
    %v2913 = vpop.f32.mrf.mxu0
    %v2914 = vadd.f32 %v2745, %v2913
    %2915 = vmatmul.bf16.gmra.mxu0 %v1512
    %v2916 = vpop.f32.mrf.mxu0
    %v2917 = vadd.f32 %v2748, %v2916
    %v2918 = vpop.f32.mrf.mxu0
    %v2919 = vadd.f32 %v2750, %v2918
    %2920 = vmatmul.bf16.gmra.mxu0 %v1520
    %v2921 = vpop.f32.mrf.mxu0
    %v2922 = vadd.f32 %v2753, %v2921
    %v2923 = vpop.f32.mrf.mxu0
    %v2924 = vadd.f32 %v2755, %v2923
    %2925 = vmatmul.bf16.gmra.mxu0 %v1528
    %v2926 = vpop.f32.mrf.mxu0
    %v2927 = vadd.f32 %v2758, %v2926
    %v2928 = vpop.f32.mrf.mxu0
    %v2929 = vadd.f32 %v2760, %v2928
    %2930 = vmatmul.bf16.gmra.mxu0 %v1536
    %v2931 = vpop.f32.mrf.mxu0
    %v2932 = vadd.f32 %v2763, %v2931
    %v2933 = vpop.f32.mrf.mxu0
    %v2934 = vadd.f32 %v2765, %v2933
    %2935 = vmatmul.bf16.gmra.mxu0 %v1544
    %v2936 = vpop.f32.mrf.mxu0
    %v2937 = vadd.f32 %v2768, %v2936
    %v2938 = vpop.f32.mrf.mxu0
    %v2939 = vadd.f32 %v2770, %v2938
    %2940 = vmatmul.bf16.gmra.mxu0 %v1552
    %v2941 = vpop.f32.mrf.mxu0
    %v2942 = vadd.f32 %v2773, %v2941
    %v2943 = vpop.f32.mrf.mxu0
    %v2944 = vadd.f32 %v2775, %v2943
    %2945 = vmatmul.bf16.gmra.mxu0 %v1560
    %v2946 = vpop.f32.mrf.mxu0
    %v2947 = vadd.f32 %v2778, %v2946
    %v2948 = vpop.f32.mrf.mxu0
    %v2949 = vadd.f32 %v2780, %v2948
    %2950 = vmatmul.bf16.gmra.mxu0 %v1568
    %v2951 = vpop.f32.mrf.mxu0
    %v2952 = vadd.f32 %v2783, %v2951
    %v2953 = vpop.f32.mrf.mxu0
    %v2954 = vadd.f32 %v2785, %v2953
    %2955 = vmatmul.bf16.gmra.mxu0 %v1576
    %v2956 = vpop.f32.mrf.mxu0
    %v2957 = vadd.f32 %v2788, %v2956
    %v2958 = vpop.f32.mrf.mxu0
    %v2959 = vadd.f32 %v2790, %v2958
    %2960 = vmatmul.bf16.gmra.mxu0 %v1584
    %v2961 = vpop.f32.mrf.mxu0
    %v2962 = vadd.f32 %v2793, %v2961
    %v2963 = vpop.f32.mrf.mxu0
    %v2964 = vadd.f32 %v2795, %v2963
    %2965 = vmatmul.bf16.gmra.mxu0 %v1592
    %v2966 = vpop.f32.mrf.mxu0
    %v2967 = vadd.f32 %v2798, %v2966
    %v2968 = vpop.f32.mrf.mxu0
    %v2969 = vadd.f32 %v2800, %v2968
    %2970 = vmatmul.bf16.gmra.mxu0 %v1600
    %v2971 = vpop.f32.mrf.mxu0
    %v2972 = vadd.f32 %v2803, %v2971
    %v2973 = vpop.f32.mrf.mxu0
    %v2974 = vadd.f32 %v2805, %v2973
    %2975 = vmatmul.bf16.gmra.mxu0 %v1608
    %v2976 = vpop.f32.mrf.mxu0
    %v2977 = vadd.f32 %v2808, %v2976
    %v2978 = vpop.f32.mrf.mxu0
    %v2979 = vadd.f32 %v2810, %v2978
    %2980 = vmatmul.bf16.gmra.mxu0 %v1616
    %v2981 = vpop.f32.mrf.mxu0
    %v2982 = vadd.f32 %v2813, %v2981
    %v2983 = vpop.f32.mrf.mxu0
    %v2984 = vadd.f32 %v2815, %v2983
    %2985 = vmatmul.bf16.gmra.mxu0 %v1624
    %v2986 = vpop.f32.mrf.mxu0
    %v2987 = vadd.f32 %v2818, %v2986
    %v2988 = vpop.f32.mrf.mxu0
    %v2989 = vadd.f32 %v2820, %v2988
    %2990 = vmatmul.bf16.gmra.mxu0 %v1632
    %v2991 = vpop.f32.mrf.mxu0
    %v2992 = vadd.f32 %v2823, %v2991
    %v2993 = vpop.f32.mrf.mxu0
    %v2994 = vadd.f32 %v2825, %v2993
    %2995 = vmatmul.bf16.gmra.mxu0 %v1640
    %v2996 = vpop.f32.mrf.mxu0
    %v2997 = vadd.f32 %v2828, %v2996
    %v2998 = vpop.f32.mrf.mxu0
    %v2999 = vadd.f32 %v2830, %v2998
    %3000 = vdwg.mxu0
    %3001 = vmatpush.bf16.msra.mxu0 %v2075
    %3002 = vmatpush.bf16.msra.mxu0 %v2074
    %3003 = vmatpush.bf16.msra.mxu0 %v2073
    %3004 = vmatpush.bf16.msra.mxu0 %v2072
    %3005 = vmatpush.bf16.msra.mxu0 %v2071
    %3006 = vmatpush.bf16.msra.mxu0 %v2070
    %3007 = vmatpush.bf16.msra.mxu0 %v2069
    %3008 = vmatpush.bf16.msra.mxu0 %v2068
    %3009 = vmatmul.bf16.gmra.mxu0 %v1393
    %v3010 = vpop.f32.mrf.mxu0
    %v3011 = vadd.f32 %v2842, %v3010
    %v3012 = vpop.f32.mrf.mxu0
    %v3013 = vadd.f32 %v2844, %v3012
    %3014 = vmatmul.bf16.gmra.mxu0 %v1401
    %v3015 = vpop.f32.mrf.mxu0
    %v3016 = vadd.f32 %v2847, %v3015
    %v3017 = vpop.f32.mrf.mxu0
    %v3018 = vadd.f32 %v2849, %v3017
    %3019 = vmatmul.bf16.gmra.mxu0 %v1409
    %v3020 = vpop.f32.mrf.mxu0
    %v3021 = vadd.f32 %v2852, %v3020
    %v3022 = vpop.f32.mrf.mxu0
    %v3023 = vadd.f32 %v2854, %v3022
    %3024 = vmatmul.bf16.gmra.mxu0 %v1417
    %v3025 = vpop.f32.mrf.mxu0
    %v3026 = vadd.f32 %v2857, %v3025
    %v3027 = vpop.f32.mrf.mxu0
    %v3028 = vadd.f32 %v2859, %v3027
    %3029 = vmatmul.bf16.gmra.mxu0 %v1425
    %v3030 = vpop.f32.mrf.mxu0
    %v3031 = vadd.f32 %v2862, %v3030
    %v3032 = vpop.f32.mrf.mxu0
    %v3033 = vadd.f32 %v2864, %v3032
    %3034 = vmatmul.bf16.gmra.mxu0 %v1433
    %v3035 = vpop.f32.mrf.mxu0
    %v3036 = vadd.f32 %v2867, %v3035
    %v3037 = vpop.f32.mrf.mxu0
    %v3038 = vadd.f32 %v2869, %v3037
    %3039 = vmatmul.bf16.gmra.mxu0 %v1441
    %v3040 = vpop.f32.mrf.mxu0
    %v3041 = vadd.f32 %v2872, %v3040
    %v3042 = vpop.f32.mrf.mxu0
    %v3043 = vadd.f32 %v2874, %v3042
    %3044 = vmatmul.bf16.gmra.mxu0 %v1449
    %v3045 = vpop.f32.mrf.mxu0
    %v3046 = vadd.f32 %v2877, %v3045
    %v3047 = vpop.f32.mrf.mxu0
    %v3048 = vadd.f32 %v2879, %v3047
    %3049 = vmatmul.bf16.gmra.mxu0 %v1457
    %v3050 = vpop.f32.mrf.mxu0
    %v3051 = vadd.f32 %v2882, %v3050
    %v3052 = vpop.f32.mrf.mxu0
    %v3053 = vadd.f32 %v2884, %v3052
    %3054 = vmatmul.bf16.gmra.mxu0 %v1465
    %v3055 = vpop.f32.mrf.mxu0
    %v3056 = vadd.f32 %v2887, %v3055
    %v3057 = vpop.f32.mrf.mxu0
    %v3058 = vadd.f32 %v2889, %v3057
    %3059 = vmatmul.bf16.gmra.mxu0 %v1473
    %v3060 = vpop.f32.mrf.mxu0
    %v3061 = vadd.f32 %v2892, %v3060
    %v3062 = vpop.f32.mrf.mxu0
    %v3063 = vadd.f32 %v2894, %v3062
    %3064 = vmatmul.bf16.gmra.mxu0 %v1481
    %v3065 = vpop.f32.mrf.mxu0
    %v3066 = vadd.f32 %v2897, %v3065
    %v3067 = vpop.f32.mrf.mxu0
    %v3068 = vadd.f32 %v2899, %v3067
    %3069 = vmatmul.bf16.gmra.mxu0 %v1489
    %v3070 = vpop.f32.mrf.mxu0
    %v3071 = vadd.f32 %v2902, %v3070
    %v3072 = vpop.f32.mrf.mxu0
    %v3073 = vadd.f32 %v2904, %v3072
    %3074 = vmatmul.bf16.gmra.mxu0 %v1497
    %v3075 = vpop.f32.mrf.mxu0
    %v3076 = vadd.f32 %v2907, %v3075
    %v3077 = vpop.f32.mrf.mxu0
    %v3078 = vadd.f32 %v2909, %v3077
    %3079 = vmatmul.bf16.gmra.mxu0 %v1505
    %v3080 = vpop.f32.mrf.mxu0
    %v3081 = vadd.f32 %v2912, %v3080
    %v3082 = vpop.f32.mrf.mxu0
    %v3083 = vadd.f32 %v2914, %v3082
    %3084 = vmatmul.bf16.gmra.mxu0 %v1513
    %v3085 = vpop.f32.mrf.mxu0
    %v3086 = vadd.f32 %v2917, %v3085
    %v3087 = vpop.f32.mrf.mxu0
    %v3088 = vadd.f32 %v2919, %v3087
    %3089 = vmatmul.bf16.gmra.mxu0 %v1521
    %v3090 = vpop.f32.mrf.mxu0
    %v3091 = vadd.f32 %v2922, %v3090
    %v3092 = vpop.f32.mrf.mxu0
    %v3093 = vadd.f32 %v2924, %v3092
    %3094 = vmatmul.bf16.gmra.mxu0 %v1529
    %v3095 = vpop.f32.mrf.mxu0
    %v3096 = vadd.f32 %v2927, %v3095
    %v3097 = vpop.f32.mrf.mxu0
    %v3098 = vadd.f32 %v2929, %v3097
    %3099 = vmatmul.bf16.gmra.mxu0 %v1537
    %v3100 = vpop.f32.mrf.mxu0
    %v3101 = vadd.f32 %v2932, %v3100
    %v3102 = vpop.f32.mrf.mxu0
    %v3103 = vadd.f32 %v2934, %v3102
    %3104 = vmatmul.bf16.gmra.mxu0 %v1545
    %v3105 = vpop.f32.mrf.mxu0
    %v3106 = vadd.f32 %v2937, %v3105
    %v3107 = vpop.f32.mrf.mxu0
    %v3108 = vadd.f32 %v2939, %v3107
    %3109 = vmatmul.bf16.gmra.mxu0 %v1553
    %v3110 = vpop.f32.mrf.mxu0
    %v3111 = vadd.f32 %v2942, %v3110
    %v3112 = vpop.f32.mrf.mxu0
    %v3113 = vadd.f32 %v2944, %v3112
    %3114 = vmatmul.bf16.gmra.mxu0 %v1561
    %v3115 = vpop.f32.mrf.mxu0
    %v3116 = vadd.f32 %v2947, %v3115
    %v3117 = vpop.f32.mrf.mxu0
    %v3118 = vadd.f32 %v2949, %v3117
    %3119 = vmatmul.bf16.gmra.mxu0 %v1569
    %v3120 = vpop.f32.mrf.mxu0
    %v3121 = vadd.f32 %v2952, %v3120
    %v3122 = vpop.f32.mrf.mxu0
    %v3123 = vadd.f32 %v2954, %v3122
    %3124 = vmatmul.bf16.gmra.mxu0 %v1577
    %v3125 = vpop.f32.mrf.mxu0
    %v3126 = vadd.f32 %v2957, %v3125
    %v3127 = vpop.f32.mrf.mxu0
    %v3128 = vadd.f32 %v2959, %v3127
    %3129 = vmatmul.bf16.gmra.mxu0 %v1585
    %v3130 = vpop.f32.mrf.mxu0
    %v3131 = vadd.f32 %v2962, %v3130
    %v3132 = vpop.f32.mrf.mxu0
    %v3133 = vadd.f32 %v2964, %v3132
    %3134 = vmatmul.bf16.gmra.mxu0 %v1593
    %v3135 = vpop.f32.mrf.mxu0
    %v3136 = vadd.f32 %v2967, %v3135
    %v3137 = vpop.f32.mrf.mxu0
    %v3138 = vadd.f32 %v2969, %v3137
    %3139 = vmatmul.bf16.gmra.mxu0 %v1601
    %v3140 = vpop.f32.mrf.mxu0
    %v3141 = vadd.f32 %v2972, %v3140
    %v3142 = vpop.f32.mrf.mxu0
    %v3143 = vadd.f32 %v2974, %v3142
    %3144 = vmatmul.bf16.gmra.mxu0 %v1609
    %v3145 = vpop.f32.mrf.mxu0
    %v3146 = vadd.f32 %v2977, %v3145
    %v3147 = vpop.f32.mrf.mxu0
    %v3148 = vadd.f32 %v2979, %v3147
    %3149 = vmatmul.bf16.gmra.mxu0 %v1617
    %v3150 = vpop.f32.mrf.mxu0
    %v3151 = vadd.f32 %v2982, %v3150
    %v3152 = vpop.f32.mrf.mxu0
    %v3153 = vadd.f32 %v2984, %v3152
    %3154 = vmatmul.bf16.gmra.mxu0 %v1625
    %v3155 = vpop.f32.mrf.mxu0
    %v3156 = vadd.f32 %v2987, %v3155
    %v3157 = vpop.f32.mrf.mxu0
    %v3158 = vadd.f32 %v2989, %v3157
    %3159 = vmatmul.bf16.gmra.mxu0 %v1633
    %v3160 = vpop.f32.mrf.mxu0
    %v3161 = vadd.f32 %v2992, %v3160
    %v3162 = vpop.f32.mrf.mxu0
    %v3163 = vadd.f32 %v2994, %v3162
    %3164 = vmatmul.bf16.gmra.mxu0 %v1641
    %v3165 = vpop.f32.mrf.mxu0
    %v3166 = vadd.f32 %v2997, %v3165
    %v3167 = vpop.f32.mrf.mxu0
    %v3168 = vadd.f32 %v2999, %v3167
    %3169 = vdwg.mxu0
    %3170 = vmatpush.bf16.msra.mxu0 %v2083
    %3171 = vmatpush.bf16.msra.mxu0 %v2082
    %3172 = vmatpush.bf16.msra.mxu0 %v2081
    %3173 = vmatpush.bf16.msra.mxu0 %v2080
    %3174 = vmatpush.bf16.msra.mxu0 %v2079
    %3175 = vmatpush.bf16.msra.mxu0 %v2078
    %3176 = vmatpush.bf16.msra.mxu0 %v2077
    %3177 = vmatpush.bf16.msra.mxu0 %v2076
    %3178 = vmatmul.bf16.gmra.mxu0 %v1394
    %v3179 = vpop.f32.mrf.mxu0
    %v3180 = vadd.f32 %v3011, %v3179
    %v3181 = vpop.f32.mrf.mxu0
    %v3182 = vadd.f32 %v3013, %v3181
    %3183 = vmatmul.bf16.gmra.mxu0 %v1402
    %v3184 = vpop.f32.mrf.mxu0
    %v3185 = vadd.f32 %v3016, %v3184
    %v3186 = vpop.f32.mrf.mxu0
    %v3187 = vadd.f32 %v3018, %v3186
    %3188 = vmatmul.bf16.gmra.mxu0 %v1410
    %v3189 = vpop.f32.mrf.mxu0
    %v3190 = vadd.f32 %v3021, %v3189
    %v3191 = vpop.f32.mrf.mxu0
    %v3192 = vadd.f32 %v3023, %v3191
    %3193 = vmatmul.bf16.gmra.mxu0 %v1418
    %v3194 = vpop.f32.mrf.mxu0
    %v3195 = vadd.f32 %v3026, %v3194
    %v3196 = vpop.f32.mrf.mxu0
    %v3197 = vadd.f32 %v3028, %v3196
    %3198 = vmatmul.bf16.gmra.mxu0 %v1426
    %v3199 = vpop.f32.mrf.mxu0
    %v3200 = vadd.f32 %v3031, %v3199
    %v3201 = vpop.f32.mrf.mxu0
    %v3202 = vadd.f32 %v3033, %v3201
    %3203 = vmatmul.bf16.gmra.mxu0 %v1434
    %v3204 = vpop.f32.mrf.mxu0
    %v3205 = vadd.f32 %v3036, %v3204
    %v3206 = vpop.f32.mrf.mxu0
    %v3207 = vadd.f32 %v3038, %v3206
    %3208 = vmatmul.bf16.gmra.mxu0 %v1442
    %v3209 = vpop.f32.mrf.mxu0
    %v3210 = vadd.f32 %v3041, %v3209
    %v3211 = vpop.f32.mrf.mxu0
    %v3212 = vadd.f32 %v3043, %v3211
    %3213 = vmatmul.bf16.gmra.mxu0 %v1450
    %v3214 = vpop.f32.mrf.mxu0
    %v3215 = vadd.f32 %v3046, %v3214
    %v3216 = vpop.f32.mrf.mxu0
    %v3217 = vadd.f32 %v3048, %v3216
    %3218 = vmatmul.bf16.gmra.mxu0 %v1458
    %v3219 = vpop.f32.mrf.mxu0
    %v3220 = vadd.f32 %v3051, %v3219
    %v3221 = vpop.f32.mrf.mxu0
    %v3222 = vadd.f32 %v3053, %v3221
    %3223 = vmatmul.bf16.gmra.mxu0 %v1466
    %v3224 = vpop.f32.mrf.mxu0
    %v3225 = vadd.f32 %v3056, %v3224
    %v3226 = vpop.f32.mrf.mxu0
    %v3227 = vadd.f32 %v3058, %v3226
    %3228 = vmatmul.bf16.gmra.mxu0 %v1474
    %v3229 = vpop.f32.mrf.mxu0
    %v3230 = vadd.f32 %v3061, %v3229
    %v3231 = vpop.f32.mrf.mxu0
    %v3232 = vadd.f32 %v3063, %v3231
    %3233 = vmatmul.bf16.gmra.mxu0 %v1482
    %v3234 = vpop.f32.mrf.mxu0
    %v3235 = vadd.f32 %v3066, %v3234
    %v3236 = vpop.f32.mrf.mxu0
    %v3237 = vadd.f32 %v3068, %v3236
    %3238 = vmatmul.bf16.gmra.mxu0 %v1490
    %v3239 = vpop.f32.mrf.mxu0
    %v3240 = vadd.f32 %v3071, %v3239
    %v3241 = vpop.f32.mrf.mxu0
    %v3242 = vadd.f32 %v3073, %v3241
    %3243 = vmatmul.bf16.gmra.mxu0 %v1498
    %v3244 = vpop.f32.mrf.mxu0
    %v3245 = vadd.f32 %v3076, %v3244
    %v3246 = vpop.f32.mrf.mxu0
    %v3247 = vadd.f32 %v3078, %v3246
    %3248 = vmatmul.bf16.gmra.mxu0 %v1506
    %v3249 = vpop.f32.mrf.mxu0
    %v3250 = vadd.f32 %v3081, %v3249
    %v3251 = vpop.f32.mrf.mxu0
    %v3252 = vadd.f32 %v3083, %v3251
    %3253 = vmatmul.bf16.gmra.mxu0 %v1514
    %v3254 = vpop.f32.mrf.mxu0
    %v3255 = vadd.f32 %v3086, %v3254
    %v3256 = vpop.f32.mrf.mxu0
    %v3257 = vadd.f32 %v3088, %v3256
    %3258 = vmatmul.bf16.gmra.mxu0 %v1522
    %v3259 = vpop.f32.mrf.mxu0
    %v3260 = vadd.f32 %v3091, %v3259
    %v3261 = vpop.f32.mrf.mxu0
    %v3262 = vadd.f32 %v3093, %v3261
    %3263 = vmatmul.bf16.gmra.mxu0 %v1530
    %v3264 = vpop.f32.mrf.mxu0
    %v3265 = vadd.f32 %v3096, %v3264
    %v3266 = vpop.f32.mrf.mxu0
    %v3267 = vadd.f32 %v3098, %v3266
    %3268 = vmatmul.bf16.gmra.mxu0 %v1538
    %v3269 = vpop.f32.mrf.mxu0
    %v3270 = vadd.f32 %v3101, %v3269
    %v3271 = vpop.f32.mrf.mxu0
    %v3272 = vadd.f32 %v3103, %v3271
    %3273 = vmatmul.bf16.gmra.mxu0 %v1546
    %v3274 = vpop.f32.mrf.mxu0
    %v3275 = vadd.f32 %v3106, %v3274
    %v3276 = vpop.f32.mrf.mxu0
    %v3277 = vadd.f32 %v3108, %v3276
    %3278 = vmatmul.bf16.gmra.mxu0 %v1554
    %v3279 = vpop.f32.mrf.mxu0
    %v3280 = vadd.f32 %v3111, %v3279
    %v3281 = vpop.f32.mrf.mxu0
    %v3282 = vadd.f32 %v3113, %v3281
    %3283 = vmatmul.bf16.gmra.mxu0 %v1562
    %v3284 = vpop.f32.mrf.mxu0
    %v3285 = vadd.f32 %v3116, %v3284
    %v3286 = vpop.f32.mrf.mxu0
    %v3287 = vadd.f32 %v3118, %v3286
    %3288 = vmatmul.bf16.gmra.mxu0 %v1570
    %v3289 = vpop.f32.mrf.mxu0
    %v3290 = vadd.f32 %v3121, %v3289
    %v3291 = vpop.f32.mrf.mxu0
    %v3292 = vadd.f32 %v3123, %v3291
    %3293 = vmatmul.bf16.gmra.mxu0 %v1578
    %v3294 = vpop.f32.mrf.mxu0
    %v3295 = vadd.f32 %v3126, %v3294
    %v3296 = vpop.f32.mrf.mxu0
    %v3297 = vadd.f32 %v3128, %v3296
    %3298 = vmatmul.bf16.gmra.mxu0 %v1586
    %v3299 = vpop.f32.mrf.mxu0
    %v3300 = vadd.f32 %v3131, %v3299
    %v3301 = vpop.f32.mrf.mxu0
    %v3302 = vadd.f32 %v3133, %v3301
    %3303 = vmatmul.bf16.gmra.mxu0 %v1594
    %v3304 = vpop.f32.mrf.mxu0
    %v3305 = vadd.f32 %v3136, %v3304
    %v3306 = vpop.f32.mrf.mxu0
    %v3307 = vadd.f32 %v3138, %v3306
    %3308 = vmatmul.bf16.gmra.mxu0 %v1602
    %v3309 = vpop.f32.mrf.mxu0
    %v3310 = vadd.f32 %v3141, %v3309
    %v3311 = vpop.f32.mrf.mxu0
    %v3312 = vadd.f32 %v3143, %v3311
    %3313 = vmatmul.bf16.gmra.mxu0 %v1610
    %v3314 = vpop.f32.mrf.mxu0
    %v3315 = vadd.f32 %v3146, %v3314
    %v3316 = vpop.f32.mrf.mxu0
    %v3317 = vadd.f32 %v3148, %v3316
    %3318 = vmatmul.bf16.gmra.mxu0 %v1618
    %v3319 = vpop.f32.mrf.mxu0
    %v3320 = vadd.f32 %v3151, %v3319
    %v3321 = vpop.f32.mrf.mxu0
    %v3322 = vadd.f32 %v3153, %v3321
    %3323 = vmatmul.bf16.gmra.mxu0 %v1626
    %v3324 = vpop.f32.mrf.mxu0
    %v3325 = vadd.f32 %v3156, %v3324
    %v3326 = vpop.f32.mrf.mxu0
    %v3327 = vadd.f32 %v3158, %v3326
    %3328 = vmatmul.bf16.gmra.mxu0 %v1634
    %v3329 = vpop.f32.mrf.mxu0
    %v3330 = vadd.f32 %v3161, %v3329
    %v3331 = vpop.f32.mrf.mxu0
    %v3332 = vadd.f32 %v3163, %v3331
    %3333 = vmatmul.bf16.gmra.mxu0 %v1642
    %v3334 = vpop.f32.mrf.mxu0
    %v3335 = vadd.f32 %v3166, %v3334
    %v3336 = vpop.f32.mrf.mxu0
    %v3337 = vadd.f32 %v3168, %v3336
    %3338 = vdwg.mxu0
    %3339 = vmatpush.bf16.msra.mxu0 %v2091
    %3340 = vmatpush.bf16.msra.mxu0 %v2090
    %3341 = vmatpush.bf16.msra.mxu0 %v2089
    %3342 = vmatpush.bf16.msra.mxu0 %v2088
    %3343 = vmatpush.bf16.msra.mxu0 %v2087
    %3344 = vmatpush.bf16.msra.mxu0 %v2086
    %3345 = vmatpush.bf16.msra.mxu0 %v2085
    %3346 = vmatpush.bf16.msra.mxu0 %v2084
    %3347 = vmatmul.bf16.gmra.mxu0 %v1395
    %v3348 = vpop.f32.mrf.mxu0
    %v3349 = vadd.f32 %v3180, %v3348
    %v3350 = vpop.f32.mrf.mxu0
    %v3351 = vadd.f32 %v3182, %v3350
    %3352 = vmatmul.bf16.gmra.mxu0 %v1403
    %v3353 = vpop.f32.mrf.mxu0
    %v3354 = vadd.f32 %v3185, %v3353
    %v3355 = vpop.f32.mrf.mxu0
    %v3356 = vadd.f32 %v3187, %v3355
    %3357 = vmatmul.bf16.gmra.mxu0 %v1411
    %v3358 = vpop.f32.mrf.mxu0
    %v3359 = vadd.f32 %v3190, %v3358
    %v3360 = vpop.f32.mrf.mxu0
    %v3361 = vadd.f32 %v3192, %v3360
    %3362 = vmatmul.bf16.gmra.mxu0 %v1419
    %v3363 = vpop.f32.mrf.mxu0
    %v3364 = vadd.f32 %v3195, %v3363
    %v3365 = vpop.f32.mrf.mxu0
    %v3366 = vadd.f32 %v3197, %v3365
    %3367 = vmatmul.bf16.gmra.mxu0 %v1427
    %v3368 = vpop.f32.mrf.mxu0
    %v3369 = vadd.f32 %v3200, %v3368
    %v3370 = vpop.f32.mrf.mxu0
    %v3371 = vadd.f32 %v3202, %v3370
    %3372 = vmatmul.bf16.gmra.mxu0 %v1435
    %v3373 = vpop.f32.mrf.mxu0
    %v3374 = vadd.f32 %v3205, %v3373
    %v3375 = vpop.f32.mrf.mxu0
    %v3376 = vadd.f32 %v3207, %v3375
    %3377 = vmatmul.bf16.gmra.mxu0 %v1443
    %v3378 = vpop.f32.mrf.mxu0
    %v3379 = vadd.f32 %v3210, %v3378
    %v3380 = vpop.f32.mrf.mxu0
    %v3381 = vadd.f32 %v3212, %v3380
    %3382 = vmatmul.bf16.gmra.mxu0 %v1451
    %v3383 = vpop.f32.mrf.mxu0
    %v3384 = vadd.f32 %v3215, %v3383
    %v3385 = vpop.f32.mrf.mxu0
    %v3386 = vadd.f32 %v3217, %v3385
    %3387 = vmatmul.bf16.gmra.mxu0 %v1459
    %v3388 = vpop.f32.mrf.mxu0
    %v3389 = vadd.f32 %v3220, %v3388
    %v3390 = vpop.f32.mrf.mxu0
    %v3391 = vadd.f32 %v3222, %v3390
    %3392 = vmatmul.bf16.gmra.mxu0 %v1467
    %v3393 = vpop.f32.mrf.mxu0
    %v3394 = vadd.f32 %v3225, %v3393
    %v3395 = vpop.f32.mrf.mxu0
    %v3396 = vadd.f32 %v3227, %v3395
    %3397 = vmatmul.bf16.gmra.mxu0 %v1475
    %v3398 = vpop.f32.mrf.mxu0
    %v3399 = vadd.f32 %v3230, %v3398
    %v3400 = vpop.f32.mrf.mxu0
    %v3401 = vadd.f32 %v3232, %v3400
    %3402 = vmatmul.bf16.gmra.mxu0 %v1483
    %v3403 = vpop.f32.mrf.mxu0
    %v3404 = vadd.f32 %v3235, %v3403
    %v3405 = vpop.f32.mrf.mxu0
    %v3406 = vadd.f32 %v3237, %v3405
    %3407 = vmatmul.bf16.gmra.mxu0 %v1491
    %v3408 = vpop.f32.mrf.mxu0
    %v3409 = vadd.f32 %v3240, %v3408
    %v3410 = vpop.f32.mrf.mxu0
    %v3411 = vadd.f32 %v3242, %v3410
    %3412 = vmatmul.bf16.gmra.mxu0 %v1499
    %v3413 = vpop.f32.mrf.mxu0
    %v3414 = vadd.f32 %v3245, %v3413
    %v3415 = vpop.f32.mrf.mxu0
    %v3416 = vadd.f32 %v3247, %v3415
    %3417 = vmatmul.bf16.gmra.mxu0 %v1507
    %v3418 = vpop.f32.mrf.mxu0
    %v3419 = vadd.f32 %v3250, %v3418
    %v3420 = vpop.f32.mrf.mxu0
    %v3421 = vadd.f32 %v3252, %v3420
    %3422 = vmatmul.bf16.gmra.mxu0 %v1515
    %v3423 = vpop.f32.mrf.mxu0
    %v3424 = vadd.f32 %v3255, %v3423
    %v3425 = vpop.f32.mrf.mxu0
    %v3426 = vadd.f32 %v3257, %v3425
    %3427 = vmatmul.bf16.gmra.mxu0 %v1523
    %v3428 = vpop.f32.mrf.mxu0
    %v3429 = vadd.f32 %v3260, %v3428
    %v3430 = vpop.f32.mrf.mxu0
    %v3431 = vadd.f32 %v3262, %v3430
    %3432 = vmatmul.bf16.gmra.mxu0 %v1531
    %v3433 = vpop.f32.mrf.mxu0
    %v3434 = vadd.f32 %v3265, %v3433
    %v3435 = vpop.f32.mrf.mxu0
    %v3436 = vadd.f32 %v3267, %v3435
    %3437 = vmatmul.bf16.gmra.mxu0 %v1539
    %v3438 = vpop.f32.mrf.mxu0
    %v3439 = vadd.f32 %v3270, %v3438
    %v3440 = vpop.f32.mrf.mxu0
    %v3441 = vadd.f32 %v3272, %v3440
    %3442 = vmatmul.bf16.gmra.mxu0 %v1547
    %v3443 = vpop.f32.mrf.mxu0
    %v3444 = vadd.f32 %v3275, %v3443
    %v3445 = vpop.f32.mrf.mxu0
    %v3446 = vadd.f32 %v3277, %v3445
    %3447 = vmatmul.bf16.gmra.mxu0 %v1555
    %v3448 = vpop.f32.mrf.mxu0
    %v3449 = vadd.f32 %v3280, %v3448
    %v3450 = vpop.f32.mrf.mxu0
    %v3451 = vadd.f32 %v3282, %v3450
    %3452 = vmatmul.bf16.gmra.mxu0 %v1563
    %v3453 = vpop.f32.mrf.mxu0
    %v3454 = vadd.f32 %v3285, %v3453
    %v3455 = vpop.f32.mrf.mxu0
    %v3456 = vadd.f32 %v3287, %v3455
    %3457 = vmatmul.bf16.gmra.mxu0 %v1571
    %v3458 = vpop.f32.mrf.mxu0
    %v3459 = vadd.f32 %v3290, %v3458
    %v3460 = vpop.f32.mrf.mxu0
    %v3461 = vadd.f32 %v3292, %v3460
    %3462 = vmatmul.bf16.gmra.mxu0 %v1579
    %v3463 = vpop.f32.mrf.mxu0
    %v3464 = vadd.f32 %v3295, %v3463
    %v3465 = vpop.f32.mrf.mxu0
    %v3466 = vadd.f32 %v3297, %v3465
    %3467 = vmatmul.bf16.gmra.mxu0 %v1587
    %v3468 = vpop.f32.mrf.mxu0
    %v3469 = vadd.f32 %v3300, %v3468
    %v3470 = vpop.f32.mrf.mxu0
    %v3471 = vadd.f32 %v3302, %v3470
    %3472 = vmatmul.bf16.gmra.mxu0 %v1595
    %v3473 = vpop.f32.mrf.mxu0
    %v3474 = vadd.f32 %v3305, %v3473
    %v3475 = vpop.f32.mrf.mxu0
    %v3476 = vadd.f32 %v3307, %v3475
    %3477 = vmatmul.bf16.gmra.mxu0 %v1603
    %v3478 = vpop.f32.mrf.mxu0
    %v3479 = vadd.f32 %v3310, %v3478
    %v3480 = vpop.f32.mrf.mxu0
    %v3481 = vadd.f32 %v3312, %v3480
    %3482 = vmatmul.bf16.gmra.mxu0 %v1611
    %v3483 = vpop.f32.mrf.mxu0
    %v3484 = vadd.f32 %v3315, %v3483
    %v3485 = vpop.f32.mrf.mxu0
    %v3486 = vadd.f32 %v3317, %v3485
    %3487 = vmatmul.bf16.gmra.mxu0 %v1619
    %v3488 = vpop.f32.mrf.mxu0
    %v3489 = vadd.f32 %v3320, %v3488
    %v3490 = vpop.f32.mrf.mxu0
    %v3491 = vadd.f32 %v3322, %v3490
    %3492 = vmatmul.bf16.gmra.mxu0 %v1627
    %v3493 = vpop.f32.mrf.mxu0
    %v3494 = vadd.f32 %v3325, %v3493
    %v3495 = vpop.f32.mrf.mxu0
    %v3496 = vadd.f32 %v3327, %v3495
    %3497 = vmatmul.bf16.gmra.mxu0 %v1635
    %v3498 = vpop.f32.mrf.mxu0
    %v3499 = vadd.f32 %v3330, %v3498
    %v3500 = vpop.f32.mrf.mxu0
    %v3501 = vadd.f32 %v3332, %v3500
    %3502 = vmatmul.bf16.gmra.mxu0 %v1643
    %v3503 = vpop.f32.mrf.mxu0
    %v3504 = vadd.f32 %v3335, %v3503
    %v3505 = vpop.f32.mrf.mxu0
    %v3506 = vadd.f32 %v3337, %v3505
    %3507 = vdwg.mxu0
    %v3508 = vlaneseq
    %v3509 = vshrl.u32 %v3508, 7
    %v3510 = vadd.s32 %v3509, 8
    %v3511 = vadd.s32 %v3509, 16
    %v3512 = vadd.s32 %v3509, 24
    %v3513 = vadd.s32 %v3509, 32
    %v3514 = vadd.s32 %v3509, 40
    %v3515 = vadd.s32 %v3509, 48
    %v3516 = vadd.s32 %v3509, 56
    %v3517 = vadd.s32 %v3509, 64
    %v3518 = vadd.s32 %v3509, 72
    %v3519 = vadd.s32 %v3509, 80
    %v3520 = vadd.s32 %v3509, 88
    %v3521 = vadd.s32 %v3509, 96
    %v3522 = vadd.s32 %v3509, 104
    %v3523 = vadd.s32 %v3509, 112
    %v3524 = vadd.s32 %v3509, 120
    %v3525 = vadd.s32 %v3509, 128
    %v3526 = vadd.s32 %v3509, 136
    %v3527 = vadd.s32 %v3509, 144
    %v3528 = vadd.s32 %v3509, 152
    %v3529 = vadd.s32 %v3509, 160
    %v3530 = vadd.s32 %v3509, 168
    %v3531 = vadd.s32 %v3509, 176
    %v3532 = vadd.s32 %v3509, 184
    %v3533 = vadd.s32 %v3509, 192
    %v3534 = vadd.s32 %v3509, 200
    %v3535 = vadd.s32 %v3509, 208
    %v3536 = vadd.s32 %v3509, 216
    %v3537 = vadd.s32 %v3509, 224
    %v3538 = vadd.s32 %v3509, 232
    %v3539 = vadd.s32 %v3509, 240
    %v3540 = vadd.s32 %v3509, 248
    %v3541 = vadd.s32 %v3509, 256
    %v3542 = vadd.s32 %v3509, 264
    %v3543 = vadd.s32 %v3509, 272
    %v3544 = vadd.s32 %v3509, 280
    %v3545 = vadd.s32 %v3509, 288
    %v3546 = vadd.s32 %v3509, 296
    %v3547 = vadd.s32 %v3509, 304
    %v3548 = vadd.s32 %v3509, 312
    %v3549 = vadd.s32 %v3509, 320
    %v3550 = vadd.s32 %v3509, 328
    %v3551 = vadd.s32 %v3509, 336
    %v3552 = vadd.s32 %v3509, 344
    %v3553 = vadd.s32 %v3509, 352
    %v3554 = vadd.s32 %v3509, 360
    %v3555 = vadd.s32 %v3509, 368
    %v3556 = vadd.s32 %v3509, 376
    %v3557 = vadd.s32 %v3509, 384
    %v3558 = vadd.s32 %v3509, 392
    %v3559 = vadd.s32 %v3509, 400
    %v3560 = vadd.s32 %v3509, 408
    %v3561 = vadd.s32 %v3509, 416
    %v3562 = vadd.s32 %v3509, 424
    %v3563 = vadd.s32 %v3509, 432
    %v3564 = vadd.s32 %v3509, 440
    %v3565 = vadd.s32 %v3509, 448
    %v3566 = vadd.s32 %v3509, 456
    %v3567 = vadd.s32 %v3509, 464
    %v3568 = vadd.s32 %v3509, 472
    %v3569 = vadd.s32 %v3509, 480
    %v3570 = vadd.s32 %v3509, 488
    %v3571 = vadd.s32 %v3509, 496
    %v3572 = vadd.s32 %v3509, 504
    %vm3573 = vcmp.lt.s32.totalorder %v3509, 0
    %v3574 = vsub.s32 0, %v3509
    %v3575 = vsel %vm3573, %v3574, %v3509
    %v3576 = vshrl.u32 %v3575, 3
    %v3577 = vand.u32 %v3575, 7
    %v3578 = vsub.s32 0, %v3577
    %v3579 = vsel %vm3573, %v3578, %v3577
    %vm3580 = vcmp.lt.s32.totalorder %v3510, 0
    %v3581 = vsub.s32 0, %v3510
    %v3582 = vsel %vm3580, %v3581, %v3510
    %v3583 = vshrl.u32 %v3582, 3
    %v3584 = vand.u32 %v3582, 7
    %v3585 = vsub.s32 0, %v3584
    %v3586 = vsel %vm3580, %v3585, %v3584
    %vm3587 = vcmp.lt.s32.totalorder %v3511, 0
    %v3588 = vsub.s32 0, %v3511
    %v3589 = vsel %vm3587, %v3588, %v3511
    %v3590 = vshrl.u32 %v3589, 3
    %v3591 = vand.u32 %v3589, 7
    %v3592 = vsub.s32 0, %v3591
    %v3593 = vsel %vm3587, %v3592, %v3591
    %vm3594 = vcmp.lt.s32.totalorder %v3512, 0
    %v3595 = vsub.s32 0, %v3512
    %v3596 = vsel %vm3594, %v3595, %v3512
    %v3597 = vshrl.u32 %v3596, 3
    %v3598 = vand.u32 %v3596, 7
    %v3599 = vsub.s32 0, %v3598
    %v3600 = vsel %vm3594, %v3599, %v3598
    %vm3601 = vcmp.lt.s32.totalorder %v3513, 0
    %v3602 = vsub.s32 0, %v3513
    %v3603 = vsel %vm3601, %v3602, %v3513
    %v3604 = vshrl.u32 %v3603, 3
    %v3605 = vand.u32 %v3603, 7
    %v3606 = vsub.s32 0, %v3605
    %v3607 = vsel %vm3601, %v3606, %v3605
    %vm3608 = vcmp.lt.s32.totalorder %v3514, 0
    %v3609 = vsub.s32 0, %v3514
    %v3610 = vsel %vm3608, %v3609, %v3514
    %v3611 = vshrl.u32 %v3610, 3
    %v3612 = vand.u32 %v3610, 7
    %v3613 = vsub.s32 0, %v3612
    %v3614 = vsel %vm3608, %v3613, %v3612
    %vm3615 = vcmp.lt.s32.totalorder %v3515, 0
    %v3616 = vsub.s32 0, %v3515
    %v3617 = vsel %vm3615, %v3616, %v3515
    %v3618 = vshrl.u32 %v3617, 3
    %v3619 = vand.u32 %v3617, 7
    %v3620 = vsub.s32 0, %v3619
    %v3621 = vsel %vm3615, %v3620, %v3619
    %vm3622 = vcmp.lt.s32.totalorder %v3516, 0
    %v3623 = vsub.s32 0, %v3516
    %v3624 = vsel %vm3622, %v3623, %v3516
    %v3625 = vshrl.u32 %v3624, 3
    %v3626 = vand.u32 %v3624, 7
    %v3627 = vsub.s32 0, %v3626
    %v3628 = vsel %vm3622, %v3627, %v3626
    %vm3629 = vcmp.lt.s32.totalorder %v3517, 0
    %v3630 = vsub.s32 0, %v3517
    %v3631 = vsel %vm3629, %v3630, %v3517
    %v3632 = vshrl.u32 %v3631, 3
    %v3633 = vand.u32 %v3631, 7
    %v3634 = vsub.s32 0, %v3633
    %v3635 = vsel %vm3629, %v3634, %v3633
    %vm3636 = vcmp.lt.s32.totalorder %v3518, 0
    %v3637 = vsub.s32 0, %v3518
    %v3638 = vsel %vm3636, %v3637, %v3518
    %v3639 = vshrl.u32 %v3638, 3
    %v3640 = vand.u32 %v3638, 7
    %v3641 = vsub.s32 0, %v3640
    %v3642 = vsel %vm3636, %v3641, %v3640
    %vm3643 = vcmp.lt.s32.totalorder %v3519, 0
    %v3644 = vsub.s32 0, %v3519
    %v3645 = vsel %vm3643, %v3644, %v3519
    %v3646 = vshrl.u32 %v3645, 3
    %v3647 = vand.u32 %v3645, 7
    %v3648 = vsub.s32 0, %v3647
    %v3649 = vsel %vm3643, %v3648, %v3647
    %vm3650 = vcmp.lt.s32.totalorder %v3520, 0
    %v3651 = vsub.s32 0, %v3520
    %v3652 = vsel %vm3650, %v3651, %v3520
    %v3653 = vshrl.u32 %v3652, 3
    %v3654 = vand.u32 %v3652, 7
    %v3655 = vsub.s32 0, %v3654
    %v3656 = vsel %vm3650, %v3655, %v3654
    %vm3657 = vcmp.lt.s32.totalorder %v3521, 0
    %v3658 = vsub.s32 0, %v3521
    %v3659 = vsel %vm3657, %v3658, %v3521
    %v3660 = vshrl.u32 %v3659, 3
    %v3661 = vand.u32 %v3659, 7
    %v3662 = vsub.s32 0, %v3661
    %v3663 = vsel %vm3657, %v3662, %v3661
    %vm3664 = vcmp.lt.s32.totalorder %v3522, 0
    %v3665 = vsub.s32 0, %v3522
    %v3666 = vsel %vm3664, %v3665, %v3522
    %v3667 = vshrl.u32 %v3666, 3
    %v3668 = vand.u32 %v3666, 7
    %v3669 = vsub.s32 0, %v3668
    %v3670 = vsel %vm3664, %v3669, %v3668
    %vm3671 = vcmp.lt.s32.totalorder %v3523, 0
    %v3672 = vsub.s32 0, %v3523
    %v3673 = vsel %vm3671, %v3672, %v3523
    %v3674 = vshrl.u32 %v3673, 3
    %v3675 = vand.u32 %v3673, 7
    %v3676 = vsub.s32 0, %v3675
    %v3677 = vsel %vm3671, %v3676, %v3675
    %vm3678 = vcmp.lt.s32.totalorder %v3524, 0
    %v3679 = vsub.s32 0, %v3524
    %v3680 = vsel %vm3678, %v3679, %v3524
    %v3681 = vshrl.u32 %v3680, 3
    %v3682 = vand.u32 %v3680, 7
    %v3683 = vsub.s32 0, %v3682
    %v3684 = vsel %vm3678, %v3683, %v3682
    %vm3685 = vcmp.lt.s32.totalorder %v3525, 0
    %v3686 = vsub.s32 0, %v3525
    %v3687 = vsel %vm3685, %v3686, %v3525
    %v3688 = vshrl.u32 %v3687, 3
    %v3689 = vand.u32 %v3687, 7
    %v3690 = vsub.s32 0, %v3689
    %v3691 = vsel %vm3685, %v3690, %v3689
    %vm3692 = vcmp.lt.s32.totalorder %v3526, 0
    %v3693 = vsub.s32 0, %v3526
    %v3694 = vsel %vm3692, %v3693, %v3526
    %v3695 = vshrl.u32 %v3694, 3
    %v3696 = vand.u32 %v3694, 7
    %v3697 = vsub.s32 0, %v3696
    %v3698 = vsel %vm3692, %v3697, %v3696
    %vm3699 = vcmp.lt.s32.totalorder %v3527, 0
    %v3700 = vsub.s32 0, %v3527
    %v3701 = vsel %vm3699, %v3700, %v3527
    %v3702 = vshrl.u32 %v3701, 3
    %v3703 = vand.u32 %v3701, 7
    %v3704 = vsub.s32 0, %v3703
    %v3705 = vsel %vm3699, %v3704, %v3703
    %vm3706 = vcmp.lt.s32.totalorder %v3528, 0
    %v3707 = vsub.s32 0, %v3528
    %v3708 = vsel %vm3706, %v3707, %v3528
    %v3709 = vshrl.u32 %v3708, 3
    %v3710 = vand.u32 %v3708, 7
    %v3711 = vsub.s32 0, %v3710
    %v3712 = vsel %vm3706, %v3711, %v3710
    %vm3713 = vcmp.lt.s32.totalorder %v3529, 0
    %v3714 = vsub.s32 0, %v3529
    %v3715 = vsel %vm3713, %v3714, %v3529
    %v3716 = vshrl.u32 %v3715, 3
    %v3717 = vand.u32 %v3715, 7
    %v3718 = vsub.s32 0, %v3717
    %v3719 = vsel %vm3713, %v3718, %v3717
    %vm3720 = vcmp.lt.s32.totalorder %v3530, 0
    %v3721 = vsub.s32 0, %v3530
    %v3722 = vsel %vm3720, %v3721, %v3530
    %v3723 = vshrl.u32 %v3722, 3
    %v3724 = vand.u32 %v3722, 7
    %v3725 = vsub.s32 0, %v3724
    %v3726 = vsel %vm3720, %v3725, %v3724
    %vm3727 = vcmp.lt.s32.totalorder %v3531, 0
    %v3728 = vsub.s32 0, %v3531
    %v3729 = vsel %vm3727, %v3728, %v3531
    %v3730 = vshrl.u32 %v3729, 3
    %v3731 = vand.u32 %v3729, 7
    %v3732 = vsub.s32 0, %v3731
    %v3733 = vsel %vm3727, %v3732, %v3731
    %vm3734 = vcmp.lt.s32.totalorder %v3532, 0
    %v3735 = vsub.s32 0, %v3532
    %v3736 = vsel %vm3734, %v3735, %v3532
    %v3737 = vshrl.u32 %v3736, 3
    %v3738 = vand.u32 %v3736, 7
    %v3739 = vsub.s32 0, %v3738
    %v3740 = vsel %vm3734, %v3739, %v3738
    %vm3741 = vcmp.lt.s32.totalorder %v3533, 0
    %v3742 = vsub.s32 0, %v3533
    %v3743 = vsel %vm3741, %v3742, %v3533
    %v3744 = vshrl.u32 %v3743, 3
    %v3745 = vand.u32 %v3743, 7
    %v3746 = vsub.s32 0, %v3745
    %v3747 = vsel %vm3741, %v3746, %v3745
    %vm3748 = vcmp.lt.s32.totalorder %v3534, 0
    %v3749 = vsub.s32 0, %v3534
    %v3750 = vsel %vm3748, %v3749, %v3534
    %v3751 = vshrl.u32 %v3750, 3
    %v3752 = vand.u32 %v3750, 7
    %v3753 = vsub.s32 0, %v3752
    %v3754 = vsel %vm3748, %v3753, %v3752
    %vm3755 = vcmp.lt.s32.totalorder %v3535, 0
    %v3756 = vsub.s32 0, %v3535
    %v3757 = vsel %vm3755, %v3756, %v3535
    %v3758 = vshrl.u32 %v3757, 3
    %v3759 = vand.u32 %v3757, 7
    %v3760 = vsub.s32 0, %v3759
    %v3761 = vsel %vm3755, %v3760, %v3759
    %vm3762 = vcmp.lt.s32.totalorder %v3536, 0
    %v3763 = vsub.s32 0, %v3536
    %v3764 = vsel %vm3762, %v3763, %v3536
    %v3765 = vshrl.u32 %v3764, 3
    %v3766 = vand.u32 %v3764, 7
    %v3767 = vsub.s32 0, %v3766
    %v3768 = vsel %vm3762, %v3767, %v3766
    %vm3769 = vcmp.lt.s32.totalorder %v3537, 0
    %v3770 = vsub.s32 0, %v3537
    %v3771 = vsel %vm3769, %v3770, %v3537
    %v3772 = vshrl.u32 %v3771, 3
    %v3773 = vand.u32 %v3771, 7
    %v3774 = vsub.s32 0, %v3773
    %v3775 = vsel %vm3769, %v3774, %v3773
    %vm3776 = vcmp.lt.s32.totalorder %v3538, 0
    %v3777 = vsub.s32 0, %v3538
    %v3778 = vsel %vm3776, %v3777, %v3538
    %v3779 = vshrl.u32 %v3778, 3
    %v3780 = vand.u32 %v3778, 7
    %v3781 = vsub.s32 0, %v3780
    %v3782 = vsel %vm3776, %v3781, %v3780
    %vm3783 = vcmp.lt.s32.totalorder %v3539, 0
    %v3784 = vsub.s32 0, %v3539
    %v3785 = vsel %vm3783, %v3784, %v3539
    %v3786 = vshrl.u32 %v3785, 3
    %v3787 = vand.u32 %v3785, 7
    %v3788 = vsub.s32 0, %v3787
    %v3789 = vsel %vm3783, %v3788, %v3787
    %vm3790 = vcmp.lt.s32.totalorder %v3540, 0
    %v3791 = vsub.s32 0, %v3540
    %v3792 = vsel %vm3790, %v3791, %v3540
    %v3793 = vshrl.u32 %v3792, 3
    %v3794 = vand.u32 %v3792, 7
    %v3795 = vsub.s32 0, %v3794
    %v3796 = vsel %vm3790, %v3795, %v3794
    %vm3797 = vcmp.lt.s32.totalorder %v3541, 0
    %v3798 = vsub.s32 0, %v3541
    %v3799 = vsel %vm3797, %v3798, %v3541
    %v3800 = vshrl.u32 %v3799, 3
    %v3801 = vand.u32 %v3799, 7
    %v3802 = vsub.s32 0, %v3801
    %v3803 = vsel %vm3797, %v3802, %v3801
    %vm3804 = vcmp.lt.s32.totalorder %v3542, 0
    %v3805 = vsub.s32 0, %v3542
    %v3806 = vsel %vm3804, %v3805, %v3542
    %v3807 = vshrl.u32 %v3806, 3
    %v3808 = vand.u32 %v3806, 7
    %v3809 = vsub.s32 0, %v3808
    %v3810 = vsel %vm3804, %v3809, %v3808
    %vm3811 = vcmp.lt.s32.totalorder %v3543, 0
    %v3812 = vsub.s32 0, %v3543
    %v3813 = vsel %vm3811, %v3812, %v3543
    %v3814 = vshrl.u32 %v3813, 3
    %v3815 = vand.u32 %v3813, 7
    %v3816 = vsub.s32 0, %v3815
    %v3817 = vsel %vm3811, %v3816, %v3815
    %vm3818 = vcmp.lt.s32.totalorder %v3544, 0
    %v3819 = vsub.s32 0, %v3544
    %v3820 = vsel %vm3818, %v3819, %v3544
    %v3821 = vshrl.u32 %v3820, 3
    %v3822 = vand.u32 %v3820, 7
    %v3823 = vsub.s32 0, %v3822
    %v3824 = vsel %vm3818, %v3823, %v3822
    %vm3825 = vcmp.lt.s32.totalorder %v3545, 0
    %v3826 = vsub.s32 0, %v3545
    %v3827 = vsel %vm3825, %v3826, %v3545
    %v3828 = vshrl.u32 %v3827, 3
    %v3829 = vand.u32 %v3827, 7
    %v3830 = vsub.s32 0, %v3829
    %v3831 = vsel %vm3825, %v3830, %v3829
    %vm3832 = vcmp.lt.s32.totalorder %v3546, 0
    %v3833 = vsub.s32 0, %v3546
    %v3834 = vsel %vm3832, %v3833, %v3546
    %v3835 = vshrl.u32 %v3834, 3
    %v3836 = vand.u32 %v3834, 7
    %v3837 = vsub.s32 0, %v3836
    %v3838 = vsel %vm3832, %v3837, %v3836
    %vm3839 = vcmp.lt.s32.totalorder %v3547, 0
    %v3840 = vsub.s32 0, %v3547
    %v3841 = vsel %vm3839, %v3840, %v3547
    %v3842 = vshrl.u32 %v3841, 3
    %v3843 = vand.u32 %v3841, 7
    %v3844 = vsub.s32 0, %v3843
    %v3845 = vsel %vm3839, %v3844, %v3843
    %vm3846 = vcmp.lt.s32.totalorder %v3548, 0
    %v3847 = vsub.s32 0, %v3548
    %v3848 = vsel %vm3846, %v3847, %v3548
    %v3849 = vshrl.u32 %v3848, 3
    %v3850 = vand.u32 %v3848, 7
    %v3851 = vsub.s32 0, %v3850
    %v3852 = vsel %vm3846, %v3851, %v3850
    %vm3853 = vcmp.lt.s32.totalorder %v3549, 0
    %v3854 = vsub.s32 0, %v3549
    %v3855 = vsel %vm3853, %v3854, %v3549
    %v3856 = vshrl.u32 %v3855, 3
    %v3857 = vand.u32 %v3855, 7
    %v3858 = vsub.s32 0, %v3857
    %v3859 = vsel %vm3853, %v3858, %v3857
    %vm3860 = vcmp.lt.s32.totalorder %v3550, 0
    %v3861 = vsub.s32 0, %v3550
    %v3862 = vsel %vm3860, %v3861, %v3550
    %v3863 = vshrl.u32 %v3862, 3
    %v3864 = vand.u32 %v3862, 7
    %v3865 = vsub.s32 0, %v3864
    %v3866 = vsel %vm3860, %v3865, %v3864
    %vm3867 = vcmp.lt.s32.totalorder %v3551, 0
    %v3868 = vsub.s32 0, %v3551
    %v3869 = vsel %vm3867, %v3868, %v3551
    %v3870 = vshrl.u32 %v3869, 3
    %v3871 = vand.u32 %v3869, 7
    %v3872 = vsub.s32 0, %v3871
    %v3873 = vsel %vm3867, %v3872, %v3871
    %vm3874 = vcmp.lt.s32.totalorder %v3552, 0
    %v3875 = vsub.s32 0, %v3552
    %v3876 = vsel %vm3874, %v3875, %v3552
    %v3877 = vshrl.u32 %v3876, 3
    %v3878 = vand.u32 %v3876, 7
    %v3879 = vsub.s32 0, %v3878
    %v3880 = vsel %vm3874, %v3879, %v3878
    %vm3881 = vcmp.lt.s32.totalorder %v3553, 0
    %v3882 = vsub.s32 0, %v3553
    %v3883 = vsel %vm3881, %v3882, %v3553
    %v3884 = vshrl.u32 %v3883, 3
    %v3885 = vand.u32 %v3883, 7
    %v3886 = vsub.s32 0, %v3885
    %v3887 = vsel %vm3881, %v3886, %v3885
    %vm3888 = vcmp.lt.s32.totalorder %v3554, 0
    %v3889 = vsub.s32 0, %v3554
    %v3890 = vsel %vm3888, %v3889, %v3554
    %v3891 = vshrl.u32 %v3890, 3
    %v3892 = vand.u32 %v3890, 7
    %v3893 = vsub.s32 0, %v3892
    %v3894 = vsel %vm3888, %v3893, %v3892
    %vm3895 = vcmp.lt.s32.totalorder %v3555, 0
    %v3896 = vsub.s32 0, %v3555
    %v3897 = vsel %vm3895, %v3896, %v3555
    %v3898 = vshrl.u32 %v3897, 3
    %v3899 = vand.u32 %v3897, 7
    %v3900 = vsub.s32 0, %v3899
    %v3901 = vsel %vm3895, %v3900, %v3899
    %vm3902 = vcmp.lt.s32.totalorder %v3556, 0
    %v3903 = vsub.s32 0, %v3556
    %v3904 = vsel %vm3902, %v3903, %v3556
    %v3905 = vshrl.u32 %v3904, 3
    %v3906 = vand.u32 %v3904, 7
    %v3907 = vsub.s32 0, %v3906
    %v3908 = vsel %vm3902, %v3907, %v3906
    %vm3909 = vcmp.lt.s32.totalorder %v3557, 0
    %v3910 = vsub.s32 0, %v3557
    %v3911 = vsel %vm3909, %v3910, %v3557
    %v3912 = vshrl.u32 %v3911, 3
    %v3913 = vand.u32 %v3911, 7
    %v3914 = vsub.s32 0, %v3913
    %v3915 = vsel %vm3909, %v3914, %v3913
    %vm3916 = vcmp.lt.s32.totalorder %v3558, 0
    %v3917 = vsub.s32 0, %v3558
    %v3918 = vsel %vm3916, %v3917, %v3558
    %v3919 = vshrl.u32 %v3918, 3
    %v3920 = vand.u32 %v3918, 7
    %v3921 = vsub.s32 0, %v3920
    %v3922 = vsel %vm3916, %v3921, %v3920
    %vm3923 = vcmp.lt.s32.totalorder %v3559, 0
    %v3924 = vsub.s32 0, %v3559
    %v3925 = vsel %vm3923, %v3924, %v3559
    %v3926 = vshrl.u32 %v3925, 3
    %v3927 = vand.u32 %v3925, 7
    %v3928 = vsub.s32 0, %v3927
    %v3929 = vsel %vm3923, %v3928, %v3927
    %vm3930 = vcmp.lt.s32.totalorder %v3560, 0
    %v3931 = vsub.s32 0, %v3560
    %v3932 = vsel %vm3930, %v3931, %v3560
    %v3933 = vshrl.u32 %v3932, 3
    %v3934 = vand.u32 %v3932, 7
    %v3935 = vsub.s32 0, %v3934
    %v3936 = vsel %vm3930, %v3935, %v3934
    %vm3937 = vcmp.lt.s32.totalorder %v3561, 0
    %v3938 = vsub.s32 0, %v3561
    %v3939 = vsel %vm3937, %v3938, %v3561
    %v3940 = vshrl.u32 %v3939, 3
    %v3941 = vand.u32 %v3939, 7
    %v3942 = vsub.s32 0, %v3941
    %v3943 = vsel %vm3937, %v3942, %v3941
    %vm3944 = vcmp.lt.s32.totalorder %v3562, 0
    %v3945 = vsub.s32 0, %v3562
    %v3946 = vsel %vm3944, %v3945, %v3562
    %v3947 = vshrl.u32 %v3946, 3
    %v3948 = vand.u32 %v3946, 7
    %v3949 = vsub.s32 0, %v3948
    %v3950 = vsel %vm3944, %v3949, %v3948
    %vm3951 = vcmp.lt.s32.totalorder %v3563, 0
    %v3952 = vsub.s32 0, %v3563
    %v3953 = vsel %vm3951, %v3952, %v3563
    %v3954 = vshrl.u32 %v3953, 3
    %v3955 = vand.u32 %v3953, 7
    %v3956 = vsub.s32 0, %v3955
    %v3957 = vsel %vm3951, %v3956, %v3955
    %vm3958 = vcmp.lt.s32.totalorder %v3564, 0
    %v3959 = vsub.s32 0, %v3564
    %v3960 = vsel %vm3958, %v3959, %v3564
    %v3961 = vshrl.u32 %v3960, 3
    %v3962 = vand.u32 %v3960, 7
    %v3963 = vsub.s32 0, %v3962
    %v3964 = vsel %vm3958, %v3963, %v3962
    %vm3965 = vcmp.lt.s32.totalorder %v3565, 0
    %v3966 = vsub.s32 0, %v3565
    %v3967 = vsel %vm3965, %v3966, %v3565
    %v3968 = vshrl.u32 %v3967, 3
    %v3969 = vand.u32 %v3967, 7
    %v3970 = vsub.s32 0, %v3969
    %v3971 = vsel %vm3965, %v3970, %v3969
    %vm3972 = vcmp.lt.s32.totalorder %v3566, 0
    %v3973 = vsub.s32 0, %v3566
    %v3974 = vsel %vm3972, %v3973, %v3566
    %v3975 = vshrl.u32 %v3974, 3
    %v3976 = vand.u32 %v3974, 7
    %v3977 = vsub.s32 0, %v3976
    %v3978 = vsel %vm3972, %v3977, %v3976
    %vm3979 = vcmp.lt.s32.totalorder %v3567, 0
    %v3980 = vsub.s32 0, %v3567
    %v3981 = vsel %vm3979, %v3980, %v3567
    %v3982 = vshrl.u32 %v3981, 3
    %v3983 = vand.u32 %v3981, 7
    %v3984 = vsub.s32 0, %v3983
    %v3985 = vsel %vm3979, %v3984, %v3983
    %vm3986 = vcmp.lt.s32.totalorder %v3568, 0
    %v3987 = vsub.s32 0, %v3568
    %v3988 = vsel %vm3986, %v3987, %v3568
    %v3989 = vshrl.u32 %v3988, 3
    %v3990 = vand.u32 %v3988, 7
    %v3991 = vsub.s32 0, %v3990
    %v3992 = vsel %vm3986, %v3991, %v3990
    %vm3993 = vcmp.lt.s32.totalorder %v3569, 0
    %v3994 = vsub.s32 0, %v3569
    %v3995 = vsel %vm3993, %v3994, %v3569
    %v3996 = vshrl.u32 %v3995, 3
    %v3997 = vand.u32 %v3995, 7
    %v3998 = vsub.s32 0, %v3997
    %v3999 = vsel %vm3993, %v3998, %v3997
    %vm4000 = vcmp.lt.s32.totalorder %v3570, 0
    %v4001 = vsub.s32 0, %v3570
    %v4002 = vsel %vm4000, %v4001, %v3570
    %v4003 = vshrl.u32 %v4002, 3
    %v4004 = vand.u32 %v4002, 7
    %v4005 = vsub.s32 0, %v4004
    %v4006 = vsel %vm4000, %v4005, %v4004
    %vm4007 = vcmp.lt.s32.totalorder %v3571, 0
    %v4008 = vsub.s32 0, %v3571
    %v4009 = vsel %vm4007, %v4008, %v3571
    %v4010 = vshrl.u32 %v4009, 3
    %v4011 = vand.u32 %v4009, 7
    %v4012 = vsub.s32 0, %v4011
    %v4013 = vsel %vm4007, %v4012, %v4011
    %vm4014 = vcmp.lt.s32.totalorder %v3572, 0
    %v4015 = vsub.s32 0, %v3572
    %v4016 = vsel %vm4014, %v4015, %v3572
    %v4017 = vshrl.u32 %v4016, 3
    %v4018 = vand.u32 %v4016, 7
    %v4019 = vsub.s32 0, %v4018
    %v4020 = vsel %vm4014, %v4019, %v4018
    %vm4021 = vcmp.ne.s32.totalorder %v3579, 0
    %vm4022 = vcmp.ne.s32.totalorder %v3586, 0
    %vm4023 = vcmp.ne.s32.totalorder %v3593, 0
    %vm4024 = vcmp.ne.s32.totalorder %v3600, 0
    %vm4025 = vcmp.ne.s32.totalorder %v3607, 0
    %vm4026 = vcmp.ne.s32.totalorder %v3614, 0
    %vm4027 = vcmp.ne.s32.totalorder %v3621, 0
    %vm4028 = vcmp.ne.s32.totalorder %v3628, 0
    %vm4029 = vcmp.ne.s32.totalorder %v3635, 0
    %vm4030 = vcmp.ne.s32.totalorder %v3642, 0
    %vm4031 = vcmp.ne.s32.totalorder %v3649, 0
    %vm4032 = vcmp.ne.s32.totalorder %v3656, 0
    %vm4033 = vcmp.ne.s32.totalorder %v3663, 0
    %vm4034 = vcmp.ne.s32.totalorder %v3670, 0
    %vm4035 = vcmp.ne.s32.totalorder %v3677, 0
    %vm4036 = vcmp.ne.s32.totalorder %v3684, 0
    %vm4037 = vcmp.ne.s32.totalorder %v3691, 0
    %vm4038 = vcmp.ne.s32.totalorder %v3698, 0
    %vm4039 = vcmp.ne.s32.totalorder %v3705, 0
    %vm4040 = vcmp.ne.s32.totalorder %v3712, 0
    %vm4041 = vcmp.ne.s32.totalorder %v3719, 0
    %vm4042 = vcmp.ne.s32.totalorder %v3726, 0
    %vm4043 = vcmp.ne.s32.totalorder %v3733, 0
    %vm4044 = vcmp.ne.s32.totalorder %v3740, 0
    %vm4045 = vcmp.ne.s32.totalorder %v3747, 0
    %vm4046 = vcmp.ne.s32.totalorder %v3754, 0
    %vm4047 = vcmp.ne.s32.totalorder %v3761, 0
    %vm4048 = vcmp.ne.s32.totalorder %v3768, 0
    %vm4049 = vcmp.ne.s32.totalorder %v3775, 0
    %vm4050 = vcmp.ne.s32.totalorder %v3782, 0
    %vm4051 = vcmp.ne.s32.totalorder %v3789, 0
    %vm4052 = vcmp.ne.s32.totalorder %v3796, 0
    %vm4053 = vcmp.ne.s32.totalorder %v3803, 0
    %vm4054 = vcmp.ne.s32.totalorder %v3810, 0
    %vm4055 = vcmp.ne.s32.totalorder %v3817, 0
    %vm4056 = vcmp.ne.s32.totalorder %v3824, 0
    %vm4057 = vcmp.ne.s32.totalorder %v3831, 0
    %vm4058 = vcmp.ne.s32.totalorder %v3838, 0
    %vm4059 = vcmp.ne.s32.totalorder %v3845, 0
    %vm4060 = vcmp.ne.s32.totalorder %v3852, 0
    %vm4061 = vcmp.ne.s32.totalorder %v3859, 0
    %vm4062 = vcmp.ne.s32.totalorder %v3866, 0
    %vm4063 = vcmp.ne.s32.totalorder %v3873, 0
    %vm4064 = vcmp.ne.s32.totalorder %v3880, 0
    %vm4065 = vcmp.ne.s32.totalorder %v3887, 0
    %vm4066 = vcmp.ne.s32.totalorder %v3894, 0
    %vm4067 = vcmp.ne.s32.totalorder %v3901, 0
    %vm4068 = vcmp.ne.s32.totalorder %v3908, 0
    %vm4069 = vcmp.ne.s32.totalorder %v3915, 0
    %vm4070 = vcmp.ne.s32.totalorder %v3922, 0
    %vm4071 = vcmp.ne.s32.totalorder %v3929, 0
    %vm4072 = vcmp.ne.s32.totalorder %v3936, 0
    %vm4073 = vcmp.ne.s32.totalorder %v3943, 0
    %vm4074 = vcmp.ne.s32.totalorder %v3950, 0
    %vm4075 = vcmp.ne.s32.totalorder %v3957, 0
    %vm4076 = vcmp.ne.s32.totalorder %v3964, 0
    %vm4077 = vcmp.ne.s32.totalorder %v3971, 0
    %vm4078 = vcmp.ne.s32.totalorder %v3978, 0
    %vm4079 = vcmp.ne.s32.totalorder %v3985, 0
    %vm4080 = vcmp.ne.s32.totalorder %v3992, 0
    %vm4081 = vcmp.ne.s32.totalorder %v3999, 0
    %vm4082 = vcmp.ne.s32.totalorder %v4006, 0
    %vm4083 = vcmp.ne.s32.totalorder %v4013, 0
    %vm4084 = vcmp.ne.s32.totalorder %v4020, 0
    %vm4085 = vcmp.lt.s32.totalorder %v3579, 0
    %vm4086 = vcmp.lt.s32.totalorder %v3586, 0
    %vm4087 = vcmp.lt.s32.totalorder %v3593, 0
    %vm4088 = vcmp.lt.s32.totalorder %v3600, 0
    %vm4089 = vcmp.lt.s32.totalorder %v3607, 0
    %vm4090 = vcmp.lt.s32.totalorder %v3614, 0
    %vm4091 = vcmp.lt.s32.totalorder %v3621, 0
    %vm4092 = vcmp.lt.s32.totalorder %v3628, 0
    %vm4093 = vcmp.lt.s32.totalorder %v3635, 0
    %vm4094 = vcmp.lt.s32.totalorder %v3642, 0
    %vm4095 = vcmp.lt.s32.totalorder %v3649, 0
    %vm4096 = vcmp.lt.s32.totalorder %v3656, 0
    %vm4097 = vcmp.lt.s32.totalorder %v3663, 0
    %vm4098 = vcmp.lt.s32.totalorder %v3670, 0
    %vm4099 = vcmp.lt.s32.totalorder %v3677, 0
    %vm4100 = vcmp.lt.s32.totalorder %v3684, 0
    %vm4101 = vcmp.lt.s32.totalorder %v3691, 0
    %vm4102 = vcmp.lt.s32.totalorder %v3698, 0
    %vm4103 = vcmp.lt.s32.totalorder %v3705, 0
    %vm4104 = vcmp.lt.s32.totalorder %v3712, 0
    %vm4105 = vcmp.lt.s32.totalorder %v3719, 0
    %vm4106 = vcmp.lt.s32.totalorder %v3726, 0
    %vm4107 = vcmp.lt.s32.totalorder %v3733, 0
    %vm4108 = vcmp.lt.s32.totalorder %v3740, 0
    %vm4109 = vcmp.lt.s32.totalorder %v3747, 0
    %vm4110 = vcmp.lt.s32.totalorder %v3754, 0
    %vm4111 = vcmp.lt.s32.totalorder %v3761, 0
    %vm4112 = vcmp.lt.s32.totalorder %v3768, 0
    %vm4113 = vcmp.lt.s32.totalorder %v3775, 0
    %vm4114 = vcmp.lt.s32.totalorder %v3782, 0
    %vm4115 = vcmp.lt.s32.totalorder %v3789, 0
    %vm4116 = vcmp.lt.s32.totalorder %v3796, 0
    %vm4117 = vcmp.lt.s32.totalorder %v3803, 0
    %vm4118 = vcmp.lt.s32.totalorder %v3810, 0
    %vm4119 = vcmp.lt.s32.totalorder %v3817, 0
    %vm4120 = vcmp.lt.s32.totalorder %v3824, 0
    %vm4121 = vcmp.lt.s32.totalorder %v3831, 0
    %vm4122 = vcmp.lt.s32.totalorder %v3838, 0
    %vm4123 = vcmp.lt.s32.totalorder %v3845, 0
    %vm4124 = vcmp.lt.s32.totalorder %v3852, 0
    %vm4125 = vcmp.lt.s32.totalorder %v3859, 0
    %vm4126 = vcmp.lt.s32.totalorder %v3866, 0
    %vm4127 = vcmp.lt.s32.totalorder %v3873, 0
    %vm4128 = vcmp.lt.s32.totalorder %v3880, 0
    %vm4129 = vcmp.lt.s32.totalorder %v3887, 0
    %vm4130 = vcmp.lt.s32.totalorder %v3894, 0
    %vm4131 = vcmp.lt.s32.totalorder %v3901, 0
    %vm4132 = vcmp.lt.s32.totalorder %v3908, 0
    %vm4133 = vcmp.lt.s32.totalorder %v3915, 0
    %vm4134 = vcmp.lt.s32.totalorder %v3922, 0
    %vm4135 = vcmp.lt.s32.totalorder %v3929, 0
    %vm4136 = vcmp.lt.s32.totalorder %v3936, 0
    %vm4137 = vcmp.lt.s32.totalorder %v3943, 0
    %vm4138 = vcmp.lt.s32.totalorder %v3950, 0
    %vm4139 = vcmp.lt.s32.totalorder %v3957, 0
    %vm4140 = vcmp.lt.s32.totalorder %v3964, 0
    %vm4141 = vcmp.lt.s32.totalorder %v3971, 0
    %vm4142 = vcmp.lt.s32.totalorder %v3978, 0
    %vm4143 = vcmp.lt.s32.totalorder %v3985, 0
    %vm4144 = vcmp.lt.s32.totalorder %v3992, 0
    %vm4145 = vcmp.lt.s32.totalorder %v3999, 0
    %vm4146 = vcmp.lt.s32.totalorder %v4006, 0
    %vm4147 = vcmp.lt.s32.totalorder %v4013, 0
    %vm4148 = vcmp.lt.s32.totalorder %v4020, 0
    %vm4149 = vmand %vm4085, %vm4021
    %vm4150 = vmand %vm4086, %vm4022
    %vm4151 = vmand %vm4087, %vm4023
    %vm4152 = vmand %vm4088, %vm4024
    %vm4153 = vmand %vm4089, %vm4025
    %vm4154 = vmand %vm4090, %vm4026
    %vm4155 = vmand %vm4091, %vm4027
    %vm4156 = vmand %vm4092, %vm4028
    %vm4157 = vmand %vm4093, %vm4029
    %vm4158 = vmand %vm4094, %vm4030
    %vm4159 = vmand %vm4095, %vm4031
    %vm4160 = vmand %vm4096, %vm4032
    %vm4161 = vmand %vm4097, %vm4033
    %vm4162 = vmand %vm4098, %vm4034
    %vm4163 = vmand %vm4099, %vm4035
    %vm4164 = vmand %vm4100, %vm4036
    %vm4165 = vmand %vm4101, %vm4037
    %vm4166 = vmand %vm4102, %vm4038
    %vm4167 = vmand %vm4103, %vm4039
    %vm4168 = vmand %vm4104, %vm4040
    %vm4169 = vmand %vm4105, %vm4041
    %vm4170 = vmand %vm4106, %vm4042
    %vm4171 = vmand %vm4107, %vm4043
    %vm4172 = vmand %vm4108, %vm4044
    %vm4173 = vmand %vm4109, %vm4045
    %vm4174 = vmand %vm4110, %vm4046
    %vm4175 = vmand %vm4111, %vm4047
    %vm4176 = vmand %vm4112, %vm4048
    %vm4177 = vmand %vm4113, %vm4049
    %vm4178 = vmand %vm4114, %vm4050
    %vm4179 = vmand %vm4115, %vm4051
    %vm4180 = vmand %vm4116, %vm4052
    %vm4181 = vmand %vm4117, %vm4053
    %vm4182 = vmand %vm4118, %vm4054
    %vm4183 = vmand %vm4119, %vm4055
    %vm4184 = vmand %vm4120, %vm4056
    %vm4185 = vmand %vm4121, %vm4057
    %vm4186 = vmand %vm4122, %vm4058
    %vm4187 = vmand %vm4123, %vm4059
    %vm4188 = vmand %vm4124, %vm4060
    %vm4189 = vmand %vm4125, %vm4061
    %vm4190 = vmand %vm4126, %vm4062
    %vm4191 = vmand %vm4127, %vm4063
    %vm4192 = vmand %vm4128, %vm4064
    %vm4193 = vmand %vm4129, %vm4065
    %vm4194 = vmand %vm4130, %vm4066
    %vm4195 = vmand %vm4131, %vm4067
    %vm4196 = vmand %vm4132, %vm4068
    %vm4197 = vmand %vm4133, %vm4069
    %vm4198 = vmand %vm4134, %vm4070
    %vm4199 = vmand %vm4135, %vm4071
    %vm4200 = vmand %vm4136, %vm4072
    %vm4201 = vmand %vm4137, %vm4073
    %vm4202 = vmand %vm4138, %vm4074
    %vm4203 = vmand %vm4139, %vm4075
    %vm4204 = vmand %vm4140, %vm4076
    %vm4205 = vmand %vm4141, %vm4077
    %vm4206 = vmand %vm4142, %vm4078
    %vm4207 = vmand %vm4143, %vm4079
    %vm4208 = vmand %vm4144, %vm4080
    %vm4209 = vmand %vm4145, %vm4081
    %vm4210 = vmand %vm4146, %vm4082
    %vm4211 = vmand %vm4147, %vm4083
    %vm4212 = vmand %vm4148, %vm4084
    %v4213 = vadd.s32 %v3579, 8
    %v4214 = vadd.s32 %v3586, 8
    %v4215 = vadd.s32 %v3593, 8
    %v4216 = vadd.s32 %v3600, 8
    %v4217 = vadd.s32 %v3607, 8
    %v4218 = vadd.s32 %v3614, 8
    %v4219 = vadd.s32 %v3621, 8
    %v4220 = vadd.s32 %v3628, 8
    %v4221 = vadd.s32 %v3635, 8
    %v4222 = vadd.s32 %v3642, 8
    %v4223 = vadd.s32 %v3649, 8
    %v4224 = vadd.s32 %v3656, 8
    %v4225 = vadd.s32 %v3663, 8
    %v4226 = vadd.s32 %v3670, 8
    %v4227 = vadd.s32 %v3677, 8
    %v4228 = vadd.s32 %v3684, 8
    %v4229 = vadd.s32 %v3691, 8
    %v4230 = vadd.s32 %v3698, 8
    %v4231 = vadd.s32 %v3705, 8
    %v4232 = vadd.s32 %v3712, 8
    %v4233 = vadd.s32 %v3719, 8
    %v4234 = vadd.s32 %v3726, 8
    %v4235 = vadd.s32 %v3733, 8
    %v4236 = vadd.s32 %v3740, 8
    %v4237 = vadd.s32 %v3747, 8
    %v4238 = vadd.s32 %v3754, 8
    %v4239 = vadd.s32 %v3761, 8
    %v4240 = vadd.s32 %v3768, 8
    %v4241 = vadd.s32 %v3775, 8
    %v4242 = vadd.s32 %v3782, 8
    %v4243 = vadd.s32 %v3789, 8
    %v4244 = vadd.s32 %v3796, 8
    %v4245 = vadd.s32 %v3803, 8
    %v4246 = vadd.s32 %v3810, 8
    %v4247 = vadd.s32 %v3817, 8
    %v4248 = vadd.s32 %v3824, 8
    %v4249 = vadd.s32 %v3831, 8
    %v4250 = vadd.s32 %v3838, 8
    %v4251 = vadd.s32 %v3845, 8
    %v4252 = vadd.s32 %v3852, 8
    %v4253 = vadd.s32 %v3859, 8
    %v4254 = vadd.s32 %v3866, 8
    %v4255 = vadd.s32 %v3873, 8
    %v4256 = vadd.s32 %v3880, 8
    %v4257 = vadd.s32 %v3887, 8
    %v4258 = vadd.s32 %v3894, 8
    %v4259 = vadd.s32 %v3901, 8
    %v4260 = vadd.s32 %v3908, 8
    %v4261 = vadd.s32 %v3915, 8
    %v4262 = vadd.s32 %v3922, 8
    %v4263 = vadd.s32 %v3929, 8
    %v4264 = vadd.s32 %v3936, 8
    %v4265 = vadd.s32 %v3943, 8
    %v4266 = vadd.s32 %v3950, 8
    %v4267 = vadd.s32 %v3957, 8
    %v4268 = vadd.s32 %v3964, 8
    %v4269 = vadd.s32 %v3971, 8
    %v4270 = vadd.s32 %v3978, 8
    %v4271 = vadd.s32 %v3985, 8
    %v4272 = vadd.s32 %v3992, 8
    %v4273 = vadd.s32 %v3999, 8
    %v4274 = vadd.s32 %v4006, 8
    %v4275 = vadd.s32 %v4013, 8
    %v4276 = vadd.s32 %v4020, 8
    %v4277 = vsel %vm4149, %v4213, %v3579
    %v4278 = vsel %vm4150, %v4214, %v3586
    %v4279 = vsel %vm4151, %v4215, %v3593
    %v4280 = vsel %vm4152, %v4216, %v3600
    %v4281 = vsel %vm4153, %v4217, %v3607
    %v4282 = vsel %vm4154, %v4218, %v3614
    %v4283 = vsel %vm4155, %v4219, %v3621
    %v4284 = vsel %vm4156, %v4220, %v3628
    %v4285 = vsel %vm4157, %v4221, %v3635
    %v4286 = vsel %vm4158, %v4222, %v3642
    %v4287 = vsel %vm4159, %v4223, %v3649
    %v4288 = vsel %vm4160, %v4224, %v3656
    %v4289 = vsel %vm4161, %v4225, %v3663
    %v4290 = vsel %vm4162, %v4226, %v3670
    %v4291 = vsel %vm4163, %v4227, %v3677
    %v4292 = vsel %vm4164, %v4228, %v3684
    %v4293 = vsel %vm4165, %v4229, %v3691
    %v4294 = vsel %vm4166, %v4230, %v3698
    %v4295 = vsel %vm4167, %v4231, %v3705
    %v4296 = vsel %vm4168, %v4232, %v3712
    %v4297 = vsel %vm4169, %v4233, %v3719
    %v4298 = vsel %vm4170, %v4234, %v3726
    %v4299 = vsel %vm4171, %v4235, %v3733
    %v4300 = vsel %vm4172, %v4236, %v3740
    %v4301 = vsel %vm4173, %v4237, %v3747
    %v4302 = vsel %vm4174, %v4238, %v3754
    %v4303 = vsel %vm4175, %v4239, %v3761
    %v4304 = vsel %vm4176, %v4240, %v3768
    %v4305 = vsel %vm4177, %v4241, %v3775
    %v4306 = vsel %vm4178, %v4242, %v3782
    %v4307 = vsel %vm4179, %v4243, %v3789
    %v4308 = vsel %vm4180, %v4244, %v3796
    %v4309 = vsel %vm4181, %v4245, %v3803
    %v4310 = vsel %vm4182, %v4246, %v3810
    %v4311 = vsel %vm4183, %v4247, %v3817
    %v4312 = vsel %vm4184, %v4248, %v3824
    %v4313 = vsel %vm4185, %v4249, %v3831
    %v4314 = vsel %vm4186, %v4250, %v3838
    %v4315 = vsel %vm4187, %v4251, %v3845
    %v4316 = vsel %vm4188, %v4252, %v3852
    %v4317 = vsel %vm4189, %v4253, %v3859
    %v4318 = vsel %vm4190, %v4254, %v3866
    %v4319 = vsel %vm4191, %v4255, %v3873
    %v4320 = vsel %vm4192, %v4256, %v3880
    %v4321 = vsel %vm4193, %v4257, %v3887
    %v4322 = vsel %vm4194, %v4258, %v3894
    %v4323 = vsel %vm4195, %v4259, %v3901
    %v4324 = vsel %vm4196, %v4260, %v3908
    %v4325 = vsel %vm4197, %v4261, %v3915
    %v4326 = vsel %vm4198, %v4262, %v3922
    %v4327 = vsel %vm4199, %v4263, %v3929
    %v4328 = vsel %vm4200, %v4264, %v3936
    %v4329 = vsel %vm4201, %v4265, %v3943
    %v4330 = vsel %vm4202, %v4266, %v3950
    %v4331 = vsel %vm4203, %v4267, %v3957
    %v4332 = vsel %vm4204, %v4268, %v3964
    %v4333 = vsel %vm4205, %v4269, %v3971
    %v4334 = vsel %vm4206, %v4270, %v3978
    %v4335 = vsel %vm4207, %v4271, %v3985
    %v4336 = vsel %vm4208, %v4272, %v3992
    %v4337 = vsel %vm4209, %v4273, %v3999
    %v4338 = vsel %vm4210, %v4274, %v4006
    %v4339 = vsel %vm4211, %v4275, %v4013
    %v4340 = vsel %vm4212, %v4276, %v4020
    %vm4341 = vcmp.eq.s32.totalorder %v4277, 0
    %vm4342 = vcmp.eq.s32.totalorder %v4278, 0
    %vm4343 = vcmp.eq.s32.totalorder %v4279, 0
    %vm4344 = vcmp.eq.s32.totalorder %v4280, 0
    %vm4345 = vcmp.eq.s32.totalorder %v4281, 0
    %vm4346 = vcmp.eq.s32.totalorder %v4282, 0
    %vm4347 = vcmp.eq.s32.totalorder %v4283, 0
    %vm4348 = vcmp.eq.s32.totalorder %v4284, 0
    %vm4349 = vcmp.eq.s32.totalorder %v4285, 0
    %vm4350 = vcmp.eq.s32.totalorder %v4286, 0
    %vm4351 = vcmp.eq.s32.totalorder %v4287, 0
    %vm4352 = vcmp.eq.s32.totalorder %v4288, 0
    %vm4353 = vcmp.eq.s32.totalorder %v4289, 0
    %vm4354 = vcmp.eq.s32.totalorder %v4290, 0
    %vm4355 = vcmp.eq.s32.totalorder %v4291, 0
    %vm4356 = vcmp.eq.s32.totalorder %v4292, 0
    %vm4357 = vcmp.eq.s32.totalorder %v4293, 0
    %vm4358 = vcmp.eq.s32.totalorder %v4294, 0
    %vm4359 = vcmp.eq.s32.totalorder %v4295, 0
    %vm4360 = vcmp.eq.s32.totalorder %v4296, 0
    %vm4361 = vcmp.eq.s32.totalorder %v4297, 0
    %vm4362 = vcmp.eq.s32.totalorder %v4298, 0
    %vm4363 = vcmp.eq.s32.totalorder %v4299, 0
    %vm4364 = vcmp.eq.s32.totalorder %v4300, 0
    %vm4365 = vcmp.eq.s32.totalorder %v4301, 0
    %vm4366 = vcmp.eq.s32.totalorder %v4302, 0
    %vm4367 = vcmp.eq.s32.totalorder %v4303, 0
    %vm4368 = vcmp.eq.s32.totalorder %v4304, 0
    %vm4369 = vcmp.eq.s32.totalorder %v4305, 0
    %vm4370 = vcmp.eq.s32.totalorder %v4306, 0
    %vm4371 = vcmp.eq.s32.totalorder %v4307, 0
    %vm4372 = vcmp.eq.s32.totalorder %v4308, 0
    %vm4373 = vcmp.eq.s32.totalorder %v4309, 0
    %vm4374 = vcmp.eq.s32.totalorder %v4310, 0
    %vm4375 = vcmp.eq.s32.totalorder %v4311, 0
    %vm4376 = vcmp.eq.s32.totalorder %v4312, 0
    %vm4377 = vcmp.eq.s32.totalorder %v4313, 0
    %vm4378 = vcmp.eq.s32.totalorder %v4314, 0
    %vm4379 = vcmp.eq.s32.totalorder %v4315, 0
    %vm4380 = vcmp.eq.s32.totalorder %v4316, 0
    %vm4381 = vcmp.eq.s32.totalorder %v4317, 0
    %vm4382 = vcmp.eq.s32.totalorder %v4318, 0
    %vm4383 = vcmp.eq.s32.totalorder %v4319, 0
    %vm4384 = vcmp.eq.s32.totalorder %v4320, 0
    %vm4385 = vcmp.eq.s32.totalorder %v4321, 0
    %vm4386 = vcmp.eq.s32.totalorder %v4322, 0
    %vm4387 = vcmp.eq.s32.totalorder %v4323, 0
    %vm4388 = vcmp.eq.s32.totalorder %v4324, 0
    %vm4389 = vcmp.eq.s32.totalorder %v4325, 0
    %vm4390 = vcmp.eq.s32.totalorder %v4326, 0
    %vm4391 = vcmp.eq.s32.totalorder %v4327, 0
    %vm4392 = vcmp.eq.s32.totalorder %v4328, 0
    %vm4393 = vcmp.eq.s32.totalorder %v4329, 0
    %vm4394 = vcmp.eq.s32.totalorder %v4330, 0
    %vm4395 = vcmp.eq.s32.totalorder %v4331, 0
    %vm4396 = vcmp.eq.s32.totalorder %v4332, 0
    %vm4397 = vcmp.eq.s32.totalorder %v4333, 0
    %vm4398 = vcmp.eq.s32.totalorder %v4334, 0
    %vm4399 = vcmp.eq.s32.totalorder %v4335, 0
    %vm4400 = vcmp.eq.s32.totalorder %v4336, 0
    %vm4401 = vcmp.eq.s32.totalorder %v4337, 0
    %vm4402 = vcmp.eq.s32.totalorder %v4338, 0
    %vm4403 = vcmp.eq.s32.totalorder %v4339, 0
    %vm4404 = vcmp.eq.s32.totalorder %v4340, 0
    %vm4405 = vcmp.eq.s32.totalorder %v4277, 7
    %vm4406 = vcmp.eq.s32.totalorder %v4278, 7
    %vm4407 = vcmp.eq.s32.totalorder %v4279, 7
    %vm4408 = vcmp.eq.s32.totalorder %v4280, 7
    %vm4409 = vcmp.eq.s32.totalorder %v4281, 7
    %vm4410 = vcmp.eq.s32.totalorder %v4282, 7
    %vm4411 = vcmp.eq.s32.totalorder %v4283, 7
    %vm4412 = vcmp.eq.s32.totalorder %v4284, 7
    %vm4413 = vcmp.eq.s32.totalorder %v4285, 7
    %vm4414 = vcmp.eq.s32.totalorder %v4286, 7
    %vm4415 = vcmp.eq.s32.totalorder %v4287, 7
    %vm4416 = vcmp.eq.s32.totalorder %v4288, 7
    %vm4417 = vcmp.eq.s32.totalorder %v4289, 7
    %vm4418 = vcmp.eq.s32.totalorder %v4290, 7
    %vm4419 = vcmp.eq.s32.totalorder %v4291, 7
    %vm4420 = vcmp.eq.s32.totalorder %v4292, 7
    %vm4421 = vcmp.eq.s32.totalorder %v4293, 7
    %vm4422 = vcmp.eq.s32.totalorder %v4294, 7
    %vm4423 = vcmp.eq.s32.totalorder %v4295, 7
    %vm4424 = vcmp.eq.s32.totalorder %v4296, 7
    %vm4425 = vcmp.eq.s32.totalorder %v4297, 7
    %vm4426 = vcmp.eq.s32.totalorder %v4298, 7
    %vm4427 = vcmp.eq.s32.totalorder %v4299, 7
    %vm4428 = vcmp.eq.s32.totalorder %v4300, 7
    %vm4429 = vcmp.eq.s32.totalorder %v4301, 7
    %vm4430 = vcmp.eq.s32.totalorder %v4302, 7
    %vm4431 = vcmp.eq.s32.totalorder %v4303, 7
    %vm4432 = vcmp.eq.s32.totalorder %v4304, 7
    %vm4433 = vcmp.eq.s32.totalorder %v4305, 7
    %vm4434 = vcmp.eq.s32.totalorder %v4306, 7
    %vm4435 = vcmp.eq.s32.totalorder %v4307, 7
    %vm4436 = vcmp.eq.s32.totalorder %v4308, 7
    %vm4437 = vcmp.eq.s32.totalorder %v4309, 7
    %vm4438 = vcmp.eq.s32.totalorder %v4310, 7
    %vm4439 = vcmp.eq.s32.totalorder %v4311, 7
    %vm4440 = vcmp.eq.s32.totalorder %v4312, 7
    %vm4441 = vcmp.eq.s32.totalorder %v4313, 7
    %vm4442 = vcmp.eq.s32.totalorder %v4314, 7
    %vm4443 = vcmp.eq.s32.totalorder %v4315, 7
    %vm4444 = vcmp.eq.s32.totalorder %v4316, 7
    %vm4445 = vcmp.eq.s32.totalorder %v4317, 7
    %vm4446 = vcmp.eq.s32.totalorder %v4318, 7
    %vm4447 = vcmp.eq.s32.totalorder %v4319, 7
    %vm4448 = vcmp.eq.s32.totalorder %v4320, 7
    %vm4449 = vcmp.eq.s32.totalorder %v4321, 7
    %vm4450 = vcmp.eq.s32.totalorder %v4322, 7
    %vm4451 = vcmp.eq.s32.totalorder %v4323, 7
    %vm4452 = vcmp.eq.s32.totalorder %v4324, 7
    %vm4453 = vcmp.eq.s32.totalorder %v4325, 7
    %vm4454 = vcmp.eq.s32.totalorder %v4326, 7
    %vm4455 = vcmp.eq.s32.totalorder %v4327, 7
    %vm4456 = vcmp.eq.s32.totalorder %v4328, 7
    %vm4457 = vcmp.eq.s32.totalorder %v4329, 7
    %vm4458 = vcmp.eq.s32.totalorder %v4330, 7
    %vm4459 = vcmp.eq.s32.totalorder %v4331, 7
    %vm4460 = vcmp.eq.s32.totalorder %v4332, 7
    %vm4461 = vcmp.eq.s32.totalorder %v4333, 7
    %vm4462 = vcmp.eq.s32.totalorder %v4334, 7
    %vm4463 = vcmp.eq.s32.totalorder %v4335, 7
    %vm4464 = vcmp.eq.s32.totalorder %v4336, 7
    %vm4465 = vcmp.eq.s32.totalorder %v4337, 7
    %vm4466 = vcmp.eq.s32.totalorder %v4338, 7
    %vm4467 = vcmp.eq.s32.totalorder %v4339, 7
    %vm4468 = vcmp.eq.s32.totalorder %v4340, 7
    %v4469 = vrot.slane %v3349, 7
    %v4470 = vrot.slane %v3351, 7
    %v4471 = vrot.slane %v3354, 7
    %v4472 = vrot.slane %v3356, 7
    %v4473 = vrot.slane %v3359, 7
    %v4474 = vrot.slane %v3361, 7
    %v4475 = vrot.slane %v3364, 7
    %v4476 = vrot.slane %v3366, 7
    %v4477 = vrot.slane %v3369, 7
    %v4478 = vrot.slane %v3371, 7
    %v4479 = vrot.slane %v3374, 7
    %v4480 = vrot.slane %v3376, 7
    %v4481 = vrot.slane %v3379, 7
    %v4482 = vrot.slane %v3381, 7
    %v4483 = vrot.slane %v3384, 7
    %v4484 = vrot.slane %v3386, 7
    %v4485 = vrot.slane %v3389, 7
    %v4486 = vrot.slane %v3391, 7
    %v4487 = vrot.slane %v3394, 7
    %v4488 = vrot.slane %v3396, 7
    %v4489 = vrot.slane %v3399, 7
    %v4490 = vrot.slane %v3401, 7
    %v4491 = vrot.slane %v3404, 7
    %v4492 = vrot.slane %v3406, 7
    %v4493 = vrot.slane %v3409, 7
    %v4494 = vrot.slane %v3411, 7
    %v4495 = vrot.slane %v3414, 7
    %v4496 = vrot.slane %v3416, 7
    %v4497 = vrot.slane %v3419, 7
    %v4498 = vrot.slane %v3421, 7
    %v4499 = vrot.slane %v3424, 7
    %v4500 = vrot.slane %v3426, 7
    %v4501 = vrot.slane %v3429, 7
    %v4502 = vrot.slane %v3431, 7
    %v4503 = vrot.slane %v3434, 7
    %v4504 = vrot.slane %v3436, 7
    %v4505 = vrot.slane %v3439, 7
    %v4506 = vrot.slane %v3441, 7
    %v4507 = vrot.slane %v3444, 7
    %v4508 = vrot.slane %v3446, 7
    %v4509 = vrot.slane %v3449, 7
    %v4510 = vrot.slane %v3451, 7
    %v4511 = vrot.slane %v3454, 7
    %v4512 = vrot.slane %v3456, 7
    %v4513 = vrot.slane %v3459, 7
    %v4514 = vrot.slane %v3461, 7
    %v4515 = vrot.slane %v3464, 7
    %v4516 = vrot.slane %v3466, 7
    %v4517 = vrot.slane %v3469, 7
    %v4518 = vrot.slane %v3471, 7
    %v4519 = vrot.slane %v3474, 7
    %v4520 = vrot.slane %v3476, 7
    %v4521 = vrot.slane %v3479, 7
    %v4522 = vrot.slane %v3481, 7
    %v4523 = vrot.slane %v3484, 7
    %v4524 = vrot.slane %v3486, 7
    %v4525 = vrot.slane %v3489, 7
    %v4526 = vrot.slane %v3491, 7
    %v4527 = vrot.slane %v3494, 7
    %v4528 = vrot.slane %v3496, 7
    %v4529 = vrot.slane %v3499, 7
    %v4530 = vrot.slane %v3501, 7
    %v4531 = vrot.slane %v3504, 7
    %v4532 = vrot.slane %v3506, 7
    %vm4533 = vcmp.lt.s32.totalorder %v3509, 1
    %v4534 = vsel %vm4533, %v4531, %v4532
    %v4535 = vsel %vm4533, %v4530, %v4531
    %v4536 = vsel %vm4533, %v4529, %v4530
    %v4537 = vsel %vm4533, %v4528, %v4529
    %v4538 = vsel %vm4533, %v4527, %v4528
    %v4539 = vsel %vm4533, %v4526, %v4527
    %v4540 = vsel %vm4533, %v4525, %v4526
    %v4541 = vsel %vm4533, %v4524, %v4525
    %v4542 = vsel %vm4533, %v4523, %v4524
    %v4543 = vsel %vm4533, %v4522, %v4523
    %v4544 = vsel %vm4533, %v4521, %v4522
    %v4545 = vsel %vm4533, %v4520, %v4521
    %v4546 = vsel %vm4533, %v4519, %v4520
    %v4547 = vsel %vm4533, %v4518, %v4519
    %v4548 = vsel %vm4533, %v4517, %v4518
    %v4549 = vsel %vm4533, %v4516, %v4517
    %v4550 = vsel %vm4533, %v4515, %v4516
    %v4551 = vsel %vm4533, %v4514, %v4515
    %v4552 = vsel %vm4533, %v4513, %v4514
    %v4553 = vsel %vm4533, %v4512, %v4513
    %v4554 = vsel %vm4533, %v4511, %v4512
    %v4555 = vsel %vm4533, %v4510, %v4511
    %v4556 = vsel %vm4533, %v4509, %v4510
    %v4557 = vsel %vm4533, %v4508, %v4509
    %v4558 = vsel %vm4533, %v4507, %v4508
    %v4559 = vsel %vm4533, %v4506, %v4507
    %v4560 = vsel %vm4533, %v4505, %v4506
    %v4561 = vsel %vm4533, %v4504, %v4505
    %v4562 = vsel %vm4533, %v4503, %v4504
    %v4563 = vsel %vm4533, %v4502, %v4503
    %v4564 = vsel %vm4533, %v4501, %v4502
    %v4565 = vsel %vm4533, %v4500, %v4501
    %v4566 = vsel %vm4533, %v4499, %v4500
    %v4567 = vsel %vm4533, %v4498, %v4499
    %v4568 = vsel %vm4533, %v4497, %v4498
    %v4569 = vsel %vm4533, %v4496, %v4497
    %v4570 = vsel %vm4533, %v4495, %v4496
    %v4571 = vsel %vm4533, %v4494, %v4495
    %v4572 = vsel %vm4533, %v4493, %v4494
    %v4573 = vsel %vm4533, %v4492, %v4493
    %v4574 = vsel %vm4533, %v4491, %v4492
    %v4575 = vsel %vm4533, %v4490, %v4491
    %v4576 = vsel %vm4533, %v4489, %v4490
    %v4577 = vsel %vm4533, %v4488, %v4489
    %v4578 = vsel %vm4533, %v4487, %v4488
    %v4579 = vsel %vm4533, %v4486, %v4487
    %v4580 = vsel %vm4533, %v4485, %v4486
    %v4581 = vsel %vm4533, %v4484, %v4485
    %v4582 = vsel %vm4533, %v4483, %v4484
    %v4583 = vsel %vm4533, %v4482, %v4483
    %v4584 = vsel %vm4533, %v4481, %v4482
    %v4585 = vsel %vm4533, %v4480, %v4481
    %v4586 = vsel %vm4533, %v4479, %v4480
    %v4587 = vsel %vm4533, %v4478, %v4479
    %v4588 = vsel %vm4533, %v4477, %v4478
    %v4589 = vsel %vm4533, %v4476, %v4477
    %v4590 = vsel %vm4533, %v4475, %v4476
    %v4591 = vsel %vm4533, %v4474, %v4475
    %v4592 = vsel %vm4533, %v4473, %v4474
    %v4593 = vsel %vm4533, %v4472, %v4473
    %v4594 = vsel %vm4533, %v4471, %v4472
    %v4595 = vsel %vm4533, %v4470, %v4471
    %v4596 = vsel %vm4533, %v4469, %v4470
    %v4597 = vsel %vm4533, %v4532, %v4469
    %v4598 = vsel %vm4341, 1, 0
    %v4599 = vsel %vm4342, 1, 0
    %v4600 = vsel %vm4343, 1, 0
    %v4601 = vsel %vm4344, 1, 0
    %v4602 = vsel %vm4345, 1, 0
    %v4603 = vsel %vm4346, 1, 0
    %v4604 = vsel %vm4347, 1, 0
    %v4605 = vsel %vm4348, 1, 0
    %v4606 = vsel %vm4349, 1, 0
    %v4607 = vsel %vm4350, 1, 0
    %v4608 = vsel %vm4351, 1, 0
    %v4609 = vsel %vm4352, 1, 0
    %v4610 = vsel %vm4353, 1, 0
    %v4611 = vsel %vm4354, 1, 0
    %v4612 = vsel %vm4355, 1, 0
    %v4613 = vsel %vm4356, 1, 0
    %v4614 = vsel %vm4357, 1, 0
    %v4615 = vsel %vm4358, 1, 0
    %v4616 = vsel %vm4359, 1, 0
    %v4617 = vsel %vm4360, 1, 0
    %v4618 = vsel %vm4361, 1, 0
    %v4619 = vsel %vm4362, 1, 0
    %v4620 = vsel %vm4363, 1, 0
    %v4621 = vsel %vm4364, 1, 0
    %v4622 = vsel %vm4365, 1, 0
    %v4623 = vsel %vm4366, 1, 0
    %v4624 = vsel %vm4367, 1, 0
    %v4625 = vsel %vm4368, 1, 0
    %v4626 = vsel %vm4369, 1, 0
    %v4627 = vsel %vm4370, 1, 0
    %v4628 = vsel %vm4371, 1, 0
    %v4629 = vsel %vm4372, 1, 0
    %v4630 = vsel %vm4373, 1, 0
    %v4631 = vsel %vm4374, 1, 0
    %v4632 = vsel %vm4375, 1, 0
    %v4633 = vsel %vm4376, 1, 0
    %v4634 = vsel %vm4377, 1, 0
    %v4635 = vsel %vm4378, 1, 0
    %v4636 = vsel %vm4379, 1, 0
    %v4637 = vsel %vm4380, 1, 0
    %v4638 = vsel %vm4381, 1, 0
    %v4639 = vsel %vm4382, 1, 0
    %v4640 = vsel %vm4383, 1, 0
    %v4641 = vsel %vm4384, 1, 0
    %v4642 = vsel %vm4385, 1, 0
    %v4643 = vsel %vm4386, 1, 0
    %v4644 = vsel %vm4387, 1, 0
    %v4645 = vsel %vm4388, 1, 0
    %v4646 = vsel %vm4389, 1, 0
    %v4647 = vsel %vm4390, 1, 0
    %v4648 = vsel %vm4391, 1, 0
    %v4649 = vsel %vm4392, 1, 0
    %v4650 = vsel %vm4393, 1, 0
    %v4651 = vsel %vm4394, 1, 0
    %v4652 = vsel %vm4395, 1, 0
    %v4653 = vsel %vm4396, 1, 0
    %v4654 = vsel %vm4397, 1, 0
    %v4655 = vsel %vm4398, 1, 0
    %v4656 = vsel %vm4399, 1, 0
    %v4657 = vsel %vm4400, 1, 0
    %v4658 = vsel %vm4401, 1, 0
    %v4659 = vsel %vm4402, 1, 0
    %v4660 = vsel %vm4403, 1, 0
    %v4661 = vsel %vm4404, 1, 0
    %vm4662 = vcmp.eq.s32.totalorder %v4598, 1
    %vm4663 = vcmp.eq.s32.totalorder %v4599, 1
    %vm4664 = vcmp.eq.s32.totalorder %v4600, 1
    %vm4665 = vcmp.eq.s32.totalorder %v4601, 1
    %vm4666 = vcmp.eq.s32.totalorder %v4602, 1
    %vm4667 = vcmp.eq.s32.totalorder %v4603, 1
    %vm4668 = vcmp.eq.s32.totalorder %v4604, 1
    %vm4669 = vcmp.eq.s32.totalorder %v4605, 1
    %vm4670 = vcmp.eq.s32.totalorder %v4606, 1
    %vm4671 = vcmp.eq.s32.totalorder %v4607, 1
    %vm4672 = vcmp.eq.s32.totalorder %v4608, 1
    %vm4673 = vcmp.eq.s32.totalorder %v4609, 1
    %vm4674 = vcmp.eq.s32.totalorder %v4610, 1
    %vm4675 = vcmp.eq.s32.totalorder %v4611, 1
    %vm4676 = vcmp.eq.s32.totalorder %v4612, 1
    %vm4677 = vcmp.eq.s32.totalorder %v4613, 1
    %vm4678 = vcmp.eq.s32.totalorder %v4614, 1
    %vm4679 = vcmp.eq.s32.totalorder %v4615, 1
    %vm4680 = vcmp.eq.s32.totalorder %v4616, 1
    %vm4681 = vcmp.eq.s32.totalorder %v4617, 1
    %vm4682 = vcmp.eq.s32.totalorder %v4618, 1
    %vm4683 = vcmp.eq.s32.totalorder %v4619, 1
    %vm4684 = vcmp.eq.s32.totalorder %v4620, 1
    %vm4685 = vcmp.eq.s32.totalorder %v4621, 1
    %vm4686 = vcmp.eq.s32.totalorder %v4622, 1
    %vm4687 = vcmp.eq.s32.totalorder %v4623, 1
    %vm4688 = vcmp.eq.s32.totalorder %v4624, 1
    %vm4689 = vcmp.eq.s32.totalorder %v4625, 1
    %vm4690 = vcmp.eq.s32.totalorder %v4626, 1
    %vm4691 = vcmp.eq.s32.totalorder %v4627, 1
    %vm4692 = vcmp.eq.s32.totalorder %v4628, 1
    %vm4693 = vcmp.eq.s32.totalorder %v4629, 1
    %vm4694 = vcmp.eq.s32.totalorder %v4630, 1
    %vm4695 = vcmp.eq.s32.totalorder %v4631, 1
    %vm4696 = vcmp.eq.s32.totalorder %v4632, 1
    %vm4697 = vcmp.eq.s32.totalorder %v4633, 1
    %vm4698 = vcmp.eq.s32.totalorder %v4634, 1
    %vm4699 = vcmp.eq.s32.totalorder %v4635, 1
    %vm4700 = vcmp.eq.s32.totalorder %v4636, 1
    %vm4701 = vcmp.eq.s32.totalorder %v4637, 1
    %vm4702 = vcmp.eq.s32.totalorder %v4638, 1
    %vm4703 = vcmp.eq.s32.totalorder %v4639, 1
    %vm4704 = vcmp.eq.s32.totalorder %v4640, 1
    %vm4705 = vcmp.eq.s32.totalorder %v4641, 1
    %vm4706 = vcmp.eq.s32.totalorder %v4642, 1
    %vm4707 = vcmp.eq.s32.totalorder %v4643, 1
    %vm4708 = vcmp.eq.s32.totalorder %v4644, 1
    %vm4709 = vcmp.eq.s32.totalorder %v4645, 1
    %vm4710 = vcmp.eq.s32.totalorder %v4646, 1
    %vm4711 = vcmp.eq.s32.totalorder %v4647, 1
    %vm4712 = vcmp.eq.s32.totalorder %v4648, 1
    %vm4713 = vcmp.eq.s32.totalorder %v4649, 1
    %vm4714 = vcmp.eq.s32.totalorder %v4650, 1
    %vm4715 = vcmp.eq.s32.totalorder %v4651, 1
    %vm4716 = vcmp.eq.s32.totalorder %v4652, 1
    %vm4717 = vcmp.eq.s32.totalorder %v4653, 1
    %vm4718 = vcmp.eq.s32.totalorder %v4654, 1
    %vm4719 = vcmp.eq.s32.totalorder %v4655, 1
    %vm4720 = vcmp.eq.s32.totalorder %v4656, 1
    %vm4721 = vcmp.eq.s32.totalorder %v4657, 1
    %vm4722 = vcmp.eq.s32.totalorder %v4658, 1
    %vm4723 = vcmp.eq.s32.totalorder %v4659, 1
    %vm4724 = vcmp.eq.s32.totalorder %v4660, 1
    %vm4725 = vcmp.eq.s32.totalorder %v4661, 1
    %v4726 = vsel %vm4662, 0.0, %v4597
    %v4727 = vsel %vm4663, 0.0, %v4596
    %v4728 = vsel %vm4664, 0.0, %v4595
    %v4729 = vsel %vm4665, 0.0, %v4594
    %v4730 = vsel %vm4666, 0.0, %v4593
    %v4731 = vsel %vm4667, 0.0, %v4592
    %v4732 = vsel %vm4668, 0.0, %v4591
    %v4733 = vsel %vm4669, 0.0, %v4590
    %v4734 = vsel %vm4670, 0.0, %v4589
    %v4735 = vsel %vm4671, 0.0, %v4588
    %v4736 = vsel %vm4672, 0.0, %v4587
    %v4737 = vsel %vm4673, 0.0, %v4586
    %v4738 = vsel %vm4674, 0.0, %v4585
    %v4739 = vsel %vm4675, 0.0, %v4584
    %v4740 = vsel %vm4676, 0.0, %v4583
    %v4741 = vsel %vm4677, 0.0, %v4582
    %v4742 = vsel %vm4678, 0.0, %v4581
    %v4743 = vsel %vm4679, 0.0, %v4580
    %v4744 = vsel %vm4680, 0.0, %v4579
    %v4745 = vsel %vm4681, 0.0, %v4578
    %v4746 = vsel %vm4682, 0.0, %v4577
    %v4747 = vsel %vm4683, 0.0, %v4576
    %v4748 = vsel %vm4684, 0.0, %v4575
    %v4749 = vsel %vm4685, 0.0, %v4574
    %v4750 = vsel %vm4686, 0.0, %v4573
    %v4751 = vsel %vm4687, 0.0, %v4572
    %v4752 = vsel %vm4688, 0.0, %v4571
    %v4753 = vsel %vm4689, 0.0, %v4570
    %v4754 = vsel %vm4690, 0.0, %v4569
    %v4755 = vsel %vm4691, 0.0, %v4568
    %v4756 = vsel %vm4692, 0.0, %v4567
    %v4757 = vsel %vm4693, 0.0, %v4566
    %v4758 = vsel %vm4694, 0.0, %v4565
    %v4759 = vsel %vm4695, 0.0, %v4564
    %v4760 = vsel %vm4696, 0.0, %v4563
    %v4761 = vsel %vm4697, 0.0, %v4562
    %v4762 = vsel %vm4698, 0.0, %v4561
    %v4763 = vsel %vm4699, 0.0, %v4560
    %v4764 = vsel %vm4700, 0.0, %v4559
    %v4765 = vsel %vm4701, 0.0, %v4558
    %v4766 = vsel %vm4702, 0.0, %v4557
    %v4767 = vsel %vm4703, 0.0, %v4556
    %v4768 = vsel %vm4704, 0.0, %v4555
    %v4769 = vsel %vm4705, 0.0, %v4554
    %v4770 = vsel %vm4706, 0.0, %v4553
    %v4771 = vsel %vm4707, 0.0, %v4552
    %v4772 = vsel %vm4708, 0.0, %v4551
    %v4773 = vsel %vm4709, 0.0, %v4550
    %v4774 = vsel %vm4710, 0.0, %v4549
    %v4775 = vsel %vm4711, 0.0, %v4548
    %v4776 = vsel %vm4712, 0.0, %v4547
    %v4777 = vsel %vm4713, 0.0, %v4546
    %v4778 = vsel %vm4714, 0.0, %v4545
    %v4779 = vsel %vm4715, 0.0, %v4544
    %v4780 = vsel %vm4716, 0.0, %v4543
    %v4781 = vsel %vm4717, 0.0, %v4542
    %v4782 = vsel %vm4718, 0.0, %v4541
    %v4783 = vsel %vm4719, 0.0, %v4540
    %v4784 = vsel %vm4720, 0.0, %v4539
    %v4785 = vsel %vm4721, 0.0, %v4538
    %v4786 = vsel %vm4722, 0.0, %v4537
    %v4787 = vsel %vm4723, 0.0, %v4536
    %v4788 = vsel %vm4724, 0.0, %v4535
    %v4789 = vsel %vm4725, 0.0, %v4534
    %v4790 = vrot.slane %v3349, 1
    %v4791 = vrot.slane %v3351, 1
    %v4792 = vrot.slane %v3354, 1
    %v4793 = vrot.slane %v3356, 1
    %v4794 = vrot.slane %v3359, 1
    %v4795 = vrot.slane %v3361, 1
    %v4796 = vrot.slane %v3364, 1
    %v4797 = vrot.slane %v3366, 1
    %v4798 = vrot.slane %v3369, 1
    %v4799 = vrot.slane %v3371, 1
    %v4800 = vrot.slane %v3374, 1
    %v4801 = vrot.slane %v3376, 1
    %v4802 = vrot.slane %v3379, 1
    %v4803 = vrot.slane %v3381, 1
    %v4804 = vrot.slane %v3384, 1
    %v4805 = vrot.slane %v3386, 1
    %v4806 = vrot.slane %v3389, 1
    %v4807 = vrot.slane %v3391, 1
    %v4808 = vrot.slane %v3394, 1
    %v4809 = vrot.slane %v3396, 1
    %v4810 = vrot.slane %v3399, 1
    %v4811 = vrot.slane %v3401, 1
    %v4812 = vrot.slane %v3404, 1
    %v4813 = vrot.slane %v3406, 1
    %v4814 = vrot.slane %v3409, 1
    %v4815 = vrot.slane %v3411, 1
    %v4816 = vrot.slane %v3414, 1
    %v4817 = vrot.slane %v3416, 1
    %v4818 = vrot.slane %v3419, 1
    %v4819 = vrot.slane %v3421, 1
    %v4820 = vrot.slane %v3424, 1
    %v4821 = vrot.slane %v3426, 1
    %v4822 = vrot.slane %v3429, 1
    %v4823 = vrot.slane %v3431, 1
    %v4824 = vrot.slane %v3434, 1
    %v4825 = vrot.slane %v3436, 1
    %v4826 = vrot.slane %v3439, 1
    %v4827 = vrot.slane %v3441, 1
    %v4828 = vrot.slane %v3444, 1
    %v4829 = vrot.slane %v3446, 1
    %v4830 = vrot.slane %v3449, 1
    %v4831 = vrot.slane %v3451, 1
    %v4832 = vrot.slane %v3454, 1
    %v4833 = vrot.slane %v3456, 1
    %v4834 = vrot.slane %v3459, 1
    %v4835 = vrot.slane %v3461, 1
    %v4836 = vrot.slane %v3464, 1
    %v4837 = vrot.slane %v3466, 1
    %v4838 = vrot.slane %v3469, 1
    %v4839 = vrot.slane %v3471, 1
    %v4840 = vrot.slane %v3474, 1
    %v4841 = vrot.slane %v3476, 1
    %v4842 = vrot.slane %v3479, 1
    %v4843 = vrot.slane %v3481, 1
    %v4844 = vrot.slane %v3484, 1
    %v4845 = vrot.slane %v3486, 1
    %v4846 = vrot.slane %v3489, 1
    %v4847 = vrot.slane %v3491, 1
    %v4848 = vrot.slane %v3494, 1
    %v4849 = vrot.slane %v3496, 1
    %v4850 = vrot.slane %v3499, 1
    %v4851 = vrot.slane %v3501, 1
    %v4852 = vrot.slane %v3504, 1
    %v4853 = vrot.slane %v3506, 1
    %vm4854 = vcmp.lt.s32.totalorder %v3509, 7
    %v4855 = vsel %vm4854, %v4852, %v4853
    %v4856 = vsel %vm4854, %v4851, %v4852
    %v4857 = vsel %vm4854, %v4850, %v4851
    %v4858 = vsel %vm4854, %v4849, %v4850
    %v4859 = vsel %vm4854, %v4848, %v4849
    %v4860 = vsel %vm4854, %v4847, %v4848
    %v4861 = vsel %vm4854, %v4846, %v4847
    %v4862 = vsel %vm4854, %v4845, %v4846
    %v4863 = vsel %vm4854, %v4844, %v4845
    %v4864 = vsel %vm4854, %v4843, %v4844
    %v4865 = vsel %vm4854, %v4842, %v4843
    %v4866 = vsel %vm4854, %v4841, %v4842
    %v4867 = vsel %vm4854, %v4840, %v4841
    %v4868 = vsel %vm4854, %v4839, %v4840
    %v4869 = vsel %vm4854, %v4838, %v4839
    %v4870 = vsel %vm4854, %v4837, %v4838
    %v4871 = vsel %vm4854, %v4836, %v4837
    %v4872 = vsel %vm4854, %v4835, %v4836
    %v4873 = vsel %vm4854, %v4834, %v4835
    %v4874 = vsel %vm4854, %v4833, %v4834
    %v4875 = vsel %vm4854, %v4832, %v4833
    %v4876 = vsel %vm4854, %v4831, %v4832
    %v4877 = vsel %vm4854, %v4830, %v4831
    %v4878 = vsel %vm4854, %v4829, %v4830
    %v4879 = vsel %vm4854, %v4828, %v4829
    %v4880 = vsel %vm4854, %v4827, %v4828
    %v4881 = vsel %vm4854, %v4826, %v4827
    %v4882 = vsel %vm4854, %v4825, %v4826
    %v4883 = vsel %vm4854, %v4824, %v4825
    %v4884 = vsel %vm4854, %v4823, %v4824
    %v4885 = vsel %vm4854, %v4822, %v4823
    %v4886 = vsel %vm4854, %v4821, %v4822
    %v4887 = vsel %vm4854, %v4820, %v4821
    %v4888 = vsel %vm4854, %v4819, %v4820
    %v4889 = vsel %vm4854, %v4818, %v4819
    %v4890 = vsel %vm4854, %v4817, %v4818
    %v4891 = vsel %vm4854, %v4816, %v4817
    %v4892 = vsel %vm4854, %v4815, %v4816
    %v4893 = vsel %vm4854, %v4814, %v4815
    %v4894 = vsel %vm4854, %v4813, %v4814
    %v4895 = vsel %vm4854, %v4812, %v4813
    %v4896 = vsel %vm4854, %v4811, %v4812
    %v4897 = vsel %vm4854, %v4810, %v4811
    %v4898 = vsel %vm4854, %v4809, %v4810
    %v4899 = vsel %vm4854, %v4808, %v4809
    %v4900 = vsel %vm4854, %v4807, %v4808
    %v4901 = vsel %vm4854, %v4806, %v4807
    %v4902 = vsel %vm4854, %v4805, %v4806
    %v4903 = vsel %vm4854, %v4804, %v4805
    %v4904 = vsel %vm4854, %v4803, %v4804
    %v4905 = vsel %vm4854, %v4802, %v4803
    %v4906 = vsel %vm4854, %v4801, %v4802
    %v4907 = vsel %vm4854, %v4800, %v4801
    %v4908 = vsel %vm4854, %v4799, %v4800
    %v4909 = vsel %vm4854, %v4798, %v4799
    %v4910 = vsel %vm4854, %v4797, %v4798
    %v4911 = vsel %vm4854, %v4796, %v4797
    %v4912 = vsel %vm4854, %v4795, %v4796
    %v4913 = vsel %vm4854, %v4794, %v4795
    %v4914 = vsel %vm4854, %v4793, %v4794
    %v4915 = vsel %vm4854, %v4792, %v4793
    %v4916 = vsel %vm4854, %v4791, %v4792
    %v4917 = vsel %vm4854, %v4790, %v4791
    %v4918 = vsel %vm4854, %v4853, %v4790
    %v4919 = vsel %vm4405, 1, 0
    %v4920 = vsel %vm4406, 1, 0
    %v4921 = vsel %vm4407, 1, 0
    %v4922 = vsel %vm4408, 1, 0
    %v4923 = vsel %vm4409, 1, 0
    %v4924 = vsel %vm4410, 1, 0
    %v4925 = vsel %vm4411, 1, 0
    %v4926 = vsel %vm4412, 1, 0
    %v4927 = vsel %vm4413, 1, 0
    %v4928 = vsel %vm4414, 1, 0
    %v4929 = vsel %vm4415, 1, 0
    %v4930 = vsel %vm4416, 1, 0
    %v4931 = vsel %vm4417, 1, 0
    %v4932 = vsel %vm4418, 1, 0
    %v4933 = vsel %vm4419, 1, 0
    %v4934 = vsel %vm4420, 1, 0
    %v4935 = vsel %vm4421, 1, 0
    %v4936 = vsel %vm4422, 1, 0
    %v4937 = vsel %vm4423, 1, 0
    %v4938 = vsel %vm4424, 1, 0
    %v4939 = vsel %vm4425, 1, 0
    %v4940 = vsel %vm4426, 1, 0
    %v4941 = vsel %vm4427, 1, 0
    %v4942 = vsel %vm4428, 1, 0
    %v4943 = vsel %vm4429, 1, 0
    %v4944 = vsel %vm4430, 1, 0
    %v4945 = vsel %vm4431, 1, 0
    %v4946 = vsel %vm4432, 1, 0
    %v4947 = vsel %vm4433, 1, 0
    %v4948 = vsel %vm4434, 1, 0
    %v4949 = vsel %vm4435, 1, 0
    %v4950 = vsel %vm4436, 1, 0
    %v4951 = vsel %vm4437, 1, 0
    %v4952 = vsel %vm4438, 1, 0
    %v4953 = vsel %vm4439, 1, 0
    %v4954 = vsel %vm4440, 1, 0
    %v4955 = vsel %vm4441, 1, 0
    %v4956 = vsel %vm4442, 1, 0
    %v4957 = vsel %vm4443, 1, 0
    %v4958 = vsel %vm4444, 1, 0
    %v4959 = vsel %vm4445, 1, 0
    %v4960 = vsel %vm4446, 1, 0
    %v4961 = vsel %vm4447, 1, 0
    %v4962 = vsel %vm4448, 1, 0
    %v4963 = vsel %vm4449, 1, 0
    %v4964 = vsel %vm4450, 1, 0
    %v4965 = vsel %vm4451, 1, 0
    %v4966 = vsel %vm4452, 1, 0
    %v4967 = vsel %vm4453, 1, 0
    %v4968 = vsel %vm4454, 1, 0
    %v4969 = vsel %vm4455, 1, 0
    %v4970 = vsel %vm4456, 1, 0
    %v4971 = vsel %vm4457, 1, 0
    %v4972 = vsel %vm4458, 1, 0
    %v4973 = vsel %vm4459, 1, 0
    %v4974 = vsel %vm4460, 1, 0
    %v4975 = vsel %vm4461, 1, 0
    %v4976 = vsel %vm4462, 1, 0
    %v4977 = vsel %vm4463, 1, 0
    %v4978 = vsel %vm4464, 1, 0
    %v4979 = vsel %vm4465, 1, 0
    %v4980 = vsel %vm4466, 1, 0
    %v4981 = vsel %vm4467, 1, 0
    %v4982 = vsel %vm4468, 1, 0
    %vm4983 = vcmp.eq.s32.totalorder %v4919, 1
    %vm4984 = vcmp.eq.s32.totalorder %v4920, 1
    %vm4985 = vcmp.eq.s32.totalorder %v4921, 1
    %vm4986 = vcmp.eq.s32.totalorder %v4922, 1
    %vm4987 = vcmp.eq.s32.totalorder %v4923, 1
    %vm4988 = vcmp.eq.s32.totalorder %v4924, 1
    %vm4989 = vcmp.eq.s32.totalorder %v4925, 1
    %vm4990 = vcmp.eq.s32.totalorder %v4926, 1
    %vm4991 = vcmp.eq.s32.totalorder %v4927, 1
    %vm4992 = vcmp.eq.s32.totalorder %v4928, 1
    %vm4993 = vcmp.eq.s32.totalorder %v4929, 1
    %vm4994 = vcmp.eq.s32.totalorder %v4930, 1
    %vm4995 = vcmp.eq.s32.totalorder %v4931, 1
    %vm4996 = vcmp.eq.s32.totalorder %v4932, 1
    %vm4997 = vcmp.eq.s32.totalorder %v4933, 1
    %vm4998 = vcmp.eq.s32.totalorder %v4934, 1
    %vm4999 = vcmp.eq.s32.totalorder %v4935, 1
    %vm5000 = vcmp.eq.s32.totalorder %v4936, 1
    %vm5001 = vcmp.eq.s32.totalorder %v4937, 1
    %vm5002 = vcmp.eq.s32.totalorder %v4938, 1
    %vm5003 = vcmp.eq.s32.totalorder %v4939, 1
    %vm5004 = vcmp.eq.s32.totalorder %v4940, 1
    %vm5005 = vcmp.eq.s32.totalorder %v4941, 1
    %vm5006 = vcmp.eq.s32.totalorder %v4942, 1
    %vm5007 = vcmp.eq.s32.totalorder %v4943, 1
    %vm5008 = vcmp.eq.s32.totalorder %v4944, 1
    %vm5009 = vcmp.eq.s32.totalorder %v4945, 1
    %vm5010 = vcmp.eq.s32.totalorder %v4946, 1
    %vm5011 = vcmp.eq.s32.totalorder %v4947, 1
    %vm5012 = vcmp.eq.s32.totalorder %v4948, 1
    %vm5013 = vcmp.eq.s32.totalorder %v4949, 1
    %vm5014 = vcmp.eq.s32.totalorder %v4950, 1
    %vm5015 = vcmp.eq.s32.totalorder %v4951, 1
    %vm5016 = vcmp.eq.s32.totalorder %v4952, 1
    %vm5017 = vcmp.eq.s32.totalorder %v4953, 1
    %vm5018 = vcmp.eq.s32.totalorder %v4954, 1
    %vm5019 = vcmp.eq.s32.totalorder %v4955, 1
    %vm5020 = vcmp.eq.s32.totalorder %v4956, 1
    %vm5021 = vcmp.eq.s32.totalorder %v4957, 1
    %vm5022 = vcmp.eq.s32.totalorder %v4958, 1
    %vm5023 = vcmp.eq.s32.totalorder %v4959, 1
    %vm5024 = vcmp.eq.s32.totalorder %v4960, 1
    %vm5025 = vcmp.eq.s32.totalorder %v4961, 1
    %vm5026 = vcmp.eq.s32.totalorder %v4962, 1
    %vm5027 = vcmp.eq.s32.totalorder %v4963, 1
    %vm5028 = vcmp.eq.s32.totalorder %v4964, 1
    %vm5029 = vcmp.eq.s32.totalorder %v4965, 1
    %vm5030 = vcmp.eq.s32.totalorder %v4966, 1
    %vm5031 = vcmp.eq.s32.totalorder %v4967, 1
    %vm5032 = vcmp.eq.s32.totalorder %v4968, 1
    %vm5033 = vcmp.eq.s32.totalorder %v4969, 1
    %vm5034 = vcmp.eq.s32.totalorder %v4970, 1
    %vm5035 = vcmp.eq.s32.totalorder %v4971, 1
    %vm5036 = vcmp.eq.s32.totalorder %v4972, 1
    %vm5037 = vcmp.eq.s32.totalorder %v4973, 1
    %vm5038 = vcmp.eq.s32.totalorder %v4974, 1
    %vm5039 = vcmp.eq.s32.totalorder %v4975, 1
    %vm5040 = vcmp.eq.s32.totalorder %v4976, 1
    %vm5041 = vcmp.eq.s32.totalorder %v4977, 1
    %vm5042 = vcmp.eq.s32.totalorder %v4978, 1
    %vm5043 = vcmp.eq.s32.totalorder %v4979, 1
    %vm5044 = vcmp.eq.s32.totalorder %v4980, 1
    %vm5045 = vcmp.eq.s32.totalorder %v4981, 1
    %vm5046 = vcmp.eq.s32.totalorder %v4982, 1
    %v5047 = vsel %vm4983, 0.0, %v4917
    %v5048 = vsel %vm4984, 0.0, %v4916
    %v5049 = vsel %vm4985, 0.0, %v4915
    %v5050 = vsel %vm4986, 0.0, %v4914
    %v5051 = vsel %vm4987, 0.0, %v4913
    %v5052 = vsel %vm4988, 0.0, %v4912
    %v5053 = vsel %vm4989, 0.0, %v4911
    %v5054 = vsel %vm4990, 0.0, %v4910
    %v5055 = vsel %vm4991, 0.0, %v4909
    %v5056 = vsel %vm4992, 0.0, %v4908
    %v5057 = vsel %vm4993, 0.0, %v4907
    %v5058 = vsel %vm4994, 0.0, %v4906
    %v5059 = vsel %vm4995, 0.0, %v4905
    %v5060 = vsel %vm4996, 0.0, %v4904
    %v5061 = vsel %vm4997, 0.0, %v4903
    %v5062 = vsel %vm4998, 0.0, %v4902
    %v5063 = vsel %vm4999, 0.0, %v4901
    %v5064 = vsel %vm5000, 0.0, %v4900
    %v5065 = vsel %vm5001, 0.0, %v4899
    %v5066 = vsel %vm5002, 0.0, %v4898
    %v5067 = vsel %vm5003, 0.0, %v4897
    %v5068 = vsel %vm5004, 0.0, %v4896
    %v5069 = vsel %vm5005, 0.0, %v4895
    %v5070 = vsel %vm5006, 0.0, %v4894
    %v5071 = vsel %vm5007, 0.0, %v4893
    %v5072 = vsel %vm5008, 0.0, %v4892
    %v5073 = vsel %vm5009, 0.0, %v4891
    %v5074 = vsel %vm5010, 0.0, %v4890
    %v5075 = vsel %vm5011, 0.0, %v4889
    %v5076 = vsel %vm5012, 0.0, %v4888
    %v5077 = vsel %vm5013, 0.0, %v4887
    %v5078 = vsel %vm5014, 0.0, %v4886
    %v5079 = vsel %vm5015, 0.0, %v4885
    %v5080 = vsel %vm5016, 0.0, %v4884
    %v5081 = vsel %vm5017, 0.0, %v4883
    %v5082 = vsel %vm5018, 0.0, %v4882
    %v5083 = vsel %vm5019, 0.0, %v4881
    %v5084 = vsel %vm5020, 0.0, %v4880
    %v5085 = vsel %vm5021, 0.0, %v4879
    %v5086 = vsel %vm5022, 0.0, %v4878
    %v5087 = vsel %vm5023, 0.0, %v4877
    %v5088 = vsel %vm5024, 0.0, %v4876
    %v5089 = vsel %vm5025, 0.0, %v4875
    %v5090 = vsel %vm5026, 0.0, %v4874
    %v5091 = vsel %vm5027, 0.0, %v4873
    %v5092 = vsel %vm5028, 0.0, %v4872
    %v5093 = vsel %vm5029, 0.0, %v4871
    %v5094 = vsel %vm5030, 0.0, %v4870
    %v5095 = vsel %vm5031, 0.0, %v4869
    %v5096 = vsel %vm5032, 0.0, %v4868
    %v5097 = vsel %vm5033, 0.0, %v4867
    %v5098 = vsel %vm5034, 0.0, %v4866
    %v5099 = vsel %vm5035, 0.0, %v4865
    %v5100 = vsel %vm5036, 0.0, %v4864
    %v5101 = vsel %vm5037, 0.0, %v4863
    %v5102 = vsel %vm5038, 0.0, %v4862
    %v5103 = vsel %vm5039, 0.0, %v4861
    %v5104 = vsel %vm5040, 0.0, %v4860
    %v5105 = vsel %vm5041, 0.0, %v4859
    %v5106 = vsel %vm5042, 0.0, %v4858
    %v5107 = vsel %vm5043, 0.0, %v4857
    %v5108 = vsel %vm5044, 0.0, %v4856
    %v5109 = vsel %vm5045, 0.0, %v4855
    %v5110 = vsel %vm5046, 0.0, %v4918
    %v5111 = vpack.c.bf16 %v4727, %v4726
    %v5112 = vpack.c.bf16 %v4729, %v4728
    %v5113 = vpack.c.bf16 %v4731, %v4730
    %v5114 = vpack.c.bf16 %v4733, %v4732
    %v5115 = vpack.c.bf16 %v4735, %v4734
    %v5116 = vpack.c.bf16 %v4737, %v4736
    %v5117 = vpack.c.bf16 %v4739, %v4738
    %v5118 = vpack.c.bf16 %v4741, %v4740
    %v5119 = vpack.c.bf16 %v4743, %v4742
    %v5120 = vpack.c.bf16 %v4745, %v4744
    %v5121 = vpack.c.bf16 %v4747, %v4746
    %v5122 = vpack.c.bf16 %v4749, %v4748
    %v5123 = vpack.c.bf16 %v4751, %v4750
    %v5124 = vpack.c.bf16 %v4753, %v4752
    %v5125 = vpack.c.bf16 %v4755, %v4754
    %v5126 = vpack.c.bf16 %v4757, %v4756
    %v5127 = vpack.c.bf16 %v4759, %v4758
    %v5128 = vpack.c.bf16 %v4761, %v4760
    %v5129 = vpack.c.bf16 %v4763, %v4762
    %v5130 = vpack.c.bf16 %v4765, %v4764
    %v5131 = vpack.c.bf16 %v4767, %v4766
    %v5132 = vpack.c.bf16 %v4769, %v4768
    %v5133 = vpack.c.bf16 %v4771, %v4770
    %v5134 = vpack.c.bf16 %v4773, %v4772
    %v5135 = vpack.c.bf16 %v4775, %v4774
    %v5136 = vpack.c.bf16 %v4777, %v4776
    %v5137 = vpack.c.bf16 %v4779, %v4778
    %v5138 = vpack.c.bf16 %v4781, %v4780
    %v5139 = vpack.c.bf16 %v4783, %v4782
    %v5140 = vpack.c.bf16 %v4785, %v4784
    %v5141 = vpack.c.bf16 %v4787, %v4786
    %v5142 = vpack.c.bf16 %v4789, %v4788
    %v5143 = vld [vmem:[#allocation2] sm:$0xff]
    %v5144 = vld [vmem:[#allocation2 + $0x8] sm:$0xff]
    %v5145 = vld [vmem:[#allocation2 + $0x10] sm:$0xff]
    %v5146 = vld [vmem:[#allocation2 + $0x18] sm:$0xff]
    %v5147 = vld [vmem:[#allocation2 + $0x20] sm:$0xff]
    %v5148 = vld [vmem:[#allocation2 + $0x28] sm:$0xff]
    %v5149 = vld [vmem:[#allocation2 + $0x30] sm:$0xff]
    %v5150 = vld [vmem:[#allocation2 + $0x38] sm:$0xff]
    %v5151 = vld [vmem:[#allocation2 + $0x40] sm:$0xff]
    %v5152 = vld [vmem:[#allocation2 + $0x48] sm:$0xff]
    %v5153 = vld [vmem:[#allocation2 + $0x50] sm:$0xff]
    %v5154 = vld [vmem:[#allocation2 + $0x58] sm:$0xff]
    %v5155 = vld [vmem:[#allocation2 + $0x60] sm:$0xff]
    %v5156 = vld [vmem:[#allocation2 + $0x68] sm:$0xff]
    %v5157 = vld [vmem:[#allocation2 + $0x70] sm:$0xff]
    %v5158 = vld [vmem:[#allocation2 + $0x78] sm:$0xff]
    %v5159 = vpack.c.bf16 %v3351, %v3349
    %v5160 = vpack.c.bf16 %v3356, %v3354
    %v5161 = vpack.c.bf16 %v3361, %v3359
    %v5162 = vpack.c.bf16 %v3366, %v3364
    %v5163 = vpack.c.bf16 %v3371, %v3369
    %v5164 = vpack.c.bf16 %v3376, %v3374
    %v5165 = vpack.c.bf16 %v3381, %v3379
    %v5166 = vpack.c.bf16 %v3386, %v3384
    %v5167 = vpack.c.bf16 %v3391, %v3389
    %v5168 = vpack.c.bf16 %v3396, %v3394
    %v5169 = vpack.c.bf16 %v3401, %v3399
    %v5170 = vpack.c.bf16 %v3406, %v3404
    %v5171 = vpack.c.bf16 %v3411, %v3409
    %v5172 = vpack.c.bf16 %v3416, %v3414
    %v5173 = vpack.c.bf16 %v3421, %v3419
    %v5174 = vpack.c.bf16 %v3426, %v3424
    %v5175 = vpack.c.bf16 %v3431, %v3429
    %v5176 = vpack.c.bf16 %v3436, %v3434
    %v5177 = vpack.c.bf16 %v3441, %v3439
    %v5178 = vpack.c.bf16 %v3446, %v3444
    %v5179 = vpack.c.bf16 %v3451, %v3449
    %v5180 = vpack.c.bf16 %v3456, %v3454
    %v5181 = vpack.c.bf16 %v3461, %v3459
    %v5182 = vpack.c.bf16 %v3466, %v3464
    %v5183 = vpack.c.bf16 %v3471, %v3469
    %v5184 = vpack.c.bf16 %v3476, %v3474
    %v5185 = vpack.c.bf16 %v3481, %v3479
    %v5186 = vpack.c.bf16 %v3486, %v3484
    %v5187 = vpack.c.bf16 %v3491, %v3489
    %v5188 = vpack.c.bf16 %v3496, %v3494
    %v5189 = vpack.c.bf16 %v3501, %v3499
    %v5190 = vpack.c.bf16 %v3506, %v3504
    %s5191 = scalar_lea.vmem [#allocation2], 128
    %v5192 = vld [vmem:[%s5191] sm:$0xff]
    %v5193 = vld [vmem:[%s5191 + $0x8] sm:$0xff]
    %v5194 = vld [vmem:[%s5191 + $0x10] sm:$0xff]
    %v5195 = vld [vmem:[%s5191 + $0x18] sm:$0xff]
    %v5196 = vld [vmem:[%s5191 + $0x20] sm:$0xff]
    %v5197 = vld [vmem:[%s5191 + $0x28] sm:$0xff]
    %v5198 = vld [vmem:[%s5191 + $0x30] sm:$0xff]
    %v5199 = vld [vmem:[%s5191 + $0x38] sm:$0xff]
    %v5200 = vld [vmem:[%s5191 + $0x40] sm:$0xff]
    %v5201 = vld [vmem:[%s5191 + $0x48] sm:$0xff]
    %v5202 = vld [vmem:[%s5191 + $0x50] sm:$0xff]
    %v5203 = vld [vmem:[%s5191 + $0x58] sm:$0xff]
    %v5204 = vld [vmem:[%s5191 + $0x60] sm:$0xff]
    %v5205 = vld [vmem:[%s5191 + $0x68] sm:$0xff]
    %v5206 = vld [vmem:[%s5191 + $0x70] sm:$0xff]
    %v5207 = vld [vmem:[%s5191 + $0x78] sm:$0xff]
    %v5224 = vunpack.c.l.b16 %v5192
    %v5225 = vunpack.c.h.b16 %v5192
    %v5226 = vunpack.c.l.b16 %v5193
    %v5227 = vunpack.c.h.b16 %v5193
    %v5228 = vunpack.c.l.b16 %v5194
    %v5229 = vunpack.c.h.b16 %v5194
    %v5230 = vunpack.c.l.b16 %v5195
    %v5231 = vunpack.c.h.b16 %v5195
    %v5232 = vunpack.c.l.b16 %v5196
    %v5233 = vunpack.c.h.b16 %v5196
    %v5234 = vunpack.c.l.b16 %v5197
    %v5235 = vunpack.c.h.b16 %v5197
    %v5236 = vunpack.c.l.b16 %v5198
    %v5237 = vunpack.c.h.b16 %v5198
    %v5238 = vunpack.c.l.b16 %v5199
    %v5239 = vunpack.c.h.b16 %v5199
    %v5240 = vunpack.c.l.b16 %v5200
    %v5241 = vunpack.c.h.b16 %v5200
    %v5242 = vunpack.c.l.b16 %v5201
    %v5243 = vunpack.c.h.b16 %v5201
    %v5244 = vunpack.c.l.b16 %v5202
    %v5245 = vunpack.c.h.b16 %v5202
    %v5246 = vunpack.c.l.b16 %v5203
    %v5247 = vunpack.c.h.b16 %v5203
    %v5248 = vunpack.c.l.b16 %v5204
    %v5249 = vunpack.c.h.b16 %v5204
    %v5250 = vunpack.c.l.b16 %v5205
    %v5251 = vunpack.c.h.b16 %v5205
    %v5252 = vunpack.c.l.b16 %v5206
    %v5253 = vunpack.c.h.b16 %v5206
    %v5254 = vunpack.c.l.b16 %v5207
    %v5255 = vunpack.c.h.b16 %v5207
    %v5256 = vpack.c.b16 %v5226, %v5224
    %v5257 = vpack.c.b16 %v5227, %v5225
    %v5258 = vpack.c.b16 %v5230, %v5228
    %v5259 = vpack.c.b16 %v5231, %v5229
    %v5260 = vpack.c.b16 %v5234, %v5232
    %v5261 = vpack.c.b16 %v5235, %v5233
    %v5262 = vpack.c.b16 %v5238, %v5236
    %v5263 = vpack.c.b16 %v5239, %v5237
    %v5264 = vpack.c.b16 %v5242, %v5240
    %v5265 = vpack.c.b16 %v5243, %v5241
    %v5266 = vpack.c.b16 %v5246, %v5244
    %v5267 = vpack.c.b16 %v5247, %v5245
    %v5268 = vpack.c.b16 %v5250, %v5248
    %v5269 = vpack.c.b16 %v5251, %v5249
    %v5270 = vpack.c.b16 %v5254, %v5252
    %v5271 = vpack.c.b16 %v5255, %v5253
    %5288 = vmatpush.bf16.msra.mxu0 %v5270
    %5289 = vmatpush.bf16.msra.mxu0 %v5268
    %5290 = vmatpush.bf16.msra.mxu0 %v5266
    %5291 = vmatpush.bf16.msra.mxu0 %v5264
    %5292 = vmatpush.bf16.msra.mxu0 %v5262
    %5293 = vmatpush.bf16.msra.mxu0 %v5260
    %5294 = vmatpush.bf16.msra.mxu0 %v5258
    %5295 = vmatpush.bf16.msra.mxu0 %v5256
    %5296 = vmatmul.bf16.gmra.mxu0 %v5159
    %v5297 = vpop.f32.mrf.mxu0
    %v5298 = vadd.f32 0.0, %v5297
    %v5299 = vpop.f32.mrf.mxu0
    %v5300 = vadd.f32 0.0, %v5299
    %5301 = vmatmul.bf16.gmra.mxu0 %v5160
    %v5302 = vpop.f32.mrf.mxu0
    %v5303 = vadd.f32 0.0, %v5302
    %v5304 = vpop.f32.mrf.mxu0
    %v5305 = vadd.f32 0.0, %v5304
    %5306 = vmatmul.bf16.gmra.mxu0 %v5161
    %v5307 = vpop.f32.mrf.mxu0
    %v5308 = vadd.f32 0.0, %v5307
    %v5309 = vpop.f32.mrf.mxu0
    %v5310 = vadd.f32 0.0, %v5309
    %5311 = vmatmul.bf16.gmra.mxu0 %v5162
    %v5312 = vpop.f32.mrf.mxu0
    %v5313 = vadd.f32 0.0, %v5312
    %v5314 = vpop.f32.mrf.mxu0
    %v5315 = vadd.f32 0.0, %v5314
    %5316 = vmatmul.bf16.gmra.mxu0 %v5163
    %v5317 = vpop.f32.mrf.mxu0
    %v5318 = vadd.f32 0.0, %v5317
    %v5319 = vpop.f32.mrf.mxu0
    %v5320 = vadd.f32 0.0, %v5319
    %5321 = vmatmul.bf16.gmra.mxu0 %v5164
    %v5322 = vpop.f32.mrf.mxu0
    %v5323 = vadd.f32 0.0, %v5322
    %v5324 = vpop.f32.mrf.mxu0
    %v5325 = vadd.f32 0.0, %v5324
    %5326 = vmatmul.bf16.gmra.mxu0 %v5165
    %v5327 = vpop.f32.mrf.mxu0
    %v5328 = vadd.f32 0.0, %v5327
    %v5329 = vpop.f32.mrf.mxu0
    %v5330 = vadd.f32 0.0, %v5329
    %5331 = vmatmul.bf16.gmra.mxu0 %v5166
    %v5332 = vpop.f32.mrf.mxu0
    %v5333 = vadd.f32 0.0, %v5332
    %v5334 = vpop.f32.mrf.mxu0
    %v5335 = vadd.f32 0.0, %v5334
    %5336 = vmatmul.bf16.gmra.mxu0 %v5167
    %v5337 = vpop.f32.mrf.mxu0
    %v5338 = vadd.f32 0.0, %v5337
    %v5339 = vpop.f32.mrf.mxu0
    %v5340 = vadd.f32 0.0, %v5339
    %5341 = vmatmul.bf16.gmra.mxu0 %v5168
    %v5342 = vpop.f32.mrf.mxu0
    %v5343 = vadd.f32 0.0, %v5342
    %v5344 = vpop.f32.mrf.mxu0
    %v5345 = vadd.f32 0.0, %v5344
    %5346 = vmatmul.bf16.gmra.mxu0 %v5169
    %v5347 = vpop.f32.mrf.mxu0
    %v5348 = vadd.f32 0.0, %v5347
    %v5349 = vpop.f32.mrf.mxu0
    %v5350 = vadd.f32 0.0, %v5349
    %5351 = vmatmul.bf16.gmra.mxu0 %v5170
    %v5352 = vpop.f32.mrf.mxu0
    %v5353 = vadd.f32 0.0, %v5352
    %v5354 = vpop.f32.mrf.mxu0
    %v5355 = vadd.f32 0.0, %v5354
    %5356 = vmatmul.bf16.gmra.mxu0 %v5171
    %v5357 = vpop.f32.mrf.mxu0
    %v5358 = vadd.f32 0.0, %v5357
    %v5359 = vpop.f32.mrf.mxu0
    %v5360 = vadd.f32 0.0, %v5359
    %5361 = vmatmul.bf16.gmra.mxu0 %v5172
    %v5362 = vpop.f32.mrf.mxu0
    %v5363 = vadd.f32 0.0, %v5362
    %v5364 = vpop.f32.mrf.mxu0
    %v5365 = vadd.f32 0.0, %v5364
    %5366 = vmatmul.bf16.gmra.mxu0 %v5173
    %v5367 = vpop.f32.mrf.mxu0
    %v5368 = vadd.f32 0.0, %v5367
    %v5369 = vpop.f32.mrf.mxu0
    %v5370 = vadd.f32 0.0, %v5369
    %5371 = vmatmul.bf16.gmra.mxu0 %v5174
    %v5372 = vpop.f32.mrf.mxu0
    %v5373 = vadd.f32 0.0, %v5372
    %v5374 = vpop.f32.mrf.mxu0
    %v5375 = vadd.f32 0.0, %v5374
    %5376 = vmatmul.bf16.gmra.mxu0 %v5175
    %v5377 = vpop.f32.mrf.mxu0
    %v5378 = vadd.f32 0.0, %v5377
    %v5379 = vpop.f32.mrf.mxu0
    %v5380 = vadd.f32 0.0, %v5379
    %5381 = vmatmul.bf16.gmra.mxu0 %v5176
    %v5382 = vpop.f32.mrf.mxu0
    %v5383 = vadd.f32 0.0, %v5382
    %v5384 = vpop.f32.mrf.mxu0
    %v5385 = vadd.f32 0.0, %v5384
    %5386 = vmatmul.bf16.gmra.mxu0 %v5177
    %v5387 = vpop.f32.mrf.mxu0
    %v5388 = vadd.f32 0.0, %v5387
    %v5389 = vpop.f32.mrf.mxu0
    %v5390 = vadd.f32 0.0, %v5389
    %5391 = vmatmul.bf16.gmra.mxu0 %v5178
    %v5392 = vpop.f32.mrf.mxu0
    %v5393 = vadd.f32 0.0, %v5392
    %v5394 = vpop.f32.mrf.mxu0
    %v5395 = vadd.f32 0.0, %v5394
    %5396 = vmatmul.bf16.gmra.mxu0 %v5179
    %v5397 = vpop.f32.mrf.mxu0
    %v5398 = vadd.f32 0.0, %v5397
    %v5399 = vpop.f32.mrf.mxu0
    %v5400 = vadd.f32 0.0, %v5399
    %5401 = vmatmul.bf16.gmra.mxu0 %v5180
    %v5402 = vpop.f32.mrf.mxu0
    %v5403 = vadd.f32 0.0, %v5402
    %v5404 = vpop.f32.mrf.mxu0
    %v5405 = vadd.f32 0.0, %v5404
    %5406 = vmatmul.bf16.gmra.mxu0 %v5181
    %v5407 = vpop.f32.mrf.mxu0
    %v5408 = vadd.f32 0.0, %v5407
    %v5409 = vpop.f32.mrf.mxu0
    %v5410 = vadd.f32 0.0, %v5409
    %5411 = vmatmul.bf16.gmra.mxu0 %v5182
    %v5412 = vpop.f32.mrf.mxu0
    %v5413 = vadd.f32 0.0, %v5412
    %v5414 = vpop.f32.mrf.mxu0
    %v5415 = vadd.f32 0.0, %v5414
    %5416 = vmatmul.bf16.gmra.mxu0 %v5183
    %v5417 = vpop.f32.mrf.mxu0
    %v5418 = vadd.f32 0.0, %v5417
    %v5419 = vpop.f32.mrf.mxu0
    %v5420 = vadd.f32 0.0, %v5419
    %5421 = vmatmul.bf16.gmra.mxu0 %v5184
    %v5422 = vpop.f32.mrf.mxu0
    %v5423 = vadd.f32 0.0, %v5422
    %v5424 = vpop.f32.mrf.mxu0
    %v5425 = vadd.f32 0.0, %v5424
    %5426 = vmatmul.bf16.gmra.mxu0 %v5185
    %v5427 = vpop.f32.mrf.mxu0
    %v5428 = vadd.f32 0.0, %v5427
    %v5429 = vpop.f32.mrf.mxu0
    %v5430 = vadd.f32 0.0, %v5429
    %5431 = vmatmul.bf16.gmra.mxu0 %v5186
    %v5432 = vpop.f32.mrf.mxu0
    %v5433 = vadd.f32 0.0, %v5432
    %v5434 = vpop.f32.mrf.mxu0
    %v5435 = vadd.f32 0.0, %v5434
    %5436 = vmatmul.bf16.gmra.mxu0 %v5187
    %v5437 = vpop.f32.mrf.mxu0
    %v5438 = vadd.f32 0.0, %v5437
    %v5439 = vpop.f32.mrf.mxu0
    %v5440 = vadd.f32 0.0, %v5439
    %5441 = vmatmul.bf16.gmra.mxu0 %v5188
    %v5442 = vpop.f32.mrf.mxu0
    %v5443 = vadd.f32 0.0, %v5442
    %v5444 = vpop.f32.mrf.mxu0
    %v5445 = vadd.f32 0.0, %v5444
    %5446 = vmatmul.bf16.gmra.mxu0 %v5189
    %v5447 = vpop.f32.mrf.mxu0
    %v5448 = vadd.f32 0.0, %v5447
    %v5449 = vpop.f32.mrf.mxu0
    %v5450 = vadd.f32 0.0, %v5449
    %5451 = vmatmul.bf16.gmra.mxu0 %v5190
    %v5452 = vpop.f32.mrf.mxu0
    %v5453 = vadd.f32 0.0, %v5452
    %v5454 = vpop.f32.mrf.mxu0
    %v5455 = vadd.f32 0.0, %v5454
    %5456 = vdwg.mxu0
    %5457 = vmatpush.bf16.msra.mxu0 %v5271
    %5458 = vmatpush.bf16.msra.mxu0 %v5269
    %5459 = vmatpush.bf16.msra.mxu0 %v5267
    %5460 = vmatpush.bf16.msra.mxu0 %v5265
    %5461 = vmatpush.bf16.msra.mxu0 %v5263
    %5462 = vmatpush.bf16.msra.mxu0 %v5261
    %5463 = vmatpush.bf16.msra.mxu0 %v5259
    %5464 = vmatpush.bf16.msra.mxu0 %v5257
    %5465 = vmatmul.bf16.gmra.mxu0 %v5159
    %v5466 = vpop.f32.mrf.mxu0
    %v5467 = vadd.f32 0.0, %v5466
    %v5468 = vpop.f32.mrf.mxu0
    %v5469 = vadd.f32 0.0, %v5468
    %5470 = vmatmul.bf16.gmra.mxu0 %v5160
    %v5471 = vpop.f32.mrf.mxu0
    %v5472 = vadd.f32 0.0, %v5471
    %v5473 = vpop.f32.mrf.mxu0
    %v5474 = vadd.f32 0.0, %v5473
    %5475 = vmatmul.bf16.gmra.mxu0 %v5161
    %v5476 = vpop.f32.mrf.mxu0
    %v5477 = vadd.f32 0.0, %v5476
    %v5478 = vpop.f32.mrf.mxu0
    %v5479 = vadd.f32 0.0, %v5478
    %5480 = vmatmul.bf16.gmra.mxu0 %v5162
    %v5481 = vpop.f32.mrf.mxu0
    %v5482 = vadd.f32 0.0, %v5481
    %v5483 = vpop.f32.mrf.mxu0
    %v5484 = vadd.f32 0.0, %v5483
    %5485 = vmatmul.bf16.gmra.mxu0 %v5163
    %v5486 = vpop.f32.mrf.mxu0
    %v5487 = vadd.f32 0.0, %v5486
    %v5488 = vpop.f32.mrf.mxu0
    %v5489 = vadd.f32 0.0, %v5488
    %5490 = vmatmul.bf16.gmra.mxu0 %v5164
    %v5491 = vpop.f32.mrf.mxu0
    %v5492 = vadd.f32 0.0, %v5491
    %v5493 = vpop.f32.mrf.mxu0
    %v5494 = vadd.f32 0.0, %v5493
    %5495 = vmatmul.bf16.gmra.mxu0 %v5165
    %v5496 = vpop.f32.mrf.mxu0
    %v5497 = vadd.f32 0.0, %v5496
    %v5498 = vpop.f32.mrf.mxu0
    %v5499 = vadd.f32 0.0, %v5498
    %5500 = vmatmul.bf16.gmra.mxu0 %v5166
    %v5501 = vpop.f32.mrf.mxu0
    %v5502 = vadd.f32 0.0, %v5501
    %v5503 = vpop.f32.mrf.mxu0
    %v5504 = vadd.f32 0.0, %v5503
    %5505 = vmatmul.bf16.gmra.mxu0 %v5167
    %v5506 = vpop.f32.mrf.mxu0
    %v5507 = vadd.f32 0.0, %v5506
    %v5508 = vpop.f32.mrf.mxu0
    %v5509 = vadd.f32 0.0, %v5508
    %5510 = vmatmul.bf16.gmra.mxu0 %v5168
    %v5511 = vpop.f32.mrf.mxu0
    %v5512 = vadd.f32 0.0, %v5511
    %v5513 = vpop.f32.mrf.mxu0
    %v5514 = vadd.f32 0.0, %v5513
    %5515 = vmatmul.bf16.gmra.mxu0 %v5169
    %v5516 = vpop.f32.mrf.mxu0
    %v5517 = vadd.f32 0.0, %v5516
    %v5518 = vpop.f32.mrf.mxu0
    %v5519 = vadd.f32 0.0, %v5518
    %5520 = vmatmul.bf16.gmra.mxu0 %v5170
    %v5521 = vpop.f32.mrf.mxu0
    %v5522 = vadd.f32 0.0, %v5521
    %v5523 = vpop.f32.mrf.mxu0
    %v5524 = vadd.f32 0.0, %v5523
    %5525 = vmatmul.bf16.gmra.mxu0 %v5171
    %v5526 = vpop.f32.mrf.mxu0
    %v5527 = vadd.f32 0.0, %v5526
    %v5528 = vpop.f32.mrf.mxu0
    %v5529 = vadd.f32 0.0, %v5528
    %5530 = vmatmul.bf16.gmra.mxu0 %v5172
    %v5531 = vpop.f32.mrf.mxu0
    %v5532 = vadd.f32 0.0, %v5531
    %v5533 = vpop.f32.mrf.mxu0
    %v5534 = vadd.f32 0.0, %v5533
    %5535 = vmatmul.bf16.gmra.mxu0 %v5173
    %v5536 = vpop.f32.mrf.mxu0
    %v5537 = vadd.f32 0.0, %v5536
    %v5538 = vpop.f32.mrf.mxu0
    %v5539 = vadd.f32 0.0, %v5538
    %5540 = vmatmul.bf16.gmra.mxu0 %v5174
    %v5541 = vpop.f32.mrf.mxu0
    %v5542 = vadd.f32 0.0, %v5541
    %v5543 = vpop.f32.mrf.mxu0
    %v5544 = vadd.f32 0.0, %v5543
    %5545 = vmatmul.bf16.gmra.mxu0 %v5175
    %v5546 = vpop.f32.mrf.mxu0
    %v5547 = vadd.f32 0.0, %v5546
    %v5548 = vpop.f32.mrf.mxu0
    %v5549 = vadd.f32 0.0, %v5548
    %5550 = vmatmul.bf16.gmra.mxu0 %v5176
    %v5551 = vpop.f32.mrf.mxu0
    %v5552 = vadd.f32 0.0, %v5551
    %v5553 = vpop.f32.mrf.mxu0
    %v5554 = vadd.f32 0.0, %v5553
    %5555 = vmatmul.bf16.gmra.mxu0 %v5177
    %v5556 = vpop.f32.mrf.mxu0
    %v5557 = vadd.f32 0.0, %v5556
    %v5558 = vpop.f32.mrf.mxu0
    %v5559 = vadd.f32 0.0, %v5558
    %5560 = vmatmul.bf16.gmra.mxu0 %v5178
    %v5561 = vpop.f32.mrf.mxu0
    %v5562 = vadd.f32 0.0, %v5561
    %v5563 = vpop.f32.mrf.mxu0
    %v5564 = vadd.f32 0.0, %v5563
    %5565 = vmatmul.bf16.gmra.mxu0 %v5179
    %v5566 = vpop.f32.mrf.mxu0
    %v5567 = vadd.f32 0.0, %v5566
    %v5568 = vpop.f32.mrf.mxu0
    %v5569 = vadd.f32 0.0, %v5568
    %5570 = vmatmul.bf16.gmra.mxu0 %v5180
    %v5571 = vpop.f32.mrf.mxu0
    %v5572 = vadd.f32 0.0, %v5571
    %v5573 = vpop.f32.mrf.mxu0
    %v5574 = vadd.f32 0.0, %v5573
    %5575 = vmatmul.bf16.gmra.mxu0 %v5181
    %v5576 = vpop.f32.mrf.mxu0
    %v5577 = vadd.f32 0.0, %v5576
    %v5578 = vpop.f32.mrf.mxu0
    %v5579 = vadd.f32 0.0, %v5578
    %5580 = vmatmul.bf16.gmra.mxu0 %v5182
    %v5581 = vpop.f32.mrf.mxu0
    %v5582 = vadd.f32 0.0, %v5581
    %v5583 = vpop.f32.mrf.mxu0
    %v5584 = vadd.f32 0.0, %v5583
    %5585 = vmatmul.bf16.gmra.mxu0 %v5183
    %v5586 = vpop.f32.mrf.mxu0
    %v5587 = vadd.f32 0.0, %v5586
    %v5588 = vpop.f32.mrf.mxu0
    %v5589 = vadd.f32 0.0, %v5588
    %5590 = vmatmul.bf16.gmra.mxu0 %v5184
    %v5591 = vpop.f32.mrf.mxu0
    %v5592 = vadd.f32 0.0, %v5591
    %v5593 = vpop.f32.mrf.mxu0
    %v5594 = vadd.f32 0.0, %v5593
    %5595 = vmatmul.bf16.gmra.mxu0 %v5185
    %v5596 = vpop.f32.mrf.mxu0
    %v5597 = vadd.f32 0.0, %v5596
    %v5598 = vpop.f32.mrf.mxu0
    %v5599 = vadd.f32 0.0, %v5598
    %5600 = vmatmul.bf16.gmra.mxu0 %v5186
    %v5601 = vpop.f32.mrf.mxu0
    %v5602 = vadd.f32 0.0, %v5601
    %v5603 = vpop.f32.mrf.mxu0
    %v5604 = vadd.f32 0.0, %v5603
    %5605 = vmatmul.bf16.gmra.mxu0 %v5187
    %v5606 = vpop.f32.mrf.mxu0
    %v5607 = vadd.f32 0.0, %v5606
    %v5608 = vpop.f32.mrf.mxu0
    %v5609 = vadd.f32 0.0, %v5608
    %5610 = vmatmul.bf16.gmra.mxu0 %v5188
    %v5611 = vpop.f32.mrf.mxu0
    %v5612 = vadd.f32 0.0, %v5611
    %v5613 = vpop.f32.mrf.mxu0
    %v5614 = vadd.f32 0.0, %v5613
    %5615 = vmatmul.bf16.gmra.mxu0 %v5189
    %v5616 = vpop.f32.mrf.mxu0
    %v5617 = vadd.f32 0.0, %v5616
    %v5618 = vpop.f32.mrf.mxu0
    %v5619 = vadd.f32 0.0, %v5618
    %5620 = vmatmul.bf16.gmra.mxu0 %v5190
    %v5621 = vpop.f32.mrf.mxu0
    %v5622 = vadd.f32 0.0, %v5621
    %v5623 = vpop.f32.mrf.mxu0
    %v5624 = vadd.f32 0.0, %v5623
    %5625 = vdwg.mxu0
    %v5642 = vunpack.c.l.b16 %v5143
    %v5643 = vunpack.c.h.b16 %v5143
    %v5644 = vunpack.c.l.b16 %v5144
    %v5645 = vunpack.c.h.b16 %v5144
    %v5646 = vunpack.c.l.b16 %v5145
    %v5647 = vunpack.c.h.b16 %v5145
    %v5648 = vunpack.c.l.b16 %v5146
    %v5649 = vunpack.c.h.b16 %v5146
    %v5650 = vunpack.c.l.b16 %v5147
    %v5651 = vunpack.c.h.b16 %v5147
    %v5652 = vunpack.c.l.b16 %v5148
    %v5653 = vunpack.c.h.b16 %v5148
    %v5654 = vunpack.c.l.b16 %v5149
    %v5655 = vunpack.c.h.b16 %v5149
    %v5656 = vunpack.c.l.b16 %v5150
    %v5657 = vunpack.c.h.b16 %v5150
    %v5658 = vunpack.c.l.b16 %v5151
    %v5659 = vunpack.c.h.b16 %v5151
    %v5660 = vunpack.c.l.b16 %v5152
    %v5661 = vunpack.c.h.b16 %v5152
    %v5662 = vunpack.c.l.b16 %v5153
    %v5663 = vunpack.c.h.b16 %v5153
    %v5664 = vunpack.c.l.b16 %v5154
    %v5665 = vunpack.c.h.b16 %v5154
    %v5666 = vunpack.c.l.b16 %v5155
    %v5667 = vunpack.c.h.b16 %v5155
    %v5668 = vunpack.c.l.b16 %v5156
    %v5669 = vunpack.c.h.b16 %v5156
    %v5670 = vunpack.c.l.b16 %v5157
    %v5671 = vunpack.c.h.b16 %v5157
    %v5672 = vunpack.c.l.b16 %v5158
    %v5673 = vunpack.c.h.b16 %v5158
    %v5674 = vpack.c.b16 %v5644, %v5642
    %v5675 = vpack.c.b16 %v5645, %v5643
    %v5676 = vpack.c.b16 %v5648, %v5646
    %v5677 = vpack.c.b16 %v5649, %v5647
    %v5678 = vpack.c.b16 %v5652, %v5650
    %v5679 = vpack.c.b16 %v5653, %v5651
    %v5680 = vpack.c.b16 %v5656, %v5654
    %v5681 = vpack.c.b16 %v5657, %v5655
    %v5682 = vpack.c.b16 %v5660, %v5658
    %v5683 = vpack.c.b16 %v5661, %v5659
    %v5684 = vpack.c.b16 %v5664, %v5662
    %v5685 = vpack.c.b16 %v5665, %v5663
    %v5686 = vpack.c.b16 %v5668, %v5666
    %v5687 = vpack.c.b16 %v5669, %v5667
    %v5688 = vpack.c.b16 %v5672, %v5670
    %v5689 = vpack.c.b16 %v5673, %v5671
    %5706 = vmatpush.bf16.msra.mxu0 %v5688
    %5707 = vmatpush.bf16.msra.mxu0 %v5686
    %5708 = vmatpush.bf16.msra.mxu0 %v5684
    %5709 = vmatpush.bf16.msra.mxu0 %v5682
    %5710 = vmatpush.bf16.msra.mxu0 %v5680
    %5711 = vmatpush.bf16.msra.mxu0 %v5678
    %5712 = vmatpush.bf16.msra.mxu0 %v5676
    %5713 = vmatpush.bf16.msra.mxu0 %v5674
    %5714 = vmatmul.bf16.gmra.mxu0 %v5111
    %v5715 = vpop.f32.mrf.mxu0
    %v5716 = vadd.f32 %v5298, %v5715
    %v5717 = vpop.f32.mrf.mxu0
    %v5718 = vadd.f32 %v5300, %v5717
    %5719 = vmatmul.bf16.gmra.mxu0 %v5112
    %v5720 = vpop.f32.mrf.mxu0
    %v5721 = vadd.f32 %v5303, %v5720
    %v5722 = vpop.f32.mrf.mxu0
    %v5723 = vadd.f32 %v5305, %v5722
    %5724 = vmatmul.bf16.gmra.mxu0 %v5113
    %v5725 = vpop.f32.mrf.mxu0
    %v5726 = vadd.f32 %v5308, %v5725
    %v5727 = vpop.f32.mrf.mxu0
    %v5728 = vadd.f32 %v5310, %v5727
    %5729 = vmatmul.bf16.gmra.mxu0 %v5114
    %v5730 = vpop.f32.mrf.mxu0
    %v5731 = vadd.f32 %v5313, %v5730
    %v5732 = vpop.f32.mrf.mxu0
    %v5733 = vadd.f32 %v5315, %v5732
    %5734 = vmatmul.bf16.gmra.mxu0 %v5115
    %v5735 = vpop.f32.mrf.mxu0
    %v5736 = vadd.f32 %v5318, %v5735
    %v5737 = vpop.f32.mrf.mxu0
    %v5738 = vadd.f32 %v5320, %v5737
    %5739 = vmatmul.bf16.gmra.mxu0 %v5116
    %v5740 = vpop.f32.mrf.mxu0
    %v5741 = vadd.f32 %v5323, %v5740
    %v5742 = vpop.f32.mrf.mxu0
    %v5743 = vadd.f32 %v5325, %v5742
    %5744 = vmatmul.bf16.gmra.mxu0 %v5117
    %v5745 = vpop.f32.mrf.mxu0
    %v5746 = vadd.f32 %v5328, %v5745
    %v5747 = vpop.f32.mrf.mxu0
    %v5748 = vadd.f32 %v5330, %v5747
    %5749 = vmatmul.bf16.gmra.mxu0 %v5118
    %v5750 = vpop.f32.mrf.mxu0
    %v5751 = vadd.f32 %v5333, %v5750
    %v5752 = vpop.f32.mrf.mxu0
    %v5753 = vadd.f32 %v5335, %v5752
    %5754 = vmatmul.bf16.gmra.mxu0 %v5119
    %v5755 = vpop.f32.mrf.mxu0
    %v5756 = vadd.f32 %v5338, %v5755
    %v5757 = vpop.f32.mrf.mxu0
    %v5758 = vadd.f32 %v5340, %v5757
    %5759 = vmatmul.bf16.gmra.mxu0 %v5120
    %v5760 = vpop.f32.mrf.mxu0
    %v5761 = vadd.f32 %v5343, %v5760
    %v5762 = vpop.f32.mrf.mxu0
    %v5763 = vadd.f32 %v5345, %v5762
    %5764 = vmatmul.bf16.gmra.mxu0 %v5121
    %v5765 = vpop.f32.mrf.mxu0
    %v5766 = vadd.f32 %v5348, %v5765
    %v5767 = vpop.f32.mrf.mxu0
    %v5768 = vadd.f32 %v5350, %v5767
    %5769 = vmatmul.bf16.gmra.mxu0 %v5122
    %v5770 = vpop.f32.mrf.mxu0
    %v5771 = vadd.f32 %v5353, %v5770
    %v5772 = vpop.f32.mrf.mxu0
    %v5773 = vadd.f32 %v5355, %v5772
    %5774 = vmatmul.bf16.gmra.mxu0 %v5123
    %v5775 = vpop.f32.mrf.mxu0
    %v5776 = vadd.f32 %v5358, %v5775
    %v5777 = vpop.f32.mrf.mxu0
    %v5778 = vadd.f32 %v5360, %v5777
    %5779 = vmatmul.bf16.gmra.mxu0 %v5124
    %v5780 = vpop.f32.mrf.mxu0
    %v5781 = vadd.f32 %v5363, %v5780
    %v5782 = vpop.f32.mrf.mxu0
    %v5783 = vadd.f32 %v5365, %v5782
    %5784 = vmatmul.bf16.gmra.mxu0 %v5125
    %v5785 = vpop.f32.mrf.mxu0
    %v5786 = vadd.f32 %v5368, %v5785
    %v5787 = vpop.f32.mrf.mxu0
    %v5788 = vadd.f32 %v5370, %v5787
    %5789 = vmatmul.bf16.gmra.mxu0 %v5126
    %v5790 = vpop.f32.mrf.mxu0
    %v5791 = vadd.f32 %v5373, %v5790
    %v5792 = vpop.f32.mrf.mxu0
    %v5793 = vadd.f32 %v5375, %v5792
    %5794 = vmatmul.bf16.gmra.mxu0 %v5127
    %v5795 = vpop.f32.mrf.mxu0
    %v5796 = vadd.f32 %v5378, %v5795
    %v5797 = vpop.f32.mrf.mxu0
    %v5798 = vadd.f32 %v5380, %v5797
    %5799 = vmatmul.bf16.gmra.mxu0 %v5128
    %v5800 = vpop.f32.mrf.mxu0
    %v5801 = vadd.f32 %v5383, %v5800
    %v5802 = vpop.f32.mrf.mxu0
    %v5803 = vadd.f32 %v5385, %v5802
    %5804 = vmatmul.bf16.gmra.mxu0 %v5129
    %v5805 = vpop.f32.mrf.mxu0
    %v5806 = vadd.f32 %v5388, %v5805
    %v5807 = vpop.f32.mrf.mxu0
    %v5808 = vadd.f32 %v5390, %v5807
    %5809 = vmatmul.bf16.gmra.mxu0 %v5130
    %v5810 = vpop.f32.mrf.mxu0
    %v5811 = vadd.f32 %v5393, %v5810
    %v5812 = vpop.f32.mrf.mxu0
    %v5813 = vadd.f32 %v5395, %v5812
    %5814 = vmatmul.bf16.gmra.mxu0 %v5131
    %v5815 = vpop.f32.mrf.mxu0
    %v5816 = vadd.f32 %v5398, %v5815
    %v5817 = vpop.f32.mrf.mxu0
    %v5818 = vadd.f32 %v5400, %v5817
    %5819 = vmatmul.bf16.gmra.mxu0 %v5132
    %v5820 = vpop.f32.mrf.mxu0
    %v5821 = vadd.f32 %v5403, %v5820
    %v5822 = vpop.f32.mrf.mxu0
    %v5823 = vadd.f32 %v5405, %v5822
    %5824 = vmatmul.bf16.gmra.mxu0 %v5133
    %v5825 = vpop.f32.mrf.mxu0
    %v5826 = vadd.f32 %v5408, %v5825
    %v5827 = vpop.f32.mrf.mxu0
    %v5828 = vadd.f32 %v5410, %v5827
    %5829 = vmatmul.bf16.gmra.mxu0 %v5134
    %v5830 = vpop.f32.mrf.mxu0
    %v5831 = vadd.f32 %v5413, %v5830
    %v5832 = vpop.f32.mrf.mxu0
    %v5833 = vadd.f32 %v5415, %v5832
    %5834 = vmatmul.bf16.gmra.mxu0 %v5135
    %v5835 = vpop.f32.mrf.mxu0
    %v5836 = vadd.f32 %v5418, %v5835
    %v5837 = vpop.f32.mrf.mxu0
    %v5838 = vadd.f32 %v5420, %v5837
    %5839 = vmatmul.bf16.gmra.mxu0 %v5136
    %v5840 = vpop.f32.mrf.mxu0
    %v5841 = vadd.f32 %v5423, %v5840
    %v5842 = vpop.f32.mrf.mxu0
    %v5843 = vadd.f32 %v5425, %v5842
    %5844 = vmatmul.bf16.gmra.mxu0 %v5137
    %v5845 = vpop.f32.mrf.mxu0
    %v5846 = vadd.f32 %v5428, %v5845
    %v5847 = vpop.f32.mrf.mxu0
    %v5848 = vadd.f32 %v5430, %v5847
    %5849 = vmatmul.bf16.gmra.mxu0 %v5138
    %v5850 = vpop.f32.mrf.mxu0
    %v5851 = vadd.f32 %v5433, %v5850
    %v5852 = vpop.f32.mrf.mxu0
    %v5853 = vadd.f32 %v5435, %v5852
    %5854 = vmatmul.bf16.gmra.mxu0 %v5139
    %v5855 = vpop.f32.mrf.mxu0
    %v5856 = vadd.f32 %v5438, %v5855
    %v5857 = vpop.f32.mrf.mxu0
    %v5858 = vadd.f32 %v5440, %v5857
    %5859 = vmatmul.bf16.gmra.mxu0 %v5140
    %v5860 = vpop.f32.mrf.mxu0
    %v5861 = vadd.f32 %v5443, %v5860
    %v5862 = vpop.f32.mrf.mxu0
    %v5863 = vadd.f32 %v5445, %v5862
    %5864 = vmatmul.bf16.gmra.mxu0 %v5141
    %v5865 = vpop.f32.mrf.mxu0
    %v5866 = vadd.f32 %v5448, %v5865
    %v5867 = vpop.f32.mrf.mxu0
    %v5868 = vadd.f32 %v5450, %v5867
    %5869 = vmatmul.bf16.gmra.mxu0 %v5142
    %v5870 = vpop.f32.mrf.mxu0
    %v5871 = vadd.f32 %v5453, %v5870
    %v5872 = vpop.f32.mrf.mxu0
    %v5873 = vadd.f32 %v5455, %v5872
    %5874 = vdwg.mxu0
    %5875 = vmatpush.bf16.msra.mxu0 %v5689
    %5876 = vmatpush.bf16.msra.mxu0 %v5687
    %5877 = vmatpush.bf16.msra.mxu0 %v5685
    %5878 = vmatpush.bf16.msra.mxu0 %v5683
    %5879 = vmatpush.bf16.msra.mxu0 %v5681
    %5880 = vmatpush.bf16.msra.mxu0 %v5679
    %5881 = vmatpush.bf16.msra.mxu0 %v5677
    %5882 = vmatpush.bf16.msra.mxu0 %v5675
    %5883 = vmatmul.bf16.gmra.mxu0 %v5111
    %v5884 = vpop.f32.mrf.mxu0
    %v5885 = vadd.f32 %v5467, %v5884
    %v5886 = vpop.f32.mrf.mxu0
    %v5887 = vadd.f32 %v5469, %v5886
    %5888 = vmatmul.bf16.gmra.mxu0 %v5112
    %v5889 = vpop.f32.mrf.mxu0
    %v5890 = vadd.f32 %v5472, %v5889
    %v5891 = vpop.f32.mrf.mxu0
    %v5892 = vadd.f32 %v5474, %v5891
    %5893 = vmatmul.bf16.gmra.mxu0 %v5113
    %v5894 = vpop.f32.mrf.mxu0
    %v5895 = vadd.f32 %v5477, %v5894
    %v5896 = vpop.f32.mrf.mxu0
    %v5897 = vadd.f32 %v5479, %v5896
    %5898 = vmatmul.bf16.gmra.mxu0 %v5114
    %v5899 = vpop.f32.mrf.mxu0
    %v5900 = vadd.f32 %v5482, %v5899
    %v5901 = vpop.f32.mrf.mxu0
    %v5902 = vadd.f32 %v5484, %v5901
    %5903 = vmatmul.bf16.gmra.mxu0 %v5115
    %v5904 = vpop.f32.mrf.mxu0
    %v5905 = vadd.f32 %v5487, %v5904
    %v5906 = vpop.f32.mrf.mxu0
    %v5907 = vadd.f32 %v5489, %v5906
    %5908 = vmatmul.bf16.gmra.mxu0 %v5116
    %v5909 = vpop.f32.mrf.mxu0
    %v5910 = vadd.f32 %v5492, %v5909
    %v5911 = vpop.f32.mrf.mxu0
    %v5912 = vadd.f32 %v5494, %v5911
    %5913 = vmatmul.bf16.gmra.mxu0 %v5117
    %v5914 = vpop.f32.mrf.mxu0
    %v5915 = vadd.f32 %v5497, %v5914
    %v5916 = vpop.f32.mrf.mxu0
    %v5917 = vadd.f32 %v5499, %v5916
    %5918 = vmatmul.bf16.gmra.mxu0 %v5118
    %v5919 = vpop.f32.mrf.mxu0
    %v5920 = vadd.f32 %v5502, %v5919
    %v5921 = vpop.f32.mrf.mxu0
    %v5922 = vadd.f32 %v5504, %v5921
    %5923 = vmatmul.bf16.gmra.mxu0 %v5119
    %v5924 = vpop.f32.mrf.mxu0
    %v5925 = vadd.f32 %v5507, %v5924
    %v5926 = vpop.f32.mrf.mxu0
    %v5927 = vadd.f32 %v5509, %v5926
    %5928 = vmatmul.bf16.gmra.mxu0 %v5120
    %v5929 = vpop.f32.mrf.mxu0
    %v5930 = vadd.f32 %v5512, %v5929
    %v5931 = vpop.f32.mrf.mxu0
    %v5932 = vadd.f32 %v5514, %v5931
    %5933 = vmatmul.bf16.gmra.mxu0 %v5121
    %v5934 = vpop.f32.mrf.mxu0
    %v5935 = vadd.f32 %v5517, %v5934
    %v5936 = vpop.f32.mrf.mxu0
    %v5937 = vadd.f32 %v5519, %v5936
    %5938 = vmatmul.bf16.gmra.mxu0 %v5122
    %v5939 = vpop.f32.mrf.mxu0
    %v5940 = vadd.f32 %v5522, %v5939
    %v5941 = vpop.f32.mrf.mxu0
    %v5942 = vadd.f32 %v5524, %v5941
    %5943 = vmatmul.bf16.gmra.mxu0 %v5123
    %v5944 = vpop.f32.mrf.mxu0
    %v5945 = vadd.f32 %v5527, %v5944
    %v5946 = vpop.f32.mrf.mxu0
    %v5947 = vadd.f32 %v5529, %v5946
    %5948 = vmatmul.bf16.gmra.mxu0 %v5124
    %v5949 = vpop.f32.mrf.mxu0
    %v5950 = vadd.f32 %v5532, %v5949
    %v5951 = vpop.f32.mrf.mxu0
    %v5952 = vadd.f32 %v5534, %v5951
    %5953 = vmatmul.bf16.gmra.mxu0 %v5125
    %v5954 = vpop.f32.mrf.mxu0
    %v5955 = vadd.f32 %v5537, %v5954
    %v5956 = vpop.f32.mrf.mxu0
    %v5957 = vadd.f32 %v5539, %v5956
    %5958 = vmatmul.bf16.gmra.mxu0 %v5126
    %v5959 = vpop.f32.mrf.mxu0
    %v5960 = vadd.f32 %v5542, %v5959
    %v5961 = vpop.f32.mrf.mxu0
    %v5962 = vadd.f32 %v5544, %v5961
    %5963 = vmatmul.bf16.gmra.mxu0 %v5127
    %v5964 = vpop.f32.mrf.mxu0
    %v5965 = vadd.f32 %v5547, %v5964
    %v5966 = vpop.f32.mrf.mxu0
    %v5967 = vadd.f32 %v5549, %v5966
    %5968 = vmatmul.bf16.gmra.mxu0 %v5128
    %v5969 = vpop.f32.mrf.mxu0
    %v5970 = vadd.f32 %v5552, %v5969
    %v5971 = vpop.f32.mrf.mxu0
    %v5972 = vadd.f32 %v5554, %v5971
    %5973 = vmatmul.bf16.gmra.mxu0 %v5129
    %v5974 = vpop.f32.mrf.mxu0
    %v5975 = vadd.f32 %v5557, %v5974
    %v5976 = vpop.f32.mrf.mxu0
    %v5977 = vadd.f32 %v5559, %v5976
    %5978 = vmatmul.bf16.gmra.mxu0 %v5130
    %v5979 = vpop.f32.mrf.mxu0
    %v5980 = vadd.f32 %v5562, %v5979
    %v5981 = vpop.f32.mrf.mxu0
    %v5982 = vadd.f32 %v5564, %v5981
    %5983 = vmatmul.bf16.gmra.mxu0 %v5131
    %v5984 = vpop.f32.mrf.mxu0
    %v5985 = vadd.f32 %v5567, %v5984
    %v5986 = vpop.f32.mrf.mxu0
    %v5987 = vadd.f32 %v5569, %v5986
    %5988 = vmatmul.bf16.gmra.mxu0 %v5132
    %v5989 = vpop.f32.mrf.mxu0
    %v5990 = vadd.f32 %v5572, %v5989
    %v5991 = vpop.f32.mrf.mxu0
    %v5992 = vadd.f32 %v5574, %v5991
    %5993 = vmatmul.bf16.gmra.mxu0 %v5133
    %v5994 = vpop.f32.mrf.mxu0
    %v5995 = vadd.f32 %v5577, %v5994
    %v5996 = vpop.f32.mrf.mxu0
    %v5997 = vadd.f32 %v5579, %v5996
    %5998 = vmatmul.bf16.gmra.mxu0 %v5134
    %v5999 = vpop.f32.mrf.mxu0
    %v6000 = vadd.f32 %v5582, %v5999
    %v6001 = vpop.f32.mrf.mxu0
    %v6002 = vadd.f32 %v5584, %v6001
    %6003 = vmatmul.bf16.gmra.mxu0 %v5135
    %v6004 = vpop.f32.mrf.mxu0
    %v6005 = vadd.f32 %v5587, %v6004
    %v6006 = vpop.f32.mrf.mxu0
    %v6007 = vadd.f32 %v5589, %v6006
    %6008 = vmatmul.bf16.gmra.mxu0 %v5136
    %v6009 = vpop.f32.mrf.mxu0
    %v6010 = vadd.f32 %v5592, %v6009
    %v6011 = vpop.f32.mrf.mxu0
    %v6012 = vadd.f32 %v5594, %v6011
    %6013 = vmatmul.bf16.gmra.mxu0 %v5137
    %v6014 = vpop.f32.mrf.mxu0
    %v6015 = vadd.f32 %v5597, %v6014
    %v6016 = vpop.f32.mrf.mxu0
    %v6017 = vadd.f32 %v5599, %v6016
    %6018 = vmatmul.bf16.gmra.mxu0 %v5138
    %v6019 = vpop.f32.mrf.mxu0
    %v6020 = vadd.f32 %v5602, %v6019
    %v6021 = vpop.f32.mrf.mxu0
    %v6022 = vadd.f32 %v5604, %v6021
    %6023 = vmatmul.bf16.gmra.mxu0 %v5139
    %v6024 = vpop.f32.mrf.mxu0
    %v6025 = vadd.f32 %v5607, %v6024
    %v6026 = vpop.f32.mrf.mxu0
    %v6027 = vadd.f32 %v5609, %v6026
    %6028 = vmatmul.bf16.gmra.mxu0 %v5140
    %v6029 = vpop.f32.mrf.mxu0
    %v6030 = vadd.f32 %v5612, %v6029
    %v6031 = vpop.f32.mrf.mxu0
    %v6032 = vadd.f32 %v5614, %v6031
    %6033 = vmatmul.bf16.gmra.mxu0 %v5141
    %v6034 = vpop.f32.mrf.mxu0
    %v6035 = vadd.f32 %v5617, %v6034
    %v6036 = vpop.f32.mrf.mxu0
    %v6037 = vadd.f32 %v5619, %v6036
    %6038 = vmatmul.bf16.gmra.mxu0 %v5142
    %v6039 = vpop.f32.mrf.mxu0
    %v6040 = vadd.f32 %v5622, %v6039
    %v6041 = vpop.f32.mrf.mxu0
    %v6042 = vadd.f32 %v5624, %v6041
    %6043 = vdwg.mxu0
    %v6044 = vpack.c.bf16 %v5048, %v5047
    %v6045 = vpack.c.bf16 %v5050, %v5049
    %v6046 = vpack.c.bf16 %v5052, %v5051
    %v6047 = vpack.c.bf16 %v5054, %v5053
    %v6048 = vpack.c.bf16 %v5056, %v5055
    %v6049 = vpack.c.bf16 %v5058, %v5057
    %v6050 = vpack.c.bf16 %v5060, %v5059
    %v6051 = vpack.c.bf16 %v5062, %v5061
    %v6052 = vpack.c.bf16 %v5064, %v5063
    %v6053 = vpack.c.bf16 %v5066, %v5065
    %v6054 = vpack.c.bf16 %v5068, %v5067
    %v6055 = vpack.c.bf16 %v5070, %v5069
    %v6056 = vpack.c.bf16 %v5072, %v5071
    %v6057 = vpack.c.bf16 %v5074, %v5073
    %v6058 = vpack.c.bf16 %v5076, %v5075
    %v6059 = vpack.c.bf16 %v5078, %v5077
    %v6060 = vpack.c.bf16 %v5080, %v5079
    %v6061 = vpack.c.bf16 %v5082, %v5081
    %v6062 = vpack.c.bf16 %v5084, %v5083
    %v6063 = vpack.c.bf16 %v5086, %v5085
    %v6064 = vpack.c.bf16 %v5088, %v5087
    %v6065 = vpack.c.bf16 %v5090, %v5089
    %v6066 = vpack.c.bf16 %v5092, %v5091
    %v6067 = vpack.c.bf16 %v5094, %v5093
    %v6068 = vpack.c.bf16 %v5096, %v5095
    %v6069 = vpack.c.bf16 %v5098, %v5097
    %v6070 = vpack.c.bf16 %v5100, %v5099
    %v6071 = vpack.c.bf16 %v5102, %v5101
    %v6072 = vpack.c.bf16 %v5104, %v5103
    %v6073 = vpack.c.bf16 %v5106, %v5105
    %v6074 = vpack.c.bf16 %v5108, %v5107
    %v6075 = vpack.c.bf16 %v5110, %v5109
    %s6076 = scalar_lea.vmem [#allocation2], 256
    %v6077 = vld [vmem:[%s6076] sm:$0xff]
    %v6078 = vld [vmem:[%s6076 + $0x8] sm:$0xff]
    %v6079 = vld [vmem:[%s6076 + $0x10] sm:$0xff]
    %v6080 = vld [vmem:[%s6076 + $0x18] sm:$0xff]
    %v6081 = vld [vmem:[%s6076 + $0x20] sm:$0xff]
    %v6082 = vld [vmem:[%s6076 + $0x28] sm:$0xff]
    %v6083 = vld [vmem:[%s6076 + $0x30] sm:$0xff]
    %v6084 = vld [vmem:[%s6076 + $0x38] sm:$0xff]
    %v6085 = vld [vmem:[%s6076 + $0x40] sm:$0xff]
    %v6086 = vld [vmem:[%s6076 + $0x48] sm:$0xff]
    %v6087 = vld [vmem:[%s6076 + $0x50] sm:$0xff]
    %v6088 = vld [vmem:[%s6076 + $0x58] sm:$0xff]
    %v6089 = vld [vmem:[%s6076 + $0x60] sm:$0xff]
    %v6090 = vld [vmem:[%s6076 + $0x68] sm:$0xff]
    %v6091 = vld [vmem:[%s6076 + $0x70] sm:$0xff]
    %v6092 = vld [vmem:[%s6076 + $0x78] sm:$0xff]
    %v6109 = vunpack.c.l.b16 %v6077
    %v6110 = vunpack.c.h.b16 %v6077
    %v6111 = vunpack.c.l.b16 %v6078
    %v6112 = vunpack.c.h.b16 %v6078
    %v6113 = vunpack.c.l.b16 %v6079
    %v6114 = vunpack.c.h.b16 %v6079
    %v6115 = vunpack.c.l.b16 %v6080
    %v6116 = vunpack.c.h.b16 %v6080
    %v6117 = vunpack.c.l.b16 %v6081
    %v6118 = vunpack.c.h.b16 %v6081
    %v6119 = vunpack.c.l.b16 %v6082
    %v6120 = vunpack.c.h.b16 %v6082
    %v6121 = vunpack.c.l.b16 %v6083
    %v6122 = vunpack.c.h.b16 %v6083
    %v6123 = vunpack.c.l.b16 %v6084
    %v6124 = vunpack.c.h.b16 %v6084
    %v6125 = vunpack.c.l.b16 %v6085
    %v6126 = vunpack.c.h.b16 %v6085
    %v6127 = vunpack.c.l.b16 %v6086
    %v6128 = vunpack.c.h.b16 %v6086
    %v6129 = vunpack.c.l.b16 %v6087
    %v6130 = vunpack.c.h.b16 %v6087
    %v6131 = vunpack.c.l.b16 %v6088
    %v6132 = vunpack.c.h.b16 %v6088
    %v6133 = vunpack.c.l.b16 %v6089
    %v6134 = vunpack.c.h.b16 %v6089
    %v6135 = vunpack.c.l.b16 %v6090
    %v6136 = vunpack.c.h.b16 %v6090
    %v6137 = vunpack.c.l.b16 %v6091
    %v6138 = vunpack.c.h.b16 %v6091
    %v6139 = vunpack.c.l.b16 %v6092
    %v6140 = vunpack.c.h.b16 %v6092
    %v6141 = vpack.c.b16 %v6111, %v6109
    %v6142 = vpack.c.b16 %v6112, %v6110
    %v6143 = vpack.c.b16 %v6115, %v6113
    %v6144 = vpack.c.b16 %v6116, %v6114
    %v6145 = vpack.c.b16 %v6119, %v6117
    %v6146 = vpack.c.b16 %v6120, %v6118
    %v6147 = vpack.c.b16 %v6123, %v6121
    %v6148 = vpack.c.b16 %v6124, %v6122
    %v6149 = vpack.c.b16 %v6127, %v6125
    %v6150 = vpack.c.b16 %v6128, %v6126
    %v6151 = vpack.c.b16 %v6131, %v6129
    %v6152 = vpack.c.b16 %v6132, %v6130
    %v6153 = vpack.c.b16 %v6135, %v6133
    %v6154 = vpack.c.b16 %v6136, %v6134
    %v6155 = vpack.c.b16 %v6139, %v6137
    %v6156 = vpack.c.b16 %v6140, %v6138
    %6173 = vmatpush.bf16.msra.mxu0 %v6155
    %6174 = vmatpush.bf16.msra.mxu0 %v6153
    %6175 = vmatpush.bf16.msra.mxu0 %v6151
    %6176 = vmatpush.bf16.msra.mxu0 %v6149
    %6177 = vmatpush.bf16.msra.mxu0 %v6147
    %6178 = vmatpush.bf16.msra.mxu0 %v6145
    %6179 = vmatpush.bf16.msra.mxu0 %v6143
    %6180 = vmatpush.bf16.msra.mxu0 %v6141
    %6181 = vmatmul.bf16.gmra.mxu0 %v6044
    %v6182 = vpop.f32.mrf.mxu0
    %v6183 = vadd.f32 0.0, %v6182
    %v6184 = vpop.f32.mrf.mxu0
    %v6185 = vadd.f32 0.0, %v6184
    %6186 = vmatmul.bf16.gmra.mxu0 %v6045
    %v6187 = vpop.f32.mrf.mxu0
    %v6188 = vadd.f32 0.0, %v6187
    %v6189 = vpop.f32.mrf.mxu0
    %v6190 = vadd.f32 0.0, %v6189
    %6191 = vmatmul.bf16.gmra.mxu0 %v6046
    %v6192 = vpop.f32.mrf.mxu0
    %v6193 = vadd.f32 0.0, %v6192
    %v6194 = vpop.f32.mrf.mxu0
    %v6195 = vadd.f32 0.0, %v6194
    %6196 = vmatmul.bf16.gmra.mxu0 %v6047
    %v6197 = vpop.f32.mrf.mxu0
    %v6198 = vadd.f32 0.0, %v6197
    %v6199 = vpop.f32.mrf.mxu0
    %v6200 = vadd.f32 0.0, %v6199
    %6201 = vmatmul.bf16.gmra.mxu0 %v6048
    %v6202 = vpop.f32.mrf.mxu0
    %v6203 = vadd.f32 0.0, %v6202
    %v6204 = vpop.f32.mrf.mxu0
    %v6205 = vadd.f32 0.0, %v6204
    %6206 = vmatmul.bf16.gmra.mxu0 %v6049
    %v6207 = vpop.f32.mrf.mxu0
    %v6208 = vadd.f32 0.0, %v6207
    %v6209 = vpop.f32.mrf.mxu0
    %v6210 = vadd.f32 0.0, %v6209
    %6211 = vmatmul.bf16.gmra.mxu0 %v6050
    %v6212 = vpop.f32.mrf.mxu0
    %v6213 = vadd.f32 0.0, %v6212
    %v6214 = vpop.f32.mrf.mxu0
    %v6215 = vadd.f32 0.0, %v6214
    %6216 = vmatmul.bf16.gmra.mxu0 %v6051
    %v6217 = vpop.f32.mrf.mxu0
    %v6218 = vadd.f32 0.0, %v6217
    %v6219 = vpop.f32.mrf.mxu0
    %v6220 = vadd.f32 0.0, %v6219
    %6221 = vmatmul.bf16.gmra.mxu0 %v6052
    %v6222 = vpop.f32.mrf.mxu0
    %v6223 = vadd.f32 0.0, %v6222
    %v6224 = vpop.f32.mrf.mxu0
    %v6225 = vadd.f32 0.0, %v6224
    %6226 = vmatmul.bf16.gmra.mxu0 %v6053
    %v6227 = vpop.f32.mrf.mxu0
    %v6228 = vadd.f32 0.0, %v6227
    %v6229 = vpop.f32.mrf.mxu0
    %v6230 = vadd.f32 0.0, %v6229
    %6231 = vmatmul.bf16.gmra.mxu0 %v6054
    %v6232 = vpop.f32.mrf.mxu0
    %v6233 = vadd.f32 0.0, %v6232
    %v6234 = vpop.f32.mrf.mxu0
    %v6235 = vadd.f32 0.0, %v6234
    %6236 = vmatmul.bf16.gmra.mxu0 %v6055
    %v6237 = vpop.f32.mrf.mxu0
    %v6238 = vadd.f32 0.0, %v6237
    %v6239 = vpop.f32.mrf.mxu0
    %v6240 = vadd.f32 0.0, %v6239
    %6241 = vmatmul.bf16.gmra.mxu0 %v6056
    %v6242 = vpop.f32.mrf.mxu0
    %v6243 = vadd.f32 0.0, %v6242
    %v6244 = vpop.f32.mrf.mxu0
    %v6245 = vadd.f32 0.0, %v6244
    %6246 = vmatmul.bf16.gmra.mxu0 %v6057
    %v6247 = vpop.f32.mrf.mxu0
    %v6248 = vadd.f32 0.0, %v6247
    %v6249 = vpop.f32.mrf.mxu0
    %v6250 = vadd.f32 0.0, %v6249
    %6251 = vmatmul.bf16.gmra.mxu0 %v6058
    %v6252 = vpop.f32.mrf.mxu0
    %v6253 = vadd.f32 0.0, %v6252
    %v6254 = vpop.f32.mrf.mxu0
    %v6255 = vadd.f32 0.0, %v6254
    %6256 = vmatmul.bf16.gmra.mxu0 %v6059
    %v6257 = vpop.f32.mrf.mxu0
    %v6258 = vadd.f32 0.0, %v6257
    %v6259 = vpop.f32.mrf.mxu0
    %v6260 = vadd.f32 0.0, %v6259
    %6261 = vmatmul.bf16.gmra.mxu0 %v6060
    %v6262 = vpop.f32.mrf.mxu0
    %v6263 = vadd.f32 0.0, %v6262
    %v6264 = vpop.f32.mrf.mxu0
    %v6265 = vadd.f32 0.0, %v6264
    %6266 = vmatmul.bf16.gmra.mxu0 %v6061
    %v6267 = vpop.f32.mrf.mxu0
    %v6268 = vadd.f32 0.0, %v6267
    %v6269 = vpop.f32.mrf.mxu0
    %v6270 = vadd.f32 0.0, %v6269
    %6271 = vmatmul.bf16.gmra.mxu0 %v6062
    %v6272 = vpop.f32.mrf.mxu0
    %v6273 = vadd.f32 0.0, %v6272
    %v6274 = vpop.f32.mrf.mxu0
    %v6275 = vadd.f32 0.0, %v6274
    %6276 = vmatmul.bf16.gmra.mxu0 %v6063
    %v6277 = vpop.f32.mrf.mxu0
    %v6278 = vadd.f32 0.0, %v6277
    %v6279 = vpop.f32.mrf.mxu0
    %v6280 = vadd.f32 0.0, %v6279
    %6281 = vmatmul.bf16.gmra.mxu0 %v6064
    %v6282 = vpop.f32.mrf.mxu0
    %v6283 = vadd.f32 0.0, %v6282
    %v6284 = vpop.f32.mrf.mxu0
    %v6285 = vadd.f32 0.0, %v6284
    %6286 = vmatmul.bf16.gmra.mxu0 %v6065
    %v6287 = vpop.f32.mrf.mxu0
    %v6288 = vadd.f32 0.0, %v6287
    %v6289 = vpop.f32.mrf.mxu0
    %v6290 = vadd.f32 0.0, %v6289
    %6291 = vmatmul.bf16.gmra.mxu0 %v6066
    %v6292 = vpop.f32.mrf.mxu0
    %v6293 = vadd.f32 0.0, %v6292
    %v6294 = vpop.f32.mrf.mxu0
    %v6295 = vadd.f32 0.0, %v6294
    %6296 = vmatmul.bf16.gmra.mxu0 %v6067
    %v6297 = vpop.f32.mrf.mxu0
    %v6298 = vadd.f32 0.0, %v6297
    %v6299 = vpop.f32.mrf.mxu0
    %v6300 = vadd.f32 0.0, %v6299
    %6301 = vmatmul.bf16.gmra.mxu0 %v6068
    %v6302 = vpop.f32.mrf.mxu0
    %v6303 = vadd.f32 0.0, %v6302
    %v6304 = vpop.f32.mrf.mxu0
    %v6305 = vadd.f32 0.0, %v6304
    %6306 = vmatmul.bf16.gmra.mxu0 %v6069
    %v6307 = vpop.f32.mrf.mxu0
    %v6308 = vadd.f32 0.0, %v6307
    %v6309 = vpop.f32.mrf.mxu0
    %v6310 = vadd.f32 0.0, %v6309
    %6311 = vmatmul.bf16.gmra.mxu0 %v6070
    %v6312 = vpop.f32.mrf.mxu0
    %v6313 = vadd.f32 0.0, %v6312
    %v6314 = vpop.f32.mrf.mxu0
    %v6315 = vadd.f32 0.0, %v6314
    %6316 = vmatmul.bf16.gmra.mxu0 %v6071
    %v6317 = vpop.f32.mrf.mxu0
    %v6318 = vadd.f32 0.0, %v6317
    %v6319 = vpop.f32.mrf.mxu0
    %v6320 = vadd.f32 0.0, %v6319
    %6321 = vmatmul.bf16.gmra.mxu0 %v6072
    %v6322 = vpop.f32.mrf.mxu0
    %v6323 = vadd.f32 0.0, %v6322
    %v6324 = vpop.f32.mrf.mxu0
    %v6325 = vadd.f32 0.0, %v6324
    %6326 = vmatmul.bf16.gmra.mxu0 %v6073
    %v6327 = vpop.f32.mrf.mxu0
    %v6328 = vadd.f32 0.0, %v6327
    %v6329 = vpop.f32.mrf.mxu0
    %v6330 = vadd.f32 0.0, %v6329
    %6331 = vmatmul.bf16.gmra.mxu0 %v6074
    %v6332 = vpop.f32.mrf.mxu0
    %v6333 = vadd.f32 0.0, %v6332
    %v6334 = vpop.f32.mrf.mxu0
    %v6335 = vadd.f32 0.0, %v6334
    %6336 = vmatmul.bf16.gmra.mxu0 %v6075
    %v6337 = vpop.f32.mrf.mxu0
    %v6338 = vadd.f32 0.0, %v6337
    %v6339 = vpop.f32.mrf.mxu0
    %v6340 = vadd.f32 0.0, %v6339
    %6341 = vdwg.mxu0
    %6342 = vmatpush.bf16.msra.mxu0 %v6156
    %6343 = vmatpush.bf16.msra.mxu0 %v6154
    %6344 = vmatpush.bf16.msra.mxu0 %v6152
    %6345 = vmatpush.bf16.msra.mxu0 %v6150
    %6346 = vmatpush.bf16.msra.mxu0 %v6148
    %6347 = vmatpush.bf16.msra.mxu0 %v6146
    %6348 = vmatpush.bf16.msra.mxu0 %v6144
    %6349 = vmatpush.bf16.msra.mxu0 %v6142
    %6350 = vmatmul.bf16.gmra.mxu0 %v6044
    %v6351 = vpop.f32.mrf.mxu0
    %v6352 = vadd.f32 0.0, %v6351
    %v6353 = vpop.f32.mrf.mxu0
    %v6354 = vadd.f32 0.0, %v6353
    %6355 = vmatmul.bf16.gmra.mxu0 %v6045
    %v6356 = vpop.f32.mrf.mxu0
    %v6357 = vadd.f32 0.0, %v6356
    %v6358 = vpop.f32.mrf.mxu0
    %v6359 = vadd.f32 0.0, %v6358
    %6360 = vmatmul.bf16.gmra.mxu0 %v6046
    %v6361 = vpop.f32.mrf.mxu0
    %v6362 = vadd.f32 0.0, %v6361
    %v6363 = vpop.f32.mrf.mxu0
    %v6364 = vadd.f32 0.0, %v6363
    %6365 = vmatmul.bf16.gmra.mxu0 %v6047
    %v6366 = vpop.f32.mrf.mxu0
    %v6367 = vadd.f32 0.0, %v6366
    %v6368 = vpop.f32.mrf.mxu0
    %v6369 = vadd.f32 0.0, %v6368
    %6370 = vmatmul.bf16.gmra.mxu0 %v6048
    %v6371 = vpop.f32.mrf.mxu0
    %v6372 = vadd.f32 0.0, %v6371
    %v6373 = vpop.f32.mrf.mxu0
    %v6374 = vadd.f32 0.0, %v6373
    %6375 = vmatmul.bf16.gmra.mxu0 %v6049
    %v6376 = vpop.f32.mrf.mxu0
    %v6377 = vadd.f32 0.0, %v6376
    %v6378 = vpop.f32.mrf.mxu0
    %v6379 = vadd.f32 0.0, %v6378
    %6380 = vmatmul.bf16.gmra.mxu0 %v6050
    %v6381 = vpop.f32.mrf.mxu0
    %v6382 = vadd.f32 0.0, %v6381
    %v6383 = vpop.f32.mrf.mxu0
    %v6384 = vadd.f32 0.0, %v6383
    %6385 = vmatmul.bf16.gmra.mxu0 %v6051
    %v6386 = vpop.f32.mrf.mxu0
    %v6387 = vadd.f32 0.0, %v6386
    %v6388 = vpop.f32.mrf.mxu0
    %v6389 = vadd.f32 0.0, %v6388
    %6390 = vmatmul.bf16.gmra.mxu0 %v6052
    %v6391 = vpop.f32.mrf.mxu0
    %v6392 = vadd.f32 0.0, %v6391
    %v6393 = vpop.f32.mrf.mxu0
    %v6394 = vadd.f32 0.0, %v6393
    %6395 = vmatmul.bf16.gmra.mxu0 %v6053
    %v6396 = vpop.f32.mrf.mxu0
    %v6397 = vadd.f32 0.0, %v6396
    %v6398 = vpop.f32.mrf.mxu0
    %v6399 = vadd.f32 0.0, %v6398
    %6400 = vmatmul.bf16.gmra.mxu0 %v6054
    %v6401 = vpop.f32.mrf.mxu0
    %v6402 = vadd.f32 0.0, %v6401
    %v6403 = vpop.f32.mrf.mxu0
    %v6404 = vadd.f32 0.0, %v6403
    %6405 = vmatmul.bf16.gmra.mxu0 %v6055
    %v6406 = vpop.f32.mrf.mxu0
    %v6407 = vadd.f32 0.0, %v6406
    %v6408 = vpop.f32.mrf.mxu0
    %v6409 = vadd.f32 0.0, %v6408
    %6410 = vmatmul.bf16.gmra.mxu0 %v6056
    %v6411 = vpop.f32.mrf.mxu0
    %v6412 = vadd.f32 0.0, %v6411
    %v6413 = vpop.f32.mrf.mxu0
    %v6414 = vadd.f32 0.0, %v6413
    %6415 = vmatmul.bf16.gmra.mxu0 %v6057
    %v6416 = vpop.f32.mrf.mxu0
    %v6417 = vadd.f32 0.0, %v6416
    %v6418 = vpop.f32.mrf.mxu0
    %v6419 = vadd.f32 0.0, %v6418
    %6420 = vmatmul.bf16.gmra.mxu0 %v6058
    %v6421 = vpop.f32.mrf.mxu0
    %v6422 = vadd.f32 0.0, %v6421
    %v6423 = vpop.f32.mrf.mxu0
    %v6424 = vadd.f32 0.0, %v6423
    %6425 = vmatmul.bf16.gmra.mxu0 %v6059
    %v6426 = vpop.f32.mrf.mxu0
    %v6427 = vadd.f32 0.0, %v6426
    %v6428 = vpop.f32.mrf.mxu0
    %v6429 = vadd.f32 0.0, %v6428
    %6430 = vmatmul.bf16.gmra.mxu0 %v6060
    %v6431 = vpop.f32.mrf.mxu0
    %v6432 = vadd.f32 0.0, %v6431
    %v6433 = vpop.f32.mrf.mxu0
    %v6434 = vadd.f32 0.0, %v6433
    %6435 = vmatmul.bf16.gmra.mxu0 %v6061
    %v6436 = vpop.f32.mrf.mxu0
    %v6437 = vadd.f32 0.0, %v6436
    %v6438 = vpop.f32.mrf.mxu0
    %v6439 = vadd.f32 0.0, %v6438
    %6440 = vmatmul.bf16.gmra.mxu0 %v6062
    %v6441 = vpop.f32.mrf.mxu0
    %v6442 = vadd.f32 0.0, %v6441
    %v6443 = vpop.f32.mrf.mxu0
    %v6444 = vadd.f32 0.0, %v6443
    %6445 = vmatmul.bf16.gmra.mxu0 %v6063
    %v6446 = vpop.f32.mrf.mxu0
    %v6447 = vadd.f32 0.0, %v6446
    %v6448 = vpop.f32.mrf.mxu0
    %v6449 = vadd.f32 0.0, %v6448
    %6450 = vmatmul.bf16.gmra.mxu0 %v6064
    %v6451 = vpop.f32.mrf.mxu0
    %v6452 = vadd.f32 0.0, %v6451
    %v6453 = vpop.f32.mrf.mxu0
    %v6454 = vadd.f32 0.0, %v6453
    %6455 = vmatmul.bf16.gmra.mxu0 %v6065
    %v6456 = vpop.f32.mrf.mxu0
    %v6457 = vadd.f32 0.0, %v6456
    %v6458 = vpop.f32.mrf.mxu0
    %v6459 = vadd.f32 0.0, %v6458
    %6460 = vmatmul.bf16.gmra.mxu0 %v6066
    %v6461 = vpop.f32.mrf.mxu0
    %v6462 = vadd.f32 0.0, %v6461
    %v6463 = vpop.f32.mrf.mxu0
    %v6464 = vadd.f32 0.0, %v6463
    %6465 = vmatmul.bf16.gmra.mxu0 %v6067
    %v6466 = vpop.f32.mrf.mxu0
    %v6467 = vadd.f32 0.0, %v6466
    %v6468 = vpop.f32.mrf.mxu0
    %v6469 = vadd.f32 0.0, %v6468
    %6470 = vmatmul.bf16.gmra.mxu0 %v6068
    %v6471 = vpop.f32.mrf.mxu0
    %v6472 = vadd.f32 0.0, %v6471
    %v6473 = vpop.f32.mrf.mxu0
    %v6474 = vadd.f32 0.0, %v6473
    %6475 = vmatmul.bf16.gmra.mxu0 %v6069
    %v6476 = vpop.f32.mrf.mxu0
    %v6477 = vadd.f32 0.0, %v6476
    %v6478 = vpop.f32.mrf.mxu0
    %v6479 = vadd.f32 0.0, %v6478
    %6480 = vmatmul.bf16.gmra.mxu0 %v6070
    %v6481 = vpop.f32.mrf.mxu0
    %v6482 = vadd.f32 0.0, %v6481
    %v6483 = vpop.f32.mrf.mxu0
    %v6484 = vadd.f32 0.0, %v6483
    %6485 = vmatmul.bf16.gmra.mxu0 %v6071
    %v6486 = vpop.f32.mrf.mxu0
    %v6487 = vadd.f32 0.0, %v6486
    %v6488 = vpop.f32.mrf.mxu0
    %v6489 = vadd.f32 0.0, %v6488
    %6490 = vmatmul.bf16.gmra.mxu0 %v6072
    %v6491 = vpop.f32.mrf.mxu0
    %v6492 = vadd.f32 0.0, %v6491
    %v6493 = vpop.f32.mrf.mxu0
    %v6494 = vadd.f32 0.0, %v6493
    %6495 = vmatmul.bf16.gmra.mxu0 %v6073
    %v6496 = vpop.f32.mrf.mxu0
    %v6497 = vadd.f32 0.0, %v6496
    %v6498 = vpop.f32.mrf.mxu0
    %v6499 = vadd.f32 0.0, %v6498
    %6500 = vmatmul.bf16.gmra.mxu0 %v6074
    %v6501 = vpop.f32.mrf.mxu0
    %v6502 = vadd.f32 0.0, %v6501
    %v6503 = vpop.f32.mrf.mxu0
    %v6504 = vadd.f32 0.0, %v6503
    %6505 = vmatmul.bf16.gmra.mxu0 %v6075
    %v6506 = vpop.f32.mrf.mxu0
    %v6507 = vadd.f32 0.0, %v6506
    %v6508 = vpop.f32.mrf.mxu0
    %v6509 = vadd.f32 0.0, %v6508
    %6510 = vdwg.mxu0
    %v6511 = vadd.f32 %v5716, %v6183
    %v6512 = vadd.f32 %v5885, %v6352
    %v6513 = vadd.f32 %v5718, %v6185
    %v6514 = vadd.f32 %v5887, %v6354
    %v6515 = vadd.f32 %v5721, %v6188
    %v6516 = vadd.f32 %v5890, %v6357
    %v6517 = vadd.f32 %v5723, %v6190
    %v6518 = vadd.f32 %v5892, %v6359
    %v6519 = vadd.f32 %v5726, %v6193
    %v6520 = vadd.f32 %v5895, %v6362
    %v6521 = vadd.f32 %v5728, %v6195
    %v6522 = vadd.f32 %v5897, %v6364
    %v6523 = vadd.f32 %v5731, %v6198
    %v6524 = vadd.f32 %v5900, %v6367
    %v6525 = vadd.f32 %v5733, %v6200
    %v6526 = vadd.f32 %v5902, %v6369
    %v6527 = vadd.f32 %v5736, %v6203
    %v6528 = vadd.f32 %v5905, %v6372
    %v6529 = vadd.f32 %v5738, %v6205
    %v6530 = vadd.f32 %v5907, %v6374
    %v6531 = vadd.f32 %v5741, %v6208
    %v6532 = vadd.f32 %v5910, %v6377
    %v6533 = vadd.f32 %v5743, %v6210
    %v6534 = vadd.f32 %v5912, %v6379
    %v6535 = vadd.f32 %v5746, %v6213
    %v6536 = vadd.f32 %v5915, %v6382
    %v6537 = vadd.f32 %v5748, %v6215
    %v6538 = vadd.f32 %v5917, %v6384
    %v6539 = vadd.f32 %v5751, %v6218
    %v6540 = vadd.f32 %v5920, %v6387
    %v6541 = vadd.f32 %v5753, %v6220
    %v6542 = vadd.f32 %v5922, %v6389
    %v6543 = vadd.f32 %v5756, %v6223
    %v6544 = vadd.f32 %v5925, %v6392
    %v6545 = vadd.f32 %v5758, %v6225
    %v6546 = vadd.f32 %v5927, %v6394
    %v6547 = vadd.f32 %v5761, %v6228
    %v6548 = vadd.f32 %v5930, %v6397
    %v6549 = vadd.f32 %v5763, %v6230
    %v6550 = vadd.f32 %v5932, %v6399
    %v6551 = vadd.f32 %v5766, %v6233
    %v6552 = vadd.f32 %v5935, %v6402
    %v6553 = vadd.f32 %v5768, %v6235
    %v6554 = vadd.f32 %v5937, %v6404
    %v6555 = vadd.f32 %v5771, %v6238
    %v6556 = vadd.f32 %v5940, %v6407
    %v6557 = vadd.f32 %v5773, %v6240
    %v6558 = vadd.f32 %v5942, %v6409
    %v6559 = vadd.f32 %v5776, %v6243
    %v6560 = vadd.f32 %v5945, %v6412
    %v6561 = vadd.f32 %v5778, %v6245
    %v6562 = vadd.f32 %v5947, %v6414
    %v6563 = vadd.f32 %v5781, %v6248
    %v6564 = vadd.f32 %v5950, %v6417
    %v6565 = vadd.f32 %v5783, %v6250
    %v6566 = vadd.f32 %v5952, %v6419
    %v6567 = vadd.f32 %v5786, %v6253
    %v6568 = vadd.f32 %v5955, %v6422
    %v6569 = vadd.f32 %v5788, %v6255
    %v6570 = vadd.f32 %v5957, %v6424
    %v6571 = vadd.f32 %v5791, %v6258
    %v6572 = vadd.f32 %v5960, %v6427
    %v6573 = vadd.f32 %v5793, %v6260
    %v6574 = vadd.f32 %v5962, %v6429
    %v6575 = vadd.f32 %v5796, %v6263
    %v6576 = vadd.f32 %v5965, %v6432
    %v6577 = vadd.f32 %v5798, %v6265
    %v6578 = vadd.f32 %v5967, %v6434
    %v6579 = vadd.f32 %v5801, %v6268
    %v6580 = vadd.f32 %v5970, %v6437
    %v6581 = vadd.f32 %v5803, %v6270
    %v6582 = vadd.f32 %v5972, %v6439
    %v6583 = vadd.f32 %v5806, %v6273
    %v6584 = vadd.f32 %v5975, %v6442
    %v6585 = vadd.f32 %v5808, %v6275
    %v6586 = vadd.f32 %v5977, %v6444
    %v6587 = vadd.f32 %v5811, %v6278
    %v6588 = vadd.f32 %v5980, %v6447
    %v6589 = vadd.f32 %v5813, %v6280
    %v6590 = vadd.f32 %v5982, %v6449
    %v6591 = vadd.f32 %v5816, %v6283
    %v6592 = vadd.f32 %v5985, %v6452
    %v6593 = vadd.f32 %v5818, %v6285
    %v6594 = vadd.f32 %v5987, %v6454
    %v6595 = vadd.f32 %v5821, %v6288
    %v6596 = vadd.f32 %v5990, %v6457
    %v6597 = vadd.f32 %v5823, %v6290
    %v6598 = vadd.f32 %v5992, %v6459
    %v6599 = vadd.f32 %v5826, %v6293
    %v6600 = vadd.f32 %v5995, %v6462
    %v6601 = vadd.f32 %v5828, %v6295
    %v6602 = vadd.f32 %v5997, %v6464
    %v6603 = vadd.f32 %v5831, %v6298
    %v6604 = vadd.f32 %v6000, %v6467
    %v6605 = vadd.f32 %v5833, %v6300
    %v6606 = vadd.f32 %v6002, %v6469
    %v6607 = vadd.f32 %v5836, %v6303
    %v6608 = vadd.f32 %v6005, %v6472
    %v6609 = vadd.f32 %v5838, %v6305
    %v6610 = vadd.f32 %v6007, %v6474
    %v6611 = vadd.f32 %v5841, %v6308
    %v6612 = vadd.f32 %v6010, %v6477
    %v6613 = vadd.f32 %v5843, %v6310
    %v6614 = vadd.f32 %v6012, %v6479
    %v6615 = vadd.f32 %v5846, %v6313
    %v6616 = vadd.f32 %v6015, %v6482
    %v6617 = vadd.f32 %v5848, %v6315
    %v6618 = vadd.f32 %v6017, %v6484
    %v6619 = vadd.f32 %v5851, %v6318
    %v6620 = vadd.f32 %v6020, %v6487
    %v6621 = vadd.f32 %v5853, %v6320
    %v6622 = vadd.f32 %v6022, %v6489
    %v6623 = vadd.f32 %v5856, %v6323
    %v6624 = vadd.f32 %v6025, %v6492
    %v6625 = vadd.f32 %v5858, %v6325
    %v6626 = vadd.f32 %v6027, %v6494
    %v6627 = vadd.f32 %v5861, %v6328
    %v6628 = vadd.f32 %v6030, %v6497
    %v6629 = vadd.f32 %v5863, %v6330
    %v6630 = vadd.f32 %v6032, %v6499
    %v6631 = vadd.f32 %v5866, %v6333
    %v6632 = vadd.f32 %v6035, %v6502
    %v6633 = vadd.f32 %v5868, %v6335
    %v6634 = vadd.f32 %v6037, %v6504
    %v6635 = vadd.f32 %v5871, %v6338
    %v6636 = vadd.f32 %v6040, %v6507
    %v6637 = vadd.f32 %v5873, %v6340
    %v6638 = vadd.f32 %v6042, %v6509
    %v6639 = vld [vmem:[%s3] sm:$0x3]
    %v6641 = vperm.slane %v6639, 0
    %v6642 = vperm.slane %v6639, 1
    %v6645 = vadd.f32 %v6511, %v6641
    %v6646 = vadd.f32 %v6512, %v6642
    %v6647 = vadd.f32 %v6513, %v6641
    %v6648 = vadd.f32 %v6514, %v6642
    %v6649 = vadd.f32 %v6515, %v6641
    %v6650 = vadd.f32 %v6516, %v6642
    %v6651 = vadd.f32 %v6517, %v6641
    %v6652 = vadd.f32 %v6518, %v6642
    %v6653 = vadd.f32 %v6519, %v6641
    %v6654 = vadd.f32 %v6520, %v6642
    %v6655 = vadd.f32 %v6521, %v6641
    %v6656 = vadd.f32 %v6522, %v6642
    %v6657 = vadd.f32 %v6523, %v6641
    %v6658 = vadd.f32 %v6524, %v6642
    %v6659 = vadd.f32 %v6525, %v6641
    %v6660 = vadd.f32 %v6526, %v6642
    %v6661 = vadd.f32 %v6527, %v6641
    %v6662 = vadd.f32 %v6528, %v6642
    %v6663 = vadd.f32 %v6529, %v6641
    %v6664 = vadd.f32 %v6530, %v6642
    %v6665 = vadd.f32 %v6531, %v6641
    %v6666 = vadd.f32 %v6532, %v6642
    %v6667 = vadd.f32 %v6533, %v6641
    %v6668 = vadd.f32 %v6534, %v6642
    %v6669 = vadd.f32 %v6535, %v6641
    %v6670 = vadd.f32 %v6536, %v6642
    %v6671 = vadd.f32 %v6537, %v6641
    %v6672 = vadd.f32 %v6538, %v6642
    %v6673 = vadd.f32 %v6539, %v6641
    %v6674 = vadd.f32 %v6540, %v6642
    %v6675 = vadd.f32 %v6541, %v6641
    %v6676 = vadd.f32 %v6542, %v6642
    %v6677 = vadd.f32 %v6543, %v6641
    %v6678 = vadd.f32 %v6544, %v6642
    %v6679 = vadd.f32 %v6545, %v6641
    %v6680 = vadd.f32 %v6546, %v6642
    %v6681 = vadd.f32 %v6547, %v6641
    %v6682 = vadd.f32 %v6548, %v6642
    %v6683 = vadd.f32 %v6549, %v6641
    %v6684 = vadd.f32 %v6550, %v6642
    %v6685 = vadd.f32 %v6551, %v6641
    %v6686 = vadd.f32 %v6552, %v6642
    %v6687 = vadd.f32 %v6553, %v6641
    %v6688 = vadd.f32 %v6554, %v6642
    %v6689 = vadd.f32 %v6555, %v6641
    %v6690 = vadd.f32 %v6556, %v6642
    %v6691 = vadd.f32 %v6557, %v6641
    %v6692 = vadd.f32 %v6558, %v6642
    %v6693 = vadd.f32 %v6559, %v6641
    %v6694 = vadd.f32 %v6560, %v6642
    %v6695 = vadd.f32 %v6561, %v6641
    %v6696 = vadd.f32 %v6562, %v6642
    %v6697 = vadd.f32 %v6563, %v6641
    %v6698 = vadd.f32 %v6564, %v6642
    %v6699 = vadd.f32 %v6565, %v6641
    %v6700 = vadd.f32 %v6566, %v6642
    %v6701 = vadd.f32 %v6567, %v6641
    %v6702 = vadd.f32 %v6568, %v6642
    %v6703 = vadd.f32 %v6569, %v6641
    %v6704 = vadd.f32 %v6570, %v6642
    %v6705 = vadd.f32 %v6571, %v6641
    %v6706 = vadd.f32 %v6572, %v6642
    %v6707 = vadd.f32 %v6573, %v6641
    %v6708 = vadd.f32 %v6574, %v6642
    %v6709 = vadd.f32 %v6575, %v6641
    %v6710 = vadd.f32 %v6576, %v6642
    %v6711 = vadd.f32 %v6577, %v6641
    %v6712 = vadd.f32 %v6578, %v6642
    %v6713 = vadd.f32 %v6579, %v6641
    %v6714 = vadd.f32 %v6580, %v6642
    %v6715 = vadd.f32 %v6581, %v6641
    %v6716 = vadd.f32 %v6582, %v6642
    %v6717 = vadd.f32 %v6583, %v6641
    %v6718 = vadd.f32 %v6584, %v6642
    %v6719 = vadd.f32 %v6585, %v6641
    %v6720 = vadd.f32 %v6586, %v6642
    %v6721 = vadd.f32 %v6587, %v6641
    %v6722 = vadd.f32 %v6588, %v6642
    %v6723 = vadd.f32 %v6589, %v6641
    %v6724 = vadd.f32 %v6590, %v6642
    %v6725 = vadd.f32 %v6591, %v6641
    %v6726 = vadd.f32 %v6592, %v6642
    %v6727 = vadd.f32 %v6593, %v6641
    %v6728 = vadd.f32 %v6594, %v6642
    %v6729 = vadd.f32 %v6595, %v6641
    %v6730 = vadd.f32 %v6596, %v6642
    %v6731 = vadd.f32 %v6597, %v6641
    %v6732 = vadd.f32 %v6598, %v6642
    %v6733 = vadd.f32 %v6599, %v6641
    %v6734 = vadd.f32 %v6600, %v6642
    %v6735 = vadd.f32 %v6601, %v6641
    %v6736 = vadd.f32 %v6602, %v6642
    %v6737 = vadd.f32 %v6603, %v6641
    %v6738 = vadd.f32 %v6604, %v6642
    %v6739 = vadd.f32 %v6605, %v6641
    %v6740 = vadd.f32 %v6606, %v6642
    %v6741 = vadd.f32 %v6607, %v6641
    %v6742 = vadd.f32 %v6608, %v6642
    %v6743 = vadd.f32 %v6609, %v6641
    %v6744 = vadd.f32 %v6610, %v6642
    %v6745 = vadd.f32 %v6611, %v6641
    %v6746 = vadd.f32 %v6612, %v6642
    %v6747 = vadd.f32 %v6613, %v6641
    %v6748 = vadd.f32 %v6614, %v6642
    %v6749 = vadd.f32 %v6615, %v6641
    %v6750 = vadd.f32 %v6616, %v6642
    %v6751 = vadd.f32 %v6617, %v6641
    %v6752 = vadd.f32 %v6618, %v6642
    %v6753 = vadd.f32 %v6619, %v6641
    %v6754 = vadd.f32 %v6620, %v6642
    %v6755 = vadd.f32 %v6621, %v6641
    %v6756 = vadd.f32 %v6622, %v6642
    %v6757 = vadd.f32 %v6623, %v6641
    %v6758 = vadd.f32 %v6624, %v6642
    %v6759 = vadd.f32 %v6625, %v6641
    %v6760 = vadd.f32 %v6626, %v6642
    %v6761 = vadd.f32 %v6627, %v6641
    %v6762 = vadd.f32 %v6628, %v6642
    %v6763 = vadd.f32 %v6629, %v6641
    %v6764 = vadd.f32 %v6630, %v6642
    %v6765 = vadd.f32 %v6631, %v6641
    %v6766 = vadd.f32 %v6632, %v6642
    %v6767 = vadd.f32 %v6633, %v6641
    %v6768 = vadd.f32 %v6634, %v6642
    %v6769 = vadd.f32 %v6635, %v6641
    %v6770 = vadd.f32 %v6636, %v6642
    %v6771 = vadd.f32 %v6637, %v6641
    %v6772 = vadd.f32 %v6638, %v6642
    %v6773 = vmax.f32 %v6645, 0.0
    %v6774 = vmax.f32 %v6646, 0.0
    %v6775 = vmax.f32 %v6647, 0.0
    %v6776 = vmax.f32 %v6648, 0.0
    %v6777 = vmax.f32 %v6649, 0.0
    %v6778 = vmax.f32 %v6650, 0.0
    %v6779 = vmax.f32 %v6651, 0.0
    %v6780 = vmax.f32 %v6652, 0.0
    %v6781 = vmax.f32 %v6653, 0.0
    %v6782 = vmax.f32 %v6654, 0.0
    %v6783 = vmax.f32 %v6655, 0.0
    %v6784 = vmax.f32 %v6656, 0.0
    %v6785 = vmax.f32 %v6657, 0.0
    %v6786 = vmax.f32 %v6658, 0.0
    %v6787 = vmax.f32 %v6659, 0.0
    %v6788 = vmax.f32 %v6660, 0.0
    %v6789 = vmax.f32 %v6661, 0.0
    %v6790 = vmax.f32 %v6662, 0.0
    %v6791 = vmax.f32 %v6663, 0.0
    %v6792 = vmax.f32 %v6664, 0.0
    %v6793 = vmax.f32 %v6665, 0.0
    %v6794 = vmax.f32 %v6666, 0.0
    %v6795 = vmax.f32 %v6667, 0.0
    %v6796 = vmax.f32 %v6668, 0.0
    %v6797 = vmax.f32 %v6669, 0.0
    %v6798 = vmax.f32 %v6670, 0.0
    %v6799 = vmax.f32 %v6671, 0.0
    %v6800 = vmax.f32 %v6672, 0.0
    %v6801 = vmax.f32 %v6673, 0.0
    %v6802 = vmax.f32 %v6674, 0.0
    %v6803 = vmax.f32 %v6675, 0.0
    %v6804 = vmax.f32 %v6676, 0.0
    %v6805 = vmax.f32 %v6677, 0.0
    %v6806 = vmax.f32 %v6678, 0.0
    %v6807 = vmax.f32 %v6679, 0.0
    %v6808 = vmax.f32 %v6680, 0.0
    %v6809 = vmax.f32 %v6681, 0.0
    %v6810 = vmax.f32 %v6682, 0.0
    %v6811 = vmax.f32 %v6683, 0.0
    %v6812 = vmax.f32 %v6684, 0.0
    %v6813 = vmax.f32 %v6685, 0.0
    %v6814 = vmax.f32 %v6686, 0.0
    %v6815 = vmax.f32 %v6687, 0.0
    %v6816 = vmax.f32 %v6688, 0.0
    %v6817 = vmax.f32 %v6689, 0.0
    %v6818 = vmax.f32 %v6690, 0.0
    %v6819 = vmax.f32 %v6691, 0.0
    %v6820 = vmax.f32 %v6692, 0.0
    %v6821 = vmax.f32 %v6693, 0.0
    %v6822 = vmax.f32 %v6694, 0.0
    %v6823 = vmax.f32 %v6695, 0.0
    %v6824 = vmax.f32 %v6696, 0.0
    %v6825 = vmax.f32 %v6697, 0.0
    %v6826 = vmax.f32 %v6698, 0.0
    %v6827 = vmax.f32 %v6699, 0.0
    %v6828 = vmax.f32 %v6700, 0.0
    %v6829 = vmax.f32 %v6701, 0.0
    %v6830 = vmax.f32 %v6702, 0.0
    %v6831 = vmax.f32 %v6703, 0.0
    %v6832 = vmax.f32 %v6704, 0.0
    %v6833 = vmax.f32 %v6705, 0.0
    %v6834 = vmax.f32 %v6706, 0.0
    %v6835 = vmax.f32 %v6707, 0.0
    %v6836 = vmax.f32 %v6708, 0.0
    %v6837 = vmax.f32 %v6709, 0.0
    %v6838 = vmax.f32 %v6710, 0.0
    %v6839 = vmax.f32 %v6711, 0.0
    %v6840 = vmax.f32 %v6712, 0.0
    %v6841 = vmax.f32 %v6713, 0.0
    %v6842 = vmax.f32 %v6714, 0.0
    %v6843 = vmax.f32 %v6715, 0.0
    %v6844 = vmax.f32 %v6716, 0.0
    %v6845 = vmax.f32 %v6717, 0.0
    %v6846 = vmax.f32 %v6718, 0.0
    %v6847 = vmax.f32 %v6719, 0.0
    %v6848 = vmax.f32 %v6720, 0.0
    %v6849 = vmax.f32 %v6721, 0.0
    %v6850 = vmax.f32 %v6722, 0.0
    %v6851 = vmax.f32 %v6723, 0.0
    %v6852 = vmax.f32 %v6724, 0.0
    %v6853 = vmax.f32 %v6725, 0.0
    %v6854 = vmax.f32 %v6726, 0.0
    %v6855 = vmax.f32 %v6727, 0.0
    %v6856 = vmax.f32 %v6728, 0.0
    %v6857 = vmax.f32 %v6729, 0.0
    %v6858 = vmax.f32 %v6730, 0.0
    %v6859 = vmax.f32 %v6731, 0.0
    %v6860 = vmax.f32 %v6732, 0.0
    %v6861 = vmax.f32 %v6733, 0.0
    %v6862 = vmax.f32 %v6734, 0.0
    %v6863 = vmax.f32 %v6735, 0.0
    %v6864 = vmax.f32 %v6736, 0.0
    %v6865 = vmax.f32 %v6737, 0.0
    %v6866 = vmax.f32 %v6738, 0.0
    %v6867 = vmax.f32 %v6739, 0.0
    %v6868 = vmax.f32 %v6740, 0.0
    %v6869 = vmax.f32 %v6741, 0.0
    %v6870 = vmax.f32 %v6742, 0.0
    %v6871 = vmax.f32 %v6743, 0.0
    %v6872 = vmax.f32 %v6744, 0.0
    %v6873 = vmax.f32 %v6745, 0.0
    %v6874 = vmax.f32 %v6746, 0.0
    %v6875 = vmax.f32 %v6747, 0.0
    %v6876 = vmax.f32 %v6748, 0.0
    %v6877 = vmax.f32 %v6749, 0.0
    %v6878 = vmax.f32 %v6750, 0.0
    %v6879 = vmax.f32 %v6751, 0.0
    %v6880 = vmax.f32 %v6752, 0.0
    %v6881 = vmax.f32 %v6753, 0.0
    %v6882 = vmax.f32 %v6754, 0.0
    %v6883 = vmax.f32 %v6755, 0.0
    %v6884 = vmax.f32 %v6756, 0.0
    %v6885 = vmax.f32 %v6757, 0.0
    %v6886 = vmax.f32 %v6758, 0.0
    %v6887 = vmax.f32 %v6759, 0.0
    %v6888 = vmax.f32 %v6760, 0.0
    %v6889 = vmax.f32 %v6761, 0.0
    %v6890 = vmax.f32 %v6762, 0.0
    %v6891 = vmax.f32 %v6763, 0.0
    %v6892 = vmax.f32 %v6764, 0.0
    %v6893 = vmax.f32 %v6765, 0.0
    %v6894 = vmax.f32 %v6766, 0.0
    %v6895 = vmax.f32 %v6767, 0.0
    %v6896 = vmax.f32 %v6768, 0.0
    %v6897 = vmax.f32 %v6769, 0.0
    %v6898 = vmax.f32 %v6770, 0.0
    %v6899 = vmax.f32 %v6771, 0.0
    %v6900 = vmax.f32 %v6772, 0.0
    %v6901 = vrot.slane %v6773, 7
    %v6902 = vrot.slane %v6774, 7
    %v6903 = vrot.slane %v6775, 7
    %v6904 = vrot.slane %v6776, 7
    %v6905 = vrot.slane %v6777, 7
    %v6906 = vrot.slane %v6778, 7
    %v6907 = vrot.slane %v6779, 7
    %v6908 = vrot.slane %v6780, 7
    %v6909 = vrot.slane %v6781, 7
    %v6910 = vrot.slane %v6782, 7
    %v6911 = vrot.slane %v6783, 7
    %v6912 = vrot.slane %v6784, 7
    %v6913 = vrot.slane %v6785, 7
    %v6914 = vrot.slane %v6786, 7
    %v6915 = vrot.slane %v6787, 7
    %v6916 = vrot.slane %v6788, 7
    %v6917 = vrot.slane %v6789, 7
    %v6918 = vrot.slane %v6790, 7
    %v6919 = vrot.slane %v6791, 7
    %v6920 = vrot.slane %v6792, 7
    %v6921 = vrot.slane %v6793, 7
    %v6922 = vrot.slane %v6794, 7
    %v6923 = vrot.slane %v6795, 7
    %v6924 = vrot.slane %v6796, 7
    %v6925 = vrot.slane %v6797, 7
    %v6926 = vrot.slane %v6798, 7
    %v6927 = vrot.slane %v6799, 7
    %v6928 = vrot.slane %v6800, 7
    %v6929 = vrot.slane %v6801, 7
    %v6930 = vrot.slane %v6802, 7
    %v6931 = vrot.slane %v6803, 7
    %v6932 = vrot.slane %v6804, 7
    %v6933 = vrot.slane %v6805, 7
    %v6934 = vrot.slane %v6806, 7
    %v6935 = vrot.slane %v6807, 7
    %v6936 = vrot.slane %v6808, 7
    %v6937 = vrot.slane %v6809, 7
    %v6938 = vrot.slane %v6810, 7
    %v6939 = vrot.slane %v6811, 7
    %v6940 = vrot.slane %v6812, 7
    %v6941 = vrot.slane %v6813, 7
    %v6942 = vrot.slane %v6814, 7
    %v6943 = vrot.slane %v6815, 7
    %v6944 = vrot.slane %v6816, 7
    %v6945 = vrot.slane %v6817, 7
    %v6946 = vrot.slane %v6818, 7
    %v6947 = vrot.slane %v6819, 7
    %v6948 = vrot.slane %v6820, 7
    %v6949 = vrot.slane %v6821, 7
    %v6950 = vrot.slane %v6822, 7
    %v6951 = vrot.slane %v6823, 7
    %v6952 = vrot.slane %v6824, 7
    %v6953 = vrot.slane %v6825, 7
    %v6954 = vrot.slane %v6826, 7
    %v6955 = vrot.slane %v6827, 7
    %v6956 = vrot.slane %v6828, 7
    %v6957 = vrot.slane %v6829, 7
    %v6958 = vrot.slane %v6830, 7
    %v6959 = vrot.slane %v6831, 7
    %v6960 = vrot.slane %v6832, 7
    %v6961 = vrot.slane %v6833, 7
    %v6962 = vrot.slane %v6834, 7
    %v6963 = vrot.slane %v6835, 7
    %v6964 = vrot.slane %v6836, 7
    %v6965 = vrot.slane %v6837, 7
    %v6966 = vrot.slane %v6838, 7
    %v6967 = vrot.slane %v6839, 7
    %v6968 = vrot.slane %v6840, 7
    %v6969 = vrot.slane %v6841, 7
    %v6970 = vrot.slane %v6842, 7
    %v6971 = vrot.slane %v6843, 7
    %v6972 = vrot.slane %v6844, 7
    %v6973 = vrot.slane %v6845, 7
    %v6974 = vrot.slane %v6846, 7
    %v6975 = vrot.slane %v6847, 7
    %v6976 = vrot.slane %v6848, 7
    %v6977 = vrot.slane %v6849, 7
    %v6978 = vrot.slane %v6850, 7
    %v6979 = vrot.slane %v6851, 7
    %v6980 = vrot.slane %v6852, 7
    %v6981 = vrot.slane %v6853, 7
    %v6982 = vrot.slane %v6854, 7
    %v6983 = vrot.slane %v6855, 7
    %v6984 = vrot.slane %v6856, 7
    %v6985 = vrot.slane %v6857, 7
    %v6986 = vrot.slane %v6858, 7
    %v6987 = vrot.slane %v6859, 7
    %v6988 = vrot.slane %v6860, 7
    %v6989 = vrot.slane %v6861, 7
    %v6990 = vrot.slane %v6862, 7
    %v6991 = vrot.slane %v6863, 7
    %v6992 = vrot.slane %v6864, 7
    %v6993 = vrot.slane %v6865, 7
    %v6994 = vrot.slane %v6866, 7
    %v6995 = vrot.slane %v6867, 7
    %v6996 = vrot.slane %v6868, 7
    %v6997 = vrot.slane %v6869, 7
    %v6998 = vrot.slane %v6870, 7
    %v6999 = vrot.slane %v6871, 7
    %v7000 = vrot.slane %v6872, 7
    %v7001 = vrot.slane %v6873, 7
    %v7002 = vrot.slane %v6874, 7
    %v7003 = vrot.slane %v6875, 7
    %v7004 = vrot.slane %v6876, 7
    %v7005 = vrot.slane %v6877, 7
    %v7006 = vrot.slane %v6878, 7
    %v7007 = vrot.slane %v6879, 7
    %v7008 = vrot.slane %v6880, 7
    %v7009 = vrot.slane %v6881, 7
    %v7010 = vrot.slane %v6882, 7
    %v7011 = vrot.slane %v6883, 7
    %v7012 = vrot.slane %v6884, 7
    %v7013 = vrot.slane %v6885, 7
    %v7014 = vrot.slane %v6886, 7
    %v7015 = vrot.slane %v6887, 7
    %v7016 = vrot.slane %v6888, 7
    %v7017 = vrot.slane %v6889, 7
    %v7018 = vrot.slane %v6890, 7
    %v7019 = vrot.slane %v6891, 7
    %v7020 = vrot.slane %v6892, 7
    %v7021 = vrot.slane %v6893, 7
    %v7022 = vrot.slane %v6894, 7
    %v7023 = vrot.slane %v6895, 7
    %v7024 = vrot.slane %v6896, 7
    %v7025 = vrot.slane %v6897, 7
    %v7026 = vrot.slane %v6898, 7
    %v7027 = vrot.slane %v6899, 7
    %v7028 = vrot.slane %v6900, 7
    %v7029 = vsel %vm4533, %v7025, %v7027
    %v7030 = vsel %vm4533, %v7026, %v7028
    %v7031 = vsel %vm4533, %v7023, %v7025
    %v7032 = vsel %vm4533, %v7024, %v7026
    %v7033 = vsel %vm4533, %v7021, %v7023
    %v7034 = vsel %vm4533, %v7022, %v7024
    %v7035 = vsel %vm4533, %v7019, %v7021
    %v7036 = vsel %vm4533, %v7020, %v7022
    %v7037 = vsel %vm4533, %v7017, %v7019
    %v7038 = vsel %vm4533, %v7018, %v7020
    %v7039 = vsel %vm4533, %v7015, %v7017
    %v7040 = vsel %vm4533, %v7016, %v7018
    %v7041 = vsel %vm4533, %v7013, %v7015
    %v7042 = vsel %vm4533, %v7014, %v7016
    %v7043 = vsel %vm4533, %v7011, %v7013
    %v7044 = vsel %vm4533, %v7012, %v7014
    %v7045 = vsel %vm4533, %v7009, %v7011
    %v7046 = vsel %vm4533, %v7010, %v7012
    %v7047 = vsel %vm4533, %v7007, %v7009
    %v7048 = vsel %vm4533, %v7008, %v7010
    %v7049 = vsel %vm4533, %v7005, %v7007
    %v7050 = vsel %vm4533, %v7006, %v7008
    %v7051 = vsel %vm4533, %v7003, %v7005
    %v7052 = vsel %vm4533, %v7004, %v7006
    %v7053 = vsel %vm4533, %v7001, %v7003
    %v7054 = vsel %vm4533, %v7002, %v7004
    %v7055 = vsel %vm4533, %v6999, %v7001
    %v7056 = vsel %vm4533, %v7000, %v7002
    %v7057 = vsel %vm4533, %v6997, %v6999
    %v7058 = vsel %vm4533, %v6998, %v7000
    %v7059 = vsel %vm4533, %v6995, %v6997
    %v7060 = vsel %vm4533, %v6996, %v6998
    %v7061 = vsel %vm4533, %v6993, %v6995
    %v7062 = vsel %vm4533, %v6994, %v6996
    %v7063 = vsel %vm4533, %v6991, %v6993
    %v7064 = vsel %vm4533, %v6992, %v6994
    %v7065 = vsel %vm4533, %v6989, %v6991
    %v7066 = vsel %vm4533, %v6990, %v6992
    %v7067 = vsel %vm4533, %v6987, %v6989
    %v7068 = vsel %vm4533, %v6988, %v6990
    %v7069 = vsel %vm4533, %v6985, %v6987
    %v7070 = vsel %vm4533, %v6986, %v6988
    %v7071 = vsel %vm4533, %v6983, %v6985
    %v7072 = vsel %vm4533, %v6984, %v6986
    %v7073 = vsel %vm4533, %v6981, %v6983
    %v7074 = vsel %vm4533, %v6982, %v6984
    %v7075 = vsel %vm4533, %v6979, %v6981
    %v7076 = vsel %vm4533, %v6980, %v6982
    %v7077 = vsel %vm4533, %v6977, %v6979
    %v7078 = vsel %vm4533, %v6978, %v6980
    %v7079 = vsel %vm4533, %v6975, %v6977
    %v7080 = vsel %vm4533, %v6976, %v6978
    %v7081 = vsel %vm4533, %v6973, %v6975
    %v7082 = vsel %vm4533, %v6974, %v6976
    %v7083 = vsel %vm4533, %v6971, %v6973
    %v7084 = vsel %vm4533, %v6972, %v6974
    %v7085 = vsel %vm4533, %v6969, %v6971
    %v7086 = vsel %vm4533, %v6970, %v6972
    %v7087 = vsel %vm4533, %v6967, %v6969
    %v7088 = vsel %vm4533, %v6968, %v6970
    %v7089 = vsel %vm4533, %v6965, %v6967
    %v7090 = vsel %vm4533, %v6966, %v6968
    %v7091 = vsel %vm4533, %v6963, %v6965
    %v7092 = vsel %vm4533, %v6964, %v6966
    %v7093 = vsel %vm4533, %v6961, %v6963
    %v7094 = vsel %vm4533, %v6962, %v6964
    %v7095 = vsel %vm4533, %v6959, %v6961
    %v7096 = vsel %vm4533, %v6960, %v6962
    %v7097 = vsel %vm4533, %v6957, %v6959
    %v7098 = vsel %vm4533, %v6958, %v6960
    %v7099 = vsel %vm4533, %v6955, %v6957
    %v7100 = vsel %vm4533, %v6956, %v6958
    %v7101 = vsel %vm4533, %v6953, %v6955
    %v7102 = vsel %vm4533, %v6954, %v6956
    %v7103 = vsel %vm4533, %v6951, %v6953
    %v7104 = vsel %vm4533, %v6952, %v6954
    %v7105 = vsel %vm4533, %v6949, %v6951
    %v7106 = vsel %vm4533, %v6950, %v6952
    %v7107 = vsel %vm4533, %v6947, %v6949
    %v7108 = vsel %vm4533, %v6948, %v6950
    %v7109 = vsel %vm4533, %v6945, %v6947
    %v7110 = vsel %vm4533, %v6946, %v6948
    %v7111 = vsel %vm4533, %v6943, %v6945
    %v7112 = vsel %vm4533, %v6944, %v6946
    %v7113 = vsel %vm4533, %v6941, %v6943
    %v7114 = vsel %vm4533, %v6942, %v6944
    %v7115 = vsel %vm4533, %v6939, %v6941
    %v7116 = vsel %vm4533, %v6940, %v6942
    %v7117 = vsel %vm4533, %v6937, %v6939
    %v7118 = vsel %vm4533, %v6938, %v6940
    %v7119 = vsel %vm4533, %v6935, %v6937
    %v7120 = vsel %vm4533, %v6936, %v6938
    %v7121 = vsel %vm4533, %v6933, %v6935
    %v7122 = vsel %vm4533, %v6934, %v6936
    %v7123 = vsel %vm4533, %v6931, %v6933
    %v7124 = vsel %vm4533, %v6932, %v6934
    %v7125 = vsel %vm4533, %v6929, %v6931
    %v7126 = vsel %vm4533, %v6930, %v6932
    %v7127 = vsel %vm4533, %v6927, %v6929
    %v7128 = vsel %vm4533, %v6928, %v6930
    %v7129 = vsel %vm4533, %v6925, %v6927
    %v7130 = vsel %vm4533, %v6926, %v6928
    %v7131 = vsel %vm4533, %v6923, %v6925
    %v7132 = vsel %vm4533, %v6924, %v6926
    %v7133 = vsel %vm4533, %v6921, %v6923
    %v7134 = vsel %vm4533, %v6922, %v6924
    %v7135 = vsel %vm4533, %v6919, %v6921
    %v7136 = vsel %vm4533, %v6920, %v6922
    %v7137 = vsel %vm4533, %v6917, %v6919
    %v7138 = vsel %vm4533, %v6918, %v6920
    %v7139 = vsel %vm4533, %v6915, %v6917
    %v7140 = vsel %vm4533, %v6916, %v6918
    %v7141 = vsel %vm4533, %v6913, %v6915
    %v7142 = vsel %vm4533, %v6914, %v6916
    %v7143 = vsel %vm4533, %v6911, %v6913
    %v7144 = vsel %vm4533, %v6912, %v6914
    %v7145 = vsel %vm4533, %v6909, %v6911
    %v7146 = vsel %vm4533, %v6910, %v6912
    %v7147 = vsel %vm4533, %v6907, %v6909
    %v7148 = vsel %vm4533, %v6908, %v6910
    %v7149 = vsel %vm4533, %v6905, %v6907
    %v7150 = vsel %vm4533, %v6906, %v6908
    %v7151 = vsel %vm4533, %v6903, %v6905
    %v7152 = vsel %vm4533, %v6904, %v6906
    %v7153 = vsel %vm4533, %v6901, %v6903
    %v7154 = vsel %vm4533, %v6902, %v6904
    %v7155 = vsel %vm4533, %v7027, %v6901
    %v7156 = vsel %vm4533, %v7028, %v6902
    %v7157 = vsel %vm4662, 0.0, %v7155
    %v7158 = vsel %vm4662, 0.0, %v7156
    %v7159 = vsel %vm4663, 0.0, %v7153
    %v7160 = vsel %vm4663, 0.0, %v7154
    %v7161 = vsel %vm4664, 0.0, %v7151
    %v7162 = vsel %vm4664, 0.0, %v7152
    %v7163 = vsel %vm4665, 0.0, %v7149
    %v7164 = vsel %vm4665, 0.0, %v7150
    %v7165 = vsel %vm4666, 0.0, %v7147
    %v7166 = vsel %vm4666, 0.0, %v7148
    %v7167 = vsel %vm4667, 0.0, %v7145
    %v7168 = vsel %vm4667, 0.0, %v7146
    %v7169 = vsel %vm4668, 0.0, %v7143
    %v7170 = vsel %vm4668, 0.0, %v7144
    %v7171 = vsel %vm4669, 0.0, %v7141
    %v7172 = vsel %vm4669, 0.0, %v7142
    %v7173 = vsel %vm4670, 0.0, %v7139
    %v7174 = vsel %vm4670, 0.0, %v7140
    %v7175 = vsel %vm4671, 0.0, %v7137
    %v7176 = vsel %vm4671, 0.0, %v7138
    %v7177 = vsel %vm4672, 0.0, %v7135
    %v7178 = vsel %vm4672, 0.0, %v7136
    %v7179 = vsel %vm4673, 0.0, %v7133
    %v7180 = vsel %vm4673, 0.0, %v7134
    %v7181 = vsel %vm4674, 0.0, %v7131
    %v7182 = vsel %vm4674, 0.0, %v7132
    %v7183 = vsel %vm4675, 0.0, %v7129
    %v7184 = vsel %vm4675, 0.0, %v7130
    %v7185 = vsel %vm4676, 0.0, %v7127
    %v7186 = vsel %vm4676, 0.0, %v7128
    %v7187 = vsel %vm4677, 0.0, %v7125
    %v7188 = vsel %vm4677, 0.0, %v7126
    %v7189 = vsel %vm4678, 0.0, %v7123
    %v7190 = vsel %vm4678, 0.0, %v7124
    %v7191 = vsel %vm4679, 0.0, %v7121
    %v7192 = vsel %vm4679, 0.0, %v7122
    %v7193 = vsel %vm4680, 0.0, %v7119
    %v7194 = vsel %vm4680, 0.0, %v7120
    %v7195 = vsel %vm4681, 0.0, %v7117
    %v7196 = vsel %vm4681, 0.0, %v7118
    %v7197 = vsel %vm4682, 0.0, %v7115
    %v7198 = vsel %vm4682, 0.0, %v7116
    %v7199 = vsel %vm4683, 0.0, %v7113
    %v7200 = vsel %vm4683, 0.0, %v7114
    %v7201 = vsel %vm4684, 0.0, %v7111
    %v7202 = vsel %vm4684, 0.0, %v7112
    %v7203 = vsel %vm4685, 0.0, %v7109
    %v7204 = vsel %vm4685, 0.0, %v7110
    %v7205 = vsel %vm4686, 0.0, %v7107
    %v7206 = vsel %vm4686, 0.0, %v7108
    %v7207 = vsel %vm4687, 0.0, %v7105
    %v7208 = vsel %vm4687, 0.0, %v7106
    %v7209 = vsel %vm4688, 0.0, %v7103
    %v7210 = vsel %vm4688, 0.0, %v7104
    %v7211 = vsel %vm4689, 0.0, %v7101
    %v7212 = vsel %vm4689, 0.0, %v7102
    %v7213 = vsel %vm4690, 0.0, %v7099
    %v7214 = vsel %vm4690, 0.0, %v7100
    %v7215 = vsel %vm4691, 0.0, %v7097
    %v7216 = vsel %vm4691, 0.0, %v7098
    %v7217 = vsel %vm4692, 0.0, %v7095
    %v7218 = vsel %vm4692, 0.0, %v7096
    %v7219 = vsel %vm4693, 0.0, %v7093
    %v7220 = vsel %vm4693, 0.0, %v7094
    %v7221 = vsel %vm4694, 0.0, %v7091
    %v7222 = vsel %vm4694, 0.0, %v7092
    %v7223 = vsel %vm4695, 0.0, %v7089
    %v7224 = vsel %vm4695, 0.0, %v7090
    %v7225 = vsel %vm4696, 0.0, %v7087
    %v7226 = vsel %vm4696, 0.0, %v7088
    %v7227 = vsel %vm4697, 0.0, %v7085
    %v7228 = vsel %vm4697, 0.0, %v7086
    %v7229 = vsel %vm4698, 0.0, %v7083
    %v7230 = vsel %vm4698, 0.0, %v7084
    %v7231 = vsel %vm4699, 0.0, %v7081
    %v7232 = vsel %vm4699, 0.0, %v7082
    %v7233 = vsel %vm4700, 0.0, %v7079
    %v7234 = vsel %vm4700, 0.0, %v7080
    %v7235 = vsel %vm4701, 0.0, %v7077
    %v7236 = vsel %vm4701, 0.0, %v7078
    %v7237 = vsel %vm4702, 0.0, %v7075
    %v7238 = vsel %vm4702, 0.0, %v7076
    %v7239 = vsel %vm4703, 0.0, %v7073
    %v7240 = vsel %vm4703, 0.0, %v7074
    %v7241 = vsel %vm4704, 0.0, %v7071
    %v7242 = vsel %vm4704, 0.0, %v7072
    %v7243 = vsel %vm4705, 0.0, %v7069
    %v7244 = vsel %vm4705, 0.0, %v7070
    %v7245 = vsel %vm4706, 0.0, %v7067
    %v7246 = vsel %vm4706, 0.0, %v7068
    %v7247 = vsel %vm4707, 0.0, %v7065
    %v7248 = vsel %vm4707, 0.0, %v7066
    %v7249 = vsel %vm4708, 0.0, %v7063
    %v7250 = vsel %vm4708, 0.0, %v7064
    %v7251 = vsel %vm4709, 0.0, %v7061
    %v7252 = vsel %vm4709, 0.0, %v7062
    %v7253 = vsel %vm4710, 0.0, %v7059
    %v7254 = vsel %vm4710, 0.0, %v7060
    %v7255 = vsel %vm4711, 0.0, %v7057
    %v7256 = vsel %vm4711, 0.0, %v7058
    %v7257 = vsel %vm4712, 0.0, %v7055
    %v7258 = vsel %vm4712, 0.0, %v7056
    %v7259 = vsel %vm4713, 0.0, %v7053
    %v7260 = vsel %vm4713, 0.0, %v7054
    %v7261 = vsel %vm4714, 0.0, %v7051
    %v7262 = vsel %vm4714, 0.0, %v7052
    %v7263 = vsel %vm4715, 0.0, %v7049
    %v7264 = vsel %vm4715, 0.0, %v7050
    %v7265 = vsel %vm4716, 0.0, %v7047
    %v7266 = vsel %vm4716, 0.0, %v7048
    %v7267 = vsel %vm4717, 0.0, %v7045
    %v7268 = vsel %vm4717, 0.0, %v7046
    %v7269 = vsel %vm4718, 0.0, %v7043
    %v7270 = vsel %vm4718, 0.0, %v7044
    %v7271 = vsel %vm4719, 0.0, %v7041
    %v7272 = vsel %vm4719, 0.0, %v7042
    %v7273 = vsel %vm4720, 0.0, %v7039
    %v7274 = vsel %vm4720, 0.0, %v7040
    %v7275 = vsel %vm4721, 0.0, %v7037
    %v7276 = vsel %vm4721, 0.0, %v7038
    %v7277 = vsel %vm4722, 0.0, %v7035
    %v7278 = vsel %vm4722, 0.0, %v7036
    %v7279 = vsel %vm4723, 0.0, %v7033
    %v7280 = vsel %vm4723, 0.0, %v7034
    %v7281 = vsel %vm4724, 0.0, %v7031
    %v7282 = vsel %vm4724, 0.0, %v7032
    %v7283 = vsel %vm4725, 0.0, %v7029
    %v7284 = vsel %vm4725, 0.0, %v7030
    %v7285 = vrot.slane %v6773, 1
    %v7286 = vrot.slane %v6774, 1
    %v7287 = vrot.slane %v6775, 1
    %v7288 = vrot.slane %v6776, 1
    %v7289 = vrot.slane %v6777, 1
    %v7290 = vrot.slane %v6778, 1
    %v7291 = vrot.slane %v6779, 1
    %v7292 = vrot.slane %v6780, 1
    %v7293 = vrot.slane %v6781, 1
    %v7294 = vrot.slane %v6782, 1
    %v7295 = vrot.slane %v6783, 1
    %v7296 = vrot.slane %v6784, 1
    %v7297 = vrot.slane %v6785, 1
    %v7298 = vrot.slane %v6786, 1
    %v7299 = vrot.slane %v6787, 1
    %v7300 = vrot.slane %v6788, 1
    %v7301 = vrot.slane %v6789, 1
    %v7302 = vrot.slane %v6790, 1
    %v7303 = vrot.slane %v6791, 1
    %v7304 = vrot.slane %v6792, 1
    %v7305 = vrot.slane %v6793, 1
    %v7306 = vrot.slane %v6794, 1
    %v7307 = vrot.slane %v6795, 1
    %v7308 = vrot.slane %v6796, 1
    %v7309 = vrot.slane %v6797, 1
    %v7310 = vrot.slane %v6798, 1
    %v7311 = vrot.slane %v6799, 1
    %v7312 = vrot.slane %v6800, 1
    %v7313 = vrot.slane %v6801, 1
    %v7314 = vrot.slane %v6802, 1
    %v7315 = vrot.slane %v6803, 1
    %v7316 = vrot.slane %v6804, 1
    %v7317 = vrot.slane %v6805, 1
    %v7318 = vrot.slane %v6806, 1
    %v7319 = vrot.slane %v6807, 1
    %v7320 = vrot.slane %v6808, 1
    %v7321 = vrot.slane %v6809, 1
    %v7322 = vrot.slane %v6810, 1
    %v7323 = vrot.slane %v6811, 1
    %v7324 = vrot.slane %v6812, 1
    %v7325 = vrot.slane %v6813, 1
    %v7326 = vrot.slane %v6814, 1
    %v7327 = vrot.slane %v6815, 1
    %v7328 = vrot.slane %v6816, 1
    %v7329 = vrot.slane %v6817, 1
    %v7330 = vrot.slane %v6818, 1
    %v7331 = vrot.slane %v6819, 1
    %v7332 = vrot.slane %v6820, 1
    %v7333 = vrot.slane %v6821, 1
    %v7334 = vrot.slane %v6822, 1
    %v7335 = vrot.slane %v6823, 1
    %v7336 = vrot.slane %v6824, 1
    %v7337 = vrot.slane %v6825, 1
    %v7338 = vrot.slane %v6826, 1
    %v7339 = vrot.slane %v6827, 1
    %v7340 = vrot.slane %v6828, 1
    %v7341 = vrot.slane %v6829, 1
    %v7342 = vrot.slane %v6830, 1
    %v7343 = vrot.slane %v6831, 1
    %v7344 = vrot.slane %v6832, 1
    %v7345 = vrot.slane %v6833, 1
    %v7346 = vrot.slane %v6834, 1
    %v7347 = vrot.slane %v6835, 1
    %v7348 = vrot.slane %v6836, 1
    %v7349 = vrot.slane %v6837, 1
    %v7350 = vrot.slane %v6838, 1
    %v7351 = vrot.slane %v6839, 1
    %v7352 = vrot.slane %v6840, 1
    %v7353 = vrot.slane %v6841, 1
    %v7354 = vrot.slane %v6842, 1
    %v7355 = vrot.slane %v6843, 1
    %v7356 = vrot.slane %v6844, 1
    %v7357 = vrot.slane %v6845, 1
    %v7358 = vrot.slane %v6846, 1
    %v7359 = vrot.slane %v6847, 1
    %v7360 = vrot.slane %v6848, 1
    %v7361 = vrot.slane %v6849, 1
    %v7362 = vrot.slane %v6850, 1
    %v7363 = vrot.slane %v6851, 1
    %v7364 = vrot.slane %v6852, 1
    %v7365 = vrot.slane %v6853, 1
    %v7366 = vrot.slane %v6854, 1
    %v7367 = vrot.slane %v6855, 1
    %v7368 = vrot.slane %v6856, 1
    %v7369 = vrot.slane %v6857, 1
    %v7370 = vrot.slane %v6858, 1
    %v7371 = vrot.slane %v6859, 1
    %v7372 = vrot.slane %v6860, 1
    %v7373 = vrot.slane %v6861, 1
    %v7374 = vrot.slane %v6862, 1
    %v7375 = vrot.slane %v6863, 1
    %v7376 = vrot.slane %v6864, 1
    %v7377 = vrot.slane %v6865, 1
    %v7378 = vrot.slane %v6866, 1
    %v7379 = vrot.slane %v6867, 1
    %v7380 = vrot.slane %v6868, 1
    %v7381 = vrot.slane %v6869, 1
    %v7382 = vrot.slane %v6870, 1
    %v7383 = vrot.slane %v6871, 1
    %v7384 = vrot.slane %v6872, 1
    %v7385 = vrot.slane %v6873, 1
    %v7386 = vrot.slane %v6874, 1
    %v7387 = vrot.slane %v6875, 1
    %v7388 = vrot.slane %v6876, 1
    %v7389 = vrot.slane %v6877, 1
    %v7390 = vrot.slane %v6878, 1
    %v7391 = vrot.slane %v6879, 1
    %v7392 = vrot.slane %v6880, 1
    %v7393 = vrot.slane %v6881, 1
    %v7394 = vrot.slane %v6882, 1
    %v7395 = vrot.slane %v6883, 1
    %v7396 = vrot.slane %v6884, 1
    %v7397 = vrot.slane %v6885, 1
    %v7398 = vrot.slane %v6886, 1
    %v7399 = vrot.slane %v6887, 1
    %v7400 = vrot.slane %v6888, 1
    %v7401 = vrot.slane %v6889, 1
    %v7402 = vrot.slane %v6890, 1
    %v7403 = vrot.slane %v6891, 1
    %v7404 = vrot.slane %v6892, 1
    %v7405 = vrot.slane %v6893, 1
    %v7406 = vrot.slane %v6894, 1
    %v7407 = vrot.slane %v6895, 1
    %v7408 = vrot.slane %v6896, 1
    %v7409 = vrot.slane %v6897, 1
    %v7410 = vrot.slane %v6898, 1
    %v7411 = vrot.slane %v6899, 1
    %v7412 = vrot.slane %v6900, 1
    %v7413 = vsel %vm4854, %v7409, %v7411
    %v7414 = vsel %vm4854, %v7410, %v7412
    %v7415 = vsel %vm4854, %v7407, %v7409
    %v7416 = vsel %vm4854, %v7408, %v7410
    %v7417 = vsel %vm4854, %v7405, %v7407
    %v7418 = vsel %vm4854, %v7406, %v7408
    %v7419 = vsel %vm4854, %v7403, %v7405
    %v7420 = vsel %vm4854, %v7404, %v7406
    %v7421 = vsel %vm4854, %v7401, %v7403
    %v7422 = vsel %vm4854, %v7402, %v7404
    %v7423 = vsel %vm4854, %v7399, %v7401
    %v7424 = vsel %vm4854, %v7400, %v7402
    %v7425 = vsel %vm4854, %v7397, %v7399
    %v7426 = vsel %vm4854, %v7398, %v7400
    %v7427 = vsel %vm4854, %v7395, %v7397
    %v7428 = vsel %vm4854, %v7396, %v7398
    %v7429 = vsel %vm4854, %v7393, %v7395
    %v7430 = vsel %vm4854, %v7394, %v7396
    %v7431 = vsel %vm4854, %v7391, %v7393
    %v7432 = vsel %vm4854, %v7392, %v7394
    %v7433 = vsel %vm4854, %v7389, %v7391
    %v7434 = vsel %vm4854, %v7390, %v7392
    %v7435 = vsel %vm4854, %v7387, %v7389
    %v7436 = vsel %vm4854, %v7388, %v7390
    %v7437 = vsel %vm4854, %v7385, %v7387
    %v7438 = vsel %vm4854, %v7386, %v7388
    %v7439 = vsel %vm4854, %v7383, %v7385
    %v7440 = vsel %vm4854, %v7384, %v7386
    %v7441 = vsel %vm4854, %v7381, %v7383
    %v7442 = vsel %vm4854, %v7382, %v7384
    %v7443 = vsel %vm4854, %v7379, %v7381
    %v7444 = vsel %vm4854, %v7380, %v7382
    %v7445 = vsel %vm4854, %v7377, %v7379
    %v7446 = vsel %vm4854, %v7378, %v7380
    %v7447 = vsel %vm4854, %v7375, %v7377
    %v7448 = vsel %vm4854, %v7376, %v7378
    %v7449 = vsel %vm4854, %v7373, %v7375
    %v7450 = vsel %vm4854, %v7374, %v7376
    %v7451 = vsel %vm4854, %v7371, %v7373
    %v7452 = vsel %vm4854, %v7372, %v7374
    %v7453 = vsel %vm4854, %v7369, %v7371
    %v7454 = vsel %vm4854, %v7370, %v7372
    %v7455 = vsel %vm4854, %v7367, %v7369
    %v7456 = vsel %vm4854, %v7368, %v7370
    %v7457 = vsel %vm4854, %v7365, %v7367
    %v7458 = vsel %vm4854, %v7366, %v7368
    %v7459 = vsel %vm4854, %v7363, %v7365
    %v7460 = vsel %vm4854, %v7364, %v7366
    %v7461 = vsel %vm4854, %v7361, %v7363
    %v7462 = vsel %vm4854, %v7362, %v7364
    %v7463 = vsel %vm4854, %v7359, %v7361
    %v7464 = vsel %vm4854, %v7360, %v7362
    %v7465 = vsel %vm4854, %v7357, %v7359
    %v7466 = vsel %vm4854, %v7358, %v7360
    %v7467 = vsel %vm4854, %v7355, %v7357
    %v7468 = vsel %vm4854, %v7356, %v7358
    %v7469 = vsel %vm4854, %v7353, %v7355
    %v7470 = vsel %vm4854, %v7354, %v7356
    %v7471 = vsel %vm4854, %v7351, %v7353
    %v7472 = vsel %vm4854, %v7352, %v7354
    %v7473 = vsel %vm4854, %v7349, %v7351
    %v7474 = vsel %vm4854, %v7350, %v7352
    %v7475 = vsel %vm4854, %v7347, %v7349
    %v7476 = vsel %vm4854, %v7348, %v7350
    %v7477 = vsel %vm4854, %v7345, %v7347
    %v7478 = vsel %vm4854, %v7346, %v7348
    %v7479 = vsel %vm4854, %v7343, %v7345
    %v7480 = vsel %vm4854, %v7344, %v7346
    %v7481 = vsel %vm4854, %v7341, %v7343
    %v7482 = vsel %vm4854, %v7342, %v7344
    %v7483 = vsel %vm4854, %v7339, %v7341
    %v7484 = vsel %vm4854, %v7340, %v7342
    %v7485 = vsel %vm4854, %v7337, %v7339
    %v7486 = vsel %vm4854, %v7338, %v7340
    %v7487 = vsel %vm4854, %v7335, %v7337
    %v7488 = vsel %vm4854, %v7336, %v7338
    %v7489 = vsel %vm4854, %v7333, %v7335
    %v7490 = vsel %vm4854, %v7334, %v7336
    %v7491 = vsel %vm4854, %v7331, %v7333
    %v7492 = vsel %vm4854, %v7332, %v7334
    %v7493 = vsel %vm4854, %v7329, %v7331
    %v7494 = vsel %vm4854, %v7330, %v7332
    %v7495 = vsel %vm4854, %v7327, %v7329
    %v7496 = vsel %vm4854, %v7328, %v7330
    %v7497 = vsel %vm4854, %v7325, %v7327
    %v7498 = vsel %vm4854, %v7326, %v7328
    %v7499 = vsel %vm4854, %v7323, %v7325
    %v7500 = vsel %vm4854, %v7324, %v7326
    %v7501 = vsel %vm4854, %v7321, %v7323
    %v7502 = vsel %vm4854, %v7322, %v7324
    %v7503 = vsel %vm4854, %v7319, %v7321
    %v7504 = vsel %vm4854, %v7320, %v7322
    %v7505 = vsel %vm4854, %v7317, %v7319
    %v7506 = vsel %vm4854, %v7318, %v7320
    %v7507 = vsel %vm4854, %v7315, %v7317
    %v7508 = vsel %vm4854, %v7316, %v7318
    %v7509 = vsel %vm4854, %v7313, %v7315
    %v7510 = vsel %vm4854, %v7314, %v7316
    %v7511 = vsel %vm4854, %v7311, %v7313
    %v7512 = vsel %vm4854, %v7312, %v7314
    %v7513 = vsel %vm4854, %v7309, %v7311
    %v7514 = vsel %vm4854, %v7310, %v7312
    %v7515 = vsel %vm4854, %v7307, %v7309
    %v7516 = vsel %vm4854, %v7308, %v7310
    %v7517 = vsel %vm4854, %v7305, %v7307
    %v7518 = vsel %vm4854, %v7306, %v7308
    %v7519 = vsel %vm4854, %v7303, %v7305
    %v7520 = vsel %vm4854, %v7304, %v7306
    %v7521 = vsel %vm4854, %v7301, %v7303
    %v7522 = vsel %vm4854, %v7302, %v7304
    %v7523 = vsel %vm4854, %v7299, %v7301
    %v7524 = vsel %vm4854, %v7300, %v7302
    %v7525 = vsel %vm4854, %v7297, %v7299
    %v7526 = vsel %vm4854, %v7298, %v7300
    %v7527 = vsel %vm4854, %v7295, %v7297
    %v7528 = vsel %vm4854, %v7296, %v7298
    %v7529 = vsel %vm4854, %v7293, %v7295
    %v7530 = vsel %vm4854, %v7294, %v7296
    %v7531 = vsel %vm4854, %v7291, %v7293
    %v7532 = vsel %vm4854, %v7292, %v7294
    %v7533 = vsel %vm4854, %v7289, %v7291
    %v7534 = vsel %vm4854, %v7290, %v7292
    %v7535 = vsel %vm4854, %v7287, %v7289
    %v7536 = vsel %vm4854, %v7288, %v7290
    %v7537 = vsel %vm4854, %v7285, %v7287
    %v7538 = vsel %vm4854, %v7286, %v7288
    %v7539 = vsel %vm4854, %v7411, %v7285
    %v7540 = vsel %vm4854, %v7412, %v7286
    %v7541 = vsel %vm4983, 0.0, %v7537
    %v7542 = vsel %vm4983, 0.0, %v7538
    %v7543 = vsel %vm4984, 0.0, %v7535
    %v7544 = vsel %vm4984, 0.0, %v7536
    %v7545 = vsel %vm4985, 0.0, %v7533
    %v7546 = vsel %vm4985, 0.0, %v7534
    %v7547 = vsel %vm4986, 0.0, %v7531
    %v7548 = vsel %vm4986, 0.0, %v7532
    %v7549 = vsel %vm4987, 0.0, %v7529
    %v7550 = vsel %vm4987, 0.0, %v7530
    %v7551 = vsel %vm4988, 0.0, %v7527
    %v7552 = vsel %vm4988, 0.0, %v7528
    %v7553 = vsel %vm4989, 0.0, %v7525
    %v7554 = vsel %vm4989, 0.0, %v7526
    %v7555 = vsel %vm4990, 0.0, %v7523
    %v7556 = vsel %vm4990, 0.0, %v7524
    %v7557 = vsel %vm4991, 0.0, %v7521
    %v7558 = vsel %vm4991, 0.0, %v7522
    %v7559 = vsel %vm4992, 0.0, %v7519
    %v7560 = vsel %vm4992, 0.0, %v7520
    %v7561 = vsel %vm4993, 0.0, %v7517
    %v7562 = vsel %vm4993, 0.0, %v7518
    %v7563 = vsel %vm4994, 0.0, %v7515
    %v7564 = vsel %vm4994, 0.0, %v7516
    %v7565 = vsel %vm4995, 0.0, %v7513
    %v7566 = vsel %vm4995, 0.0, %v7514
    %v7567 = vsel %vm4996, 0.0, %v7511
    %v7568 = vsel %vm4996, 0.0, %v7512
    %v7569 = vsel %vm4997, 0.0, %v7509
    %v7570 = vsel %vm4997, 0.0, %v7510
    %v7571 = vsel %vm4998, 0.0, %v7507
    %v7572 = vsel %vm4998, 0.0, %v7508
    %v7573 = vsel %vm4999, 0.0, %v7505
    %v7574 = vsel %vm4999, 0.0, %v7506
    %v7575 = vsel %vm5000, 0.0, %v7503
    %v7576 = vsel %vm5000, 0.0, %v7504
    %v7577 = vsel %vm5001, 0.0, %v7501
    %v7578 = vsel %vm5001, 0.0, %v7502
    %v7579 = vsel %vm5002, 0.0, %v7499
    %v7580 = vsel %vm5002, 0.0, %v7500
    %v7581 = vsel %vm5003, 0.0, %v7497
    %v7582 = vsel %vm5003, 0.0, %v7498
    %v7583 = vsel %vm5004, 0.0, %v7495
    %v7584 = vsel %vm5004, 0.0, %v7496
    %v7585 = vsel %vm5005, 0.0, %v7493
    %v7586 = vsel %vm5005, 0.0, %v7494
    %v7587 = vsel %vm5006, 0.0, %v7491
    %v7588 = vsel %vm5006, 0.0, %v7492
    %v7589 = vsel %vm5007, 0.0, %v7489
    %v7590 = vsel %vm5007, 0.0, %v7490
    %v7591 = vsel %vm5008, 0.0, %v7487
    %v7592 = vsel %vm5008, 0.0, %v7488
    %v7593 = vsel %vm5009, 0.0, %v7485
    %v7594 = vsel %vm5009, 0.0, %v7486
    %v7595 = vsel %vm5010, 0.0, %v7483
    %v7596 = vsel %vm5010, 0.0, %v7484
    %v7597 = vsel %vm5011, 0.0, %v7481
    %v7598 = vsel %vm5011, 0.0, %v7482
    %v7599 = vsel %vm5012, 0.0, %v7479
    %v7600 = vsel %vm5012, 0.0, %v7480
    %v7601 = vsel %vm5013, 0.0, %v7477
    %v7602 = vsel %vm5013, 0.0, %v7478
    %v7603 = vsel %vm5014, 0.0, %v7475
    %v7604 = vsel %vm5014, 0.0, %v7476
    %v7605 = vsel %vm5015, 0.0, %v7473
    %v7606 = vsel %vm5015, 0.0, %v7474
    %v7607 = vsel %vm5016, 0.0, %v7471
    %v7608 = vsel %vm5016, 0.0, %v7472
    %v7609 = vsel %vm5017, 0.0, %v7469
    %v7610 = vsel %vm5017, 0.0, %v7470
    %v7611 = vsel %vm5018, 0.0, %v7467
    %v7612 = vsel %vm5018, 0.0, %v7468
    %v7613 = vsel %vm5019, 0.0, %v7465
    %v7614 = vsel %vm5019, 0.0, %v7466
    %v7615 = vsel %vm5020, 0.0, %v7463
    %v7616 = vsel %vm5020, 0.0, %v7464
    %v7617 = vsel %vm5021, 0.0, %v7461
    %v7618 = vsel %vm5021, 0.0, %v7462
    %v7619 = vsel %vm5022, 0.0, %v7459
    %v7620 = vsel %vm5022, 0.0, %v7460
    %v7621 = vsel %vm5023, 0.0, %v7457
    %v7622 = vsel %vm5023, 0.0, %v7458
    %v7623 = vsel %vm5024, 0.0, %v7455
    %v7624 = vsel %vm5024, 0.0, %v7456
    %v7625 = vsel %vm5025, 0.0, %v7453
    %v7626 = vsel %vm5025, 0.0, %v7454
    %v7627 = vsel %vm5026, 0.0, %v7451
    %v7628 = vsel %vm5026, 0.0, %v7452
    %v7629 = vsel %vm5027, 0.0, %v7449
    %v7630 = vsel %vm5027, 0.0, %v7450
    %v7631 = vsel %vm5028, 0.0, %v7447
    %v7632 = vsel %vm5028, 0.0, %v7448
    %v7633 = vsel %vm5029, 0.0, %v7445
    %v7634 = vsel %vm5029, 0.0, %v7446
    %v7635 = vsel %vm5030, 0.0, %v7443
    %v7636 = vsel %vm5030, 0.0, %v7444
    %v7637 = vsel %vm5031, 0.0, %v7441
    %v7638 = vsel %vm5031, 0.0, %v7442
    %v7639 = vsel %vm5032, 0.0, %v7439
    %v7640 = vsel %vm5032, 0.0, %v7440
    %v7641 = vsel %vm5033, 0.0, %v7437
    %v7642 = vsel %vm5033, 0.0, %v7438
    %v7643 = vsel %vm5034, 0.0, %v7435
    %v7644 = vsel %vm5034, 0.0, %v7436
    %v7645 = vsel %vm5035, 0.0, %v7433
    %v7646 = vsel %vm5035, 0.0, %v7434
    %v7647 = vsel %vm5036, 0.0, %v7431
    %v7648 = vsel %vm5036, 0.0, %v7432
    %v7649 = vsel %vm5037, 0.0, %v7429
    %v7650 = vsel %vm5037, 0.0, %v7430
    %v7651 = vsel %vm5038, 0.0, %v7427
    %v7652 = vsel %vm5038, 0.0, %v7428
    %v7653 = vsel %vm5039, 0.0, %v7425
    %v7654 = vsel %vm5039, 0.0, %v7426
    %v7655 = vsel %vm5040, 0.0, %v7423
    %v7656 = vsel %vm5040, 0.0, %v7424
    %v7657 = vsel %vm5041, 0.0, %v7421
    %v7658 = vsel %vm5041, 0.0, %v7422
    %v7659 = vsel %vm5042, 0.0, %v7419
    %v7660 = vsel %vm5042, 0.0, %v7420
    %v7661 = vsel %vm5043, 0.0, %v7417
    %v7662 = vsel %vm5043, 0.0, %v7418
    %v7663 = vsel %vm5044, 0.0, %v7415
    %v7664 = vsel %vm5044, 0.0, %v7416
    %v7665 = vsel %vm5045, 0.0, %v7413
    %v7666 = vsel %vm5045, 0.0, %v7414
    %v7667 = vsel %vm5046, 0.0, %v7539
    %v7668 = vsel %vm5046, 0.0, %v7540
    %v7669 = vpack.c.bf16 %v7159, %v7157
    %v7670 = vpack.c.bf16 %v7160, %v7158
    %v7671 = vpack.c.bf16 %v7163, %v7161
    %v7672 = vpack.c.bf16 %v7164, %v7162
    %v7673 = vpack.c.bf16 %v7167, %v7165
    %v7674 = vpack.c.bf16 %v7168, %v7166
    %v7675 = vpack.c.bf16 %v7171, %v7169
    %v7676 = vpack.c.bf16 %v7172, %v7170
    %v7677 = vpack.c.bf16 %v7175, %v7173
    %v7678 = vpack.c.bf16 %v7176, %v7174
    %v7679 = vpack.c.bf16 %v7179, %v7177
    %v7680 = vpack.c.bf16 %v7180, %v7178
    %v7681 = vpack.c.bf16 %v7183, %v7181
    %v7682 = vpack.c.bf16 %v7184, %v7182
    %v7683 = vpack.c.bf16 %v7187, %v7185
    %v7684 = vpack.c.bf16 %v7188, %v7186
    %v7685 = vpack.c.bf16 %v7191, %v7189
    %v7686 = vpack.c.bf16 %v7192, %v7190
    %v7687 = vpack.c.bf16 %v7195, %v7193
    %v7688 = vpack.c.bf16 %v7196, %v7194
    %v7689 = vpack.c.bf16 %v7199, %v7197
    %v7690 = vpack.c.bf16 %v7200, %v7198
    %v7691 = vpack.c.bf16 %v7203, %v7201
    %v7692 = vpack.c.bf16 %v7204, %v7202
    %v7693 = vpack.c.bf16 %v7207, %v7205
    %v7694 = vpack.c.bf16 %v7208, %v7206
    %v7695 = vpack.c.bf16 %v7211, %v7209
    %v7696 = vpack.c.bf16 %v7212, %v7210
    %v7697 = vpack.c.bf16 %v7215, %v7213
    %v7698 = vpack.c.bf16 %v7216, %v7214
    %v7699 = vpack.c.bf16 %v7219, %v7217
    %v7700 = vpack.c.bf16 %v7220, %v7218
    %v7701 = vpack.c.bf16 %v7223, %v7221
    %v7702 = vpack.c.bf16 %v7224, %v7222
    %v7703 = vpack.c.bf16 %v7227, %v7225
    %v7704 = vpack.c.bf16 %v7228, %v7226
    %v7705 = vpack.c.bf16 %v7231, %v7229
    %v7706 = vpack.c.bf16 %v7232, %v7230
    %v7707 = vpack.c.bf16 %v7235, %v7233
    %v7708 = vpack.c.bf16 %v7236, %v7234
    %v7709 = vpack.c.bf16 %v7239, %v7237
    %v7710 = vpack.c.bf16 %v7240, %v7238
    %v7711 = vpack.c.bf16 %v7243, %v7241
    %v7712 = vpack.c.bf16 %v7244, %v7242
    %v7713 = vpack.c.bf16 %v7247, %v7245
    %v7714 = vpack.c.bf16 %v7248, %v7246
    %v7715 = vpack.c.bf16 %v7251, %v7249
    %v7716 = vpack.c.bf16 %v7252, %v7250
    %v7717 = vpack.c.bf16 %v7255, %v7253
    %v7718 = vpack.c.bf16 %v7256, %v7254
    %v7719 = vpack.c.bf16 %v7259, %v7257
    %v7720 = vpack.c.bf16 %v7260, %v7258
    %v7721 = vpack.c.bf16 %v7263, %v7261
    %v7722 = vpack.c.bf16 %v7264, %v7262
    %v7723 = vpack.c.bf16 %v7267, %v7265
    %v7724 = vpack.c.bf16 %v7268, %v7266
    %v7725 = vpack.c.bf16 %v7271, %v7269
    %v7726 = vpack.c.bf16 %v7272, %v7270
    %v7727 = vpack.c.bf16 %v7275, %v7273
    %v7728 = vpack.c.bf16 %v7276, %v7274
    %v7729 = vpack.c.bf16 %v7279, %v7277
    %v7730 = vpack.c.bf16 %v7280, %v7278
    %v7731 = vpack.c.bf16 %v7283, %v7281
    %v7732 = vpack.c.bf16 %v7284, %v7282
    %v7733 = vld [vmem:[#allocation5] sm:$0xff]
    %v7734 = vld [vmem:[#allocation5 + $0x8] sm:$0xff]
    %v7735 = vld [vmem:[#allocation5 + $0x10] sm:$0xff]
    %v7736 = vld [vmem:[#allocation5 + $0x18] sm:$0xff]
    %v7737 = vld [vmem:[#allocation5 + $0x20] sm:$0xff]
    %v7738 = vld [vmem:[#allocation5 + $0x28] sm:$0xff]
    %v7739 = vld [vmem:[#allocation5 + $0x30] sm:$0xff]
    %v7740 = vld [vmem:[#allocation5 + $0x38] sm:$0xff]
    %v7741 = vld [vmem:[#allocation5 + $0x40] sm:$0xff]
    %v7742 = vld [vmem:[#allocation5 + $0x48] sm:$0xff]
    %v7743 = vld [vmem:[#allocation5 + $0x50] sm:$0xff]
    %v7744 = vld [vmem:[#allocation5 + $0x58] sm:$0xff]
    %v7745 = vld [vmem:[#allocation5 + $0x60] sm:$0xff]
    %v7746 = vld [vmem:[#allocation5 + $0x68] sm:$0xff]
    %v7747 = vld [vmem:[#allocation5 + $0x70] sm:$0xff]
    %v7748 = vld [vmem:[#allocation5 + $0x78] sm:$0xff]
    %v7749 = vld [vmem:[#allocation5 + $0x80] sm:$0xff]
    %v7750 = vld [vmem:[#allocation5 + $0x88] sm:$0xff]
    %v7751 = vld [vmem:[#allocation5 + $0x90] sm:$0xff]
    %v7752 = vld [vmem:[#allocation5 + $0x98] sm:$0xff]
    %v7753 = vld [vmem:[#allocation5 + $0xa0] sm:$0xff]
    %v7754 = vld [vmem:[#allocation5 + $0xa8] sm:$0xff]
    %v7755 = vld [vmem:[#allocation5 + $0xb0] sm:$0xff]
    %v7756 = vld [vmem:[#allocation5 + $0xb8] sm:$0xff]
    %v7757 = vld [vmem:[#allocation5 + $0xc0] sm:$0xff]
    %v7758 = vld [vmem:[#allocation5 + $0xc8] sm:$0xff]
    %v7759 = vld [vmem:[#allocation5 + $0xd0] sm:$0xff]
    %v7760 = vld [vmem:[#allocation5 + $0xd8] sm:$0xff]
    %v7761 = vld [vmem:[#allocation5 + $0xe0] sm:$0xff]
    %v7762 = vld [vmem:[#allocation5 + $0xe8] sm:$0xff]
    %v7763 = vld [vmem:[#allocation5 + $0xf0] sm:$0xff]
    %v7764 = vld [vmem:[#allocation5 + $0xf8] sm:$0xff]
    %v7765 = vpack.c.bf16 %v6775, %v6773
    %v7766 = vpack.c.bf16 %v6776, %v6774
    %v7767 = vpack.c.bf16 %v6779, %v6777
    %v7768 = vpack.c.bf16 %v6780, %v6778
    %v7769 = vpack.c.bf16 %v6783, %v6781
    %v7770 = vpack.c.bf16 %v6784, %v6782
    %v7771 = vpack.c.bf16 %v6787, %v6785
    %v7772 = vpack.c.bf16 %v6788, %v6786
    %v7773 = vpack.c.bf16 %v6791, %v6789
    %v7774 = vpack.c.bf16 %v6792, %v6790
    %v7775 = vpack.c.bf16 %v6795, %v6793
    %v7776 = vpack.c.bf16 %v6796, %v6794
    %v7777 = vpack.c.bf16 %v6799, %v6797
    %v7778 = vpack.c.bf16 %v6800, %v6798
    %v7779 = vpack.c.bf16 %v6803, %v6801
    %v7780 = vpack.c.bf16 %v6804, %v6802
    %v7781 = vpack.c.bf16 %v6807, %v6805
    %v7782 = vpack.c.bf16 %v6808, %v6806
    %v7783 = vpack.c.bf16 %v6811, %v6809
    %v7784 = vpack.c.bf16 %v6812, %v6810
    %v7785 = vpack.c.bf16 %v6815, %v6813
    %v7786 = vpack.c.bf16 %v6816, %v6814
    %v7787 = vpack.c.bf16 %v6819, %v6817
    %v7788 = vpack.c.bf16 %v6820, %v6818
    %v7789 = vpack.c.bf16 %v6823, %v6821
    %v7790 = vpack.c.bf16 %v6824, %v6822
    %v7791 = vpack.c.bf16 %v6827, %v6825
    %v7792 = vpack.c.bf16 %v6828, %v6826
    %v7793 = vpack.c.bf16 %v6831, %v6829
    %v7794 = vpack.c.bf16 %v6832, %v6830
    %v7795 = vpack.c.bf16 %v6835, %v6833
    %v7796 = vpack.c.bf16 %v6836, %v6834
    %v7797 = vpack.c.bf16 %v6839, %v6837
    %v7798 = vpack.c.bf16 %v6840, %v6838
    %v7799 = vpack.c.bf16 %v6843, %v6841
    %v7800 = vpack.c.bf16 %v6844, %v6842
    %v7801 = vpack.c.bf16 %v6847, %v6845
    %v7802 = vpack.c.bf16 %v6848, %v6846
    %v7803 = vpack.c.bf16 %v6851, %v6849
    %v7804 = vpack.c.bf16 %v6852, %v6850
    %v7805 = vpack.c.bf16 %v6855, %v6853
    %v7806 = vpack.c.bf16 %v6856, %v6854
    %v7807 = vpack.c.bf16 %v6859, %v6857
    %v7808 = vpack.c.bf16 %v6860, %v6858
    %v7809 = vpack.c.bf16 %v6863, %v6861
    %v7810 = vpack.c.bf16 %v6864, %v6862
    %v7811 = vpack.c.bf16 %v6867, %v6865
    %v7812 = vpack.c.bf16 %v6868, %v6866
    %v7813 = vpack.c.bf16 %v6871, %v6869
    %v7814 = vpack.c.bf16 %v6872, %v6870
    %v7815 = vpack.c.bf16 %v6875, %v6873
    %v7816 = vpack.c.bf16 %v6876, %v6874
    %v7817 = vpack.c.bf16 %v6879, %v6877
    %v7818 = vpack.c.bf16 %v6880, %v6878
    %v7819 = vpack.c.bf16 %v6883, %v6881
    %v7820 = vpack.c.bf16 %v6884, %v6882
    %v7821 = vpack.c.bf16 %v6887, %v6885
    %v7822 = vpack.c.bf16 %v6888, %v6886
    %v7823 = vpack.c.bf16 %v6891, %v6889
    %v7824 = vpack.c.bf16 %v6892, %v6890
    %v7825 = vpack.c.bf16 %v6895, %v6893
    %v7826 = vpack.c.bf16 %v6896, %v6894
    %v7827 = vpack.c.bf16 %v6899, %v6897
    %v7828 = vpack.c.bf16 %v6900, %v6898
    %s7829 = scalar_lea.vmem [#allocation5], 256
    %v7830 = vld [vmem:[%s7829] sm:$0xff]
    %v7831 = vld [vmem:[%s7829 + $0x8] sm:$0xff]
    %v7832 = vld [vmem:[%s7829 + $0x10] sm:$0xff]
    %v7833 = vld [vmem:[%s7829 + $0x18] sm:$0xff]
    %v7834 = vld [vmem:[%s7829 + $0x20] sm:$0xff]
    %v7835 = vld [vmem:[%s7829 + $0x28] sm:$0xff]
    %v7836 = vld [vmem:[%s7829 + $0x30] sm:$0xff]
    %v7837 = vld [vmem:[%s7829 + $0x38] sm:$0xff]
    %v7838 = vld [vmem:[%s7829 + $0x40] sm:$0xff]
    %v7839 = vld [vmem:[%s7829 + $0x48] sm:$0xff]
    %v7840 = vld [vmem:[%s7829 + $0x50] sm:$0xff]
    %v7841 = vld [vmem:[%s7829 + $0x58] sm:$0xff]
    %v7842 = vld [vmem:[%s7829 + $0x60] sm:$0xff]
    %v7843 = vld [vmem:[%s7829 + $0x68] sm:$0xff]
    %v7844 = vld [vmem:[%s7829 + $0x70] sm:$0xff]
    %v7845 = vld [vmem:[%s7829 + $0x78] sm:$0xff]
    %v7846 = vld [vmem:[%s7829 + $0x80] sm:$0xff]
    %v7847 = vld [vmem:[%s7829 + $0x88] sm:$0xff]
    %v7848 = vld [vmem:[%s7829 + $0x90] sm:$0xff]
    %v7849 = vld [vmem:[%s7829 + $0x98] sm:$0xff]
    %v7850 = vld [vmem:[%s7829 + $0xa0] sm:$0xff]
    %v7851 = vld [vmem:[%s7829 + $0xa8] sm:$0xff]
    %v7852 = vld [vmem:[%s7829 + $0xb0] sm:$0xff]
    %v7853 = vld [vmem:[%s7829 + $0xb8] sm:$0xff]
    %v7854 = vld [vmem:[%s7829 + $0xc0] sm:$0xff]
    %v7855 = vld [vmem:[%s7829 + $0xc8] sm:$0xff]
    %v7856 = vld [vmem:[%s7829 + $0xd0] sm:$0xff]
    %v7857 = vld [vmem:[%s7829 + $0xd8] sm:$0xff]
    %v7858 = vld [vmem:[%s7829 + $0xe0] sm:$0xff]
    %v7859 = vld [vmem:[%s7829 + $0xe8] sm:$0xff]
    %v7860 = vld [vmem:[%s7829 + $0xf0] sm:$0xff]
    %v7861 = vld [vmem:[%s7829 + $0xf8] sm:$0xff]
    %v7894 = vunpack.c.l.b16 %v7830
    %v7895 = vunpack.c.h.b16 %v7830
    %v7896 = vunpack.c.l.b16 %v7831
    %v7897 = vunpack.c.h.b16 %v7831
    %v7898 = vunpack.c.l.b16 %v7832
    %v7899 = vunpack.c.h.b16 %v7832
    %v7900 = vunpack.c.l.b16 %v7833
    %v7901 = vunpack.c.h.b16 %v7833
    %v7902 = vunpack.c.l.b16 %v7834
    %v7903 = vunpack.c.h.b16 %v7834
    %v7904 = vunpack.c.l.b16 %v7835
    %v7905 = vunpack.c.h.b16 %v7835
    %v7906 = vunpack.c.l.b16 %v7836
    %v7907 = vunpack.c.h.b16 %v7836
    %v7908 = vunpack.c.l.b16 %v7837
    %v7909 = vunpack.c.h.b16 %v7837
    %v7910 = vunpack.c.l.b16 %v7838
    %v7911 = vunpack.c.h.b16 %v7838
    %v7912 = vunpack.c.l.b16 %v7839
    %v7913 = vunpack.c.h.b16 %v7839
    %v7914 = vunpack.c.l.b16 %v7840
    %v7915 = vunpack.c.h.b16 %v7840
    %v7916 = vunpack.c.l.b16 %v7841
    %v7917 = vunpack.c.h.b16 %v7841
    %v7918 = vunpack.c.l.b16 %v7842
    %v7919 = vunpack.c.h.b16 %v7842
    %v7920 = vunpack.c.l.b16 %v7843
    %v7921 = vunpack.c.h.b16 %v7843
    %v7922 = vunpack.c.l.b16 %v7844
    %v7923 = vunpack.c.h.b16 %v7844
    %v7924 = vunpack.c.l.b16 %v7845
    %v7925 = vunpack.c.h.b16 %v7845
    %v7926 = vunpack.c.l.b16 %v7846
    %v7927 = vunpack.c.h.b16 %v7846
    %v7928 = vunpack.c.l.b16 %v7847
    %v7929 = vunpack.c.h.b16 %v7847
    %v7930 = vunpack.c.l.b16 %v7848
    %v7931 = vunpack.c.h.b16 %v7848
    %v7932 = vunpack.c.l.b16 %v7849
    %v7933 = vunpack.c.h.b16 %v7849
    %v7934 = vunpack.c.l.b16 %v7850
    %v7935 = vunpack.c.h.b16 %v7850
    %v7936 = vunpack.c.l.b16 %v7851
    %v7937 = vunpack.c.h.b16 %v7851
    %v7938 = vunpack.c.l.b16 %v7852
    %v7939 = vunpack.c.h.b16 %v7852
    %v7940 = vunpack.c.l.b16 %v7853
    %v7941 = vunpack.c.h.b16 %v7853
    %v7942 = vunpack.c.l.b16 %v7854
    %v7943 = vunpack.c.h.b16 %v7854
    %v7944 = vunpack.c.l.b16 %v7855
    %v7945 = vunpack.c.h.b16 %v7855
    %v7946 = vunpack.c.l.b16 %v7856
    %v7947 = vunpack.c.h.b16 %v7856
    %v7948 = vunpack.c.l.b16 %v7857
    %v7949 = vunpack.c.h.b16 %v7857
    %v7950 = vunpack.c.l.b16 %v7858
    %v7951 = vunpack.c.h.b16 %v7858
    %v7952 = vunpack.c.l.b16 %v7859
    %v7953 = vunpack.c.h.b16 %v7859
    %v7954 = vunpack.c.l.b16 %v7860
    %v7955 = vunpack.c.h.b16 %v7860
    %v7956 = vunpack.c.l.b16 %v7861
    %v7957 = vunpack.c.h.b16 %v7861
    %v7958 = vpack.c.b16 %v7896, %v7894
    %v7959 = vpack.c.b16 %v7897, %v7895
    %v7960 = vpack.c.b16 %v7900, %v7898
    %v7961 = vpack.c.b16 %v7901, %v7899
    %v7962 = vpack.c.b16 %v7904, %v7902
    %v7963 = vpack.c.b16 %v7905, %v7903
    %v7964 = vpack.c.b16 %v7908, %v7906
    %v7965 = vpack.c.b16 %v7909, %v7907
    %v7966 = vpack.c.b16 %v7912, %v7910
    %v7967 = vpack.c.b16 %v7913, %v7911
    %v7968 = vpack.c.b16 %v7916, %v7914
    %v7969 = vpack.c.b16 %v7917, %v7915
    %v7970 = vpack.c.b16 %v7920, %v7918
    %v7971 = vpack.c.b16 %v7921, %v7919
    %v7972 = vpack.c.b16 %v7924, %v7922
    %v7973 = vpack.c.b16 %v7925, %v7923
    %v7974 = vpack.c.b16 %v7928, %v7926
    %v7975 = vpack.c.b16 %v7929, %v7927
    %v7976 = vpack.c.b16 %v7932, %v7930
    %v7977 = vpack.c.b16 %v7933, %v7931
    %v7978 = vpack.c.b16 %v7936, %v7934
    %v7979 = vpack.c.b16 %v7937, %v7935
    %v7980 = vpack.c.b16 %v7940, %v7938
    %v7981 = vpack.c.b16 %v7941, %v7939
    %v7982 = vpack.c.b16 %v7944, %v7942
    %v7983 = vpack.c.b16 %v7945, %v7943
    %v7984 = vpack.c.b16 %v7948, %v7946
    %v7985 = vpack.c.b16 %v7949, %v7947
    %v7986 = vpack.c.b16 %v7952, %v7950
    %v7987 = vpack.c.b16 %v7953, %v7951
    %v7988 = vpack.c.b16 %v7956, %v7954
    %v7989 = vpack.c.b16 %v7957, %v7955
    %8022 = vmatpush.bf16.msra.mxu0 %v7972
    %8023 = vmatpush.bf16.msra.mxu0 %v7970
    %8024 = vmatpush.bf16.msra.mxu0 %v7968
    %8025 = vmatpush.bf16.msra.mxu0 %v7966
    %8026 = vmatpush.bf16.msra.mxu0 %v7964
    %8027 = vmatpush.bf16.msra.mxu0 %v7962
    %8028 = vmatpush.bf16.msra.mxu0 %v7960
    %8029 = vmatpush.bf16.msra.mxu0 %v7958
    %8030 = vmatmul.bf16.gmra.mxu0 %v7765
    %v8031 = vpop.f32.mrf.mxu0
    %v8032 = vadd.f32 0.0, %v8031
    %v8033 = vpop.f32.mrf.mxu0
    %v8034 = vadd.f32 0.0, %v8033
    %8035 = vmatmul.bf16.gmra.mxu0 %v7767
    %v8036 = vpop.f32.mrf.mxu0
    %v8037 = vadd.f32 0.0, %v8036
    %v8038 = vpop.f32.mrf.mxu0
    %v8039 = vadd.f32 0.0, %v8038
    %8040 = vmatmul.bf16.gmra.mxu0 %v7769
    %v8041 = vpop.f32.mrf.mxu0
    %v8042 = vadd.f32 0.0, %v8041
    %v8043 = vpop.f32.mrf.mxu0
    %v8044 = vadd.f32 0.0, %v8043
    %8045 = vmatmul.bf16.gmra.mxu0 %v7771
    %v8046 = vpop.f32.mrf.mxu0
    %v8047 = vadd.f32 0.0, %v8046
    %v8048 = vpop.f32.mrf.mxu0
    %v8049 = vadd.f32 0.0, %v8048
    %8050 = vmatmul.bf16.gmra.mxu0 %v7773
    %v8051 = vpop.f32.mrf.mxu0
    %v8052 = vadd.f32 0.0, %v8051
    %v8053 = vpop.f32.mrf.mxu0
    %v8054 = vadd.f32 0.0, %v8053
    %8055 = vmatmul.bf16.gmra.mxu0 %v7775
    %v8056 = vpop.f32.mrf.mxu0
    %v8057 = vadd.f32 0.0, %v8056
    %v8058 = vpop.f32.mrf.mxu0
    %v8059 = vadd.f32 0.0, %v8058
    %8060 = vmatmul.bf16.gmra.mxu0 %v7777
    %v8061 = vpop.f32.mrf.mxu0
    %v8062 = vadd.f32 0.0, %v8061
    %v8063 = vpop.f32.mrf.mxu0
    %v8064 = vadd.f32 0.0, %v8063
    %8065 = vmatmul.bf16.gmra.mxu0 %v7779
    %v8066 = vpop.f32.mrf.mxu0
    %v8067 = vadd.f32 0.0, %v8066
    %v8068 = vpop.f32.mrf.mxu0
    %v8069 = vadd.f32 0.0, %v8068
    %8070 = vmatmul.bf16.gmra.mxu0 %v7781
    %v8071 = vpop.f32.mrf.mxu0
    %v8072 = vadd.f32 0.0, %v8071
    %v8073 = vpop.f32.mrf.mxu0
    %v8074 = vadd.f32 0.0, %v8073
    %8075 = vmatmul.bf16.gmra.mxu0 %v7783
    %v8076 = vpop.f32.mrf.mxu0
    %v8077 = vadd.f32 0.0, %v8076
    %v8078 = vpop.f32.mrf.mxu0
    %v8079 = vadd.f32 0.0, %v8078
    %8080 = vmatmul.bf16.gmra.mxu0 %v7785
    %v8081 = vpop.f32.mrf.mxu0
    %v8082 = vadd.f32 0.0, %v8081
    %v8083 = vpop.f32.mrf.mxu0
    %v8084 = vadd.f32 0.0, %v8083
    %8085 = vmatmul.bf16.gmra.mxu0 %v7787
    %v8086 = vpop.f32.mrf.mxu0
    %v8087 = vadd.f32 0.0, %v8086
    %v8088 = vpop.f32.mrf.mxu0
    %v8089 = vadd.f32 0.0, %v8088
    %8090 = vmatmul.bf16.gmra.mxu0 %v7789
    %v8091 = vpop.f32.mrf.mxu0
    %v8092 = vadd.f32 0.0, %v8091
    %v8093 = vpop.f32.mrf.mxu0
    %v8094 = vadd.f32 0.0, %v8093
    %8095 = vmatmul.bf16.gmra.mxu0 %v7791
    %v8096 = vpop.f32.mrf.mxu0
    %v8097 = vadd.f32 0.0, %v8096
    %v8098 = vpop.f32.mrf.mxu0
    %v8099 = vadd.f32 0.0, %v8098
    %8100 = vmatmul.bf16.gmra.mxu0 %v7793
    %v8101 = vpop.f32.mrf.mxu0
    %v8102 = vadd.f32 0.0, %v8101
    %v8103 = vpop.f32.mrf.mxu0
    %v8104 = vadd.f32 0.0, %v8103
    %8105 = vmatmul.bf16.gmra.mxu0 %v7795
    %v8106 = vpop.f32.mrf.mxu0
    %v8107 = vadd.f32 0.0, %v8106
    %v8108 = vpop.f32.mrf.mxu0
    %v8109 = vadd.f32 0.0, %v8108
    %8110 = vmatmul.bf16.gmra.mxu0 %v7797
    %v8111 = vpop.f32.mrf.mxu0
    %v8112 = vadd.f32 0.0, %v8111
    %v8113 = vpop.f32.mrf.mxu0
    %v8114 = vadd.f32 0.0, %v8113
    %8115 = vmatmul.bf16.gmra.mxu0 %v7799
    %v8116 = vpop.f32.mrf.mxu0
    %v8117 = vadd.f32 0.0, %v8116
    %v8118 = vpop.f32.mrf.mxu0
    %v8119 = vadd.f32 0.0, %v8118
    %8120 = vmatmul.bf16.gmra.mxu0 %v7801
    %v8121 = vpop.f32.mrf.mxu0
    %v8122 = vadd.f32 0.0, %v8121
    %v8123 = vpop.f32.mrf.mxu0
    %v8124 = vadd.f32 0.0, %v8123
    %8125 = vmatmul.bf16.gmra.mxu0 %v7803
    %v8126 = vpop.f32.mrf.mxu0
    %v8127 = vadd.f32 0.0, %v8126
    %v8128 = vpop.f32.mrf.mxu0
    %v8129 = vadd.f32 0.0, %v8128
    %8130 = vmatmul.bf16.gmra.mxu0 %v7805
    %v8131 = vpop.f32.mrf.mxu0
    %v8132 = vadd.f32 0.0, %v8131
    %v8133 = vpop.f32.mrf.mxu0
    %v8134 = vadd.f32 0.0, %v8133
    %8135 = vmatmul.bf16.gmra.mxu0 %v7807
    %v8136 = vpop.f32.mrf.mxu0
    %v8137 = vadd.f32 0.0, %v8136
    %v8138 = vpop.f32.mrf.mxu0
    %v8139 = vadd.f32 0.0, %v8138
    %8140 = vmatmul.bf16.gmra.mxu0 %v7809
    %v8141 = vpop.f32.mrf.mxu0
    %v8142 = vadd.f32 0.0, %v8141
    %v8143 = vpop.f32.mrf.mxu0
    %v8144 = vadd.f32 0.0, %v8143
    %8145 = vmatmul.bf16.gmra.mxu0 %v7811
    %v8146 = vpop.f32.mrf.mxu0
    %v8147 = vadd.f32 0.0, %v8146
    %v8148 = vpop.f32.mrf.mxu0
    %v8149 = vadd.f32 0.0, %v8148
    %8150 = vmatmul.bf16.gmra.mxu0 %v7813
    %v8151 = vpop.f32.mrf.mxu0
    %v8152 = vadd.f32 0.0, %v8151
    %v8153 = vpop.f32.mrf.mxu0
    %v8154 = vadd.f32 0.0, %v8153
    %8155 = vmatmul.bf16.gmra.mxu0 %v7815
    %v8156 = vpop.f32.mrf.mxu0
    %v8157 = vadd.f32 0.0, %v8156
    %v8158 = vpop.f32.mrf.mxu0
    %v8159 = vadd.f32 0.0, %v8158
    %8160 = vmatmul.bf16.gmra.mxu0 %v7817
    %v8161 = vpop.f32.mrf.mxu0
    %v8162 = vadd.f32 0.0, %v8161
    %v8163 = vpop.f32.mrf.mxu0
    %v8164 = vadd.f32 0.0, %v8163
    %8165 = vmatmul.bf16.gmra.mxu0 %v7819
    %v8166 = vpop.f32.mrf.mxu0
    %v8167 = vadd.f32 0.0, %v8166
    %v8168 = vpop.f32.mrf.mxu0
    %v8169 = vadd.f32 0.0, %v8168
    %8170 = vmatmul.bf16.gmra.mxu0 %v7821
    %v8171 = vpop.f32.mrf.mxu0
    %v8172 = vadd.f32 0.0, %v8171
    %v8173 = vpop.f32.mrf.mxu0
    %v8174 = vadd.f32 0.0, %v8173
    %8175 = vmatmul.bf16.gmra.mxu0 %v7823
    %v8176 = vpop.f32.mrf.mxu0
    %v8177 = vadd.f32 0.0, %v8176
    %v8178 = vpop.f32.mrf.mxu0
    %v8179 = vadd.f32 0.0, %v8178
    %8180 = vmatmul.bf16.gmra.mxu0 %v7825
    %v8181 = vpop.f32.mrf.mxu0
    %v8182 = vadd.f32 0.0, %v8181
    %v8183 = vpop.f32.mrf.mxu0
    %v8184 = vadd.f32 0.0, %v8183
    %8185 = vmatmul.bf16.gmra.mxu0 %v7827
    %v8186 = vpop.f32.mrf.mxu0
    %v8187 = vadd.f32 0.0, %v8186
    %v8188 = vpop.f32.mrf.mxu0
    %v8189 = vadd.f32 0.0, %v8188
    %8190 = vdwg.mxu0
    %8191 = vmatpush.bf16.msra.mxu0 %v7988
    %8192 = vmatpush.bf16.msra.mxu0 %v7986
    %8193 = vmatpush.bf16.msra.mxu0 %v7984
    %8194 = vmatpush.bf16.msra.mxu0 %v7982
    %8195 = vmatpush.bf16.msra.mxu0 %v7980
    %8196 = vmatpush.bf16.msra.mxu0 %v7978
    %8197 = vmatpush.bf16.msra.mxu0 %v7976
    %8198 = vmatpush.bf16.msra.mxu0 %v7974
    %8199 = vmatmul.bf16.gmra.mxu0 %v7766
    %v8200 = vpop.f32.mrf.mxu0
    %v8201 = vadd.f32 %v8032, %v8200
    %v8202 = vpop.f32.mrf.mxu0
    %v8203 = vadd.f32 %v8034, %v8202
    %8204 = vmatmul.bf16.gmra.mxu0 %v7768
    %v8205 = vpop.f32.mrf.mxu0
    %v8206 = vadd.f32 %v8037, %v8205
    %v8207 = vpop.f32.mrf.mxu0
    %v8208 = vadd.f32 %v8039, %v8207
    %8209 = vmatmul.bf16.gmra.mxu0 %v7770
    %v8210 = vpop.f32.mrf.mxu0
    %v8211 = vadd.f32 %v8042, %v8210
    %v8212 = vpop.f32.mrf.mxu0
    %v8213 = vadd.f32 %v8044, %v8212
    %8214 = vmatmul.bf16.gmra.mxu0 %v7772
    %v8215 = vpop.f32.mrf.mxu0
    %v8216 = vadd.f32 %v8047, %v8215
    %v8217 = vpop.f32.mrf.mxu0
    %v8218 = vadd.f32 %v8049, %v8217
    %8219 = vmatmul.bf16.gmra.mxu0 %v7774
    %v8220 = vpop.f32.mrf.mxu0
    %v8221 = vadd.f32 %v8052, %v8220
    %v8222 = vpop.f32.mrf.mxu0
    %v8223 = vadd.f32 %v8054, %v8222
    %8224 = vmatmul.bf16.gmra.mxu0 %v7776
    %v8225 = vpop.f32.mrf.mxu0
    %v8226 = vadd.f32 %v8057, %v8225
    %v8227 = vpop.f32.mrf.mxu0
    %v8228 = vadd.f32 %v8059, %v8227
    %8229 = vmatmul.bf16.gmra.mxu0 %v7778
    %v8230 = vpop.f32.mrf.mxu0
    %v8231 = vadd.f32 %v8062, %v8230
    %v8232 = vpop.f32.mrf.mxu0
    %v8233 = vadd.f32 %v8064, %v8232
    %8234 = vmatmul.bf16.gmra.mxu0 %v7780
    %v8235 = vpop.f32.mrf.mxu0
    %v8236 = vadd.f32 %v8067, %v8235
    %v8237 = vpop.f32.mrf.mxu0
    %v8238 = vadd.f32 %v8069, %v8237
    %8239 = vmatmul.bf16.gmra.mxu0 %v7782
    %v8240 = vpop.f32.mrf.mxu0
    %v8241 = vadd.f32 %v8072, %v8240
    %v8242 = vpop.f32.mrf.mxu0
    %v8243 = vadd.f32 %v8074, %v8242
    %8244 = vmatmul.bf16.gmra.mxu0 %v7784
    %v8245 = vpop.f32.mrf.mxu0
    %v8246 = vadd.f32 %v8077, %v8245
    %v8247 = vpop.f32.mrf.mxu0
    %v8248 = vadd.f32 %v8079, %v8247
    %8249 = vmatmul.bf16.gmra.mxu0 %v7786
    %v8250 = vpop.f32.mrf.mxu0
    %v8251 = vadd.f32 %v8082, %v8250
    %v8252 = vpop.f32.mrf.mxu0
    %v8253 = vadd.f32 %v8084, %v8252
    %8254 = vmatmul.bf16.gmra.mxu0 %v7788
    %v8255 = vpop.f32.mrf.mxu0
    %v8256 = vadd.f32 %v8087, %v8255
    %v8257 = vpop.f32.mrf.mxu0
    %v8258 = vadd.f32 %v8089, %v8257
    %8259 = vmatmul.bf16.gmra.mxu0 %v7790
    %v8260 = vpop.f32.mrf.mxu0
    %v8261 = vadd.f32 %v8092, %v8260
    %v8262 = vpop.f32.mrf.mxu0
    %v8263 = vadd.f32 %v8094, %v8262
    %8264 = vmatmul.bf16.gmra.mxu0 %v7792
    %v8265 = vpop.f32.mrf.mxu0
    %v8266 = vadd.f32 %v8097, %v8265
    %v8267 = vpop.f32.mrf.mxu0
    %v8268 = vadd.f32 %v8099, %v8267
    %8269 = vmatmul.bf16.gmra.mxu0 %v7794
    %v8270 = vpop.f32.mrf.mxu0
    %v8271 = vadd.f32 %v8102, %v8270
    %v8272 = vpop.f32.mrf.mxu0
    %v8273 = vadd.f32 %v8104, %v8272
    %8274 = vmatmul.bf16.gmra.mxu0 %v7796
    %v8275 = vpop.f32.mrf.mxu0
    %v8276 = vadd.f32 %v8107, %v8275
    %v8277 = vpop.f32.mrf.mxu0
    %v8278 = vadd.f32 %v8109, %v8277
    %8279 = vmatmul.bf16.gmra.mxu0 %v7798
    %v8280 = vpop.f32.mrf.mxu0
    %v8281 = vadd.f32 %v8112, %v8280
    %v8282 = vpop.f32.mrf.mxu0
    %v8283 = vadd.f32 %v8114, %v8282
    %8284 = vmatmul.bf16.gmra.mxu0 %v7800
    %v8285 = vpop.f32.mrf.mxu0
    %v8286 = vadd.f32 %v8117, %v8285
    %v8287 = vpop.f32.mrf.mxu0
    %v8288 = vadd.f32 %v8119, %v8287
    %8289 = vmatmul.bf16.gmra.mxu0 %v7802
    %v8290 = vpop.f32.mrf.mxu0
    %v8291 = vadd.f32 %v8122, %v8290
    %v8292 = vpop.f32.mrf.mxu0
    %v8293 = vadd.f32 %v8124, %v8292
    %8294 = vmatmul.bf16.gmra.mxu0 %v7804
    %v8295 = vpop.f32.mrf.mxu0
    %v8296 = vadd.f32 %v8127, %v8295
    %v8297 = vpop.f32.mrf.mxu0
    %v8298 = vadd.f32 %v8129, %v8297
    %8299 = vmatmul.bf16.gmra.mxu0 %v7806
    %v8300 = vpop.f32.mrf.mxu0
    %v8301 = vadd.f32 %v8132, %v8300
    %v8302 = vpop.f32.mrf.mxu0
    %v8303 = vadd.f32 %v8134, %v8302
    %8304 = vmatmul.bf16.gmra.mxu0 %v7808
    %v8305 = vpop.f32.mrf.mxu0
    %v8306 = vadd.f32 %v8137, %v8305
    %v8307 = vpop.f32.mrf.mxu0
    %v8308 = vadd.f32 %v8139, %v8307
    %8309 = vmatmul.bf16.gmra.mxu0 %v7810
    %v8310 = vpop.f32.mrf.mxu0
    %v8311 = vadd.f32 %v8142, %v8310
    %v8312 = vpop.f32.mrf.mxu0
    %v8313 = vadd.f32 %v8144, %v8312
    %8314 = vmatmul.bf16.gmra.mxu0 %v7812
    %v8315 = vpop.f32.mrf.mxu0
    %v8316 = vadd.f32 %v8147, %v8315
    %v8317 = vpop.f32.mrf.mxu0
    %v8318 = vadd.f32 %v8149, %v8317
    %8319 = vmatmul.bf16.gmra.mxu0 %v7814
    %v8320 = vpop.f32.mrf.mxu0
    %v8321 = vadd.f32 %v8152, %v8320
    %v8322 = vpop.f32.mrf.mxu0
    %v8323 = vadd.f32 %v8154, %v8322
    %8324 = vmatmul.bf16.gmra.mxu0 %v7816
    %v8325 = vpop.f32.mrf.mxu0
    %v8326 = vadd.f32 %v8157, %v8325
    %v8327 = vpop.f32.mrf.mxu0
    %v8328 = vadd.f32 %v8159, %v8327
    %8329 = vmatmul.bf16.gmra.mxu0 %v7818
    %v8330 = vpop.f32.mrf.mxu0
    %v8331 = vadd.f32 %v8162, %v8330
    %v8332 = vpop.f32.mrf.mxu0
    %v8333 = vadd.f32 %v8164, %v8332
    %8334 = vmatmul.bf16.gmra.mxu0 %v7820
    %v8335 = vpop.f32.mrf.mxu0
    %v8336 = vadd.f32 %v8167, %v8335
    %v8337 = vpop.f32.mrf.mxu0
    %v8338 = vadd.f32 %v8169, %v8337
    %8339 = vmatmul.bf16.gmra.mxu0 %v7822
    %v8340 = vpop.f32.mrf.mxu0
    %v8341 = vadd.f32 %v8172, %v8340
    %v8342 = vpop.f32.mrf.mxu0
    %v8343 = vadd.f32 %v8174, %v8342
    %8344 = vmatmul.bf16.gmra.mxu0 %v7824
    %v8345 = vpop.f32.mrf.mxu0
    %v8346 = vadd.f32 %v8177, %v8345
    %v8347 = vpop.f32.mrf.mxu0
    %v8348 = vadd.f32 %v8179, %v8347
    %8349 = vmatmul.bf16.gmra.mxu0 %v7826
    %v8350 = vpop.f32.mrf.mxu0
    %v8351 = vadd.f32 %v8182, %v8350
    %v8352 = vpop.f32.mrf.mxu0
    %v8353 = vadd.f32 %v8184, %v8352
    %8354 = vmatmul.bf16.gmra.mxu0 %v7828
    %v8355 = vpop.f32.mrf.mxu0
    %v8356 = vadd.f32 %v8187, %v8355
    %v8357 = vpop.f32.mrf.mxu0
    %v8358 = vadd.f32 %v8189, %v8357
    %8359 = vdwg.mxu0
    %8360 = vmatpush.bf16.msra.mxu0 %v7973
    %8361 = vmatpush.bf16.msra.mxu0 %v7971
    %8362 = vmatpush.bf16.msra.mxu0 %v7969
    %8363 = vmatpush.bf16.msra.mxu0 %v7967
    %8364 = vmatpush.bf16.msra.mxu0 %v7965
    %8365 = vmatpush.bf16.msra.mxu0 %v7963
    %8366 = vmatpush.bf16.msra.mxu0 %v7961
    %8367 = vmatpush.bf16.msra.mxu0 %v7959
    %8368 = vmatmul.bf16.gmra.mxu0 %v7765
    %v8369 = vpop.f32.mrf.mxu0
    %v8370 = vadd.f32 0.0, %v8369
    %v8371 = vpop.f32.mrf.mxu0
    %v8372 = vadd.f32 0.0, %v8371
    %8373 = vmatmul.bf16.gmra.mxu0 %v7767
    %v8374 = vpop.f32.mrf.mxu0
    %v8375 = vadd.f32 0.0, %v8374
    %v8376 = vpop.f32.mrf.mxu0
    %v8377 = vadd.f32 0.0, %v8376
    %8378 = vmatmul.bf16.gmra.mxu0 %v7769
    %v8379 = vpop.f32.mrf.mxu0
    %v8380 = vadd.f32 0.0, %v8379
    %v8381 = vpop.f32.mrf.mxu0
    %v8382 = vadd.f32 0.0, %v8381
    %8383 = vmatmul.bf16.gmra.mxu0 %v7771
    %v8384 = vpop.f32.mrf.mxu0
    %v8385 = vadd.f32 0.0, %v8384
    %v8386 = vpop.f32.mrf.mxu0
    %v8387 = vadd.f32 0.0, %v8386
    %8388 = vmatmul.bf16.gmra.mxu0 %v7773
    %v8389 = vpop.f32.mrf.mxu0
    %v8390 = vadd.f32 0.0, %v8389
    %v8391 = vpop.f32.mrf.mxu0
    %v8392 = vadd.f32 0.0, %v8391
    %8393 = vmatmul.bf16.gmra.mxu0 %v7775
    %v8394 = vpop.f32.mrf.mxu0
    %v8395 = vadd.f32 0.0, %v8394
    %v8396 = vpop.f32.mrf.mxu0
    %v8397 = vadd.f32 0.0, %v8396
    %8398 = vmatmul.bf16.gmra.mxu0 %v7777
    %v8399 = vpop.f32.mrf.mxu0
    %v8400 = vadd.f32 0.0, %v8399
    %v8401 = vpop.f32.mrf.mxu0
    %v8402 = vadd.f32 0.0, %v8401
    %8403 = vmatmul.bf16.gmra.mxu0 %v7779
    %v8404 = vpop.f32.mrf.mxu0
    %v8405 = vadd.f32 0.0, %v8404
    %v8406 = vpop.f32.mrf.mxu0
    %v8407 = vadd.f32 0.0, %v8406
    %8408 = vmatmul.bf16.gmra.mxu0 %v7781
    %v8409 = vpop.f32.mrf.mxu0
    %v8410 = vadd.f32 0.0, %v8409
    %v8411 = vpop.f32.mrf.mxu0
    %v8412 = vadd.f32 0.0, %v8411
    %8413 = vmatmul.bf16.gmra.mxu0 %v7783
    %v8414 = vpop.f32.mrf.mxu0
    %v8415 = vadd.f32 0.0, %v8414
    %v8416 = vpop.f32.mrf.mxu0
    %v8417 = vadd.f32 0.0, %v8416
    %8418 = vmatmul.bf16.gmra.mxu0 %v7785
    %v8419 = vpop.f32.mrf.mxu0
    %v8420 = vadd.f32 0.0, %v8419
    %v8421 = vpop.f32.mrf.mxu0
    %v8422 = vadd.f32 0.0, %v8421
    %8423 = vmatmul.bf16.gmra.mxu0 %v7787
    %v8424 = vpop.f32.mrf.mxu0
    %v8425 = vadd.f32 0.0, %v8424
    %v8426 = vpop.f32.mrf.mxu0
    %v8427 = vadd.f32 0.0, %v8426
    %8428 = vmatmul.bf16.gmra.mxu0 %v7789
    %v8429 = vpop.f32.mrf.mxu0
    %v8430 = vadd.f32 0.0, %v8429
    %v8431 = vpop.f32.mrf.mxu0
    %v8432 = vadd.f32 0.0, %v8431
    %8433 = vmatmul.bf16.gmra.mxu0 %v7791
    %v8434 = vpop.f32.mrf.mxu0
    %v8435 = vadd.f32 0.0, %v8434
    %v8436 = vpop.f32.mrf.mxu0
    %v8437 = vadd.f32 0.0, %v8436
    %8438 = vmatmul.bf16.gmra.mxu0 %v7793
    %v8439 = vpop.f32.mrf.mxu0
    %v8440 = vadd.f32 0.0, %v8439
    %v8441 = vpop.f32.mrf.mxu0
    %v8442 = vadd.f32 0.0, %v8441
    %8443 = vmatmul.bf16.gmra.mxu0 %v7795
    %v8444 = vpop.f32.mrf.mxu0
    %v8445 = vadd.f32 0.0, %v8444
    %v8446 = vpop.f32.mrf.mxu0
    %v8447 = vadd.f32 0.0, %v8446
    %8448 = vmatmul.bf16.gmra.mxu0 %v7797
    %v8449 = vpop.f32.mrf.mxu0
    %v8450 = vadd.f32 0.0, %v8449
    %v8451 = vpop.f32.mrf.mxu0
    %v8452 = vadd.f32 0.0, %v8451
    %8453 = vmatmul.bf16.gmra.mxu0 %v7799
    %v8454 = vpop.f32.mrf.mxu0
    %v8455 = vadd.f32 0.0, %v8454
    %v8456 = vpop.f32.mrf.mxu0
    %v8457 = vadd.f32 0.0, %v8456
    %8458 = vmatmul.bf16.gmra.mxu0 %v7801
    %v8459 = vpop.f32.mrf.mxu0
    %v8460 = vadd.f32 0.0, %v8459
    %v8461 = vpop.f32.mrf.mxu0
    %v8462 = vadd.f32 0.0, %v8461
    %8463 = vmatmul.bf16.gmra.mxu0 %v7803
    %v8464 = vpop.f32.mrf.mxu0
    %v8465 = vadd.f32 0.0, %v8464
    %v8466 = vpop.f32.mrf.mxu0
    %v8467 = vadd.f32 0.0, %v8466
    %8468 = vmatmul.bf16.gmra.mxu0 %v7805
    %v8469 = vpop.f32.mrf.mxu0
    %v8470 = vadd.f32 0.0, %v8469
    %v8471 = vpop.f32.mrf.mxu0
    %v8472 = vadd.f32 0.0, %v8471
    %8473 = vmatmul.bf16.gmra.mxu0 %v7807
    %v8474 = vpop.f32.mrf.mxu0
    %v8475 = vadd.f32 0.0, %v8474
    %v8476 = vpop.f32.mrf.mxu0
    %v8477 = vadd.f32 0.0, %v8476
    %8478 = vmatmul.bf16.gmra.mxu0 %v7809
    %v8479 = vpop.f32.mrf.mxu0
    %v8480 = vadd.f32 0.0, %v8479
    %v8481 = vpop.f32.mrf.mxu0
    %v8482 = vadd.f32 0.0, %v8481
    %8483 = vmatmul.bf16.gmra.mxu0 %v7811
    %v8484 = vpop.f32.mrf.mxu0
    %v8485 = vadd.f32 0.0, %v8484
    %v8486 = vpop.f32.mrf.mxu0
    %v8487 = vadd.f32 0.0, %v8486
    %8488 = vmatmul.bf16.gmra.mxu0 %v7813
    %v8489 = vpop.f32.mrf.mxu0
    %v8490 = vadd.f32 0.0, %v8489
    %v8491 = vpop.f32.mrf.mxu0
    %v8492 = vadd.f32 0.0, %v8491
    %8493 = vmatmul.bf16.gmra.mxu0 %v7815
    %v8494 = vpop.f32.mrf.mxu0
    %v8495 = vadd.f32 0.0, %v8494
    %v8496 = vpop.f32.mrf.mxu0
    %v8497 = vadd.f32 0.0, %v8496
    %8498 = vmatmul.bf16.gmra.mxu0 %v7817
    %v8499 = vpop.f32.mrf.mxu0
    %v8500 = vadd.f32 0.0, %v8499
    %v8501 = vpop.f32.mrf.mxu0
    %v8502 = vadd.f32 0.0, %v8501
    %8503 = vmatmul.bf16.gmra.mxu0 %v7819
    %v8504 = vpop.f32.mrf.mxu0
    %v8505 = vadd.f32 0.0, %v8504
    %v8506 = vpop.f32.mrf.mxu0
    %v8507 = vadd.f32 0.0, %v8506
    %8508 = vmatmul.bf16.gmra.mxu0 %v7821
    %v8509 = vpop.f32.mrf.mxu0
    %v8510 = vadd.f32 0.0, %v8509
    %v8511 = vpop.f32.mrf.mxu0
    %v8512 = vadd.f32 0.0, %v8511
    %8513 = vmatmul.bf16.gmra.mxu0 %v7823
    %v8514 = vpop.f32.mrf.mxu0
    %v8515 = vadd.f32 0.0, %v8514
    %v8516 = vpop.f32.mrf.mxu0
    %v8517 = vadd.f32 0.0, %v8516
    %8518 = vmatmul.bf16.gmra.mxu0 %v7825
    %v8519 = vpop.f32.mrf.mxu0
    %v8520 = vadd.f32 0.0, %v8519
    %v8521 = vpop.f32.mrf.mxu0
    %v8522 = vadd.f32 0.0, %v8521
    %8523 = vmatmul.bf16.gmra.mxu0 %v7827
    %v8524 = vpop.f32.mrf.mxu0
    %v8525 = vadd.f32 0.0, %v8524
    %v8526 = vpop.f32.mrf.mxu0
    %v8527 = vadd.f32 0.0, %v8526
    %8528 = vdwg.mxu0
    %8529 = vmatpush.bf16.msra.mxu0 %v7989
    %8530 = vmatpush.bf16.msra.mxu0 %v7987
    %8531 = vmatpush.bf16.msra.mxu0 %v7985
    %8532 = vmatpush.bf16.msra.mxu0 %v7983
    %8533 = vmatpush.bf16.msra.mxu0 %v7981
    %8534 = vmatpush.bf16.msra.mxu0 %v7979
    %8535 = vmatpush.bf16.msra.mxu0 %v7977
    %8536 = vmatpush.bf16.msra.mxu0 %v7975
    %8537 = vmatmul.bf16.gmra.mxu0 %v7766
    %v8538 = vpop.f32.mrf.mxu0
    %v8539 = vadd.f32 %v8370, %v8538
    %v8540 = vpop.f32.mrf.mxu0
    %v8541 = vadd.f32 %v8372, %v8540
    %8542 = vmatmul.bf16.gmra.mxu0 %v7768
    %v8543 = vpop.f32.mrf.mxu0
    %v8544 = vadd.f32 %v8375, %v8543
    %v8545 = vpop.f32.mrf.mxu0
    %v8546 = vadd.f32 %v8377, %v8545
    %8547 = vmatmul.bf16.gmra.mxu0 %v7770
    %v8548 = vpop.f32.mrf.mxu0
    %v8549 = vadd.f32 %v8380, %v8548
    %v8550 = vpop.f32.mrf.mxu0
    %v8551 = vadd.f32 %v8382, %v8550
    %8552 = vmatmul.bf16.gmra.mxu0 %v7772
    %v8553 = vpop.f32.mrf.mxu0
    %v8554 = vadd.f32 %v8385, %v8553
    %v8555 = vpop.f32.mrf.mxu0
    %v8556 = vadd.f32 %v8387, %v8555
    %8557 = vmatmul.bf16.gmra.mxu0 %v7774
    %v8558 = vpop.f32.mrf.mxu0
    %v8559 = vadd.f32 %v8390, %v8558
    %v8560 = vpop.f32.mrf.mxu0
    %v8561 = vadd.f32 %v8392, %v8560
    %8562 = vmatmul.bf16.gmra.mxu0 %v7776
    %v8563 = vpop.f32.mrf.mxu0
    %v8564 = vadd.f32 %v8395, %v8563
    %v8565 = vpop.f32.mrf.mxu0
    %v8566 = vadd.f32 %v8397, %v8565
    %8567 = vmatmul.bf16.gmra.mxu0 %v7778
    %v8568 = vpop.f32.mrf.mxu0
    %v8569 = vadd.f32 %v8400, %v8568
    %v8570 = vpop.f32.mrf.mxu0
    %v8571 = vadd.f32 %v8402, %v8570
    %8572 = vmatmul.bf16.gmra.mxu0 %v7780
    %v8573 = vpop.f32.mrf.mxu0
    %v8574 = vadd.f32 %v8405, %v8573
    %v8575 = vpop.f32.mrf.mxu0
    %v8576 = vadd.f32 %v8407, %v8575
    %8577 = vmatmul.bf16.gmra.mxu0 %v7782
    %v8578 = vpop.f32.mrf.mxu0
    %v8579 = vadd.f32 %v8410, %v8578
    %v8580 = vpop.f32.mrf.mxu0
    %v8581 = vadd.f32 %v8412, %v8580
    %8582 = vmatmul.bf16.gmra.mxu0 %v7784
    %v8583 = vpop.f32.mrf.mxu0
    %v8584 = vadd.f32 %v8415, %v8583
    %v8585 = vpop.f32.mrf.mxu0
    %v8586 = vadd.f32 %v8417, %v8585
    %8587 = vmatmul.bf16.gmra.mxu0 %v7786
    %v8588 = vpop.f32.mrf.mxu0
    %v8589 = vadd.f32 %v8420, %v8588
    %v8590 = vpop.f32.mrf.mxu0
    %v8591 = vadd.f32 %v8422, %v8590
    %8592 = vmatmul.bf16.gmra.mxu0 %v7788
    %v8593 = vpop.f32.mrf.mxu0
    %v8594 = vadd.f32 %v8425, %v8593
    %v8595 = vpop.f32.mrf.mxu0
    %v8596 = vadd.f32 %v8427, %v8595
    %8597 = vmatmul.bf16.gmra.mxu0 %v7790
    %v8598 = vpop.f32.mrf.mxu0
    %v8599 = vadd.f32 %v8430, %v8598
    %v8600 = vpop.f32.mrf.mxu0
    %v8601 = vadd.f32 %v8432, %v8600
    %8602 = vmatmul.bf16.gmra.mxu0 %v7792
    %v8603 = vpop.f32.mrf.mxu0
    %v8604 = vadd.f32 %v8435, %v8603
    %v8605 = vpop.f32.mrf.mxu0
    %v8606 = vadd.f32 %v8437, %v8605
    %8607 = vmatmul.bf16.gmra.mxu0 %v7794
    %v8608 = vpop.f32.mrf.mxu0
    %v8609 = vadd.f32 %v8440, %v8608
    %v8610 = vpop.f32.mrf.mxu0
    %v8611 = vadd.f32 %v8442, %v8610
    %8612 = vmatmul.bf16.gmra.mxu0 %v7796
    %v8613 = vpop.f32.mrf.mxu0
    %v8614 = vadd.f32 %v8445, %v8613
    %v8615 = vpop.f32.mrf.mxu0
    %v8616 = vadd.f32 %v8447, %v8615
    %8617 = vmatmul.bf16.gmra.mxu0 %v7798
    %v8618 = vpop.f32.mrf.mxu0
    %v8619 = vadd.f32 %v8450, %v8618
    %v8620 = vpop.f32.mrf.mxu0
    %v8621 = vadd.f32 %v8452, %v8620
    %8622 = vmatmul.bf16.gmra.mxu0 %v7800
    %v8623 = vpop.f32.mrf.mxu0
    %v8624 = vadd.f32 %v8455, %v8623
    %v8625 = vpop.f32.mrf.mxu0
    %v8626 = vadd.f32 %v8457, %v8625
    %8627 = vmatmul.bf16.gmra.mxu0 %v7802
    %v8628 = vpop.f32.mrf.mxu0
    %v8629 = vadd.f32 %v8460, %v8628
    %v8630 = vpop.f32.mrf.mxu0
    %v8631 = vadd.f32 %v8462, %v8630
    %8632 = vmatmul.bf16.gmra.mxu0 %v7804
    %v8633 = vpop.f32.mrf.mxu0
    %v8634 = vadd.f32 %v8465, %v8633
    %v8635 = vpop.f32.mrf.mxu0
    %v8636 = vadd.f32 %v8467, %v8635
    %8637 = vmatmul.bf16.gmra.mxu0 %v7806
    %v8638 = vpop.f32.mrf.mxu0
    %v8639 = vadd.f32 %v8470, %v8638
    %v8640 = vpop.f32.mrf.mxu0
    %v8641 = vadd.f32 %v8472, %v8640
    %8642 = vmatmul.bf16.gmra.mxu0 %v7808
    %v8643 = vpop.f32.mrf.mxu0
    %v8644 = vadd.f32 %v8475, %v8643
    %v8645 = vpop.f32.mrf.mxu0
    %v8646 = vadd.f32 %v8477, %v8645
    %8647 = vmatmul.bf16.gmra.mxu0 %v7810
    %v8648 = vpop.f32.mrf.mxu0
    %v8649 = vadd.f32 %v8480, %v8648
    %v8650 = vpop.f32.mrf.mxu0
    %v8651 = vadd.f32 %v8482, %v8650
    %8652 = vmatmul.bf16.gmra.mxu0 %v7812
    %v8653 = vpop.f32.mrf.mxu0
    %v8654 = vadd.f32 %v8485, %v8653
    %v8655 = vpop.f32.mrf.mxu0
    %v8656 = vadd.f32 %v8487, %v8655
    %8657 = vmatmul.bf16.gmra.mxu0 %v7814
    %v8658 = vpop.f32.mrf.mxu0
    %v8659 = vadd.f32 %v8490, %v8658
    %v8660 = vpop.f32.mrf.mxu0
    %v8661 = vadd.f32 %v8492, %v8660
    %8662 = vmatmul.bf16.gmra.mxu0 %v7816
    %v8663 = vpop.f32.mrf.mxu0
    %v8664 = vadd.f32 %v8495, %v8663
    %v8665 = vpop.f32.mrf.mxu0
    %v8666 = vadd.f32 %v8497, %v8665
    %8667 = vmatmul.bf16.gmra.mxu0 %v7818
    %v8668 = vpop.f32.mrf.mxu0
    %v8669 = vadd.f32 %v8500, %v8668
    %v8670 = vpop.f32.mrf.mxu0
    %v8671 = vadd.f32 %v8502, %v8670
    %8672 = vmatmul.bf16.gmra.mxu0 %v7820
    %v8673 = vpop.f32.mrf.mxu0
    %v8674 = vadd.f32 %v8505, %v8673
    %v8675 = vpop.f32.mrf.mxu0
    %v8676 = vadd.f32 %v8507, %v8675
    %8677 = vmatmul.bf16.gmra.mxu0 %v7822
    %v8678 = vpop.f32.mrf.mxu0
    %v8679 = vadd.f32 %v8510, %v8678
    %v8680 = vpop.f32.mrf.mxu0
    %v8681 = vadd.f32 %v8512, %v8680
    %8682 = vmatmul.bf16.gmra.mxu0 %v7824
    %v8683 = vpop.f32.mrf.mxu0
    %v8684 = vadd.f32 %v8515, %v8683
    %v8685 = vpop.f32.mrf.mxu0
    %v8686 = vadd.f32 %v8517, %v8685
    %8687 = vmatmul.bf16.gmra.mxu0 %v7826
    %v8688 = vpop.f32.mrf.mxu0
    %v8689 = vadd.f32 %v8520, %v8688
    %v8690 = vpop.f32.mrf.mxu0
    %v8691 = vadd.f32 %v8522, %v8690
    %8692 = vmatmul.bf16.gmra.mxu0 %v7828
    %v8693 = vpop.f32.mrf.mxu0
    %v8694 = vadd.f32 %v8525, %v8693
    %v8695 = vpop.f32.mrf.mxu0
    %v8696 = vadd.f32 %v8527, %v8695
    %8697 = vdwg.mxu0
    %v8730 = vunpack.c.l.b16 %v7733
    %v8731 = vunpack.c.h.b16 %v7733
    %v8732 = vunpack.c.l.b16 %v7734
    %v8733 = vunpack.c.h.b16 %v7734
    %v8734 = vunpack.c.l.b16 %v7735
    %v8735 = vunpack.c.h.b16 %v7735
    %v8736 = vunpack.c.l.b16 %v7736
    %v8737 = vunpack.c.h.b16 %v7736
    %v8738 = vunpack.c.l.b16 %v7737
    %v8739 = vunpack.c.h.b16 %v7737
    %v8740 = vunpack.c.l.b16 %v7738
    %v8741 = vunpack.c.h.b16 %v7738
    %v8742 = vunpack.c.l.b16 %v7739
    %v8743 = vunpack.c.h.b16 %v7739
    %v8744 = vunpack.c.l.b16 %v7740
    %v8745 = vunpack.c.h.b16 %v7740
    %v8746 = vunpack.c.l.b16 %v7741
    %v8747 = vunpack.c.h.b16 %v7741
    %v8748 = vunpack.c.l.b16 %v7742
    %v8749 = vunpack.c.h.b16 %v7742
    %v8750 = vunpack.c.l.b16 %v7743
    %v8751 = vunpack.c.h.b16 %v7743
    %v8752 = vunpack.c.l.b16 %v7744
    %v8753 = vunpack.c.h.b16 %v7744
    %v8754 = vunpack.c.l.b16 %v7745
    %v8755 = vunpack.c.h.b16 %v7745
    %v8756 = vunpack.c.l.b16 %v7746
    %v8757 = vunpack.c.h.b16 %v7746
    %v8758 = vunpack.c.l.b16 %v7747
    %v8759 = vunpack.c.h.b16 %v7747
    %v8760 = vunpack.c.l.b16 %v7748
    %v8761 = vunpack.c.h.b16 %v7748
    %v8762 = vunpack.c.l.b16 %v7749
    %v8763 = vunpack.c.h.b16 %v7749
    %v8764 = vunpack.c.l.b16 %v7750
    %v8765 = vunpack.c.h.b16 %v7750
    %v8766 = vunpack.c.l.b16 %v7751
    %v8767 = vunpack.c.h.b16 %v7751
    %v8768 = vunpack.c.l.b16 %v7752
    %v8769 = vunpack.c.h.b16 %v7752
    %v8770 = vunpack.c.l.b16 %v7753
    %v8771 = vunpack.c.h.b16 %v7753
    %v8772 = vunpack.c.l.b16 %v7754
    %v8773 = vunpack.c.h.b16 %v7754
    %v8774 = vunpack.c.l.b16 %v7755
    %v8775 = vunpack.c.h.b16 %v7755
    %v8776 = vunpack.c.l.b16 %v7756
    %v8777 = vunpack.c.h.b16 %v7756
    %v8778 = vunpack.c.l.b16 %v7757
    %v8779 = vunpack.c.h.b16 %v7757
    %v8780 = vunpack.c.l.b16 %v7758
    %v8781 = vunpack.c.h.b16 %v7758
    %v8782 = vunpack.c.l.b16 %v7759
    %v8783 = vunpack.c.h.b16 %v7759
    %v8784 = vunpack.c.l.b16 %v7760
    %v8785 = vunpack.c.h.b16 %v7760
    %v8786 = vunpack.c.l.b16 %v7761
    %v8787 = vunpack.c.h.b16 %v7761
    %v8788 = vunpack.c.l.b16 %v7762
    %v8789 = vunpack.c.h.b16 %v7762
    %v8790 = vunpack.c.l.b16 %v7763
    %v8791 = vunpack.c.h.b16 %v7763
    %v8792 = vunpack.c.l.b16 %v7764
    %v8793 = vunpack.c.h.b16 %v7764
    %v8794 = vpack.c.b16 %v8732, %v8730
    %v8795 = vpack.c.b16 %v8733, %v8731
    %v8796 = vpack.c.b16 %v8736, %v8734
    %v8797 = vpack.c.b16 %v8737, %v8735
    %v8798 = vpack.c.b16 %v8740, %v8738
    %v8799 = vpack.c.b16 %v8741, %v8739
    %v8800 = vpack.c.b16 %v8744, %v8742
    %v8801 = vpack.c.b16 %v8745, %v8743
    %v8802 = vpack.c.b16 %v8748, %v8746
    %v8803 = vpack.c.b16 %v8749, %v8747
    %v8804 = vpack.c.b16 %v8752, %v8750
    %v8805 = vpack.c.b16 %v8753, %v8751
    %v8806 = vpack.c.b16 %v8756, %v8754
    %v8807 = vpack.c.b16 %v8757, %v8755
    %v8808 = vpack.c.b16 %v8760, %v8758
    %v8809 = vpack.c.b16 %v8761, %v8759
    %v8810 = vpack.c.b16 %v8764, %v8762
    %v8811 = vpack.c.b16 %v8765, %v8763
    %v8812 = vpack.c.b16 %v8768, %v8766
    %v8813 = vpack.c.b16 %v8769, %v8767
    %v8814 = vpack.c.b16 %v8772, %v8770
    %v8815 = vpack.c.b16 %v8773, %v8771
    %v8816 = vpack.c.b16 %v8776, %v8774
    %v8817 = vpack.c.b16 %v8777, %v8775
    %v8818 = vpack.c.b16 %v8780, %v8778
    %v8819 = vpack.c.b16 %v8781, %v8779
    %v8820 = vpack.c.b16 %v8784, %v8782
    %v8821 = vpack.c.b16 %v8785, %v8783
    %v8822 = vpack.c.b16 %v8788, %v8786
    %v8823 = vpack.c.b16 %v8789, %v8787
    %v8824 = vpack.c.b16 %v8792, %v8790
    %v8825 = vpack.c.b16 %v8793, %v8791
    %8858 = vmatpush.bf16.msra.mxu0 %v8808
    %8859 = vmatpush.bf16.msra.mxu0 %v8806
    %8860 = vmatpush.bf16.msra.mxu0 %v8804
    %8861 = vmatpush.bf16.msra.mxu0 %v8802
    %8862 = vmatpush.bf16.msra.mxu0 %v8800
    %8863 = vmatpush.bf16.msra.mxu0 %v8798
    %8864 = vmatpush.bf16.msra.mxu0 %v8796
    %8865 = vmatpush.bf16.msra.mxu0 %v8794
    %8866 = vmatmul.bf16.gmra.mxu0 %v7669
    %v8867 = vpop.f32.mrf.mxu0
    %v8868 = vadd.f32 %v8201, %v8867
    %v8869 = vpop.f32.mrf.mxu0
    %v8870 = vadd.f32 %v8203, %v8869
    %8871 = vmatmul.bf16.gmra.mxu0 %v7671
    %v8872 = vpop.f32.mrf.mxu0
    %v8873 = vadd.f32 %v8206, %v8872
    %v8874 = vpop.f32.mrf.mxu0
    %v8875 = vadd.f32 %v8208, %v8874
    %8876 = vmatmul.bf16.gmra.mxu0 %v7673
    %v8877 = vpop.f32.mrf.mxu0
    %v8878 = vadd.f32 %v8211, %v8877
    %v8879 = vpop.f32.mrf.mxu0
    %v8880 = vadd.f32 %v8213, %v8879
    %8881 = vmatmul.bf16.gmra.mxu0 %v7675
    %v8882 = vpop.f32.mrf.mxu0
    %v8883 = vadd.f32 %v8216, %v8882
    %v8884 = vpop.f32.mrf.mxu0
    %v8885 = vadd.f32 %v8218, %v8884
    %8886 = vmatmul.bf16.gmra.mxu0 %v7677
    %v8887 = vpop.f32.mrf.mxu0
    %v8888 = vadd.f32 %v8221, %v8887
    %v8889 = vpop.f32.mrf.mxu0
    %v8890 = vadd.f32 %v8223, %v8889
    %8891 = vmatmul.bf16.gmra.mxu0 %v7679
    %v8892 = vpop.f32.mrf.mxu0
    %v8893 = vadd.f32 %v8226, %v8892
    %v8894 = vpop.f32.mrf.mxu0
    %v8895 = vadd.f32 %v8228, %v8894
    %8896 = vmatmul.bf16.gmra.mxu0 %v7681
    %v8897 = vpop.f32.mrf.mxu0
    %v8898 = vadd.f32 %v8231, %v8897
    %v8899 = vpop.f32.mrf.mxu0
    %v8900 = vadd.f32 %v8233, %v8899
    %8901 = vmatmul.bf16.gmra.mxu0 %v7683
    %v8902 = vpop.f32.mrf.mxu0
    %v8903 = vadd.f32 %v8236, %v8902
    %v8904 = vpop.f32.mrf.mxu0
    %v8905 = vadd.f32 %v8238, %v8904
    %8906 = vmatmul.bf16.gmra.mxu0 %v7685
    %v8907 = vpop.f32.mrf.mxu0
    %v8908 = vadd.f32 %v8241, %v8907
    %v8909 = vpop.f32.mrf.mxu0
    %v8910 = vadd.f32 %v8243, %v8909
    %8911 = vmatmul.bf16.gmra.mxu0 %v7687
    %v8912 = vpop.f32.mrf.mxu0
    %v8913 = vadd.f32 %v8246, %v8912
    %v8914 = vpop.f32.mrf.mxu0
    %v8915 = vadd.f32 %v8248, %v8914
    %8916 = vmatmul.bf16.gmra.mxu0 %v7689
    %v8917 = vpop.f32.mrf.mxu0
    %v8918 = vadd.f32 %v8251, %v8917
    %v8919 = vpop.f32.mrf.mxu0
    %v8920 = vadd.f32 %v8253, %v8919
    %8921 = vmatmul.bf16.gmra.mxu0 %v7691
    %v8922 = vpop.f32.mrf.mxu0
    %v8923 = vadd.f32 %v8256, %v8922
    %v8924 = vpop.f32.mrf.mxu0
    %v8925 = vadd.f32 %v8258, %v8924
    %8926 = vmatmul.bf16.gmra.mxu0 %v7693
    %v8927 = vpop.f32.mrf.mxu0
    %v8928 = vadd.f32 %v8261, %v8927
    %v8929 = vpop.f32.mrf.mxu0
    %v8930 = vadd.f32 %v8263, %v8929
    %8931 = vmatmul.bf16.gmra.mxu0 %v7695
    %v8932 = vpop.f32.mrf.mxu0
    %v8933 = vadd.f32 %v8266, %v8932
    %v8934 = vpop.f32.mrf.mxu0
    %v8935 = vadd.f32 %v8268, %v8934
    %8936 = vmatmul.bf16.gmra.mxu0 %v7697
    %v8937 = vpop.f32.mrf.mxu0
    %v8938 = vadd.f32 %v8271, %v8937
    %v8939 = vpop.f32.mrf.mxu0
    %v8940 = vadd.f32 %v8273, %v8939
    %8941 = vmatmul.bf16.gmra.mxu0 %v7699
    %v8942 = vpop.f32.mrf.mxu0
    %v8943 = vadd.f32 %v8276, %v8942
    %v8944 = vpop.f32.mrf.mxu0
    %v8945 = vadd.f32 %v8278, %v8944
    %8946 = vmatmul.bf16.gmra.mxu0 %v7701
    %v8947 = vpop.f32.mrf.mxu0
    %v8948 = vadd.f32 %v8281, %v8947
    %v8949 = vpop.f32.mrf.mxu0
    %v8950 = vadd.f32 %v8283, %v8949
    %8951 = vmatmul.bf16.gmra.mxu0 %v7703
    %v8952 = vpop.f32.mrf.mxu0
    %v8953 = vadd.f32 %v8286, %v8952
    %v8954 = vpop.f32.mrf.mxu0
    %v8955 = vadd.f32 %v8288, %v8954
    %8956 = vmatmul.bf16.gmra.mxu0 %v7705
    %v8957 = vpop.f32.mrf.mxu0
    %v8958 = vadd.f32 %v8291, %v8957
    %v8959 = vpop.f32.mrf.mxu0
    %v8960 = vadd.f32 %v8293, %v8959
    %8961 = vmatmul.bf16.gmra.mxu0 %v7707
    %v8962 = vpop.f32.mrf.mxu0
    %v8963 = vadd.f32 %v8296, %v8962
    %v8964 = vpop.f32.mrf.mxu0
    %v8965 = vadd.f32 %v8298, %v8964
    %8966 = vmatmul.bf16.gmra.mxu0 %v7709
    %v8967 = vpop.f32.mrf.mxu0
    %v8968 = vadd.f32 %v8301, %v8967
    %v8969 = vpop.f32.mrf.mxu0
    %v8970 = vadd.f32 %v8303, %v8969
    %8971 = vmatmul.bf16.gmra.mxu0 %v7711
    %v8972 = vpop.f32.mrf.mxu0
    %v8973 = vadd.f32 %v8306, %v8972
    %v8974 = vpop.f32.mrf.mxu0
    %v8975 = vadd.f32 %v8308, %v8974
    %8976 = vmatmul.bf16.gmra.mxu0 %v7713
    %v8977 = vpop.f32.mrf.mxu0
    %v8978 = vadd.f32 %v8311, %v8977
    %v8979 = vpop.f32.mrf.mxu0
    %v8980 = vadd.f32 %v8313, %v8979
    %8981 = vmatmul.bf16.gmra.mxu0 %v7715
    %v8982 = vpop.f32.mrf.mxu0
    %v8983 = vadd.f32 %v8316, %v8982
    %v8984 = vpop.f32.mrf.mxu0
    %v8985 = vadd.f32 %v8318, %v8984
    %8986 = vmatmul.bf16.gmra.mxu0 %v7717
    %v8987 = vpop.f32.mrf.mxu0
    %v8988 = vadd.f32 %v8321, %v8987
    %v8989 = vpop.f32.mrf.mxu0
    %v8990 = vadd.f32 %v8323, %v8989
    %8991 = vmatmul.bf16.gmra.mxu0 %v7719
    %v8992 = vpop.f32.mrf.mxu0
    %v8993 = vadd.f32 %v8326, %v8992
    %v8994 = vpop.f32.mrf.mxu0
    %v8995 = vadd.f32 %v8328, %v8994
    %8996 = vmatmul.bf16.gmra.mxu0 %v7721
    %v8997 = vpop.f32.mrf.mxu0
    %v8998 = vadd.f32 %v8331, %v8997
    %v8999 = vpop.f32.mrf.mxu0
    %v9000 = vadd.f32 %v8333, %v8999
    %9001 = vmatmul.bf16.gmra.mxu0 %v7723
    %v9002 = vpop.f32.mrf.mxu0
    %v9003 = vadd.f32 %v8336, %v9002
    %v9004 = vpop.f32.mrf.mxu0
    %v9005 = vadd.f32 %v8338, %v9004
    %9006 = vmatmul.bf16.gmra.mxu0 %v7725
    %v9007 = vpop.f32.mrf.mxu0
    %v9008 = vadd.f32 %v8341, %v9007
    %v9009 = vpop.f32.mrf.mxu0
    %v9010 = vadd.f32 %v8343, %v9009
    %9011 = vmatmul.bf16.gmra.mxu0 %v7727
    %v9012 = vpop.f32.mrf.mxu0
    %v9013 = vadd.f32 %v8346, %v9012
    %v9014 = vpop.f32.mrf.mxu0
    %v9015 = vadd.f32 %v8348, %v9014
    %9016 = vmatmul.bf16.gmra.mxu0 %v7729
    %v9017 = vpop.f32.mrf.mxu0
    %v9018 = vadd.f32 %v8351, %v9017
    %v9019 = vpop.f32.mrf.mxu0
    %v9020 = vadd.f32 %v8353, %v9019
    %9021 = vmatmul.bf16.gmra.mxu0 %v7731
    %v9022 = vpop.f32.mrf.mxu0
    %v9023 = vadd.f32 %v8356, %v9022
    %v9024 = vpop.f32.mrf.mxu0
    %v9025 = vadd.f32 %v8358, %v9024
    %9026 = vdwg.mxu0
    %9027 = vmatpush.bf16.msra.mxu0 %v8824
    %9028 = vmatpush.bf16.msra.mxu0 %v8822
    %9029 = vmatpush.bf16.msra.mxu0 %v8820
    %9030 = vmatpush.bf16.msra.mxu0 %v8818
    %9031 = vmatpush.bf16.msra.mxu0 %v8816
    %9032 = vmatpush.bf16.msra.mxu0 %v8814
    %9033 = vmatpush.bf16.msra.mxu0 %v8812
    %9034 = vmatpush.bf16.msra.mxu0 %v8810
    %9035 = vmatmul.bf16.gmra.mxu0 %v7670
    %v9036 = vpop.f32.mrf.mxu0
    %v9037 = vadd.f32 %v8868, %v9036
    %v9038 = vpop.f32.mrf.mxu0
    %v9039 = vadd.f32 %v8870, %v9038
    %9040 = vmatmul.bf16.gmra.mxu0 %v7672
    %v9041 = vpop.f32.mrf.mxu0
    %v9042 = vadd.f32 %v8873, %v9041
    %v9043 = vpop.f32.mrf.mxu0
    %v9044 = vadd.f32 %v8875, %v9043
    %9045 = vmatmul.bf16.gmra.mxu0 %v7674
    %v9046 = vpop.f32.mrf.mxu0
    %v9047 = vadd.f32 %v8878, %v9046
    %v9048 = vpop.f32.mrf.mxu0
    %v9049 = vadd.f32 %v8880, %v9048
    %9050 = vmatmul.bf16.gmra.mxu0 %v7676
    %v9051 = vpop.f32.mrf.mxu0
    %v9052 = vadd.f32 %v8883, %v9051
    %v9053 = vpop.f32.mrf.mxu0
    %v9054 = vadd.f32 %v8885, %v9053
    %9055 = vmatmul.bf16.gmra.mxu0 %v7678
    %v9056 = vpop.f32.mrf.mxu0
    %v9057 = vadd.f32 %v8888, %v9056
    %v9058 = vpop.f32.mrf.mxu0
    %v9059 = vadd.f32 %v8890, %v9058
    %9060 = vmatmul.bf16.gmra.mxu0 %v7680
    %v9061 = vpop.f32.mrf.mxu0
    %v9062 = vadd.f32 %v8893, %v9061
    %v9063 = vpop.f32.mrf.mxu0
    %v9064 = vadd.f32 %v8895, %v9063
    %9065 = vmatmul.bf16.gmra.mxu0 %v7682
    %v9066 = vpop.f32.mrf.mxu0
    %v9067 = vadd.f32 %v8898, %v9066
    %v9068 = vpop.f32.mrf.mxu0
    %v9069 = vadd.f32 %v8900, %v9068
    %9070 = vmatmul.bf16.gmra.mxu0 %v7684
    %v9071 = vpop.f32.mrf.mxu0
    %v9072 = vadd.f32 %v8903, %v9071
    %v9073 = vpop.f32.mrf.mxu0
    %v9074 = vadd.f32 %v8905, %v9073
    %9075 = vmatmul.bf16.gmra.mxu0 %v7686
    %v9076 = vpop.f32.mrf.mxu0
    %v9077 = vadd.f32 %v8908, %v9076
    %v9078 = vpop.f32.mrf.mxu0
    %v9079 = vadd.f32 %v8910, %v9078
    %9080 = vmatmul.bf16.gmra.mxu0 %v7688
    %v9081 = vpop.f32.mrf.mxu0
    %v9082 = vadd.f32 %v8913, %v9081
    %v9083 = vpop.f32.mrf.mxu0
    %v9084 = vadd.f32 %v8915, %v9083
    %9085 = vmatmul.bf16.gmra.mxu0 %v7690
    %v9086 = vpop.f32.mrf.mxu0
    %v9087 = vadd.f32 %v8918, %v9086
    %v9088 = vpop.f32.mrf.mxu0
    %v9089 = vadd.f32 %v8920, %v9088
    %9090 = vmatmul.bf16.gmra.mxu0 %v7692
    %v9091 = vpop.f32.mrf.mxu0
    %v9092 = vadd.f32 %v8923, %v9091
    %v9093 = vpop.f32.mrf.mxu0
    %v9094 = vadd.f32 %v8925, %v9093
    %9095 = vmatmul.bf16.gmra.mxu0 %v7694
    %v9096 = vpop.f32.mrf.mxu0
    %v9097 = vadd.f32 %v8928, %v9096
    %v9098 = vpop.f32.mrf.mxu0
    %v9099 = vadd.f32 %v8930, %v9098
    %9100 = vmatmul.bf16.gmra.mxu0 %v7696
    %v9101 = vpop.f32.mrf.mxu0
    %v9102 = vadd.f32 %v8933, %v9101
    %v9103 = vpop.f32.mrf.mxu0
    %v9104 = vadd.f32 %v8935, %v9103
    %9105 = vmatmul.bf16.gmra.mxu0 %v7698
    %v9106 = vpop.f32.mrf.mxu0
    %v9107 = vadd.f32 %v8938, %v9106
    %v9108 = vpop.f32.mrf.mxu0
    %v9109 = vadd.f32 %v8940, %v9108
    %9110 = vmatmul.bf16.gmra.mxu0 %v7700
    %v9111 = vpop.f32.mrf.mxu0
    %v9112 = vadd.f32 %v8943, %v9111
    %v9113 = vpop.f32.mrf.mxu0
    %v9114 = vadd.f32 %v8945, %v9113
    %9115 = vmatmul.bf16.gmra.mxu0 %v7702
    %v9116 = vpop.f32.mrf.mxu0
    %v9117 = vadd.f32 %v8948, %v9116
    %v9118 = vpop.f32.mrf.mxu0
    %v9119 = vadd.f32 %v8950, %v9118
    %9120 = vmatmul.bf16.gmra.mxu0 %v7704
    %v9121 = vpop.f32.mrf.mxu0
    %v9122 = vadd.f32 %v8953, %v9121
    %v9123 = vpop.f32.mrf.mxu0
    %v9124 = vadd.f32 %v8955, %v9123
    %9125 = vmatmul.bf16.gmra.mxu0 %v7706
    %v9126 = vpop.f32.mrf.mxu0
    %v9127 = vadd.f32 %v8958, %v9126
    %v9128 = vpop.f32.mrf.mxu0
    %v9129 = vadd.f32 %v8960, %v9128
    %9130 = vmatmul.bf16.gmra.mxu0 %v7708
    %v9131 = vpop.f32.mrf.mxu0
    %v9132 = vadd.f32 %v8963, %v9131
    %v9133 = vpop.f32.mrf.mxu0
    %v9134 = vadd.f32 %v8965, %v9133
    %9135 = vmatmul.bf16.gmra.mxu0 %v7710
    %v9136 = vpop.f32.mrf.mxu0
    %v9137 = vadd.f32 %v8968, %v9136
    %v9138 = vpop.f32.mrf.mxu0
    %v9139 = vadd.f32 %v8970, %v9138
    %9140 = vmatmul.bf16.gmra.mxu0 %v7712
    %v9141 = vpop.f32.mrf.mxu0
    %v9142 = vadd.f32 %v8973, %v9141
    %v9143 = vpop.f32.mrf.mxu0
    %v9144 = vadd.f32 %v8975, %v9143
    %9145 = vmatmul.bf16.gmra.mxu0 %v7714
    %v9146 = vpop.f32.mrf.mxu0
    %v9147 = vadd.f32 %v8978, %v9146
    %v9148 = vpop.f32.mrf.mxu0
    %v9149 = vadd.f32 %v8980, %v9148
    %9150 = vmatmul.bf16.gmra.mxu0 %v7716
    %v9151 = vpop.f32.mrf.mxu0
    %v9152 = vadd.f32 %v8983, %v9151
    %v9153 = vpop.f32.mrf.mxu0
    %v9154 = vadd.f32 %v8985, %v9153
    %9155 = vmatmul.bf16.gmra.mxu0 %v7718
    %v9156 = vpop.f32.mrf.mxu0
    %v9157 = vadd.f32 %v8988, %v9156
    %v9158 = vpop.f32.mrf.mxu0
    %v9159 = vadd.f32 %v8990, %v9158
    %9160 = vmatmul.bf16.gmra.mxu0 %v7720
    %v9161 = vpop.f32.mrf.mxu0
    %v9162 = vadd.f32 %v8993, %v9161
    %v9163 = vpop.f32.mrf.mxu0
    %v9164 = vadd.f32 %v8995, %v9163
    %9165 = vmatmul.bf16.gmra.mxu0 %v7722
    %v9166 = vpop.f32.mrf.mxu0
    %v9167 = vadd.f32 %v8998, %v9166
    %v9168 = vpop.f32.mrf.mxu0
    %v9169 = vadd.f32 %v9000, %v9168
    %9170 = vmatmul.bf16.gmra.mxu0 %v7724
    %v9171 = vpop.f32.mrf.mxu0
    %v9172 = vadd.f32 %v9003, %v9171
    %v9173 = vpop.f32.mrf.mxu0
    %v9174 = vadd.f32 %v9005, %v9173
    %9175 = vmatmul.bf16.gmra.mxu0 %v7726
    %v9176 = vpop.f32.mrf.mxu0
    %v9177 = vadd.f32 %v9008, %v9176
    %v9178 = vpop.f32.mrf.mxu0
    %v9179 = vadd.f32 %v9010, %v9178
    %9180 = vmatmul.bf16.gmra.mxu0 %v7728
    %v9181 = vpop.f32.mrf.mxu0
    %v9182 = vadd.f32 %v9013, %v9181
    %v9183 = vpop.f32.mrf.mxu0
    %v9184 = vadd.f32 %v9015, %v9183
    %9185 = vmatmul.bf16.gmra.mxu0 %v7730
    %v9186 = vpop.f32.mrf.mxu0
    %v9187 = vadd.f32 %v9018, %v9186
    %v9188 = vpop.f32.mrf.mxu0
    %v9189 = vadd.f32 %v9020, %v9188
    %9190 = vmatmul.bf16.gmra.mxu0 %v7732
    %v9191 = vpop.f32.mrf.mxu0
    %v9192 = vadd.f32 %v9023, %v9191
    %v9193 = vpop.f32.mrf.mxu0
    %v9194 = vadd.f32 %v9025, %v9193
    %9195 = vdwg.mxu0
    %9196 = vmatpush.bf16.msra.mxu0 %v8809
    %9197 = vmatpush.bf16.msra.mxu0 %v8807
    %9198 = vmatpush.bf16.msra.mxu0 %v8805
    %9199 = vmatpush.bf16.msra.mxu0 %v8803
    %9200 = vmatpush.bf16.msra.mxu0 %v8801
    %9201 = vmatpush.bf16.msra.mxu0 %v8799
    %9202 = vmatpush.bf16.msra.mxu0 %v8797
    %9203 = vmatpush.bf16.msra.mxu0 %v8795
    %9204 = vmatmul.bf16.gmra.mxu0 %v7669
    %v9205 = vpop.f32.mrf.mxu0
    %v9206 = vadd.f32 %v8539, %v9205
    %v9207 = vpop.f32.mrf.mxu0
    %v9208 = vadd.f32 %v8541, %v9207
    %9209 = vmatmul.bf16.gmra.mxu0 %v7671
    %v9210 = vpop.f32.mrf.mxu0
    %v9211 = vadd.f32 %v8544, %v9210
    %v9212 = vpop.f32.mrf.mxu0
    %v9213 = vadd.f32 %v8546, %v9212
    %9214 = vmatmul.bf16.gmra.mxu0 %v7673
    %v9215 = vpop.f32.mrf.mxu0
    %v9216 = vadd.f32 %v8549, %v9215
    %v9217 = vpop.f32.mrf.mxu0
    %v9218 = vadd.f32 %v8551, %v9217
    %9219 = vmatmul.bf16.gmra.mxu0 %v7675
    %v9220 = vpop.f32.mrf.mxu0
    %v9221 = vadd.f32 %v8554, %v9220
    %v9222 = vpop.f32.mrf.mxu0
    %v9223 = vadd.f32 %v8556, %v9222
    %9224 = vmatmul.bf16.gmra.mxu0 %v7677
    %v9225 = vpop.f32.mrf.mxu0
    %v9226 = vadd.f32 %v8559, %v9225
    %v9227 = vpop.f32.mrf.mxu0
    %v9228 = vadd.f32 %v8561, %v9227
    %9229 = vmatmul.bf16.gmra.mxu0 %v7679
    %v9230 = vpop.f32.mrf.mxu0
    %v9231 = vadd.f32 %v8564, %v9230
    %v9232 = vpop.f32.mrf.mxu0
    %v9233 = vadd.f32 %v8566, %v9232
    %9234 = vmatmul.bf16.gmra.mxu0 %v7681
    %v9235 = vpop.f32.mrf.mxu0
    %v9236 = vadd.f32 %v8569, %v9235
    %v9237 = vpop.f32.mrf.mxu0
    %v9238 = vadd.f32 %v8571, %v9237
    %9239 = vmatmul.bf16.gmra.mxu0 %v7683
    %v9240 = vpop.f32.mrf.mxu0
    %v9241 = vadd.f32 %v8574, %v9240
    %v9242 = vpop.f32.mrf.mxu0
    %v9243 = vadd.f32 %v8576, %v9242
    %9244 = vmatmul.bf16.gmra.mxu0 %v7685
    %v9245 = vpop.f32.mrf.mxu0
    %v9246 = vadd.f32 %v8579, %v9245
    %v9247 = vpop.f32.mrf.mxu0
    %v9248 = vadd.f32 %v8581, %v9247
    %9249 = vmatmul.bf16.gmra.mxu0 %v7687
    %v9250 = vpop.f32.mrf.mxu0
    %v9251 = vadd.f32 %v8584, %v9250
    %v9252 = vpop.f32.mrf.mxu0
    %v9253 = vadd.f32 %v8586, %v9252
    %9254 = vmatmul.bf16.gmra.mxu0 %v7689
    %v9255 = vpop.f32.mrf.mxu0
    %v9256 = vadd.f32 %v8589, %v9255
    %v9257 = vpop.f32.mrf.mxu0
    %v9258 = vadd.f32 %v8591, %v9257
    %9259 = vmatmul.bf16.gmra.mxu0 %v7691
    %v9260 = vpop.f32.mrf.mxu0
    %v9261 = vadd.f32 %v8594, %v9260
    %v9262 = vpop.f32.mrf.mxu0
    %v9263 = vadd.f32 %v8596, %v9262
    %9264 = vmatmul.bf16.gmra.mxu0 %v7693
    %v9265 = vpop.f32.mrf.mxu0
    %v9266 = vadd.f32 %v8599, %v9265
    %v9267 = vpop.f32.mrf.mxu0
    %v9268 = vadd.f32 %v8601, %v9267
    %9269 = vmatmul.bf16.gmra.mxu0 %v7695
    %v9270 = vpop.f32.mrf.mxu0
    %v9271 = vadd.f32 %v8604, %v9270
    %v9272 = vpop.f32.mrf.mxu0
    %v9273 = vadd.f32 %v8606, %v9272
    %9274 = vmatmul.bf16.gmra.mxu0 %v7697
    %v9275 = vpop.f32.mrf.mxu0
    %v9276 = vadd.f32 %v8609, %v9275
    %v9277 = vpop.f32.mrf.mxu0
    %v9278 = vadd.f32 %v8611, %v9277
    %9279 = vmatmul.bf16.gmra.mxu0 %v7699
    %v9280 = vpop.f32.mrf.mxu0
    %v9281 = vadd.f32 %v8614, %v9280
    %v9282 = vpop.f32.mrf.mxu0
    %v9283 = vadd.f32 %v8616, %v9282
    %9284 = vmatmul.bf16.gmra.mxu0 %v7701
    %v9285 = vpop.f32.mrf.mxu0
    %v9286 = vadd.f32 %v8619, %v9285
    %v9287 = vpop.f32.mrf.mxu0
    %v9288 = vadd.f32 %v8621, %v9287
    %9289 = vmatmul.bf16.gmra.mxu0 %v7703
    %v9290 = vpop.f32.mrf.mxu0
    %v9291 = vadd.f32 %v8624, %v9290
    %v9292 = vpop.f32.mrf.mxu0
    %v9293 = vadd.f32 %v8626, %v9292
    %9294 = vmatmul.bf16.gmra.mxu0 %v7705
    %v9295 = vpop.f32.mrf.mxu0
    %v9296 = vadd.f32 %v8629, %v9295
    %v9297 = vpop.f32.mrf.mxu0
    %v9298 = vadd.f32 %v8631, %v9297
    %9299 = vmatmul.bf16.gmra.mxu0 %v7707
    %v9300 = vpop.f32.mrf.mxu0
    %v9301 = vadd.f32 %v8634, %v9300
    %v9302 = vpop.f32.mrf.mxu0
    %v9303 = vadd.f32 %v8636, %v9302
    %9304 = vmatmul.bf16.gmra.mxu0 %v7709
    %v9305 = vpop.f32.mrf.mxu0
    %v9306 = vadd.f32 %v8639, %v9305
    %v9307 = vpop.f32.mrf.mxu0
    %v9308 = vadd.f32 %v8641, %v9307
    %9309 = vmatmul.bf16.gmra.mxu0 %v7711
    %v9310 = vpop.f32.mrf.mxu0
    %v9311 = vadd.f32 %v8644, %v9310
    %v9312 = vpop.f32.mrf.mxu0
    %v9313 = vadd.f32 %v8646, %v9312
    %9314 = vmatmul.bf16.gmra.mxu0 %v7713
    %v9315 = vpop.f32.mrf.mxu0
    %v9316 = vadd.f32 %v8649, %v9315
    %v9317 = vpop.f32.mrf.mxu0
    %v9318 = vadd.f32 %v8651, %v9317
    %9319 = vmatmul.bf16.gmra.mxu0 %v7715
    %v9320 = vpop.f32.mrf.mxu0
    %v9321 = vadd.f32 %v8654, %v9320
    %v9322 = vpop.f32.mrf.mxu0
    %v9323 = vadd.f32 %v8656, %v9322
    %9324 = vmatmul.bf16.gmra.mxu0 %v7717
    %v9325 = vpop.f32.mrf.mxu0
    %v9326 = vadd.f32 %v8659, %v9325
    %v9327 = vpop.f32.mrf.mxu0
    %v9328 = vadd.f32 %v8661, %v9327
    %9329 = vmatmul.bf16.gmra.mxu0 %v7719
    %v9330 = vpop.f32.mrf.mxu0
    %v9331 = vadd.f32 %v8664, %v9330
    %v9332 = vpop.f32.mrf.mxu0
    %v9333 = vadd.f32 %v8666, %v9332
    %9334 = vmatmul.bf16.gmra.mxu0 %v7721
    %v9335 = vpop.f32.mrf.mxu0
    %v9336 = vadd.f32 %v8669, %v9335
    %v9337 = vpop.f32.mrf.mxu0
    %v9338 = vadd.f32 %v8671, %v9337
    %9339 = vmatmul.bf16.gmra.mxu0 %v7723
    %v9340 = vpop.f32.mrf.mxu0
    %v9341 = vadd.f32 %v8674, %v9340
    %v9342 = vpop.f32.mrf.mxu0
    %v9343 = vadd.f32 %v8676, %v9342
    %9344 = vmatmul.bf16.gmra.mxu0 %v7725
    %v9345 = vpop.f32.mrf.mxu0
    %v9346 = vadd.f32 %v8679, %v9345
    %v9347 = vpop.f32.mrf.mxu0
    %v9348 = vadd.f32 %v8681, %v9347
    %9349 = vmatmul.bf16.gmra.mxu0 %v7727
    %v9350 = vpop.f32.mrf.mxu0
    %v9351 = vadd.f32 %v8684, %v9350
    %v9352 = vpop.f32.mrf.mxu0
    %v9353 = vadd.f32 %v8686, %v9352
    %9354 = vmatmul.bf16.gmra.mxu0 %v7729
    %v9355 = vpop.f32.mrf.mxu0
    %v9356 = vadd.f32 %v8689, %v9355
    %v9357 = vpop.f32.mrf.mxu0
    %v9358 = vadd.f32 %v8691, %v9357
    %9359 = vmatmul.bf16.gmra.mxu0 %v7731
    %v9360 = vpop.f32.mrf.mxu0
    %v9361 = vadd.f32 %v8694, %v9360
    %v9362 = vpop.f32.mrf.mxu0
    %v9363 = vadd.f32 %v8696, %v9362
    %9364 = vdwg.mxu0
    %9365 = vmatpush.bf16.msra.mxu0 %v8825
    %9366 = vmatpush.bf16.msra.mxu0 %v8823
    %9367 = vmatpush.bf16.msra.mxu0 %v8821
    %9368 = vmatpush.bf16.msra.mxu0 %v8819
    %9369 = vmatpush.bf16.msra.mxu0 %v8817
    %9370 = vmatpush.bf16.msra.mxu0 %v8815
    %9371 = vmatpush.bf16.msra.mxu0 %v8813
    %9372 = vmatpush.bf16.msra.mxu0 %v8811
    %9373 = vmatmul.bf16.gmra.mxu0 %v7670
    %v9374 = vpop.f32.mrf.mxu0
    %v9375 = vadd.f32 %v9206, %v9374
    %v9376 = vpop.f32.mrf.mxu0
    %v9377 = vadd.f32 %v9208, %v9376
    %9378 = vmatmul.bf16.gmra.mxu0 %v7672
    %v9379 = vpop.f32.mrf.mxu0
    %v9380 = vadd.f32 %v9211, %v9379
    %v9381 = vpop.f32.mrf.mxu0
    %v9382 = vadd.f32 %v9213, %v9381
    %9383 = vmatmul.bf16.gmra.mxu0 %v7674
    %v9384 = vpop.f32.mrf.mxu0
    %v9385 = vadd.f32 %v9216, %v9384
    %v9386 = vpop.f32.mrf.mxu0
    %v9387 = vadd.f32 %v9218, %v9386
    %9388 = vmatmul.bf16.gmra.mxu0 %v7676
    %v9389 = vpop.f32.mrf.mxu0
    %v9390 = vadd.f32 %v9221, %v9389
    %v9391 = vpop.f32.mrf.mxu0
    %v9392 = vadd.f32 %v9223, %v9391
    %9393 = vmatmul.bf16.gmra.mxu0 %v7678
    %v9394 = vpop.f32.mrf.mxu0
    %v9395 = vadd.f32 %v9226, %v9394
    %v9396 = vpop.f32.mrf.mxu0
    %v9397 = vadd.f32 %v9228, %v9396
    %9398 = vmatmul.bf16.gmra.mxu0 %v7680
    %v9399 = vpop.f32.mrf.mxu0
    %v9400 = vadd.f32 %v9231, %v9399
    %v9401 = vpop.f32.mrf.mxu0
    %v9402 = vadd.f32 %v9233, %v9401
    %9403 = vmatmul.bf16.gmra.mxu0 %v7682
    %v9404 = vpop.f32.mrf.mxu0
    %v9405 = vadd.f32 %v9236, %v9404
    %v9406 = vpop.f32.mrf.mxu0
    %v9407 = vadd.f32 %v9238, %v9406
    %9408 = vmatmul.bf16.gmra.mxu0 %v7684
    %v9409 = vpop.f32.mrf.mxu0
    %v9410 = vadd.f32 %v9241, %v9409
    %v9411 = vpop.f32.mrf.mxu0
    %v9412 = vadd.f32 %v9243, %v9411
    %9413 = vmatmul.bf16.gmra.mxu0 %v7686
    %v9414 = vpop.f32.mrf.mxu0
    %v9415 = vadd.f32 %v9246, %v9414
    %v9416 = vpop.f32.mrf.mxu0
    %v9417 = vadd.f32 %v9248, %v9416
    %9418 = vmatmul.bf16.gmra.mxu0 %v7688
    %v9419 = vpop.f32.mrf.mxu0
    %v9420 = vadd.f32 %v9251, %v9419
    %v9421 = vpop.f32.mrf.mxu0
    %v9422 = vadd.f32 %v9253, %v9421
    %9423 = vmatmul.bf16.gmra.mxu0 %v7690
    %v9424 = vpop.f32.mrf.mxu0
    %v9425 = vadd.f32 %v9256, %v9424
    %v9426 = vpop.f32.mrf.mxu0
    %v9427 = vadd.f32 %v9258, %v9426
    %9428 = vmatmul.bf16.gmra.mxu0 %v7692
    %v9429 = vpop.f32.mrf.mxu0
    %v9430 = vadd.f32 %v9261, %v9429
    %v9431 = vpop.f32.mrf.mxu0
    %v9432 = vadd.f32 %v9263, %v9431
    %9433 = vmatmul.bf16.gmra.mxu0 %v7694
    %v9434 = vpop.f32.mrf.mxu0
    %v9435 = vadd.f32 %v9266, %v9434
    %v9436 = vpop.f32.mrf.mxu0
    %v9437 = vadd.f32 %v9268, %v9436
    %9438 = vmatmul.bf16.gmra.mxu0 %v7696
    %v9439 = vpop.f32.mrf.mxu0
    %v9440 = vadd.f32 %v9271, %v9439
    %v9441 = vpop.f32.mrf.mxu0
    %v9442 = vadd.f32 %v9273, %v9441
    %9443 = vmatmul.bf16.gmra.mxu0 %v7698
    %v9444 = vpop.f32.mrf.mxu0
    %v9445 = vadd.f32 %v9276, %v9444
    %v9446 = vpop.f32.mrf.mxu0
    %v9447 = vadd.f32 %v9278, %v9446
    %9448 = vmatmul.bf16.gmra.mxu0 %v7700
    %v9449 = vpop.f32.mrf.mxu0
    %v9450 = vadd.f32 %v9281, %v9449
    %v9451 = vpop.f32.mrf.mxu0
    %v9452 = vadd.f32 %v9283, %v9451
    %9453 = vmatmul.bf16.gmra.mxu0 %v7702
    %v9454 = vpop.f32.mrf.mxu0
    %v9455 = vadd.f32 %v9286, %v9454
    %v9456 = vpop.f32.mrf.mxu0
    %v9457 = vadd.f32 %v9288, %v9456
    %9458 = vmatmul.bf16.gmra.mxu0 %v7704
    %v9459 = vpop.f32.mrf.mxu0
    %v9460 = vadd.f32 %v9291, %v9459
    %v9461 = vpop.f32.mrf.mxu0
    %v9462 = vadd.f32 %v9293, %v9461
    %9463 = vmatmul.bf16.gmra.mxu0 %v7706
    %v9464 = vpop.f32.mrf.mxu0
    %v9465 = vadd.f32 %v9296, %v9464
    %v9466 = vpop.f32.mrf.mxu0
    %v9467 = vadd.f32 %v9298, %v9466
    %9468 = vmatmul.bf16.gmra.mxu0 %v7708
    %v9469 = vpop.f32.mrf.mxu0
    %v9470 = vadd.f32 %v9301, %v9469
    %v9471 = vpop.f32.mrf.mxu0
    %v9472 = vadd.f32 %v9303, %v9471
    %9473 = vmatmul.bf16.gmra.mxu0 %v7710
    %v9474 = vpop.f32.mrf.mxu0
    %v9475 = vadd.f32 %v9306, %v9474
    %v9476 = vpop.f32.mrf.mxu0
    %v9477 = vadd.f32 %v9308, %v9476
    %9478 = vmatmul.bf16.gmra.mxu0 %v7712
    %v9479 = vpop.f32.mrf.mxu0
    %v9480 = vadd.f32 %v9311, %v9479
    %v9481 = vpop.f32.mrf.mxu0
    %v9482 = vadd.f32 %v9313, %v9481
    %9483 = vmatmul.bf16.gmra.mxu0 %v7714
    %v9484 = vpop.f32.mrf.mxu0
    %v9485 = vadd.f32 %v9316, %v9484
    %v9486 = vpop.f32.mrf.mxu0
    %v9487 = vadd.f32 %v9318, %v9486
    %9488 = vmatmul.bf16.gmra.mxu0 %v7716
    %v9489 = vpop.f32.mrf.mxu0
    %v9490 = vadd.f32 %v9321, %v9489
    %v9491 = vpop.f32.mrf.mxu0
    %v9492 = vadd.f32 %v9323, %v9491
    %9493 = vmatmul.bf16.gmra.mxu0 %v7718
    %v9494 = vpop.f32.mrf.mxu0
    %v9495 = vadd.f32 %v9326, %v9494
    %v9496 = vpop.f32.mrf.mxu0
    %v9497 = vadd.f32 %v9328, %v9496
    %9498 = vmatmul.bf16.gmra.mxu0 %v7720
    %v9499 = vpop.f32.mrf.mxu0
    %v9500 = vadd.f32 %v9331, %v9499
    %v9501 = vpop.f32.mrf.mxu0
    %v9502 = vadd.f32 %v9333, %v9501
    %9503 = vmatmul.bf16.gmra.mxu0 %v7722
    %v9504 = vpop.f32.mrf.mxu0
    %v9505 = vadd.f32 %v9336, %v9504
    %v9506 = vpop.f32.mrf.mxu0
    %v9507 = vadd.f32 %v9338, %v9506
    %9508 = vmatmul.bf16.gmra.mxu0 %v7724
    %v9509 = vpop.f32.mrf.mxu0
    %v9510 = vadd.f32 %v9341, %v9509
    %v9511 = vpop.f32.mrf.mxu0
    %v9512 = vadd.f32 %v9343, %v9511
    %9513 = vmatmul.bf16.gmra.mxu0 %v7726
    %v9514 = vpop.f32.mrf.mxu0
    %v9515 = vadd.f32 %v9346, %v9514
    %v9516 = vpop.f32.mrf.mxu0
    %v9517 = vadd.f32 %v9348, %v9516
    %9518 = vmatmul.bf16.gmra.mxu0 %v7728
    %v9519 = vpop.f32.mrf.mxu0
    %v9520 = vadd.f32 %v9351, %v9519
    %v9521 = vpop.f32.mrf.mxu0
    %v9522 = vadd.f32 %v9353, %v9521
    %9523 = vmatmul.bf16.gmra.mxu0 %v7730
    %v9524 = vpop.f32.mrf.mxu0
    %v9525 = vadd.f32 %v9356, %v9524
    %v9526 = vpop.f32.mrf.mxu0
    %v9527 = vadd.f32 %v9358, %v9526
    %9528 = vmatmul.bf16.gmra.mxu0 %v7732
    %v9529 = vpop.f32.mrf.mxu0
    %v9530 = vadd.f32 %v9361, %v9529
    %v9531 = vpop.f32.mrf.mxu0
    %v9532 = vadd.f32 %v9363, %v9531
    %9533 = vdwg.mxu0
    %v9534 = vpack.c.bf16 %v7543, %v7541
    %v9535 = vpack.c.bf16 %v7544, %v7542
    %v9536 = vpack.c.bf16 %v7547, %v7545
    %v9537 = vpack.c.bf16 %v7548, %v7546
    %v9538 = vpack.c.bf16 %v7551, %v7549
    %v9539 = vpack.c.bf16 %v7552, %v7550
    %v9540 = vpack.c.bf16 %v7555, %v7553
    %v9541 = vpack.c.bf16 %v7556, %v7554
    %v9542 = vpack.c.bf16 %v7559, %v7557
    %v9543 = vpack.c.bf16 %v7560, %v7558
    %v9544 = vpack.c.bf16 %v7563, %v7561
    %v9545 = vpack.c.bf16 %v7564, %v7562
    %v9546 = vpack.c.bf16 %v7567, %v7565
    %v9547 = vpack.c.bf16 %v7568, %v7566
    %v9548 = vpack.c.bf16 %v7571, %v7569
    %v9549 = vpack.c.bf16 %v7572, %v7570
    %v9550 = vpack.c.bf16 %v7575, %v7573
    %v9551 = vpack.c.bf16 %v7576, %v7574
    %v9552 = vpack.c.bf16 %v7579, %v7577
    %v9553 = vpack.c.bf16 %v7580, %v7578
    %v9554 = vpack.c.bf16 %v7583, %v7581
    %v9555 = vpack.c.bf16 %v7584, %v7582
    %v9556 = vpack.c.bf16 %v7587, %v7585
    %v9557 = vpack.c.bf16 %v7588, %v7586
    %v9558 = vpack.c.bf16 %v7591, %v7589
    %v9559 = vpack.c.bf16 %v7592, %v7590
    %v9560 = vpack.c.bf16 %v7595, %v7593
    %v9561 = vpack.c.bf16 %v7596, %v7594
    %v9562 = vpack.c.bf16 %v7599, %v7597
    %v9563 = vpack.c.bf16 %v7600, %v7598
    %v9564 = vpack.c.bf16 %v7603, %v7601
    %v9565 = vpack.c.bf16 %v7604, %v7602
    %v9566 = vpack.c.bf16 %v7607, %v7605
    %v9567 = vpack.c.bf16 %v7608, %v7606
    %v9568 = vpack.c.bf16 %v7611, %v7609
    %v9569 = vpack.c.bf16 %v7612, %v7610
    %v9570 = vpack.c.bf16 %v7615, %v7613
    %v9571 = vpack.c.bf16 %v7616, %v7614
    %v9572 = vpack.c.bf16 %v7619, %v7617
    %v9573 = vpack.c.bf16 %v7620, %v7618
    %v9574 = vpack.c.bf16 %v7623, %v7621
    %v9575 = vpack.c.bf16 %v7624, %v7622
    %v9576 = vpack.c.bf16 %v7627, %v7625
    %v9577 = vpack.c.bf16 %v7628, %v7626
    %v9578 = vpack.c.bf16 %v7631, %v7629
    %v9579 = vpack.c.bf16 %v7632, %v7630
    %v9580 = vpack.c.bf16 %v7635, %v7633
    %v9581 = vpack.c.bf16 %v7636, %v7634
    %v9582 = vpack.c.bf16 %v7639, %v7637
    %v9583 = vpack.c.bf16 %v7640, %v7638
    %v9584 = vpack.c.bf16 %v7643, %v7641
    %v9585 = vpack.c.bf16 %v7644, %v7642
    %v9586 = vpack.c.bf16 %v7647, %v7645
    %v9587 = vpack.c.bf16 %v7648, %v7646
    %v9588 = vpack.c.bf16 %v7651, %v7649
    %v9589 = vpack.c.bf16 %v7652, %v7650
    %v9590 = vpack.c.bf16 %v7655, %v7653
    %v9591 = vpack.c.bf16 %v7656, %v7654
    %v9592 = vpack.c.bf16 %v7659, %v7657
    %v9593 = vpack.c.bf16 %v7660, %v7658
    %v9594 = vpack.c.bf16 %v7663, %v7661
    %v9595 = vpack.c.bf16 %v7664, %v7662
    %v9596 = vpack.c.bf16 %v7667, %v7665
    %v9597 = vpack.c.bf16 %v7668, %v7666
    %s9598 = scalar_lea.vmem [#allocation5], 512
    %v9599 = vld [vmem:[%s9598] sm:$0xff]
    %v9600 = vld [vmem:[%s9598 + $0x8] sm:$0xff]
    %v9601 = vld [vmem:[%s9598 + $0x10] sm:$0xff]
    %v9602 = vld [vmem:[%s9598 + $0x18] sm:$0xff]
    %v9603 = vld [vmem:[%s9598 + $0x20] sm:$0xff]
    %v9604 = vld [vmem:[%s9598 + $0x28] sm:$0xff]
    %v9605 = vld [vmem:[%s9598 + $0x30] sm:$0xff]
    %v9606 = vld [vmem:[%s9598 + $0x38] sm:$0xff]
    %v9607 = vld [vmem:[%s9598 + $0x40] sm:$0xff]
    %v9608 = vld [vmem:[%s9598 + $0x48] sm:$0xff]
    %v9609 = vld [vmem:[%s9598 + $0x50] sm:$0xff]
    %v9610 = vld [vmem:[%s9598 + $0x58] sm:$0xff]
    %v9611 = vld [vmem:[%s9598 + $0x60] sm:$0xff]
    %v9612 = vld [vmem:[%s9598 + $0x68] sm:$0xff]
    %v9613 = vld [vmem:[%s9598 + $0x70] sm:$0xff]
    %v9614 = vld [vmem:[%s9598 + $0x78] sm:$0xff]
    %v9615 = vld [vmem:[%s9598 + $0x80] sm:$0xff]
    %v9616 = vld [vmem:[%s9598 + $0x88] sm:$0xff]
    %v9617 = vld [vmem:[%s9598 + $0x90] sm:$0xff]
    %v9618 = vld [vmem:[%s9598 + $0x98] sm:$0xff]
    %v9619 = vld [vmem:[%s9598 + $0xa0] sm:$0xff]
    %v9620 = vld [vmem:[%s9598 + $0xa8] sm:$0xff]
    %v9621 = vld [vmem:[%s9598 + $0xb0] sm:$0xff]
    %v9622 = vld [vmem:[%s9598 + $0xb8] sm:$0xff]
    %v9623 = vld [vmem:[%s9598 + $0xc0] sm:$0xff]
    %v9624 = vld [vmem:[%s9598 + $0xc8] sm:$0xff]
    %v9625 = vld [vmem:[%s9598 + $0xd0] sm:$0xff]
    %v9626 = vld [vmem:[%s9598 + $0xd8] sm:$0xff]
    %v9627 = vld [vmem:[%s9598 + $0xe0] sm:$0xff]
    %v9628 = vld [vmem:[%s9598 + $0xe8] sm:$0xff]
    %v9629 = vld [vmem:[%s9598 + $0xf0] sm:$0xff]
    %v9630 = vld [vmem:[%s9598 + $0xf8] sm:$0xff]
    %v9663 = vunpack.c.l.b16 %v9599
    %v9664 = vunpack.c.h.b16 %v9599
    %v9665 = vunpack.c.l.b16 %v9600
    %v9666 = vunpack.c.h.b16 %v9600
    %v9667 = vunpack.c.l.b16 %v9601
    %v9668 = vunpack.c.h.b16 %v9601
    %v9669 = vunpack.c.l.b16 %v9602
    %v9670 = vunpack.c.h.b16 %v9602
    %v9671 = vunpack.c.l.b16 %v9603
    %v9672 = vunpack.c.h.b16 %v9603
    %v9673 = vunpack.c.l.b16 %v9604
    %v9674 = vunpack.c.h.b16 %v9604
    %v9675 = vunpack.c.l.b16 %v9605
    %v9676 = vunpack.c.h.b16 %v9605
    %v9677 = vunpack.c.l.b16 %v9606
    %v9678 = vunpack.c.h.b16 %v9606
    %v9679 = vunpack.c.l.b16 %v9607
    %v9680 = vunpack.c.h.b16 %v9607
    %v9681 = vunpack.c.l.b16 %v9608
    %v9682 = vunpack.c.h.b16 %v9608
    %v9683 = vunpack.c.l.b16 %v9609
    %v9684 = vunpack.c.h.b16 %v9609
    %v9685 = vunpack.c.l.b16 %v9610
    %v9686 = vunpack.c.h.b16 %v9610
    %v9687 = vunpack.c.l.b16 %v9611
    %v9688 = vunpack.c.h.b16 %v9611
    %v9689 = vunpack.c.l.b16 %v9612
    %v9690 = vunpack.c.h.b16 %v9612
    %v9691 = vunpack.c.l.b16 %v9613
    %v9692 = vunpack.c.h.b16 %v9613
    %v9693 = vunpack.c.l.b16 %v9614
    %v9694 = vunpack.c.h.b16 %v9614
    %v9695 = vunpack.c.l.b16 %v9615
    %v9696 = vunpack.c.h.b16 %v9615
    %v9697 = vunpack.c.l.b16 %v9616
    %v9698 = vunpack.c.h.b16 %v9616
    %v9699 = vunpack.c.l.b16 %v9617
    %v9700 = vunpack.c.h.b16 %v9617
    %v9701 = vunpack.c.l.b16 %v9618
    %v9702 = vunpack.c.h.b16 %v9618
    %v9703 = vunpack.c.l.b16 %v9619
    %v9704 = vunpack.c.h.b16 %v9619
    %v9705 = vunpack.c.l.b16 %v9620
    %v9706 = vunpack.c.h.b16 %v9620
    %v9707 = vunpack.c.l.b16 %v9621
    %v9708 = vunpack.c.h.b16 %v9621
    %v9709 = vunpack.c.l.b16 %v9622
    %v9710 = vunpack.c.h.b16 %v9622
    %v9711 = vunpack.c.l.b16 %v9623
    %v9712 = vunpack.c.h.b16 %v9623
    %v9713 = vunpack.c.l.b16 %v9624
    %v9714 = vunpack.c.h.b16 %v9624
    %v9715 = vunpack.c.l.b16 %v9625
    %v9716 = vunpack.c.h.b16 %v9625
    %v9717 = vunpack.c.l.b16 %v9626
    %v9718 = vunpack.c.h.b16 %v9626
    %v9719 = vunpack.c.l.b16 %v9627
    %v9720 = vunpack.c.h.b16 %v9627
    %v9721 = vunpack.c.l.b16 %v9628
    %v9722 = vunpack.c.h.b16 %v9628
    %v9723 = vunpack.c.l.b16 %v9629
    %v9724 = vunpack.c.h.b16 %v9629
    %v9725 = vunpack.c.l.b16 %v9630
    %v9726 = vunpack.c.h.b16 %v9630
    %v9727 = vpack.c.b16 %v9665, %v9663
    %v9728 = vpack.c.b16 %v9666, %v9664
    %v9729 = vpack.c.b16 %v9669, %v9667
    %v9730 = vpack.c.b16 %v9670, %v9668
    %v9731 = vpack.c.b16 %v9673, %v9671
    %v9732 = vpack.c.b16 %v9674, %v9672
    %v9733 = vpack.c.b16 %v9677, %v9675
    %v9734 = vpack.c.b16 %v9678, %v9676
    %v9735 = vpack.c.b16 %v9681, %v9679
    %v9736 = vpack.c.b16 %v9682, %v9680
    %v9737 = vpack.c.b16 %v9685, %v9683
    %v9738 = vpack.c.b16 %v9686, %v9684
    %v9739 = vpack.c.b16 %v9689, %v9687
    %v9740 = vpack.c.b16 %v9690, %v9688
    %v9741 = vpack.c.b16 %v9693, %v9691
    %v9742 = vpack.c.b16 %v9694, %v9692
    %v9743 = vpack.c.b16 %v9697, %v9695
    %v9744 = vpack.c.b16 %v9698, %v9696
    %v9745 = vpack.c.b16 %v9701, %v9699
    %v9746 = vpack.c.b16 %v9702, %v9700
    %v9747 = vpack.c.b16 %v9705, %v9703
    %v9748 = vpack.c.b16 %v9706, %v9704
    %v9749 = vpack.c.b16 %v9709, %v9707
    %v9750 = vpack.c.b16 %v9710, %v9708
    %v9751 = vpack.c.b16 %v9713, %v9711
    %v9752 = vpack.c.b16 %v9714, %v9712
    %v9753 = vpack.c.b16 %v9717, %v9715
    %v9754 = vpack.c.b16 %v9718, %v9716
    %v9755 = vpack.c.b16 %v9721, %v9719
    %v9756 = vpack.c.b16 %v9722, %v9720
    %v9757 = vpack.c.b16 %v9725, %v9723
    %v9758 = vpack.c.b16 %v9726, %v9724
    %9791 = vmatpush.bf16.msra.mxu0 %v9741
    %9792 = vmatpush.bf16.msra.mxu0 %v9739
    %9793 = vmatpush.bf16.msra.mxu0 %v9737
    %9794 = vmatpush.bf16.msra.mxu0 %v9735
    %9795 = vmatpush.bf16.msra.mxu0 %v9733
    %9796 = vmatpush.bf16.msra.mxu0 %v9731
    %9797 = vmatpush.bf16.msra.mxu0 %v9729
    %9798 = vmatpush.bf16.msra.mxu0 %v9727
    %9799 = vmatmul.bf16.gmra.mxu0 %v9534
    %v9800 = vpop.f32.mrf.mxu0
    %v9801 = vadd.f32 0.0, %v9800
    %v9802 = vpop.f32.mrf.mxu0
    %v9803 = vadd.f32 0.0, %v9802
    %9804 = vmatmul.bf16.gmra.mxu0 %v9536
    %v9805 = vpop.f32.mrf.mxu0
    %v9806 = vadd.f32 0.0, %v9805
    %v9807 = vpop.f32.mrf.mxu0
    %v9808 = vadd.f32 0.0, %v9807
    %9809 = vmatmul.bf16.gmra.mxu0 %v9538
    %v9810 = vpop.f32.mrf.mxu0
    %v9811 = vadd.f32 0.0, %v9810
    %v9812 = vpop.f32.mrf.mxu0
    %v9813 = vadd.f32 0.0, %v9812
    %9814 = vmatmul.bf16.gmra.mxu0 %v9540
    %v9815 = vpop.f32.mrf.mxu0
    %v9816 = vadd.f32 0.0, %v9815
    %v9817 = vpop.f32.mrf.mxu0
    %v9818 = vadd.f32 0.0, %v9817
    %9819 = vmatmul.bf16.gmra.mxu0 %v9542
    %v9820 = vpop.f32.mrf.mxu0
    %v9821 = vadd.f32 0.0, %v9820
    %v9822 = vpop.f32.mrf.mxu0
    %v9823 = vadd.f32 0.0, %v9822
    %9824 = vmatmul.bf16.gmra.mxu0 %v9544
    %v9825 = vpop.f32.mrf.mxu0
    %v9826 = vadd.f32 0.0, %v9825
    %v9827 = vpop.f32.mrf.mxu0
    %v9828 = vadd.f32 0.0, %v9827
    %9829 = vmatmul.bf16.gmra.mxu0 %v9546
    %v9830 = vpop.f32.mrf.mxu0
    %v9831 = vadd.f32 0.0, %v9830
    %v9832 = vpop.f32.mrf.mxu0
    %v9833 = vadd.f32 0.0, %v9832
    %9834 = vmatmul.bf16.gmra.mxu0 %v9548
    %v9835 = vpop.f32.mrf.mxu0
    %v9836 = vadd.f32 0.0, %v9835
    %v9837 = vpop.f32.mrf.mxu0
    %v9838 = vadd.f32 0.0, %v9837
    %9839 = vmatmul.bf16.gmra.mxu0 %v9550
    %v9840 = vpop.f32.mrf.mxu0
    %v9841 = vadd.f32 0.0, %v9840
    %v9842 = vpop.f32.mrf.mxu0
    %v9843 = vadd.f32 0.0, %v9842
    %9844 = vmatmul.bf16.gmra.mxu0 %v9552
    %v9845 = vpop.f32.mrf.mxu0
    %v9846 = vadd.f32 0.0, %v9845
    %v9847 = vpop.f32.mrf.mxu0
    %v9848 = vadd.f32 0.0, %v9847
    %9849 = vmatmul.bf16.gmra.mxu0 %v9554
    %v9850 = vpop.f32.mrf.mxu0
    %v9851 = vadd.f32 0.0, %v9850
    %v9852 = vpop.f32.mrf.mxu0
    %v9853 = vadd.f32 0.0, %v9852
    %9854 = vmatmul.bf16.gmra.mxu0 %v9556
    %v9855 = vpop.f32.mrf.mxu0
    %v9856 = vadd.f32 0.0, %v9855
    %v9857 = vpop.f32.mrf.mxu0
    %v9858 = vadd.f32 0.0, %v9857
    %9859 = vmatmul.bf16.gmra.mxu0 %v9558
    %v9860 = vpop.f32.mrf.mxu0
    %v9861 = vadd.f32 0.0, %v9860
    %v9862 = vpop.f32.mrf.mxu0
    %v9863 = vadd.f32 0.0, %v9862
    %9864 = vmatmul.bf16.gmra.mxu0 %v9560
    %v9865 = vpop.f32.mrf.mxu0
    %v9866 = vadd.f32 0.0, %v9865
    %v9867 = vpop.f32.mrf.mxu0
    %v9868 = vadd.f32 0.0, %v9867
    %9869 = vmatmul.bf16.gmra.mxu0 %v9562
    %v9870 = vpop.f32.mrf.mxu0
    %v9871 = vadd.f32 0.0, %v9870
    %v9872 = vpop.f32.mrf.mxu0
    %v9873 = vadd.f32 0.0, %v9872
    %9874 = vmatmul.bf16.gmra.mxu0 %v9564
    %v9875 = vpop.f32.mrf.mxu0
    %v9876 = vadd.f32 0.0, %v9875
    %v9877 = vpop.f32.mrf.mxu0
    %v9878 = vadd.f32 0.0, %v9877
    %9879 = vmatmul.bf16.gmra.mxu0 %v9566
    %v9880 = vpop.f32.mrf.mxu0
    %v9881 = vadd.f32 0.0, %v9880
    %v9882 = vpop.f32.mrf.mxu0
    %v9883 = vadd.f32 0.0, %v9882
    %9884 = vmatmul.bf16.gmra.mxu0 %v9568
    %v9885 = vpop.f32.mrf.mxu0
    %v9886 = vadd.f32 0.0, %v9885
    %v9887 = vpop.f32.mrf.mxu0
    %v9888 = vadd.f32 0.0, %v9887
    %9889 = vmatmul.bf16.gmra.mxu0 %v9570
    %v9890 = vpop.f32.mrf.mxu0
    %v9891 = vadd.f32 0.0, %v9890
    %v9892 = vpop.f32.mrf.mxu0
    %v9893 = vadd.f32 0.0, %v9892
    %9894 = vmatmul.bf16.gmra.mxu0 %v9572
    %v9895 = vpop.f32.mrf.mxu0
    %v9896 = vadd.f32 0.0, %v9895
    %v9897 = vpop.f32.mrf.mxu0
    %v9898 = vadd.f32 0.0, %v9897
    %9899 = vmatmul.bf16.gmra.mxu0 %v9574
    %v9900 = vpop.f32.mrf.mxu0
    %v9901 = vadd.f32 0.0, %v9900
    %v9902 = vpop.f32.mrf.mxu0
    %v9903 = vadd.f32 0.0, %v9902
    %9904 = vmatmul.bf16.gmra.mxu0 %v9576
    %v9905 = vpop.f32.mrf.mxu0
    %v9906 = vadd.f32 0.0, %v9905
    %v9907 = vpop.f32.mrf.mxu0
    %v9908 = vadd.f32 0.0, %v9907
    %9909 = vmatmul.bf16.gmra.mxu0 %v9578
    %v9910 = vpop.f32.mrf.mxu0
    %v9911 = vadd.f32 0.0, %v9910
    %v9912 = vpop.f32.mrf.mxu0
    %v9913 = vadd.f32 0.0, %v9912
    %9914 = vmatmul.bf16.gmra.mxu0 %v9580
    %v9915 = vpop.f32.mrf.mxu0
    %v9916 = vadd.f32 0.0, %v9915
    %v9917 = vpop.f32.mrf.mxu0
    %v9918 = vadd.f32 0.0, %v9917
    %9919 = vmatmul.bf16.gmra.mxu0 %v9582
    %v9920 = vpop.f32.mrf.mxu0
    %v9921 = vadd.f32 0.0, %v9920
    %v9922 = vpop.f32.mrf.mxu0
    %v9923 = vadd.f32 0.0, %v9922
    %9924 = vmatmul.bf16.gmra.mxu0 %v9584
    %v9925 = vpop.f32.mrf.mxu0
    %v9926 = vadd.f32 0.0, %v9925
    %v9927 = vpop.f32.mrf.mxu0
    %v9928 = vadd.f32 0.0, %v9927
    %9929 = vmatmul.bf16.gmra.mxu0 %v9586
    %v9930 = vpop.f32.mrf.mxu0
    %v9931 = vadd.f32 0.0, %v9930
    %v9932 = vpop.f32.mrf.mxu0
    %v9933 = vadd.f32 0.0, %v9932
    %9934 = vmatmul.bf16.gmra.mxu0 %v9588
    %v9935 = vpop.f32.mrf.mxu0
    %v9936 = vadd.f32 0.0, %v9935
    %v9937 = vpop.f32.mrf.mxu0
    %v9938 = vadd.f32 0.0, %v9937
    %9939 = vmatmul.bf16.gmra.mxu0 %v9590
    %v9940 = vpop.f32.mrf.mxu0
    %v9941 = vadd.f32 0.0, %v9940
    %v9942 = vpop.f32.mrf.mxu0
    %v9943 = vadd.f32 0.0, %v9942
    %9944 = vmatmul.bf16.gmra.mxu0 %v9592
    %v9945 = vpop.f32.mrf.mxu0
    %v9946 = vadd.f32 0.0, %v9945
    %v9947 = vpop.f32.mrf.mxu0
    %v9948 = vadd.f32 0.0, %v9947
    %9949 = vmatmul.bf16.gmra.mxu0 %v9594
    %v9950 = vpop.f32.mrf.mxu0
    %v9951 = vadd.f32 0.0, %v9950
    %v9952 = vpop.f32.mrf.mxu0
    %v9953 = vadd.f32 0.0, %v9952
    %9954 = vmatmul.bf16.gmra.mxu0 %v9596
    %v9955 = vpop.f32.mrf.mxu0
    %v9956 = vadd.f32 0.0, %v9955
    %v9957 = vpop.f32.mrf.mxu0
    %v9958 = vadd.f32 0.0, %v9957
    %9959 = vdwg.mxu0
    %9960 = vmatpush.bf16.msra.mxu0 %v9757
    %9961 = vmatpush.bf16.msra.mxu0 %v9755
    %9962 = vmatpush.bf16.msra.mxu0 %v9753
    %9963 = vmatpush.bf16.msra.mxu0 %v9751
    %9964 = vmatpush.bf16.msra.mxu0 %v9749
    %9965 = vmatpush.bf16.msra.mxu0 %v9747
    %9966 = vmatpush.bf16.msra.mxu0 %v9745
    %9967 = vmatpush.bf16.msra.mxu0 %v9743
    %9968 = vmatmul.bf16.gmra.mxu0 %v9535
    %v9969 = vpop.f32.mrf.mxu0
    %v9970 = vadd.f32 %v9801, %v9969
    %v9971 = vpop.f32.mrf.mxu0
    %v9972 = vadd.f32 %v9803, %v9971
    %9973 = vmatmul.bf16.gmra.mxu0 %v9537
    %v9974 = vpop.f32.mrf.mxu0
    %v9975 = vadd.f32 %v9806, %v9974
    %v9976 = vpop.f32.mrf.mxu0
    %v9977 = vadd.f32 %v9808, %v9976
    %9978 = vmatmul.bf16.gmra.mxu0 %v9539
    %v9979 = vpop.f32.mrf.mxu0
    %v9980 = vadd.f32 %v9811, %v9979
    %v9981 = vpop.f32.mrf.mxu0
    %v9982 = vadd.f32 %v9813, %v9981
    %9983 = vmatmul.bf16.gmra.mxu0 %v9541
    %v9984 = vpop.f32.mrf.mxu0
    %v9985 = vadd.f32 %v9816, %v9984
    %v9986 = vpop.f32.mrf.mxu0
    %v9987 = vadd.f32 %v9818, %v9986
    %9988 = vmatmul.bf16.gmra.mxu0 %v9543
    %v9989 = vpop.f32.mrf.mxu0
    %v9990 = vadd.f32 %v9821, %v9989
    %v9991 = vpop.f32.mrf.mxu0
    %v9992 = vadd.f32 %v9823, %v9991
    %9993 = vmatmul.bf16.gmra.mxu0 %v9545
    %v9994 = vpop.f32.mrf.mxu0
    %v9995 = vadd.f32 %v9826, %v9994
    %v9996 = vpop.f32.mrf.mxu0
    %v9997 = vadd.f32 %v9828, %v9996
    %9998 = vmatmul.bf16.gmra.mxu0 %v9547
    %v9999 = vpop.f32.mrf.mxu0
    %v10000 = vadd.f32 %v9831, %v9999
    %v10001 = vpop.f32.mrf.mxu0
    %v10002 = vadd.f32 %v9833, %v10001
    %10003 = vmatmul.bf16.gmra.mxu0 %v9549
    %v10004 = vpop.f32.mrf.mxu0
    %v10005 = vadd.f32 %v9836, %v10004
    %v10006 = vpop.f32.mrf.mxu0
    %v10007 = vadd.f32 %v9838, %v10006
    %10008 = vmatmul.bf16.gmra.mxu0 %v9551
    %v10009 = vpop.f32.mrf.mxu0
    %v10010 = vadd.f32 %v9841, %v10009
    %v10011 = vpop.f32.mrf.mxu0
    %v10012 = vadd.f32 %v9843, %v10011
    %10013 = vmatmul.bf16.gmra.mxu0 %v9553
    %v10014 = vpop.f32.mrf.mxu0
    %v10015 = vadd.f32 %v9846, %v10014
    %v10016 = vpop.f32.mrf.mxu0
    %v10017 = vadd.f32 %v9848, %v10016
    %10018 = vmatmul.bf16.gmra.mxu0 %v9555
    %v10019 = vpop.f32.mrf.mxu0
    %v10020 = vadd.f32 %v9851, %v10019
    %v10021 = vpop.f32.mrf.mxu0
    %v10022 = vadd.f32 %v9853, %v10021
    %10023 = vmatmul.bf16.gmra.mxu0 %v9557
    %v10024 = vpop.f32.mrf.mxu0
    %v10025 = vadd.f32 %v9856, %v10024
    %v10026 = vpop.f32.mrf.mxu0
    %v10027 = vadd.f32 %v9858, %v10026
    %10028 = vmatmul.bf16.gmra.mxu0 %v9559
    %v10029 = vpop.f32.mrf.mxu0
    %v10030 = vadd.f32 %v9861, %v10029
    %v10031 = vpop.f32.mrf.mxu0
    %v10032 = vadd.f32 %v9863, %v10031
    %10033 = vmatmul.bf16.gmra.mxu0 %v9561
    %v10034 = vpop.f32.mrf.mxu0
    %v10035 = vadd.f32 %v9866, %v10034
    %v10036 = vpop.f32.mrf.mxu0
    %v10037 = vadd.f32 %v9868, %v10036
    %10038 = vmatmul.bf16.gmra.mxu0 %v9563
    %v10039 = vpop.f32.mrf.mxu0
    %v10040 = vadd.f32 %v9871, %v10039
    %v10041 = vpop.f32.mrf.mxu0
    %v10042 = vadd.f32 %v9873, %v10041
    %10043 = vmatmul.bf16.gmra.mxu0 %v9565
    %v10044 = vpop.f32.mrf.mxu0
    %v10045 = vadd.f32 %v9876, %v10044
    %v10046 = vpop.f32.mrf.mxu0
    %v10047 = vadd.f32 %v9878, %v10046
    %10048 = vmatmul.bf16.gmra.mxu0 %v9567
    %v10049 = vpop.f32.mrf.mxu0
    %v10050 = vadd.f32 %v9881, %v10049
    %v10051 = vpop.f32.mrf.mxu0
    %v10052 = vadd.f32 %v9883, %v10051
    %10053 = vmatmul.bf16.gmra.mxu0 %v9569
    %v10054 = vpop.f32.mrf.mxu0
    %v10055 = vadd.f32 %v9886, %v10054
    %v10056 = vpop.f32.mrf.mxu0
    %v10057 = vadd.f32 %v9888, %v10056
    %10058 = vmatmul.bf16.gmra.mxu0 %v9571
    %v10059 = vpop.f32.mrf.mxu0
    %v10060 = vadd.f32 %v9891, %v10059
    %v10061 = vpop.f32.mrf.mxu0
    %v10062 = vadd.f32 %v9893, %v10061
    %10063 = vmatmul.bf16.gmra.mxu0 %v9573
    %v10064 = vpop.f32.mrf.mxu0
    %v10065 = vadd.f32 %v9896, %v10064
    %v10066 = vpop.f32.mrf.mxu0
    %v10067 = vadd.f32 %v9898, %v10066
    %10068 = vmatmul.bf16.gmra.mxu0 %v9575
    %v10069 = vpop.f32.mrf.mxu0
    %v10070 = vadd.f32 %v9901, %v10069
    %v10071 = vpop.f32.mrf.mxu0
    %v10072 = vadd.f32 %v9903, %v10071
    %10073 = vmatmul.bf16.gmra.mxu0 %v9577
    %v10074 = vpop.f32.mrf.mxu0
    %v10075 = vadd.f32 %v9906, %v10074
    %v10076 = vpop.f32.mrf.mxu0
    %v10077 = vadd.f32 %v9908, %v10076
    %10078 = vmatmul.bf16.gmra.mxu0 %v9579
    %v10079 = vpop.f32.mrf.mxu0
    %v10080 = vadd.f32 %v9911, %v10079
    %v10081 = vpop.f32.mrf.mxu0
    %v10082 = vadd.f32 %v9913, %v10081
    %10083 = vmatmul.bf16.gmra.mxu0 %v9581
    %v10084 = vpop.f32.mrf.mxu0
    %v10085 = vadd.f32 %v9916, %v10084
    %v10086 = vpop.f32.mrf.mxu0
    %v10087 = vadd.f32 %v9918, %v10086
    %10088 = vmatmul.bf16.gmra.mxu0 %v9583
    %v10089 = vpop.f32.mrf.mxu0
    %v10090 = vadd.f32 %v9921, %v10089
    %v10091 = vpop.f32.mrf.mxu0
    %v10092 = vadd.f32 %v9923, %v10091
    %10093 = vmatmul.bf16.gmra.mxu0 %v9585
    %v10094 = vpop.f32.mrf.mxu0
    %v10095 = vadd.f32 %v9926, %v10094
    %v10096 = vpop.f32.mrf.mxu0
    %v10097 = vadd.f32 %v9928, %v10096
    %10098 = vmatmul.bf16.gmra.mxu0 %v9587
    %v10099 = vpop.f32.mrf.mxu0
    %v10100 = vadd.f32 %v9931, %v10099
    %v10101 = vpop.f32.mrf.mxu0
    %v10102 = vadd.f32 %v9933, %v10101
    %10103 = vmatmul.bf16.gmra.mxu0 %v9589
    %v10104 = vpop.f32.mrf.mxu0
    %v10105 = vadd.f32 %v9936, %v10104
    %v10106 = vpop.f32.mrf.mxu0
    %v10107 = vadd.f32 %v9938, %v10106
    %10108 = vmatmul.bf16.gmra.mxu0 %v9591
    %v10109 = vpop.f32.mrf.mxu0
    %v10110 = vadd.f32 %v9941, %v10109
    %v10111 = vpop.f32.mrf.mxu0
    %v10112 = vadd.f32 %v9943, %v10111
    %10113 = vmatmul.bf16.gmra.mxu0 %v9593
    %v10114 = vpop.f32.mrf.mxu0
    %v10115 = vadd.f32 %v9946, %v10114
    %v10116 = vpop.f32.mrf.mxu0
    %v10117 = vadd.f32 %v9948, %v10116
    %10118 = vmatmul.bf16.gmra.mxu0 %v9595
    %v10119 = vpop.f32.mrf.mxu0
    %v10120 = vadd.f32 %v9951, %v10119
    %v10121 = vpop.f32.mrf.mxu0
    %v10122 = vadd.f32 %v9953, %v10121
    %10123 = vmatmul.bf16.gmra.mxu0 %v9597
    %v10124 = vpop.f32.mrf.mxu0
    %v10125 = vadd.f32 %v9956, %v10124
    %v10126 = vpop.f32.mrf.mxu0
    %v10127 = vadd.f32 %v9958, %v10126
    %10128 = vdwg.mxu0
    %10129 = vmatpush.bf16.msra.mxu0 %v9742
    %10130 = vmatpush.bf16.msra.mxu0 %v9740
    %10131 = vmatpush.bf16.msra.mxu0 %v9738
    %10132 = vmatpush.bf16.msra.mxu0 %v9736
    %10133 = vmatpush.bf16.msra.mxu0 %v9734
    %10134 = vmatpush.bf16.msra.mxu0 %v9732
    %10135 = vmatpush.bf16.msra.mxu0 %v9730
    %10136 = vmatpush.bf16.msra.mxu0 %v9728
    %10137 = vmatmul.bf16.gmra.mxu0 %v9534
    %v10138 = vpop.f32.mrf.mxu0
    %v10139 = vadd.f32 0.0, %v10138
    %v10140 = vpop.f32.mrf.mxu0
    %v10141 = vadd.f32 0.0, %v10140
    %10142 = vmatmul.bf16.gmra.mxu0 %v9536
    %v10143 = vpop.f32.mrf.mxu0
    %v10144 = vadd.f32 0.0, %v10143
    %v10145 = vpop.f32.mrf.mxu0
    %v10146 = vadd.f32 0.0, %v10145
    %10147 = vmatmul.bf16.gmra.mxu0 %v9538
    %v10148 = vpop.f32.mrf.mxu0
    %v10149 = vadd.f32 0.0, %v10148
    %v10150 = vpop.f32.mrf.mxu0
    %v10151 = vadd.f32 0.0, %v10150
    %10152 = vmatmul.bf16.gmra.mxu0 %v9540
    %v10153 = vpop.f32.mrf.mxu0
    %v10154 = vadd.f32 0.0, %v10153
    %v10155 = vpop.f32.mrf.mxu0
    %v10156 = vadd.f32 0.0, %v10155
    %10157 = vmatmul.bf16.gmra.mxu0 %v9542
    %v10158 = vpop.f32.mrf.mxu0
    %v10159 = vadd.f32 0.0, %v10158
    %v10160 = vpop.f32.mrf.mxu0
    %v10161 = vadd.f32 0.0, %v10160
    %10162 = vmatmul.bf16.gmra.mxu0 %v9544
    %v10163 = vpop.f32.mrf.mxu0
    %v10164 = vadd.f32 0.0, %v10163
    %v10165 = vpop.f32.mrf.mxu0
    %v10166 = vadd.f32 0.0, %v10165
    %10167 = vmatmul.bf16.gmra.mxu0 %v9546
    %v10168 = vpop.f32.mrf.mxu0
    %v10169 = vadd.f32 0.0, %v10168
    %v10170 = vpop.f32.mrf.mxu0
    %v10171 = vadd.f32 0.0, %v10170
    %10172 = vmatmul.bf16.gmra.mxu0 %v9548
    %v10173 = vpop.f32.mrf.mxu0
    %v10174 = vadd.f32 0.0, %v10173
    %v10175 = vpop.f32.mrf.mxu0
    %v10176 = vadd.f32 0.0, %v10175
    %10177 = vmatmul.bf16.gmra.mxu0 %v9550
    %v10178 = vpop.f32.mrf.mxu0
    %v10179 = vadd.f32 0.0, %v10178
    %v10180 = vpop.f32.mrf.mxu0
    %v10181 = vadd.f32 0.0, %v10180
    %10182 = vmatmul.bf16.gmra.mxu0 %v9552
    %v10183 = vpop.f32.mrf.mxu0
    %v10184 = vadd.f32 0.0, %v10183
    %v10185 = vpop.f32.mrf.mxu0
    %v10186 = vadd.f32 0.0, %v10185
    %10187 = vmatmul.bf16.gmra.mxu0 %v9554
    %v10188 = vpop.f32.mrf.mxu0
    %v10189 = vadd.f32 0.0, %v10188
    %v10190 = vpop.f32.mrf.mxu0
    %v10191 = vadd.f32 0.0, %v10190
    %10192 = vmatmul.bf16.gmra.mxu0 %v9556
    %v10193 = vpop.f32.mrf.mxu0
    %v10194 = vadd.f32 0.0, %v10193
    %v10195 = vpop.f32.mrf.mxu0
    %v10196 = vadd.f32 0.0, %v10195
    %10197 = vmatmul.bf16.gmra.mxu0 %v9558
    %v10198 = vpop.f32.mrf.mxu0
    %v10199 = vadd.f32 0.0, %v10198
    %v10200 = vpop.f32.mrf.mxu0
    %v10201 = vadd.f32 0.0, %v10200
    %10202 = vmatmul.bf16.gmra.mxu0 %v9560
    %v10203 = vpop.f32.mrf.mxu0
    %v10204 = vadd.f32 0.0, %v10203
    %v10205 = vpop.f32.mrf.mxu0
    %v10206 = vadd.f32 0.0, %v10205
    %10207 = vmatmul.bf16.gmra.mxu0 %v9562
    %v10208 = vpop.f32.mrf.mxu0
    %v10209 = vadd.f32 0.0, %v10208
    %v10210 = vpop.f32.mrf.mxu0
    %v10211 = vadd.f32 0.0, %v10210
    %10212 = vmatmul.bf16.gmra.mxu0 %v9564
    %v10213 = vpop.f32.mrf.mxu0
    %v10214 = vadd.f32 0.0, %v10213
    %v10215 = vpop.f32.mrf.mxu0
    %v10216 = vadd.f32 0.0, %v10215
    %10217 = vmatmul.bf16.gmra.mxu0 %v9566
    %v10218 = vpop.f32.mrf.mxu0
    %v10219 = vadd.f32 0.0, %v10218
    %v10220 = vpop.f32.mrf.mxu0
    %v10221 = vadd.f32 0.0, %v10220
    %10222 = vmatmul.bf16.gmra.mxu0 %v9568
    %v10223 = vpop.f32.mrf.mxu0
    %v10224 = vadd.f32 0.0, %v10223
    %v10225 = vpop.f32.mrf.mxu0
    %v10226 = vadd.f32 0.0, %v10225
    %10227 = vmatmul.bf16.gmra.mxu0 %v9570
    %v10228 = vpop.f32.mrf.mxu0
    %v10229 = vadd.f32 0.0, %v10228
    %v10230 = vpop.f32.mrf.mxu0
    %v10231 = vadd.f32 0.0, %v10230
    %10232 = vmatmul.bf16.gmra.mxu0 %v9572
    %v10233 = vpop.f32.mrf.mxu0
    %v10234 = vadd.f32 0.0, %v10233
    %v10235 = vpop.f32.mrf.mxu0
    %v10236 = vadd.f32 0.0, %v10235
    %10237 = vmatmul.bf16.gmra.mxu0 %v9574
    %v10238 = vpop.f32.mrf.mxu0
    %v10239 = vadd.f32 0.0, %v10238
    %v10240 = vpop.f32.mrf.mxu0
    %v10241 = vadd.f32 0.0, %v10240
    %10242 = vmatmul.bf16.gmra.mxu0 %v9576
    %v10243 = vpop.f32.mrf.mxu0
    %v10244 = vadd.f32 0.0, %v10243
    %v10245 = vpop.f32.mrf.mxu0
    %v10246 = vadd.f32 0.0, %v10245
    %10247 = vmatmul.bf16.gmra.mxu0 %v9578
    %v10248 = vpop.f32.mrf.mxu0
    %v10249 = vadd.f32 0.0, %v10248
    %v10250 = vpop.f32.mrf.mxu0
    %v10251 = vadd.f32 0.0, %v10250
    %10252 = vmatmul.bf16.gmra.mxu0 %v9580
    %v10253 = vpop.f32.mrf.mxu0
    %v10254 = vadd.f32 0.0, %v10253
    %v10255 = vpop.f32.mrf.mxu0
    %v10256 = vadd.f32 0.0, %v10255
    %10257 = vmatmul.bf16.gmra.mxu0 %v9582
    %v10258 = vpop.f32.mrf.mxu0
    %v10259 = vadd.f32 0.0, %v10258
    %v10260 = vpop.f32.mrf.mxu0
    %v10261 = vadd.f32 0.0, %v10260
    %10262 = vmatmul.bf16.gmra.mxu0 %v9584
    %v10263 = vpop.f32.mrf.mxu0
    %v10264 = vadd.f32 0.0, %v10263
    %v10265 = vpop.f32.mrf.mxu0
    %v10266 = vadd.f32 0.0, %v10265
    %10267 = vmatmul.bf16.gmra.mxu0 %v9586
    %v10268 = vpop.f32.mrf.mxu0
    %v10269 = vadd.f32 0.0, %v10268
    %v10270 = vpop.f32.mrf.mxu0
    %v10271 = vadd.f32 0.0, %v10270
    %10272 = vmatmul.bf16.gmra.mxu0 %v9588
    %v10273 = vpop.f32.mrf.mxu0
    %v10274 = vadd.f32 0.0, %v10273
    %v10275 = vpop.f32.mrf.mxu0
    %v10276 = vadd.f32 0.0, %v10275
    %10277 = vmatmul.bf16.gmra.mxu0 %v9590
    %v10278 = vpop.f32.mrf.mxu0
    %v10279 = vadd.f32 0.0, %v10278
    %v10280 = vpop.f32.mrf.mxu0
    %v10281 = vadd.f32 0.0, %v10280
    %10282 = vmatmul.bf16.gmra.mxu0 %v9592
    %v10283 = vpop.f32.mrf.mxu0
    %v10284 = vadd.f32 0.0, %v10283
    %v10285 = vpop.f32.mrf.mxu0
    %v10286 = vadd.f32 0.0, %v10285
    %10287 = vmatmul.bf16.gmra.mxu0 %v9594
    %v10288 = vpop.f32.mrf.mxu0
    %v10289 = vadd.f32 0.0, %v10288
    %v10290 = vpop.f32.mrf.mxu0
    %v10291 = vadd.f32 0.0, %v10290
    %10292 = vmatmul.bf16.gmra.mxu0 %v9596
    %v10293 = vpop.f32.mrf.mxu0
    %v10294 = vadd.f32 0.0, %v10293
    %v10295 = vpop.f32.mrf.mxu0
    %v10296 = vadd.f32 0.0, %v10295
    %10297 = vdwg.mxu0
    %10298 = vmatpush.bf16.msra.mxu0 %v9758
    %10299 = vmatpush.bf16.msra.mxu0 %v9756
    %10300 = vmatpush.bf16.msra.mxu0 %v9754
    %10301 = vmatpush.bf16.msra.mxu0 %v9752
    %10302 = vmatpush.bf16.msra.mxu0 %v9750
    %10303 = vmatpush.bf16.msra.mxu0 %v9748
    %10304 = vmatpush.bf16.msra.mxu0 %v9746
    %10305 = vmatpush.bf16.msra.mxu0 %v9744
    %10306 = vmatmul.bf16.gmra.mxu0 %v9535
    %v10307 = vpop.f32.mrf.mxu0
    %v10308 = vadd.f32 %v10139, %v10307
    %v10309 = vpop.f32.mrf.mxu0
    %v10310 = vadd.f32 %v10141, %v10309
    %10311 = vmatmul.bf16.gmra.mxu0 %v9537
    %v10312 = vpop.f32.mrf.mxu0
    %v10313 = vadd.f32 %v10144, %v10312
    %v10314 = vpop.f32.mrf.mxu0
    %v10315 = vadd.f32 %v10146, %v10314
    %10316 = vmatmul.bf16.gmra.mxu0 %v9539
    %v10317 = vpop.f32.mrf.mxu0
    %v10318 = vadd.f32 %v10149, %v10317
    %v10319 = vpop.f32.mrf.mxu0
    %v10320 = vadd.f32 %v10151, %v10319
    %10321 = vmatmul.bf16.gmra.mxu0 %v9541
    %v10322 = vpop.f32.mrf.mxu0
    %v10323 = vadd.f32 %v10154, %v10322
    %v10324 = vpop.f32.mrf.mxu0
    %v10325 = vadd.f32 %v10156, %v10324
    %10326 = vmatmul.bf16.gmra.mxu0 %v9543
    %v10327 = vpop.f32.mrf.mxu0
    %v10328 = vadd.f32 %v10159, %v10327
    %v10329 = vpop.f32.mrf.mxu0
    %v10330 = vadd.f32 %v10161, %v10329
    %10331 = vmatmul.bf16.gmra.mxu0 %v9545
    %v10332 = vpop.f32.mrf.mxu0
    %v10333 = vadd.f32 %v10164, %v10332
    %v10334 = vpop.f32.mrf.mxu0
    %v10335 = vadd.f32 %v10166, %v10334
    %10336 = vmatmul.bf16.gmra.mxu0 %v9547
    %v10337 = vpop.f32.mrf.mxu0
    %v10338 = vadd.f32 %v10169, %v10337
    %v10339 = vpop.f32.mrf.mxu0
    %v10340 = vadd.f32 %v10171, %v10339
    %10341 = vmatmul.bf16.gmra.mxu0 %v9549
    %v10342 = vpop.f32.mrf.mxu0
    %v10343 = vadd.f32 %v10174, %v10342
    %v10344 = vpop.f32.mrf.mxu0
    %v10345 = vadd.f32 %v10176, %v10344
    %10346 = vmatmul.bf16.gmra.mxu0 %v9551
    %v10347 = vpop.f32.mrf.mxu0
    %v10348 = vadd.f32 %v10179, %v10347
    %v10349 = vpop.f32.mrf.mxu0
    %v10350 = vadd.f32 %v10181, %v10349
    %10351 = vmatmul.bf16.gmra.mxu0 %v9553
    %v10352 = vpop.f32.mrf.mxu0
    %v10353 = vadd.f32 %v10184, %v10352
    %v10354 = vpop.f32.mrf.mxu0
    %v10355 = vadd.f32 %v10186, %v10354
    %10356 = vmatmul.bf16.gmra.mxu0 %v9555
    %v10357 = vpop.f32.mrf.mxu0
    %v10358 = vadd.f32 %v10189, %v10357
    %v10359 = vpop.f32.mrf.mxu0
    %v10360 = vadd.f32 %v10191, %v10359
    %10361 = vmatmul.bf16.gmra.mxu0 %v9557
    %v10362 = vpop.f32.mrf.mxu0
    %v10363 = vadd.f32 %v10194, %v10362
    %v10364 = vpop.f32.mrf.mxu0
    %v10365 = vadd.f32 %v10196, %v10364
    %10366 = vmatmul.bf16.gmra.mxu0 %v9559
    %v10367 = vpop.f32.mrf.mxu0
    %v10368 = vadd.f32 %v10199, %v10367
    %v10369 = vpop.f32.mrf.mxu0
    %v10370 = vadd.f32 %v10201, %v10369
    %10371 = vmatmul.bf16.gmra.mxu0 %v9561
    %v10372 = vpop.f32.mrf.mxu0
    %v10373 = vadd.f32 %v10204, %v10372
    %v10374 = vpop.f32.mrf.mxu0
    %v10375 = vadd.f32 %v10206, %v10374
    %10376 = vmatmul.bf16.gmra.mxu0 %v9563
    %v10377 = vpop.f32.mrf.mxu0
    %v10378 = vadd.f32 %v10209, %v10377
    %v10379 = vpop.f32.mrf.mxu0
    %v10380 = vadd.f32 %v10211, %v10379
    %10381 = vmatmul.bf16.gmra.mxu0 %v9565
    %v10382 = vpop.f32.mrf.mxu0
    %v10383 = vadd.f32 %v10214, %v10382
    %v10384 = vpop.f32.mrf.mxu0
    %v10385 = vadd.f32 %v10216, %v10384
    %10386 = vmatmul.bf16.gmra.mxu0 %v9567
    %v10387 = vpop.f32.mrf.mxu0
    %v10388 = vadd.f32 %v10219, %v10387
    %v10389 = vpop.f32.mrf.mxu0
    %v10390 = vadd.f32 %v10221, %v10389
    %10391 = vmatmul.bf16.gmra.mxu0 %v9569
    %v10392 = vpop.f32.mrf.mxu0
    %v10393 = vadd.f32 %v10224, %v10392
    %v10394 = vpop.f32.mrf.mxu0
    %v10395 = vadd.f32 %v10226, %v10394
    %10396 = vmatmul.bf16.gmra.mxu0 %v9571
    %v10397 = vpop.f32.mrf.mxu0
    %v10398 = vadd.f32 %v10229, %v10397
    %v10399 = vpop.f32.mrf.mxu0
    %v10400 = vadd.f32 %v10231, %v10399
    %10401 = vmatmul.bf16.gmra.mxu0 %v9573
    %v10402 = vpop.f32.mrf.mxu0
    %v10403 = vadd.f32 %v10234, %v10402
    %v10404 = vpop.f32.mrf.mxu0
    %v10405 = vadd.f32 %v10236, %v10404
    %10406 = vmatmul.bf16.gmra.mxu0 %v9575
    %v10407 = vpop.f32.mrf.mxu0
    %v10408 = vadd.f32 %v10239, %v10407
    %v10409 = vpop.f32.mrf.mxu0
    %v10410 = vadd.f32 %v10241, %v10409
    %10411 = vmatmul.bf16.gmra.mxu0 %v9577
    %v10412 = vpop.f32.mrf.mxu0
    %v10413 = vadd.f32 %v10244, %v10412
    %v10414 = vpop.f32.mrf.mxu0
    %v10415 = vadd.f32 %v10246, %v10414
    %10416 = vmatmul.bf16.gmra.mxu0 %v9579
    %v10417 = vpop.f32.mrf.mxu0
    %v10418 = vadd.f32 %v10249, %v10417
    %v10419 = vpop.f32.mrf.mxu0
    %v10420 = vadd.f32 %v10251, %v10419
    %10421 = vmatmul.bf16.gmra.mxu0 %v9581
    %v10422 = vpop.f32.mrf.mxu0
    %v10423 = vadd.f32 %v10254, %v10422
    %v10424 = vpop.f32.mrf.mxu0
    %v10425 = vadd.f32 %v10256, %v10424
    %10426 = vmatmul.bf16.gmra.mxu0 %v9583
    %v10427 = vpop.f32.mrf.mxu0
    %v10428 = vadd.f32 %v10259, %v10427
    %v10429 = vpop.f32.mrf.mxu0
    %v10430 = vadd.f32 %v10261, %v10429
    %10431 = vmatmul.bf16.gmra.mxu0 %v9585
    %v10432 = vpop.f32.mrf.mxu0
    %v10433 = vadd.f32 %v10264, %v10432
    %v10434 = vpop.f32.mrf.mxu0
    %v10435 = vadd.f32 %v10266, %v10434
    %10436 = vmatmul.bf16.gmra.mxu0 %v9587
    %v10437 = vpop.f32.mrf.mxu0
    %v10438 = vadd.f32 %v10269, %v10437
    %v10439 = vpop.f32.mrf.mxu0
    %v10440 = vadd.f32 %v10271, %v10439
    %10441 = vmatmul.bf16.gmra.mxu0 %v9589
    %v10442 = vpop.f32.mrf.mxu0
    %v10443 = vadd.f32 %v10274, %v10442
    %v10444 = vpop.f32.mrf.mxu0
    %v10445 = vadd.f32 %v10276, %v10444
    %10446 = vmatmul.bf16.gmra.mxu0 %v9591
    %v10447 = vpop.f32.mrf.mxu0
    %v10448 = vadd.f32 %v10279, %v10447
    %v10449 = vpop.f32.mrf.mxu0
    %v10450 = vadd.f32 %v10281, %v10449
    %10451 = vmatmul.bf16.gmra.mxu0 %v9593
    %v10452 = vpop.f32.mrf.mxu0
    %v10453 = vadd.f32 %v10284, %v10452
    %v10454 = vpop.f32.mrf.mxu0
    %v10455 = vadd.f32 %v10286, %v10454
    %10456 = vmatmul.bf16.gmra.mxu0 %v9595
    %v10457 = vpop.f32.mrf.mxu0
    %v10458 = vadd.f32 %v10289, %v10457
    %v10459 = vpop.f32.mrf.mxu0
    %v10460 = vadd.f32 %v10291, %v10459
    %10461 = vmatmul.bf16.gmra.mxu0 %v9597
    %v10462 = vpop.f32.mrf.mxu0
    %v10463 = vadd.f32 %v10294, %v10462
    %v10464 = vpop.f32.mrf.mxu0
    %v10465 = vadd.f32 %v10296, %v10464
    %10466 = vdwg.mxu0
    %v10467 = vadd.f32 %v9037, %v9970
    %v10468 = vadd.f32 %v9375, %v10308
    %v10469 = vadd.f32 %v9039, %v9972
    %v10470 = vadd.f32 %v9377, %v10310
    %v10471 = vadd.f32 %v9042, %v9975
    %v10472 = vadd.f32 %v9380, %v10313
    %v10473 = vadd.f32 %v9044, %v9977
    %v10474 = vadd.f32 %v9382, %v10315
    %v10475 = vadd.f32 %v9047, %v9980
    %v10476 = vadd.f32 %v9385, %v10318
    %v10477 = vadd.f32 %v9049, %v9982
    %v10478 = vadd.f32 %v9387, %v10320
    %v10479 = vadd.f32 %v9052, %v9985
    %v10480 = vadd.f32 %v9390, %v10323
    %v10481 = vadd.f32 %v9054, %v9987
    %v10482 = vadd.f32 %v9392, %v10325
    %v10483 = vadd.f32 %v9057, %v9990
    %v10484 = vadd.f32 %v9395, %v10328
    %v10485 = vadd.f32 %v9059, %v9992
    %v10486 = vadd.f32 %v9397, %v10330
    %v10487 = vadd.f32 %v9062, %v9995
    %v10488 = vadd.f32 %v9400, %v10333
    %v10489 = vadd.f32 %v9064, %v9997
    %v10490 = vadd.f32 %v9402, %v10335
    %v10491 = vadd.f32 %v9067, %v10000
    %v10492 = vadd.f32 %v9405, %v10338
    %v10493 = vadd.f32 %v9069, %v10002
    %v10494 = vadd.f32 %v9407, %v10340
    %v10495 = vadd.f32 %v9072, %v10005
    %v10496 = vadd.f32 %v9410, %v10343
    %v10497 = vadd.f32 %v9074, %v10007
    %v10498 = vadd.f32 %v9412, %v10345
    %v10499 = vadd.f32 %v9077, %v10010
    %v10500 = vadd.f32 %v9415, %v10348
    %v10501 = vadd.f32 %v9079, %v10012
    %v10502 = vadd.f32 %v9417, %v10350
    %v10503 = vadd.f32 %v9082, %v10015
    %v10504 = vadd.f32 %v9420, %v10353
    %v10505 = vadd.f32 %v9084, %v10017
    %v10506 = vadd.f32 %v9422, %v10355
    %v10507 = vadd.f32 %v9087, %v10020
    %v10508 = vadd.f32 %v9425, %v10358
    %v10509 = vadd.f32 %v9089, %v10022
    %v10510 = vadd.f32 %v9427, %v10360
    %v10511 = vadd.f32 %v9092, %v10025
    %v10512 = vadd.f32 %v9430, %v10363
    %v10513 = vadd.f32 %v9094, %v10027
    %v10514 = vadd.f32 %v9432, %v10365
    %v10515 = vadd.f32 %v9097, %v10030
    %v10516 = vadd.f32 %v9435, %v10368
    %v10517 = vadd.f32 %v9099, %v10032
    %v10518 = vadd.f32 %v9437, %v10370
    %v10519 = vadd.f32 %v9102, %v10035
    %v10520 = vadd.f32 %v9440, %v10373
    %v10521 = vadd.f32 %v9104, %v10037
    %v10522 = vadd.f32 %v9442, %v10375
    %v10523 = vadd.f32 %v9107, %v10040
    %v10524 = vadd.f32 %v9445, %v10378
    %v10525 = vadd.f32 %v9109, %v10042
    %v10526 = vadd.f32 %v9447, %v10380
    %v10527 = vadd.f32 %v9112, %v10045
    %v10528 = vadd.f32 %v9450, %v10383
    %v10529 = vadd.f32 %v9114, %v10047
    %v10530 = vadd.f32 %v9452, %v10385
    %v10531 = vadd.f32 %v9117, %v10050
    %v10532 = vadd.f32 %v9455, %v10388
    %v10533 = vadd.f32 %v9119, %v10052
    %v10534 = vadd.f32 %v9457, %v10390
    %v10535 = vadd.f32 %v9122, %v10055
    %v10536 = vadd.f32 %v9460, %v10393
    %v10537 = vadd.f32 %v9124, %v10057
    %v10538 = vadd.f32 %v9462, %v10395
    %v10539 = vadd.f32 %v9127, %v10060
    %v10540 = vadd.f32 %v9465, %v10398
    %v10541 = vadd.f32 %v9129, %v10062
    %v10542 = vadd.f32 %v9467, %v10400
    %v10543 = vadd.f32 %v9132, %v10065
    %v10544 = vadd.f32 %v9470, %v10403
    %v10545 = vadd.f32 %v9134, %v10067
    %v10546 = vadd.f32 %v9472, %v10405
    %v10547 = vadd.f32 %v9137, %v10070
    %v10548 = vadd.f32 %v9475, %v10408
    %v10549 = vadd.f32 %v9139, %v10072
    %v10550 = vadd.f32 %v9477, %v10410
    %v10551 = vadd.f32 %v9142, %v10075
    %v10552 = vadd.f32 %v9480, %v10413
    %v10553 = vadd.f32 %v9144, %v10077
    %v10554 = vadd.f32 %v9482, %v10415
    %v10555 = vadd.f32 %v9147, %v10080
    %v10556 = vadd.f32 %v9485, %v10418
    %v10557 = vadd.f32 %v9149, %v10082
    %v10558 = vadd.f32 %v9487, %v10420
    %v10559 = vadd.f32 %v9152, %v10085
    %v10560 = vadd.f32 %v9490, %v10423
    %v10561 = vadd.f32 %v9154, %v10087
    %v10562 = vadd.f32 %v9492, %v10425
    %v10563 = vadd.f32 %v9157, %v10090
    %v10564 = vadd.f32 %v9495, %v10428
    %v10565 = vadd.f32 %v9159, %v10092
    %v10566 = vadd.f32 %v9497, %v10430
    %v10567 = vadd.f32 %v9162, %v10095
    %v10568 = vadd.f32 %v9500, %v10433
    %v10569 = vadd.f32 %v9164, %v10097
    %v10570 = vadd.f32 %v9502, %v10435
    %v10571 = vadd.f32 %v9167, %v10100
    %v10572 = vadd.f32 %v9505, %v10438
    %v10573 = vadd.f32 %v9169, %v10102
    %v10574 = vadd.f32 %v9507, %v10440
    %v10575 = vadd.f32 %v9172, %v10105
    %v10576 = vadd.f32 %v9510, %v10443
    %v10577 = vadd.f32 %v9174, %v10107
    %v10578 = vadd.f32 %v9512, %v10445
    %v10579 = vadd.f32 %v9177, %v10110
    %v10580 = vadd.f32 %v9515, %v10448
    %v10581 = vadd.f32 %v9179, %v10112
    %v10582 = vadd.f32 %v9517, %v10450
    %v10583 = vadd.f32 %v9182, %v10115
    %v10584 = vadd.f32 %v9520, %v10453
    %v10585 = vadd.f32 %v9184, %v10117
    %v10586 = vadd.f32 %v9522, %v10455
    %v10587 = vadd.f32 %v9187, %v10120
    %v10588 = vadd.f32 %v9525, %v10458
    %v10589 = vadd.f32 %v9189, %v10122
    %v10590 = vadd.f32 %v9527, %v10460
    %v10591 = vadd.f32 %v9192, %v10125
    %v10592 = vadd.f32 %v9530, %v10463
    %v10593 = vadd.f32 %v9194, %v10127
    %v10594 = vadd.f32 %v9532, %v10465
    %v10595 = vld [vmem:[%s5] sm:$0x3]
    %v10597 = vperm.slane %v10595, 0
    %v10598 = vperm.slane %v10595, 1
    %v10601 = vadd.f32 %v10467, %v10597
    %v10602 = vadd.f32 %v10468, %v10598
    %v10603 = vadd.f32 %v10469, %v10597
    %v10604 = vadd.f32 %v10470, %v10598
    %v10605 = vadd.f32 %v10471, %v10597
    %v10606 = vadd.f32 %v10472, %v10598
    %v10607 = vadd.f32 %v10473, %v10597
    %v10608 = vadd.f32 %v10474, %v10598
    %v10609 = vadd.f32 %v10475, %v10597
    %v10610 = vadd.f32 %v10476, %v10598
    %v10611 = vadd.f32 %v10477, %v10597
    %v10612 = vadd.f32 %v10478, %v10598
    %v10613 = vadd.f32 %v10479, %v10597
    %v10614 = vadd.f32 %v10480, %v10598
    %v10615 = vadd.f32 %v10481, %v10597
    %v10616 = vadd.f32 %v10482, %v10598
    %v10617 = vadd.f32 %v10483, %v10597
    %v10618 = vadd.f32 %v10484, %v10598
    %v10619 = vadd.f32 %v10485, %v10597
    %v10620 = vadd.f32 %v10486, %v10598
    %v10621 = vadd.f32 %v10487, %v10597
    %v10622 = vadd.f32 %v10488, %v10598
    %v10623 = vadd.f32 %v10489, %v10597
    %v10624 = vadd.f32 %v10490, %v10598
    %v10625 = vadd.f32 %v10491, %v10597
    %v10626 = vadd.f32 %v10492, %v10598
    %v10627 = vadd.f32 %v10493, %v10597
    %v10628 = vadd.f32 %v10494, %v10598
    %v10629 = vadd.f32 %v10495, %v10597
    %v10630 = vadd.f32 %v10496, %v10598
    %v10631 = vadd.f32 %v10497, %v10597
    %v10632 = vadd.f32 %v10498, %v10598
    %v10633 = vadd.f32 %v10499, %v10597
    %v10634 = vadd.f32 %v10500, %v10598
    %v10635 = vadd.f32 %v10501, %v10597
    %v10636 = vadd.f32 %v10502, %v10598
    %v10637 = vadd.f32 %v10503, %v10597
    %v10638 = vadd.f32 %v10504, %v10598
    %v10639 = vadd.f32 %v10505, %v10597
    %v10640 = vadd.f32 %v10506, %v10598
    %v10641 = vadd.f32 %v10507, %v10597
    %v10642 = vadd.f32 %v10508, %v10598
    %v10643 = vadd.f32 %v10509, %v10597
    %v10644 = vadd.f32 %v10510, %v10598
    %v10645 = vadd.f32 %v10511, %v10597
    %v10646 = vadd.f32 %v10512, %v10598
    %v10647 = vadd.f32 %v10513, %v10597
    %v10648 = vadd.f32 %v10514, %v10598
    %v10649 = vadd.f32 %v10515, %v10597
    %v10650 = vadd.f32 %v10516, %v10598
    %v10651 = vadd.f32 %v10517, %v10597
    %v10652 = vadd.f32 %v10518, %v10598
    %v10653 = vadd.f32 %v10519, %v10597
    %v10654 = vadd.f32 %v10520, %v10598
    %v10655 = vadd.f32 %v10521, %v10597
    %v10656 = vadd.f32 %v10522, %v10598
    %v10657 = vadd.f32 %v10523, %v10597
    %v10658 = vadd.f32 %v10524, %v10598
    %v10659 = vadd.f32 %v10525, %v10597
    %v10660 = vadd.f32 %v10526, %v10598
    %v10661 = vadd.f32 %v10527, %v10597
    %v10662 = vadd.f32 %v10528, %v10598
    %v10663 = vadd.f32 %v10529, %v10597
    %v10664 = vadd.f32 %v10530, %v10598
    %v10665 = vadd.f32 %v10531, %v10597
    %v10666 = vadd.f32 %v10532, %v10598
    %v10667 = vadd.f32 %v10533, %v10597
    %v10668 = vadd.f32 %v10534, %v10598
    %v10669 = vadd.f32 %v10535, %v10597
    %v10670 = vadd.f32 %v10536, %v10598
    %v10671 = vadd.f32 %v10537, %v10597
    %v10672 = vadd.f32 %v10538, %v10598
    %v10673 = vadd.f32 %v10539, %v10597
    %v10674 = vadd.f32 %v10540, %v10598
    %v10675 = vadd.f32 %v10541, %v10597
    %v10676 = vadd.f32 %v10542, %v10598
    %v10677 = vadd.f32 %v10543, %v10597
    %v10678 = vadd.f32 %v10544, %v10598
    %v10679 = vadd.f32 %v10545, %v10597
    %v10680 = vadd.f32 %v10546, %v10598
    %v10681 = vadd.f32 %v10547, %v10597
    %v10682 = vadd.f32 %v10548, %v10598
    %v10683 = vadd.f32 %v10549, %v10597
    %v10684 = vadd.f32 %v10550, %v10598
    %v10685 = vadd.f32 %v10551, %v10597
    %v10686 = vadd.f32 %v10552, %v10598
    %v10687 = vadd.f32 %v10553, %v10597
    %v10688 = vadd.f32 %v10554, %v10598
    %v10689 = vadd.f32 %v10555, %v10597
    %v10690 = vadd.f32 %v10556, %v10598
    %v10691 = vadd.f32 %v10557, %v10597
    %v10692 = vadd.f32 %v10558, %v10598
    %v10693 = vadd.f32 %v10559, %v10597
    %v10694 = vadd.f32 %v10560, %v10598
    %v10695 = vadd.f32 %v10561, %v10597
    %v10696 = vadd.f32 %v10562, %v10598
    %v10697 = vadd.f32 %v10563, %v10597
    %v10698 = vadd.f32 %v10564, %v10598
    %v10699 = vadd.f32 %v10565, %v10597
    %v10700 = vadd.f32 %v10566, %v10598
    %v10701 = vadd.f32 %v10567, %v10597
    %v10702 = vadd.f32 %v10568, %v10598
    %v10703 = vadd.f32 %v10569, %v10597
    %v10704 = vadd.f32 %v10570, %v10598
    %v10705 = vadd.f32 %v10571, %v10597
    %v10706 = vadd.f32 %v10572, %v10598
    %v10707 = vadd.f32 %v10573, %v10597
    %v10708 = vadd.f32 %v10574, %v10598
    %v10709 = vadd.f32 %v10575, %v10597
    %v10710 = vadd.f32 %v10576, %v10598
    %v10711 = vadd.f32 %v10577, %v10597
    %v10712 = vadd.f32 %v10578, %v10598
    %v10713 = vadd.f32 %v10579, %v10597
    %v10714 = vadd.f32 %v10580, %v10598
    %v10715 = vadd.f32 %v10581, %v10597
    %v10716 = vadd.f32 %v10582, %v10598
    %v10717 = vadd.f32 %v10583, %v10597
    %v10718 = vadd.f32 %v10584, %v10598
    %v10719 = vadd.f32 %v10585, %v10597
    %v10720 = vadd.f32 %v10586, %v10598
    %v10721 = vadd.f32 %v10587, %v10597
    %v10722 = vadd.f32 %v10588, %v10598
    %v10723 = vadd.f32 %v10589, %v10597
    %v10724 = vadd.f32 %v10590, %v10598
    %v10725 = vadd.f32 %v10591, %v10597
    %v10726 = vadd.f32 %v10592, %v10598
    %v10727 = vadd.f32 %v10593, %v10597
    %v10728 = vadd.f32 %v10594, %v10598
    %v10729 = vmax.f32 %v10601, 0.0
    %v10730 = vmax.f32 %v10602, 0.0
    %v10731 = vmax.f32 %v10603, 0.0
    %v10732 = vmax.f32 %v10604, 0.0
    %v10733 = vmax.f32 %v10605, 0.0
    %v10734 = vmax.f32 %v10606, 0.0
    %v10735 = vmax.f32 %v10607, 0.0
    %v10736 = vmax.f32 %v10608, 0.0
    %v10737 = vmax.f32 %v10609, 0.0
    %v10738 = vmax.f32 %v10610, 0.0
    %v10739 = vmax.f32 %v10611, 0.0
    %v10740 = vmax.f32 %v10612, 0.0
    %v10741 = vmax.f32 %v10613, 0.0
    %v10742 = vmax.f32 %v10614, 0.0
    %v10743 = vmax.f32 %v10615, 0.0
    %v10744 = vmax.f32 %v10616, 0.0
    %v10745 = vmax.f32 %v10617, 0.0
    %v10746 = vmax.f32 %v10618, 0.0
    %v10747 = vmax.f32 %v10619, 0.0
    %v10748 = vmax.f32 %v10620, 0.0
    %v10749 = vmax.f32 %v10621, 0.0
    %v10750 = vmax.f32 %v10622, 0.0
    %v10751 = vmax.f32 %v10623, 0.0
    %v10752 = vmax.f32 %v10624, 0.0
    %v10753 = vmax.f32 %v10625, 0.0
    %v10754 = vmax.f32 %v10626, 0.0
    %v10755 = vmax.f32 %v10627, 0.0
    %v10756 = vmax.f32 %v10628, 0.0
    %v10757 = vmax.f32 %v10629, 0.0
    %v10758 = vmax.f32 %v10630, 0.0
    %v10759 = vmax.f32 %v10631, 0.0
    %v10760 = vmax.f32 %v10632, 0.0
    %v10761 = vmax.f32 %v10633, 0.0
    %v10762 = vmax.f32 %v10634, 0.0
    %v10763 = vmax.f32 %v10635, 0.0
    %v10764 = vmax.f32 %v10636, 0.0
    %v10765 = vmax.f32 %v10637, 0.0
    %v10766 = vmax.f32 %v10638, 0.0
    %v10767 = vmax.f32 %v10639, 0.0
    %v10768 = vmax.f32 %v10640, 0.0
    %v10769 = vmax.f32 %v10641, 0.0
    %v10770 = vmax.f32 %v10642, 0.0
    %v10771 = vmax.f32 %v10643, 0.0
    %v10772 = vmax.f32 %v10644, 0.0
    %v10773 = vmax.f32 %v10645, 0.0
    %v10774 = vmax.f32 %v10646, 0.0
    %v10775 = vmax.f32 %v10647, 0.0
    %v10776 = vmax.f32 %v10648, 0.0
    %v10777 = vmax.f32 %v10649, 0.0
    %v10778 = vmax.f32 %v10650, 0.0
    %v10779 = vmax.f32 %v10651, 0.0
    %v10780 = vmax.f32 %v10652, 0.0
    %v10781 = vmax.f32 %v10653, 0.0
    %v10782 = vmax.f32 %v10654, 0.0
    %v10783 = vmax.f32 %v10655, 0.0
    %v10784 = vmax.f32 %v10656, 0.0
    %v10785 = vmax.f32 %v10657, 0.0
    %v10786 = vmax.f32 %v10658, 0.0
    %v10787 = vmax.f32 %v10659, 0.0
    %v10788 = vmax.f32 %v10660, 0.0
    %v10789 = vmax.f32 %v10661, 0.0
    %v10790 = vmax.f32 %v10662, 0.0
    %v10791 = vmax.f32 %v10663, 0.0
    %v10792 = vmax.f32 %v10664, 0.0
    %v10793 = vmax.f32 %v10665, 0.0
    %v10794 = vmax.f32 %v10666, 0.0
    %v10795 = vmax.f32 %v10667, 0.0
    %v10796 = vmax.f32 %v10668, 0.0
    %v10797 = vmax.f32 %v10669, 0.0
    %v10798 = vmax.f32 %v10670, 0.0
    %v10799 = vmax.f32 %v10671, 0.0
    %v10800 = vmax.f32 %v10672, 0.0
    %v10801 = vmax.f32 %v10673, 0.0
    %v10802 = vmax.f32 %v10674, 0.0
    %v10803 = vmax.f32 %v10675, 0.0
    %v10804 = vmax.f32 %v10676, 0.0
    %v10805 = vmax.f32 %v10677, 0.0
    %v10806 = vmax.f32 %v10678, 0.0
    %v10807 = vmax.f32 %v10679, 0.0
    %v10808 = vmax.f32 %v10680, 0.0
    %v10809 = vmax.f32 %v10681, 0.0
    %v10810 = vmax.f32 %v10682, 0.0
    %v10811 = vmax.f32 %v10683, 0.0
    %v10812 = vmax.f32 %v10684, 0.0
    %v10813 = vmax.f32 %v10685, 0.0
    %v10814 = vmax.f32 %v10686, 0.0
    %v10815 = vmax.f32 %v10687, 0.0
    %v10816 = vmax.f32 %v10688, 0.0
    %v10817 = vmax.f32 %v10689, 0.0
    %v10818 = vmax.f32 %v10690, 0.0
    %v10819 = vmax.f32 %v10691, 0.0
    %v10820 = vmax.f32 %v10692, 0.0
    %v10821 = vmax.f32 %v10693, 0.0
    %v10822 = vmax.f32 %v10694, 0.0
    %v10823 = vmax.f32 %v10695, 0.0
    %v10824 = vmax.f32 %v10696, 0.0
    %v10825 = vmax.f32 %v10697, 0.0
    %v10826 = vmax.f32 %v10698, 0.0
    %v10827 = vmax.f32 %v10699, 0.0
    %v10828 = vmax.f32 %v10700, 0.0
    %v10829 = vmax.f32 %v10701, 0.0
    %v10830 = vmax.f32 %v10702, 0.0
    %v10831 = vmax.f32 %v10703, 0.0
    %v10832 = vmax.f32 %v10704, 0.0
    %v10833 = vmax.f32 %v10705, 0.0
    %v10834 = vmax.f32 %v10706, 0.0
    %v10835 = vmax.f32 %v10707, 0.0
    %v10836 = vmax.f32 %v10708, 0.0
    %v10837 = vmax.f32 %v10709, 0.0
    %v10838 = vmax.f32 %v10710, 0.0
    %v10839 = vmax.f32 %v10711, 0.0
    %v10840 = vmax.f32 %v10712, 0.0
    %v10841 = vmax.f32 %v10713, 0.0
    %v10842 = vmax.f32 %v10714, 0.0
    %v10843 = vmax.f32 %v10715, 0.0
    %v10844 = vmax.f32 %v10716, 0.0
    %v10845 = vmax.f32 %v10717, 0.0
    %v10846 = vmax.f32 %v10718, 0.0
    %v10847 = vmax.f32 %v10719, 0.0
    %v10848 = vmax.f32 %v10720, 0.0
    %v10849 = vmax.f32 %v10721, 0.0
    %v10850 = vmax.f32 %v10722, 0.0
    %v10851 = vmax.f32 %v10723, 0.0
    %v10852 = vmax.f32 %v10724, 0.0
    %v10853 = vmax.f32 %v10725, 0.0
    %v10854 = vmax.f32 %v10726, 0.0
    %v10855 = vmax.f32 %v10727, 0.0
    %v10856 = vmax.f32 %v10728, 0.0
    %v10857 = vrot.slane %v10729, 4
    %v10858 = vmax.f32 %v10729, %v10857
    %v10859 = vrot.slane %v10858, 2
    %v10860 = vmax.f32 %v10858, %v10859
    %v10861 = vrot.slane %v10860, 1
    %v10862 = vmax.f32 %v10860, %v10861
    %v10863 = vrot.slane %v10730, 4
    %v10864 = vmax.f32 %v10730, %v10863
    %v10865 = vrot.slane %v10864, 2
    %v10866 = vmax.f32 %v10864, %v10865
    %v10867 = vrot.slane %v10866, 1
    %v10868 = vmax.f32 %v10866, %v10867
    %v10869 = vrot.slane %v10731, 4
    %v10870 = vmax.f32 %v10731, %v10869
    %v10871 = vrot.slane %v10870, 2
    %v10872 = vmax.f32 %v10870, %v10871
    %v10873 = vrot.slane %v10872, 1
    %v10874 = vmax.f32 %v10872, %v10873
    %v10875 = vrot.slane %v10732, 4
    %v10876 = vmax.f32 %v10732, %v10875
    %v10877 = vrot.slane %v10876, 2
    %v10878 = vmax.f32 %v10876, %v10877
    %v10879 = vrot.slane %v10878, 1
    %v10880 = vmax.f32 %v10878, %v10879
    %v10881 = vrot.slane %v10733, 4
    %v10882 = vmax.f32 %v10733, %v10881
    %v10883 = vrot.slane %v10882, 2
    %v10884 = vmax.f32 %v10882, %v10883
    %v10885 = vrot.slane %v10884, 1
    %v10886 = vmax.f32 %v10884, %v10885
    %v10887 = vrot.slane %v10734, 4
    %v10888 = vmax.f32 %v10734, %v10887
    %v10889 = vrot.slane %v10888, 2
    %v10890 = vmax.f32 %v10888, %v10889
    %v10891 = vrot.slane %v10890, 1
    %v10892 = vmax.f32 %v10890, %v10891
    %v10893 = vrot.slane %v10735, 4
    %v10894 = vmax.f32 %v10735, %v10893
    %v10895 = vrot.slane %v10894, 2
    %v10896 = vmax.f32 %v10894, %v10895
    %v10897 = vrot.slane %v10896, 1
    %v10898 = vmax.f32 %v10896, %v10897
    %v10899 = vrot.slane %v10736, 4
    %v10900 = vmax.f32 %v10736, %v10899
    %v10901 = vrot.slane %v10900, 2
    %v10902 = vmax.f32 %v10900, %v10901
    %v10903 = vrot.slane %v10902, 1
    %v10904 = vmax.f32 %v10902, %v10903
    %v10905 = vrot.slane %v10737, 4
    %v10906 = vmax.f32 %v10737, %v10905
    %v10907 = vrot.slane %v10906, 2
    %v10908 = vmax.f32 %v10906, %v10907
    %v10909 = vrot.slane %v10908, 1
    %v10910 = vmax.f32 %v10908, %v10909
    %v10911 = vrot.slane %v10738, 4
    %v10912 = vmax.f32 %v10738, %v10911
    %v10913 = vrot.slane %v10912, 2
    %v10914 = vmax.f32 %v10912, %v10913
    %v10915 = vrot.slane %v10914, 1
    %v10916 = vmax.f32 %v10914, %v10915
    %v10917 = vrot.slane %v10739, 4
    %v10918 = vmax.f32 %v10739, %v10917
    %v10919 = vrot.slane %v10918, 2
    %v10920 = vmax.f32 %v10918, %v10919
    %v10921 = vrot.slane %v10920, 1
    %v10922 = vmax.f32 %v10920, %v10921
    %v10923 = vrot.slane %v10740, 4
    %v10924 = vmax.f32 %v10740, %v10923
    %v10925 = vrot.slane %v10924, 2
    %v10926 = vmax.f32 %v10924, %v10925
    %v10927 = vrot.slane %v10926, 1
    %v10928 = vmax.f32 %v10926, %v10927
    %v10929 = vrot.slane %v10741, 4
    %v10930 = vmax.f32 %v10741, %v10929
    %v10931 = vrot.slane %v10930, 2
    %v10932 = vmax.f32 %v10930, %v10931
    %v10933 = vrot.slane %v10932, 1
    %v10934 = vmax.f32 %v10932, %v10933
    %v10935 = vrot.slane %v10742, 4
    %v10936 = vmax.f32 %v10742, %v10935
    %v10937 = vrot.slane %v10936, 2
    %v10938 = vmax.f32 %v10936, %v10937
    %v10939 = vrot.slane %v10938, 1
    %v10940 = vmax.f32 %v10938, %v10939
    %v10941 = vrot.slane %v10743, 4
    %v10942 = vmax.f32 %v10743, %v10941
    %v10943 = vrot.slane %v10942, 2
    %v10944 = vmax.f32 %v10942, %v10943
    %v10945 = vrot.slane %v10944, 1
    %v10946 = vmax.f32 %v10944, %v10945
    %v10947 = vrot.slane %v10744, 4
    %v10948 = vmax.f32 %v10744, %v10947
    %v10949 = vrot.slane %v10948, 2
    %v10950 = vmax.f32 %v10948, %v10949
    %v10951 = vrot.slane %v10950, 1
    %v10952 = vmax.f32 %v10950, %v10951
    %v10953 = vrot.slane %v10745, 4
    %v10954 = vmax.f32 %v10745, %v10953
    %v10955 = vrot.slane %v10954, 2
    %v10956 = vmax.f32 %v10954, %v10955
    %v10957 = vrot.slane %v10956, 1
    %v10958 = vmax.f32 %v10956, %v10957
    %v10959 = vrot.slane %v10746, 4
    %v10960 = vmax.f32 %v10746, %v10959
    %v10961 = vrot.slane %v10960, 2
    %v10962 = vmax.f32 %v10960, %v10961
    %v10963 = vrot.slane %v10962, 1
    %v10964 = vmax.f32 %v10962, %v10963
    %v10965 = vrot.slane %v10747, 4
    %v10966 = vmax.f32 %v10747, %v10965
    %v10967 = vrot.slane %v10966, 2
    %v10968 = vmax.f32 %v10966, %v10967
    %v10969 = vrot.slane %v10968, 1
    %v10970 = vmax.f32 %v10968, %v10969
    %v10971 = vrot.slane %v10748, 4
    %v10972 = vmax.f32 %v10748, %v10971
    %v10973 = vrot.slane %v10972, 2
    %v10974 = vmax.f32 %v10972, %v10973
    %v10975 = vrot.slane %v10974, 1
    %v10976 = vmax.f32 %v10974, %v10975
    %v10977 = vrot.slane %v10749, 4
    %v10978 = vmax.f32 %v10749, %v10977
    %v10979 = vrot.slane %v10978, 2
    %v10980 = vmax.f32 %v10978, %v10979
    %v10981 = vrot.slane %v10980, 1
    %v10982 = vmax.f32 %v10980, %v10981
    %v10983 = vrot.slane %v10750, 4
    %v10984 = vmax.f32 %v10750, %v10983
    %v10985 = vrot.slane %v10984, 2
    %v10986 = vmax.f32 %v10984, %v10985
    %v10987 = vrot.slane %v10986, 1
    %v10988 = vmax.f32 %v10986, %v10987
    %v10989 = vrot.slane %v10751, 4
    %v10990 = vmax.f32 %v10751, %v10989
    %v10991 = vrot.slane %v10990, 2
    %v10992 = vmax.f32 %v10990, %v10991
    %v10993 = vrot.slane %v10992, 1
    %v10994 = vmax.f32 %v10992, %v10993
    %v10995 = vrot.slane %v10752, 4
    %v10996 = vmax.f32 %v10752, %v10995
    %v10997 = vrot.slane %v10996, 2
    %v10998 = vmax.f32 %v10996, %v10997
    %v10999 = vrot.slane %v10998, 1
    %v11000 = vmax.f32 %v10998, %v10999
    %v11001 = vrot.slane %v10753, 4
    %v11002 = vmax.f32 %v10753, %v11001
    %v11003 = vrot.slane %v11002, 2
    %v11004 = vmax.f32 %v11002, %v11003
    %v11005 = vrot.slane %v11004, 1
    %v11006 = vmax.f32 %v11004, %v11005
    %v11007 = vrot.slane %v10754, 4
    %v11008 = vmax.f32 %v10754, %v11007
    %v11009 = vrot.slane %v11008, 2
    %v11010 = vmax.f32 %v11008, %v11009
    %v11011 = vrot.slane %v11010, 1
    %v11012 = vmax.f32 %v11010, %v11011
    %v11013 = vrot.slane %v10755, 4
    %v11014 = vmax.f32 %v10755, %v11013
    %v11015 = vrot.slane %v11014, 2
    %v11016 = vmax.f32 %v11014, %v11015
    %v11017 = vrot.slane %v11016, 1
    %v11018 = vmax.f32 %v11016, %v11017
    %v11019 = vrot.slane %v10756, 4
    %v11020 = vmax.f32 %v10756, %v11019
    %v11021 = vrot.slane %v11020, 2
    %v11022 = vmax.f32 %v11020, %v11021
    %v11023 = vrot.slane %v11022, 1
    %v11024 = vmax.f32 %v11022, %v11023
    %v11025 = vrot.slane %v10757, 4
    %v11026 = vmax.f32 %v10757, %v11025
    %v11027 = vrot.slane %v11026, 2
    %v11028 = vmax.f32 %v11026, %v11027
    %v11029 = vrot.slane %v11028, 1
    %v11030 = vmax.f32 %v11028, %v11029
    %v11031 = vrot.slane %v10758, 4
    %v11032 = vmax.f32 %v10758, %v11031
    %v11033 = vrot.slane %v11032, 2
    %v11034 = vmax.f32 %v11032, %v11033
    %v11035 = vrot.slane %v11034, 1
    %v11036 = vmax.f32 %v11034, %v11035
    %v11037 = vrot.slane %v10759, 4
    %v11038 = vmax.f32 %v10759, %v11037
    %v11039 = vrot.slane %v11038, 2
    %v11040 = vmax.f32 %v11038, %v11039
    %v11041 = vrot.slane %v11040, 1
    %v11042 = vmax.f32 %v11040, %v11041
    %v11043 = vrot.slane %v10760, 4
    %v11044 = vmax.f32 %v10760, %v11043
    %v11045 = vrot.slane %v11044, 2
    %v11046 = vmax.f32 %v11044, %v11045
    %v11047 = vrot.slane %v11046, 1
    %v11048 = vmax.f32 %v11046, %v11047
    %v11049 = vrot.slane %v10761, 4
    %v11050 = vmax.f32 %v10761, %v11049
    %v11051 = vrot.slane %v11050, 2
    %v11052 = vmax.f32 %v11050, %v11051
    %v11053 = vrot.slane %v11052, 1
    %v11054 = vmax.f32 %v11052, %v11053
    %v11055 = vrot.slane %v10762, 4
    %v11056 = vmax.f32 %v10762, %v11055
    %v11057 = vrot.slane %v11056, 2
    %v11058 = vmax.f32 %v11056, %v11057
    %v11059 = vrot.slane %v11058, 1
    %v11060 = vmax.f32 %v11058, %v11059
    %v11061 = vrot.slane %v10763, 4
    %v11062 = vmax.f32 %v10763, %v11061
    %v11063 = vrot.slane %v11062, 2
    %v11064 = vmax.f32 %v11062, %v11063
    %v11065 = vrot.slane %v11064, 1
    %v11066 = vmax.f32 %v11064, %v11065
    %v11067 = vrot.slane %v10764, 4
    %v11068 = vmax.f32 %v10764, %v11067
    %v11069 = vrot.slane %v11068, 2
    %v11070 = vmax.f32 %v11068, %v11069
    %v11071 = vrot.slane %v11070, 1
    %v11072 = vmax.f32 %v11070, %v11071
    %v11073 = vrot.slane %v10765, 4
    %v11074 = vmax.f32 %v10765, %v11073
    %v11075 = vrot.slane %v11074, 2
    %v11076 = vmax.f32 %v11074, %v11075
    %v11077 = vrot.slane %v11076, 1
    %v11078 = vmax.f32 %v11076, %v11077
    %v11079 = vrot.slane %v10766, 4
    %v11080 = vmax.f32 %v10766, %v11079
    %v11081 = vrot.slane %v11080, 2
    %v11082 = vmax.f32 %v11080, %v11081
    %v11083 = vrot.slane %v11082, 1
    %v11084 = vmax.f32 %v11082, %v11083
    %v11085 = vrot.slane %v10767, 4
    %v11086 = vmax.f32 %v10767, %v11085
    %v11087 = vrot.slane %v11086, 2
    %v11088 = vmax.f32 %v11086, %v11087
    %v11089 = vrot.slane %v11088, 1
    %v11090 = vmax.f32 %v11088, %v11089
    %v11091 = vrot.slane %v10768, 4
    %v11092 = vmax.f32 %v10768, %v11091
    %v11093 = vrot.slane %v11092, 2
    %v11094 = vmax.f32 %v11092, %v11093
    %v11095 = vrot.slane %v11094, 1
    %v11096 = vmax.f32 %v11094, %v11095
    %v11097 = vrot.slane %v10769, 4
    %v11098 = vmax.f32 %v10769, %v11097
    %v11099 = vrot.slane %v11098, 2
    %v11100 = vmax.f32 %v11098, %v11099
    %v11101 = vrot.slane %v11100, 1
    %v11102 = vmax.f32 %v11100, %v11101
    %v11103 = vrot.slane %v10770, 4
    %v11104 = vmax.f32 %v10770, %v11103
    %v11105 = vrot.slane %v11104, 2
    %v11106 = vmax.f32 %v11104, %v11105
    %v11107 = vrot.slane %v11106, 1
    %v11108 = vmax.f32 %v11106, %v11107
    %v11109 = vrot.slane %v10771, 4
    %v11110 = vmax.f32 %v10771, %v11109
    %v11111 = vrot.slane %v11110, 2
    %v11112 = vmax.f32 %v11110, %v11111
    %v11113 = vrot.slane %v11112, 1
    %v11114 = vmax.f32 %v11112, %v11113
    %v11115 = vrot.slane %v10772, 4
    %v11116 = vmax.f32 %v10772, %v11115
    %v11117 = vrot.slane %v11116, 2
    %v11118 = vmax.f32 %v11116, %v11117
    %v11119 = vrot.slane %v11118, 1
    %v11120 = vmax.f32 %v11118, %v11119
    %v11121 = vrot.slane %v10773, 4
    %v11122 = vmax.f32 %v10773, %v11121
    %v11123 = vrot.slane %v11122, 2
    %v11124 = vmax.f32 %v11122, %v11123
    %v11125 = vrot.slane %v11124, 1
    %v11126 = vmax.f32 %v11124, %v11125
    %v11127 = vrot.slane %v10774, 4
    %v11128 = vmax.f32 %v10774, %v11127
    %v11129 = vrot.slane %v11128, 2
    %v11130 = vmax.f32 %v11128, %v11129
    %v11131 = vrot.slane %v11130, 1
    %v11132 = vmax.f32 %v11130, %v11131
    %v11133 = vrot.slane %v10775, 4
    %v11134 = vmax.f32 %v10775, %v11133
    %v11135 = vrot.slane %v11134, 2
    %v11136 = vmax.f32 %v11134, %v11135
    %v11137 = vrot.slane %v11136, 1
    %v11138 = vmax.f32 %v11136, %v11137
    %v11139 = vrot.slane %v10776, 4
    %v11140 = vmax.f32 %v10776, %v11139
    %v11141 = vrot.slane %v11140, 2
    %v11142 = vmax.f32 %v11140, %v11141
    %v11143 = vrot.slane %v11142, 1
    %v11144 = vmax.f32 %v11142, %v11143
    %v11145 = vrot.slane %v10777, 4
    %v11146 = vmax.f32 %v10777, %v11145
    %v11147 = vrot.slane %v11146, 2
    %v11148 = vmax.f32 %v11146, %v11147
    %v11149 = vrot.slane %v11148, 1
    %v11150 = vmax.f32 %v11148, %v11149
    %v11151 = vrot.slane %v10778, 4
    %v11152 = vmax.f32 %v10778, %v11151
    %v11153 = vrot.slane %v11152, 2
    %v11154 = vmax.f32 %v11152, %v11153
    %v11155 = vrot.slane %v11154, 1
    %v11156 = vmax.f32 %v11154, %v11155
    %v11157 = vrot.slane %v10779, 4
    %v11158 = vmax.f32 %v10779, %v11157
    %v11159 = vrot.slane %v11158, 2
    %v11160 = vmax.f32 %v11158, %v11159
    %v11161 = vrot.slane %v11160, 1
    %v11162 = vmax.f32 %v11160, %v11161
    %v11163 = vrot.slane %v10780, 4
    %v11164 = vmax.f32 %v10780, %v11163
    %v11165 = vrot.slane %v11164, 2
    %v11166 = vmax.f32 %v11164, %v11165
    %v11167 = vrot.slane %v11166, 1
    %v11168 = vmax.f32 %v11166, %v11167
    %v11169 = vrot.slane %v10781, 4
    %v11170 = vmax.f32 %v10781, %v11169
    %v11171 = vrot.slane %v11170, 2
    %v11172 = vmax.f32 %v11170, %v11171
    %v11173 = vrot.slane %v11172, 1
    %v11174 = vmax.f32 %v11172, %v11173
    %v11175 = vrot.slane %v10782, 4
    %v11176 = vmax.f32 %v10782, %v11175
    %v11177 = vrot.slane %v11176, 2
    %v11178 = vmax.f32 %v11176, %v11177
    %v11179 = vrot.slane %v11178, 1
    %v11180 = vmax.f32 %v11178, %v11179
    %v11181 = vrot.slane %v10783, 4
    %v11182 = vmax.f32 %v10783, %v11181
    %v11183 = vrot.slane %v11182, 2
    %v11184 = vmax.f32 %v11182, %v11183
    %v11185 = vrot.slane %v11184, 1
    %v11186 = vmax.f32 %v11184, %v11185
    %v11187 = vrot.slane %v10784, 4
    %v11188 = vmax.f32 %v10784, %v11187
    %v11189 = vrot.slane %v11188, 2
    %v11190 = vmax.f32 %v11188, %v11189
    %v11191 = vrot.slane %v11190, 1
    %v11192 = vmax.f32 %v11190, %v11191
    %v11193 = vrot.slane %v10785, 4
    %v11194 = vmax.f32 %v10785, %v11193
    %v11195 = vrot.slane %v11194, 2
    %v11196 = vmax.f32 %v11194, %v11195
    %v11197 = vrot.slane %v11196, 1
    %v11198 = vmax.f32 %v11196, %v11197
    %v11199 = vrot.slane %v10786, 4
    %v11200 = vmax.f32 %v10786, %v11199
    %v11201 = vrot.slane %v11200, 2
    %v11202 = vmax.f32 %v11200, %v11201
    %v11203 = vrot.slane %v11202, 1
    %v11204 = vmax.f32 %v11202, %v11203
    %v11205 = vrot.slane %v10787, 4
    %v11206 = vmax.f32 %v10787, %v11205
    %v11207 = vrot.slane %v11206, 2
    %v11208 = vmax.f32 %v11206, %v11207
    %v11209 = vrot.slane %v11208, 1
    %v11210 = vmax.f32 %v11208, %v11209
    %v11211 = vrot.slane %v10788, 4
    %v11212 = vmax.f32 %v10788, %v11211
    %v11213 = vrot.slane %v11212, 2
    %v11214 = vmax.f32 %v11212, %v11213
    %v11215 = vrot.slane %v11214, 1
    %v11216 = vmax.f32 %v11214, %v11215
    %v11217 = vrot.slane %v10789, 4
    %v11218 = vmax.f32 %v10789, %v11217
    %v11219 = vrot.slane %v11218, 2
    %v11220 = vmax.f32 %v11218, %v11219
    %v11221 = vrot.slane %v11220, 1
    %v11222 = vmax.f32 %v11220, %v11221
    %v11223 = vrot.slane %v10790, 4
    %v11224 = vmax.f32 %v10790, %v11223
    %v11225 = vrot.slane %v11224, 2
    %v11226 = vmax.f32 %v11224, %v11225
    %v11227 = vrot.slane %v11226, 1
    %v11228 = vmax.f32 %v11226, %v11227
    %v11229 = vrot.slane %v10791, 4
    %v11230 = vmax.f32 %v10791, %v11229
    %v11231 = vrot.slane %v11230, 2
    %v11232 = vmax.f32 %v11230, %v11231
    %v11233 = vrot.slane %v11232, 1
    %v11234 = vmax.f32 %v11232, %v11233
    %v11235 = vrot.slane %v10792, 4
    %v11236 = vmax.f32 %v10792, %v11235
    %v11237 = vrot.slane %v11236, 2
    %v11238 = vmax.f32 %v11236, %v11237
    %v11239 = vrot.slane %v11238, 1
    %v11240 = vmax.f32 %v11238, %v11239
    %v11241 = vrot.slane %v10793, 4
    %v11242 = vmax.f32 %v10793, %v11241
    %v11243 = vrot.slane %v11242, 2
    %v11244 = vmax.f32 %v11242, %v11243
    %v11245 = vrot.slane %v11244, 1
    %v11246 = vmax.f32 %v11244, %v11245
    %v11247 = vrot.slane %v10794, 4
    %v11248 = vmax.f32 %v10794, %v11247
    %v11249 = vrot.slane %v11248, 2
    %v11250 = vmax.f32 %v11248, %v11249
    %v11251 = vrot.slane %v11250, 1
    %v11252 = vmax.f32 %v11250, %v11251
    %v11253 = vrot.slane %v10795, 4
    %v11254 = vmax.f32 %v10795, %v11253
    %v11255 = vrot.slane %v11254, 2
    %v11256 = vmax.f32 %v11254, %v11255
    %v11257 = vrot.slane %v11256, 1
    %v11258 = vmax.f32 %v11256, %v11257
    %v11259 = vrot.slane %v10796, 4
    %v11260 = vmax.f32 %v10796, %v11259
    %v11261 = vrot.slane %v11260, 2
    %v11262 = vmax.f32 %v11260, %v11261
    %v11263 = vrot.slane %v11262, 1
    %v11264 = vmax.f32 %v11262, %v11263
    %v11265 = vrot.slane %v10797, 4
    %v11266 = vmax.f32 %v10797, %v11265
    %v11267 = vrot.slane %v11266, 2
    %v11268 = vmax.f32 %v11266, %v11267
    %v11269 = vrot.slane %v11268, 1
    %v11270 = vmax.f32 %v11268, %v11269
    %v11271 = vrot.slane %v10798, 4
    %v11272 = vmax.f32 %v10798, %v11271
    %v11273 = vrot.slane %v11272, 2
    %v11274 = vmax.f32 %v11272, %v11273
    %v11275 = vrot.slane %v11274, 1
    %v11276 = vmax.f32 %v11274, %v11275
    %v11277 = vrot.slane %v10799, 4
    %v11278 = vmax.f32 %v10799, %v11277
    %v11279 = vrot.slane %v11278, 2
    %v11280 = vmax.f32 %v11278, %v11279
    %v11281 = vrot.slane %v11280, 1
    %v11282 = vmax.f32 %v11280, %v11281
    %v11283 = vrot.slane %v10800, 4
    %v11284 = vmax.f32 %v10800, %v11283
    %v11285 = vrot.slane %v11284, 2
    %v11286 = vmax.f32 %v11284, %v11285
    %v11287 = vrot.slane %v11286, 1
    %v11288 = vmax.f32 %v11286, %v11287
    %v11289 = vrot.slane %v10801, 4
    %v11290 = vmax.f32 %v10801, %v11289
    %v11291 = vrot.slane %v11290, 2
    %v11292 = vmax.f32 %v11290, %v11291
    %v11293 = vrot.slane %v11292, 1
    %v11294 = vmax.f32 %v11292, %v11293
    %v11295 = vrot.slane %v10802, 4
    %v11296 = vmax.f32 %v10802, %v11295
    %v11297 = vrot.slane %v11296, 2
    %v11298 = vmax.f32 %v11296, %v11297
    %v11299 = vrot.slane %v11298, 1
    %v11300 = vmax.f32 %v11298, %v11299
    %v11301 = vrot.slane %v10803, 4
    %v11302 = vmax.f32 %v10803, %v11301
    %v11303 = vrot.slane %v11302, 2
    %v11304 = vmax.f32 %v11302, %v11303
    %v11305 = vrot.slane %v11304, 1
    %v11306 = vmax.f32 %v11304, %v11305
    %v11307 = vrot.slane %v10804, 4
    %v11308 = vmax.f32 %v10804, %v11307
    %v11309 = vrot.slane %v11308, 2
    %v11310 = vmax.f32 %v11308, %v11309
    %v11311 = vrot.slane %v11310, 1
    %v11312 = vmax.f32 %v11310, %v11311
    %v11313 = vrot.slane %v10805, 4
    %v11314 = vmax.f32 %v10805, %v11313
    %v11315 = vrot.slane %v11314, 2
    %v11316 = vmax.f32 %v11314, %v11315
    %v11317 = vrot.slane %v11316, 1
    %v11318 = vmax.f32 %v11316, %v11317
    %v11319 = vrot.slane %v10806, 4
    %v11320 = vmax.f32 %v10806, %v11319
    %v11321 = vrot.slane %v11320, 2
    %v11322 = vmax.f32 %v11320, %v11321
    %v11323 = vrot.slane %v11322, 1
    %v11324 = vmax.f32 %v11322, %v11323
    %v11325 = vrot.slane %v10807, 4
    %v11326 = vmax.f32 %v10807, %v11325
    %v11327 = vrot.slane %v11326, 2
    %v11328 = vmax.f32 %v11326, %v11327
    %v11329 = vrot.slane %v11328, 1
    %v11330 = vmax.f32 %v11328, %v11329
    %v11331 = vrot.slane %v10808, 4
    %v11332 = vmax.f32 %v10808, %v11331
    %v11333 = vrot.slane %v11332, 2
    %v11334 = vmax.f32 %v11332, %v11333
    %v11335 = vrot.slane %v11334, 1
    %v11336 = vmax.f32 %v11334, %v11335
    %v11337 = vrot.slane %v10809, 4
    %v11338 = vmax.f32 %v10809, %v11337
    %v11339 = vrot.slane %v11338, 2
    %v11340 = vmax.f32 %v11338, %v11339
    %v11341 = vrot.slane %v11340, 1
    %v11342 = vmax.f32 %v11340, %v11341
    %v11343 = vrot.slane %v10810, 4
    %v11344 = vmax.f32 %v10810, %v11343
    %v11345 = vrot.slane %v11344, 2
    %v11346 = vmax.f32 %v11344, %v11345
    %v11347 = vrot.slane %v11346, 1
    %v11348 = vmax.f32 %v11346, %v11347
    %v11349 = vrot.slane %v10811, 4
    %v11350 = vmax.f32 %v10811, %v11349
    %v11351 = vrot.slane %v11350, 2
    %v11352 = vmax.f32 %v11350, %v11351
    %v11353 = vrot.slane %v11352, 1
    %v11354 = vmax.f32 %v11352, %v11353
    %v11355 = vrot.slane %v10812, 4
    %v11356 = vmax.f32 %v10812, %v11355
    %v11357 = vrot.slane %v11356, 2
    %v11358 = vmax.f32 %v11356, %v11357
    %v11359 = vrot.slane %v11358, 1
    %v11360 = vmax.f32 %v11358, %v11359
    %v11361 = vrot.slane %v10813, 4
    %v11362 = vmax.f32 %v10813, %v11361
    %v11363 = vrot.slane %v11362, 2
    %v11364 = vmax.f32 %v11362, %v11363
    %v11365 = vrot.slane %v11364, 1
    %v11366 = vmax.f32 %v11364, %v11365
    %v11367 = vrot.slane %v10814, 4
    %v11368 = vmax.f32 %v10814, %v11367
    %v11369 = vrot.slane %v11368, 2
    %v11370 = vmax.f32 %v11368, %v11369
    %v11371 = vrot.slane %v11370, 1
    %v11372 = vmax.f32 %v11370, %v11371
    %v11373 = vrot.slane %v10815, 4
    %v11374 = vmax.f32 %v10815, %v11373
    %v11375 = vrot.slane %v11374, 2
    %v11376 = vmax.f32 %v11374, %v11375
    %v11377 = vrot.slane %v11376, 1
    %v11378 = vmax.f32 %v11376, %v11377
    %v11379 = vrot.slane %v10816, 4
    %v11380 = vmax.f32 %v10816, %v11379
    %v11381 = vrot.slane %v11380, 2
    %v11382 = vmax.f32 %v11380, %v11381
    %v11383 = vrot.slane %v11382, 1
    %v11384 = vmax.f32 %v11382, %v11383
    %v11385 = vrot.slane %v10817, 4
    %v11386 = vmax.f32 %v10817, %v11385
    %v11387 = vrot.slane %v11386, 2
    %v11388 = vmax.f32 %v11386, %v11387
    %v11389 = vrot.slane %v11388, 1
    %v11390 = vmax.f32 %v11388, %v11389
    %v11391 = vrot.slane %v10818, 4
    %v11392 = vmax.f32 %v10818, %v11391
    %v11393 = vrot.slane %v11392, 2
    %v11394 = vmax.f32 %v11392, %v11393
    %v11395 = vrot.slane %v11394, 1
    %v11396 = vmax.f32 %v11394, %v11395
    %v11397 = vrot.slane %v10819, 4
    %v11398 = vmax.f32 %v10819, %v11397
    %v11399 = vrot.slane %v11398, 2
    %v11400 = vmax.f32 %v11398, %v11399
    %v11401 = vrot.slane %v11400, 1
    %v11402 = vmax.f32 %v11400, %v11401
    %v11403 = vrot.slane %v10820, 4
    %v11404 = vmax.f32 %v10820, %v11403
    %v11405 = vrot.slane %v11404, 2
    %v11406 = vmax.f32 %v11404, %v11405
    %v11407 = vrot.slane %v11406, 1
    %v11408 = vmax.f32 %v11406, %v11407
    %v11409 = vrot.slane %v10821, 4
    %v11410 = vmax.f32 %v10821, %v11409
    %v11411 = vrot.slane %v11410, 2
    %v11412 = vmax.f32 %v11410, %v11411
    %v11413 = vrot.slane %v11412, 1
    %v11414 = vmax.f32 %v11412, %v11413
    %v11415 = vrot.slane %v10822, 4
    %v11416 = vmax.f32 %v10822, %v11415
    %v11417 = vrot.slane %v11416, 2
    %v11418 = vmax.f32 %v11416, %v11417
    %v11419 = vrot.slane %v11418, 1
    %v11420 = vmax.f32 %v11418, %v11419
    %v11421 = vrot.slane %v10823, 4
    %v11422 = vmax.f32 %v10823, %v11421
    %v11423 = vrot.slane %v11422, 2
    %v11424 = vmax.f32 %v11422, %v11423
    %v11425 = vrot.slane %v11424, 1
    %v11426 = vmax.f32 %v11424, %v11425
    %v11427 = vrot.slane %v10824, 4
    %v11428 = vmax.f32 %v10824, %v11427
    %v11429 = vrot.slane %v11428, 2
    %v11430 = vmax.f32 %v11428, %v11429
    %v11431 = vrot.slane %v11430, 1
    %v11432 = vmax.f32 %v11430, %v11431
    %v11433 = vrot.slane %v10825, 4
    %v11434 = vmax.f32 %v10825, %v11433
    %v11435 = vrot.slane %v11434, 2
    %v11436 = vmax.f32 %v11434, %v11435
    %v11437 = vrot.slane %v11436, 1
    %v11438 = vmax.f32 %v11436, %v11437
    %v11439 = vrot.slane %v10826, 4
    %v11440 = vmax.f32 %v10826, %v11439
    %v11441 = vrot.slane %v11440, 2
    %v11442 = vmax.f32 %v11440, %v11441
    %v11443 = vrot.slane %v11442, 1
    %v11444 = vmax.f32 %v11442, %v11443
    %v11445 = vrot.slane %v10827, 4
    %v11446 = vmax.f32 %v10827, %v11445
    %v11447 = vrot.slane %v11446, 2
    %v11448 = vmax.f32 %v11446, %v11447
    %v11449 = vrot.slane %v11448, 1
    %v11450 = vmax.f32 %v11448, %v11449
    %v11451 = vrot.slane %v10828, 4
    %v11452 = vmax.f32 %v10828, %v11451
    %v11453 = vrot.slane %v11452, 2
    %v11454 = vmax.f32 %v11452, %v11453
    %v11455 = vrot.slane %v11454, 1
    %v11456 = vmax.f32 %v11454, %v11455
    %v11457 = vrot.slane %v10829, 4
    %v11458 = vmax.f32 %v10829, %v11457
    %v11459 = vrot.slane %v11458, 2
    %v11460 = vmax.f32 %v11458, %v11459
    %v11461 = vrot.slane %v11460, 1
    %v11462 = vmax.f32 %v11460, %v11461
    %v11463 = vrot.slane %v10830, 4
    %v11464 = vmax.f32 %v10830, %v11463
    %v11465 = vrot.slane %v11464, 2
    %v11466 = vmax.f32 %v11464, %v11465
    %v11467 = vrot.slane %v11466, 1
    %v11468 = vmax.f32 %v11466, %v11467
    %v11469 = vrot.slane %v10831, 4
    %v11470 = vmax.f32 %v10831, %v11469
    %v11471 = vrot.slane %v11470, 2
    %v11472 = vmax.f32 %v11470, %v11471
    %v11473 = vrot.slane %v11472, 1
    %v11474 = vmax.f32 %v11472, %v11473
    %v11475 = vrot.slane %v10832, 4
    %v11476 = vmax.f32 %v10832, %v11475
    %v11477 = vrot.slane %v11476, 2
    %v11478 = vmax.f32 %v11476, %v11477
    %v11479 = vrot.slane %v11478, 1
    %v11480 = vmax.f32 %v11478, %v11479
    %v11481 = vrot.slane %v10833, 4
    %v11482 = vmax.f32 %v10833, %v11481
    %v11483 = vrot.slane %v11482, 2
    %v11484 = vmax.f32 %v11482, %v11483
    %v11485 = vrot.slane %v11484, 1
    %v11486 = vmax.f32 %v11484, %v11485
    %v11487 = vrot.slane %v10834, 4
    %v11488 = vmax.f32 %v10834, %v11487
    %v11489 = vrot.slane %v11488, 2
    %v11490 = vmax.f32 %v11488, %v11489
    %v11491 = vrot.slane %v11490, 1
    %v11492 = vmax.f32 %v11490, %v11491
    %v11493 = vrot.slane %v10835, 4
    %v11494 = vmax.f32 %v10835, %v11493
    %v11495 = vrot.slane %v11494, 2
    %v11496 = vmax.f32 %v11494, %v11495
    %v11497 = vrot.slane %v11496, 1
    %v11498 = vmax.f32 %v11496, %v11497
    %v11499 = vrot.slane %v10836, 4
    %v11500 = vmax.f32 %v10836, %v11499
    %v11501 = vrot.slane %v11500, 2
    %v11502 = vmax.f32 %v11500, %v11501
    %v11503 = vrot.slane %v11502, 1
    %v11504 = vmax.f32 %v11502, %v11503
    %v11505 = vrot.slane %v10837, 4
    %v11506 = vmax.f32 %v10837, %v11505
    %v11507 = vrot.slane %v11506, 2
    %v11508 = vmax.f32 %v11506, %v11507
    %v11509 = vrot.slane %v11508, 1
    %v11510 = vmax.f32 %v11508, %v11509
    %v11511 = vrot.slane %v10838, 4
    %v11512 = vmax.f32 %v10838, %v11511
    %v11513 = vrot.slane %v11512, 2
    %v11514 = vmax.f32 %v11512, %v11513
    %v11515 = vrot.slane %v11514, 1
    %v11516 = vmax.f32 %v11514, %v11515
    %v11517 = vrot.slane %v10839, 4
    %v11518 = vmax.f32 %v10839, %v11517
    %v11519 = vrot.slane %v11518, 2
    %v11520 = vmax.f32 %v11518, %v11519
    %v11521 = vrot.slane %v11520, 1
    %v11522 = vmax.f32 %v11520, %v11521
    %v11523 = vrot.slane %v10840, 4
    %v11524 = vmax.f32 %v10840, %v11523
    %v11525 = vrot.slane %v11524, 2
    %v11526 = vmax.f32 %v11524, %v11525
    %v11527 = vrot.slane %v11526, 1
    %v11528 = vmax.f32 %v11526, %v11527
    %v11529 = vrot.slane %v10841, 4
    %v11530 = vmax.f32 %v10841, %v11529
    %v11531 = vrot.slane %v11530, 2
    %v11532 = vmax.f32 %v11530, %v11531
    %v11533 = vrot.slane %v11532, 1
    %v11534 = vmax.f32 %v11532, %v11533
    %v11535 = vrot.slane %v10842, 4
    %v11536 = vmax.f32 %v10842, %v11535
    %v11537 = vrot.slane %v11536, 2
    %v11538 = vmax.f32 %v11536, %v11537
    %v11539 = vrot.slane %v11538, 1
    %v11540 = vmax.f32 %v11538, %v11539
    %v11541 = vrot.slane %v10843, 4
    %v11542 = vmax.f32 %v10843, %v11541
    %v11543 = vrot.slane %v11542, 2
    %v11544 = vmax.f32 %v11542, %v11543
    %v11545 = vrot.slane %v11544, 1
    %v11546 = vmax.f32 %v11544, %v11545
    %v11547 = vrot.slane %v10844, 4
    %v11548 = vmax.f32 %v10844, %v11547
    %v11549 = vrot.slane %v11548, 2
    %v11550 = vmax.f32 %v11548, %v11549
    %v11551 = vrot.slane %v11550, 1
    %v11552 = vmax.f32 %v11550, %v11551
    %v11553 = vrot.slane %v10845, 4
    %v11554 = vmax.f32 %v10845, %v11553
    %v11555 = vrot.slane %v11554, 2
    %v11556 = vmax.f32 %v11554, %v11555
    %v11557 = vrot.slane %v11556, 1
    %v11558 = vmax.f32 %v11556, %v11557
    %v11559 = vrot.slane %v10846, 4
    %v11560 = vmax.f32 %v10846, %v11559
    %v11561 = vrot.slane %v11560, 2
    %v11562 = vmax.f32 %v11560, %v11561
    %v11563 = vrot.slane %v11562, 1
    %v11564 = vmax.f32 %v11562, %v11563
    %v11565 = vrot.slane %v10847, 4
    %v11566 = vmax.f32 %v10847, %v11565
    %v11567 = vrot.slane %v11566, 2
    %v11568 = vmax.f32 %v11566, %v11567
    %v11569 = vrot.slane %v11568, 1
    %v11570 = vmax.f32 %v11568, %v11569
    %v11571 = vrot.slane %v10848, 4
    %v11572 = vmax.f32 %v10848, %v11571
    %v11573 = vrot.slane %v11572, 2
    %v11574 = vmax.f32 %v11572, %v11573
    %v11575 = vrot.slane %v11574, 1
    %v11576 = vmax.f32 %v11574, %v11575
    %v11577 = vrot.slane %v10849, 4
    %v11578 = vmax.f32 %v10849, %v11577
    %v11579 = vrot.slane %v11578, 2
    %v11580 = vmax.f32 %v11578, %v11579
    %v11581 = vrot.slane %v11580, 1
    %v11582 = vmax.f32 %v11580, %v11581
    %v11583 = vrot.slane %v10850, 4
    %v11584 = vmax.f32 %v10850, %v11583
    %v11585 = vrot.slane %v11584, 2
    %v11586 = vmax.f32 %v11584, %v11585
    %v11587 = vrot.slane %v11586, 1
    %v11588 = vmax.f32 %v11586, %v11587
    %v11589 = vrot.slane %v10851, 4
    %v11590 = vmax.f32 %v10851, %v11589
    %v11591 = vrot.slane %v11590, 2
    %v11592 = vmax.f32 %v11590, %v11591
    %v11593 = vrot.slane %v11592, 1
    %v11594 = vmax.f32 %v11592, %v11593
    %v11595 = vrot.slane %v10852, 4
    %v11596 = vmax.f32 %v10852, %v11595
    %v11597 = vrot.slane %v11596, 2
    %v11598 = vmax.f32 %v11596, %v11597
    %v11599 = vrot.slane %v11598, 1
    %v11600 = vmax.f32 %v11598, %v11599
    %v11601 = vrot.slane %v10853, 4
    %v11602 = vmax.f32 %v10853, %v11601
    %v11603 = vrot.slane %v11602, 2
    %v11604 = vmax.f32 %v11602, %v11603
    %v11605 = vrot.slane %v11604, 1
    %v11606 = vmax.f32 %v11604, %v11605
    %v11607 = vrot.slane %v10854, 4
    %v11608 = vmax.f32 %v10854, %v11607
    %v11609 = vrot.slane %v11608, 2
    %v11610 = vmax.f32 %v11608, %v11609
    %v11611 = vrot.slane %v11610, 1
    %v11612 = vmax.f32 %v11610, %v11611
    %v11613 = vrot.slane %v10855, 4
    %v11614 = vmax.f32 %v10855, %v11613
    %v11615 = vrot.slane %v11614, 2
    %v11616 = vmax.f32 %v11614, %v11615
    %v11617 = vrot.slane %v11616, 1
    %v11618 = vmax.f32 %v11616, %v11617
    %v11619 = vrot.slane %v10856, 4
    %v11620 = vmax.f32 %v10856, %v11619
    %v11621 = vrot.slane %v11620, 2
    %v11622 = vmax.f32 %v11620, %v11621
    %v11623 = vrot.slane %v11622, 1
    %v11624 = vmax.f32 %v11622, %v11623
    %v11625 = vpack.c.bf16 %v10862, %v10862
    %v11626 = vpack.c.bf16 %v10868, %v10868
    %v11627 = vpack.c.bf16 %v10874, %v10874
    %v11628 = vpack.c.bf16 %v10880, %v10880
    %v11629 = vpack.c.bf16 %v10886, %v10886
    %v11630 = vpack.c.bf16 %v10892, %v10892
    %v11631 = vpack.c.bf16 %v10898, %v10898
    %v11632 = vpack.c.bf16 %v10904, %v10904
    %v11633 = vpack.c.bf16 %v10910, %v10910
    %v11634 = vpack.c.bf16 %v10916, %v10916
    %v11635 = vpack.c.bf16 %v10922, %v10922
    %v11636 = vpack.c.bf16 %v10928, %v10928
    %v11637 = vpack.c.bf16 %v10934, %v10934
    %v11638 = vpack.c.bf16 %v10940, %v10940
    %v11639 = vpack.c.bf16 %v10946, %v10946
    %v11640 = vpack.c.bf16 %v10952, %v10952
    %v11641 = vpack.c.bf16 %v10958, %v10958
    %v11642 = vpack.c.bf16 %v10964, %v10964
    %v11643 = vpack.c.bf16 %v10970, %v10970
    %v11644 = vpack.c.bf16 %v10976, %v10976
    %v11645 = vpack.c.bf16 %v10982, %v10982
    %v11646 = vpack.c.bf16 %v10988, %v10988
    %v11647 = vpack.c.bf16 %v10994, %v10994
    %v11648 = vpack.c.bf16 %v11000, %v11000
    %v11649 = vpack.c.bf16 %v11006, %v11006
    %v11650 = vpack.c.bf16 %v11012, %v11012
    %v11651 = vpack.c.bf16 %v11018, %v11018
    %v11652 = vpack.c.bf16 %v11024, %v11024
    %v11653 = vpack.c.bf16 %v11030, %v11030
    %v11654 = vpack.c.bf16 %v11036, %v11036
    %v11655 = vpack.c.bf16 %v11042, %v11042
    %v11656 = vpack.c.bf16 %v11048, %v11048
    %v11657 = vpack.c.bf16 %v11054, %v11054
    %v11658 = vpack.c.bf16 %v11060, %v11060
    %v11659 = vpack.c.bf16 %v11066, %v11066
    %v11660 = vpack.c.bf16 %v11072, %v11072
    %v11661 = vpack.c.bf16 %v11078, %v11078
    %v11662 = vpack.c.bf16 %v11084, %v11084
    %v11663 = vpack.c.bf16 %v11090, %v11090
    %v11664 = vpack.c.bf16 %v11096, %v11096
    %v11665 = vpack.c.bf16 %v11102, %v11102
    %v11666 = vpack.c.bf16 %v11108, %v11108
    %v11667 = vpack.c.bf16 %v11114, %v11114
    %v11668 = vpack.c.bf16 %v11120, %v11120
    %v11669 = vpack.c.bf16 %v11126, %v11126
    %v11670 = vpack.c.bf16 %v11132, %v11132
    %v11671 = vpack.c.bf16 %v11138, %v11138
    %v11672 = vpack.c.bf16 %v11144, %v11144
    %v11673 = vpack.c.bf16 %v11150, %v11150
    %v11674 = vpack.c.bf16 %v11156, %v11156
    %v11675 = vpack.c.bf16 %v11162, %v11162
    %v11676 = vpack.c.bf16 %v11168, %v11168
    %v11677 = vpack.c.bf16 %v11174, %v11174
    %v11678 = vpack.c.bf16 %v11180, %v11180
    %v11679 = vpack.c.bf16 %v11186, %v11186
    %v11680 = vpack.c.bf16 %v11192, %v11192
    %v11681 = vpack.c.bf16 %v11198, %v11198
    %v11682 = vpack.c.bf16 %v11204, %v11204
    %v11683 = vpack.c.bf16 %v11210, %v11210
    %v11684 = vpack.c.bf16 %v11216, %v11216
    %v11685 = vpack.c.bf16 %v11222, %v11222
    %v11686 = vpack.c.bf16 %v11228, %v11228
    %v11687 = vpack.c.bf16 %v11234, %v11234
    %v11688 = vpack.c.bf16 %v11240, %v11240
    %v11689 = vpack.c.bf16 %v11246, %v11246
    %v11690 = vpack.c.bf16 %v11252, %v11252
    %v11691 = vpack.c.bf16 %v11258, %v11258
    %v11692 = vpack.c.bf16 %v11264, %v11264
    %v11693 = vpack.c.bf16 %v11270, %v11270
    %v11694 = vpack.c.bf16 %v11276, %v11276
    %v11695 = vpack.c.bf16 %v11282, %v11282
    %v11696 = vpack.c.bf16 %v11288, %v11288
    %v11697 = vpack.c.bf16 %v11294, %v11294
    %v11698 = vpack.c.bf16 %v11300, %v11300
    %v11699 = vpack.c.bf16 %v11306, %v11306
    %v11700 = vpack.c.bf16 %v11312, %v11312
    %v11701 = vpack.c.bf16 %v11318, %v11318
    %v11702 = vpack.c.bf16 %v11324, %v11324
    %v11703 = vpack.c.bf16 %v11330, %v11330
    %v11704 = vpack.c.bf16 %v11336, %v11336
    %v11705 = vpack.c.bf16 %v11342, %v11342
    %v11706 = vpack.c.bf16 %v11348, %v11348
    %v11707 = vpack.c.bf16 %v11354, %v11354
    %v11708 = vpack.c.bf16 %v11360, %v11360
    %v11709 = vpack.c.bf16 %v11366, %v11366
    %v11710 = vpack.c.bf16 %v11372, %v11372
    %v11711 = vpack.c.bf16 %v11378, %v11378
    %v11712 = vpack.c.bf16 %v11384, %v11384
    %v11713 = vpack.c.bf16 %v11390, %v11390
    %v11714 = vpack.c.bf16 %v11396, %v11396
    %v11715 = vpack.c.bf16 %v11402, %v11402
    %v11716 = vpack.c.bf16 %v11408, %v11408
    %v11717 = vpack.c.bf16 %v11414, %v11414
    %v11718 = vpack.c.bf16 %v11420, %v11420
    %v11719 = vpack.c.bf16 %v11426, %v11426
    %v11720 = vpack.c.bf16 %v11432, %v11432
    %v11721 = vpack.c.bf16 %v11438, %v11438
    %v11722 = vpack.c.bf16 %v11444, %v11444
    %v11723 = vpack.c.bf16 %v11450, %v11450
    %v11724 = vpack.c.bf16 %v11456, %v11456
    %v11725 = vpack.c.bf16 %v11462, %v11462
    %v11726 = vpack.c.bf16 %v11468, %v11468
    %v11727 = vpack.c.bf16 %v11474, %v11474
    %v11728 = vpack.c.bf16 %v11480, %v11480
    %v11729 = vpack.c.bf16 %v11486, %v11486
    %v11730 = vpack.c.bf16 %v11492, %v11492
    %v11731 = vpack.c.bf16 %v11498, %v11498
    %v11732 = vpack.c.bf16 %v11504, %v11504
    %v11733 = vpack.c.bf16 %v11510, %v11510
    %v11734 = vpack.c.bf16 %v11516, %v11516
    %v11735 = vpack.c.bf16 %v11522, %v11522
    %v11736 = vpack.c.bf16 %v11528, %v11528
    %v11737 = vpack.c.bf16 %v11534, %v11534
    %v11738 = vpack.c.bf16 %v11540, %v11540
    %v11739 = vpack.c.bf16 %v11546, %v11546
    %v11740 = vpack.c.bf16 %v11552, %v11552
    %v11741 = vpack.c.bf16 %v11558, %v11558
    %v11742 = vpack.c.bf16 %v11564, %v11564
    %v11743 = vpack.c.bf16 %v11570, %v11570
    %v11744 = vpack.c.bf16 %v11576, %v11576
    %v11745 = vpack.c.bf16 %v11582, %v11582
    %v11746 = vpack.c.bf16 %v11588, %v11588
    %v11747 = vpack.c.bf16 %v11594, %v11594
    %v11748 = vpack.c.bf16 %v11600, %v11600
    %v11749 = vpack.c.bf16 %v11606, %v11606
    %v11750 = vpack.c.bf16 %v11612, %v11612
    %v11751 = vpack.c.bf16 %v11618, %v11618
    %v11752 = vpack.c.bf16 %v11624, %v11624
    %v11753 = vld [vmem:[#allocation7] sm:$0xf]
    %v11754 = vld [vmem:[#allocation7 + $0x4] sm:$0xf]
    %v11755 = vld [vmem:[#allocation7 + $0x8] sm:$0xf]
    %v11756 = vld [vmem:[#allocation7 + $0xc] sm:$0xf]
    %v11757 = vld [vmem:[#allocation7 + $0x10] sm:$0xf]
    %v11758 = vld [vmem:[#allocation7 + $0x14] sm:$0xf]
    %v11759 = vld [vmem:[#allocation7 + $0x18] sm:$0xf]
    %v11760 = vld [vmem:[#allocation7 + $0x1c] sm:$0xf]
    %v11761 = vld [vmem:[#allocation7 + $0x20] sm:$0xf]
    %v11762 = vld [vmem:[#allocation7 + $0x24] sm:$0xf]
    %v11763 = vld [vmem:[#allocation7 + $0x28] sm:$0xf]
    %v11764 = vld [vmem:[#allocation7 + $0x2c] sm:$0xf]
    %v11765 = vld [vmem:[#allocation7 + $0x30] sm:$0xf]
    %v11766 = vld [vmem:[#allocation7 + $0x34] sm:$0xf]
    %v11767 = vld [vmem:[#allocation7 + $0x38] sm:$0xf]
    %v11768 = vld [vmem:[#allocation7 + $0x3c] sm:$0xf]
    %v11769 = vld [vmem:[#allocation7 + $0x40] sm:$0xf]
    %v11770 = vld [vmem:[#allocation7 + $0x44] sm:$0xf]
    %v11771 = vld [vmem:[#allocation7 + $0x48] sm:$0xf]
    %v11772 = vld [vmem:[#allocation7 + $0x4c] sm:$0xf]
    %v11773 = vld [vmem:[#allocation7 + $0x50] sm:$0xf]
    %v11774 = vld [vmem:[#allocation7 + $0x54] sm:$0xf]
    %v11775 = vld [vmem:[#allocation7 + $0x58] sm:$0xf]
    %v11776 = vld [vmem:[#allocation7 + $0x5c] sm:$0xf]
    %v11777 = vld [vmem:[#allocation7 + $0x60] sm:$0xf]
    %v11778 = vld [vmem:[#allocation7 + $0x64] sm:$0xf]
    %v11779 = vld [vmem:[#allocation7 + $0x68] sm:$0xf]
    %v11780 = vld [vmem:[#allocation7 + $0x6c] sm:$0xf]
    %v11781 = vld [vmem:[#allocation7 + $0x70] sm:$0xf]
    %v11782 = vld [vmem:[#allocation7 + $0x74] sm:$0xf]
    %v11783 = vld [vmem:[#allocation7 + $0x78] sm:$0xf]
    %v11784 = vld [vmem:[#allocation7 + $0x7c] sm:$0xf]
    %v11785 = vld [vmem:[%s7] sm:$0x1]
    %v11787 = vperm.slane %v11785, 0
    %v11917 = vunpack.c.l.b16 %v11625
    %v11918 = vunpack.c.l.b16 %v11626
    %v11919 = vunpack.c.l.b16 %v11627
    %v11920 = vunpack.c.l.b16 %v11628
    %v11921 = vunpack.c.l.b16 %v11629
    %v11922 = vunpack.c.l.b16 %v11630
    %v11923 = vunpack.c.l.b16 %v11631
    %v11924 = vunpack.c.l.b16 %v11632
    %v11925 = vunpack.c.l.b16 %v11633
    %v11926 = vunpack.c.l.b16 %v11634
    %v11927 = vunpack.c.l.b16 %v11635
    %v11928 = vunpack.c.l.b16 %v11636
    %v11929 = vunpack.c.l.b16 %v11637
    %v11930 = vunpack.c.l.b16 %v11638
    %v11931 = vunpack.c.l.b16 %v11639
    %v11932 = vunpack.c.l.b16 %v11640
    %v11933 = vunpack.c.l.b16 %v11641
    %v11934 = vunpack.c.l.b16 %v11642
    %v11935 = vunpack.c.l.b16 %v11643
    %v11936 = vunpack.c.l.b16 %v11644
    %v11937 = vunpack.c.l.b16 %v11645
    %v11938 = vunpack.c.l.b16 %v11646
    %v11939 = vunpack.c.l.b16 %v11647
    %v11940 = vunpack.c.l.b16 %v11648
    %v11941 = vunpack.c.l.b16 %v11649
    %v11942 = vunpack.c.l.b16 %v11650
    %v11943 = vunpack.c.l.b16 %v11651
    %v11944 = vunpack.c.l.b16 %v11652
    %v11945 = vunpack.c.l.b16 %v11653
    %v11946 = vunpack.c.l.b16 %v11654
    %v11947 = vunpack.c.l.b16 %v11655
    %v11948 = vunpack.c.l.b16 %v11656
    %v11949 = vunpack.c.l.b16 %v11657
    %v11950 = vunpack.c.l.b16 %v11658
    %v11951 = vunpack.c.l.b16 %v11659
    %v11952 = vunpack.c.l.b16 %v11660
    %v11953 = vunpack.c.l.b16 %v11661
    %v11954 = vunpack.c.l.b16 %v11662
    %v11955 = vunpack.c.l.b16 %v11663
    %v11956 = vunpack.c.l.b16 %v11664
    %v11957 = vunpack.c.l.b16 %v11665
    %v11958 = vunpack.c.l.b16 %v11666
    %v11959 = vunpack.c.l.b16 %v11667
    %v11960 = vunpack.c.l.b16 %v11668
    %v11961 = vunpack.c.l.b16 %v11669
    %v11962 = vunpack.c.l.b16 %v11670
    %v11963 = vunpack.c.l.b16 %v11671
    %v11964 = vunpack.c.l.b16 %v11672
    %v11965 = vunpack.c.l.b16 %v11673
    %v11966 = vunpack.c.l.b16 %v11674
    %v11967 = vunpack.c.l.b16 %v11675
    %v11968 = vunpack.c.l.b16 %v11676
    %v11969 = vunpack.c.l.b16 %v11677
    %v11970 = vunpack.c.l.b16 %v11678
    %v11971 = vunpack.c.l.b16 %v11679
    %v11972 = vunpack.c.l.b16 %v11680
    %v11973 = vunpack.c.l.b16 %v11681
    %v11974 = vunpack.c.l.b16 %v11682
    %v11975 = vunpack.c.l.b16 %v11683
    %v11976 = vunpack.c.l.b16 %v11684
    %v11977 = vunpack.c.l.b16 %v11685
    %v11978 = vunpack.c.l.b16 %v11686
    %v11979 = vunpack.c.l.b16 %v11687
    %v11980 = vunpack.c.l.b16 %v11688
    %v11981 = vunpack.c.l.b16 %v11689
    %v11982 = vunpack.c.l.b16 %v11690
    %v11983 = vunpack.c.l.b16 %v11691
    %v11984 = vunpack.c.l.b16 %v11692
    %v11985 = vunpack.c.l.b16 %v11693
    %v11986 = vunpack.c.l.b16 %v11694
    %v11987 = vunpack.c.l.b16 %v11695
    %v11988 = vunpack.c.l.b16 %v11696
    %v11989 = vunpack.c.l.b16 %v11697
    %v11990 = vunpack.c.l.b16 %v11698
    %v11991 = vunpack.c.l.b16 %v11699
    %v11992 = vunpack.c.l.b16 %v11700
    %v11993 = vunpack.c.l.b16 %v11701
    %v11994 = vunpack.c.l.b16 %v11702
    %v11995 = vunpack.c.l.b16 %v11703
    %v11996 = vunpack.c.l.b16 %v11704
    %v11997 = vunpack.c.l.b16 %v11705
    %v11998 = vunpack.c.l.b16 %v11706
    %v11999 = vunpack.c.l.b16 %v11707
    %v12000 = vunpack.c.l.b16 %v11708
    %v12001 = vunpack.c.l.b16 %v11709
    %v12002 = vunpack.c.l.b16 %v11710
    %v12003 = vunpack.c.l.b16 %v11711
    %v12004 = vunpack.c.l.b16 %v11712
    %v12005 = vunpack.c.l.b16 %v11713
    %v12006 = vunpack.c.l.b16 %v11714
    %v12007 = vunpack.c.l.b16 %v11715
    %v12008 = vunpack.c.l.b16 %v11716
    %v12009 = vunpack.c.l.b16 %v11717
    %v12010 = vunpack.c.l.b16 %v11718
    %v12011 = vunpack.c.l.b16 %v11719
    %v12012 = vunpack.c.l.b16 %v11720
    %v12013 = vunpack.c.l.b16 %v11721
    %v12014 = vunpack.c.l.b16 %v11722
    %v12015 = vunpack.c.l.b16 %v11723
    %v12016 = vunpack.c.l.b16 %v11724
    %v12017 = vunpack.c.l.b16 %v11725
    %v12018 = vunpack.c.l.b16 %v11726
    %v12019 = vunpack.c.l.b16 %v11727
    %v12020 = vunpack.c.l.b16 %v11728
    %v12021 = vunpack.c.l.b16 %v11729
    %v12022 = vunpack.c.l.b16 %v11730
    %v12023 = vunpack.c.l.b16 %v11731
    %v12024 = vunpack.c.l.b16 %v11732
    %v12025 = vunpack.c.l.b16 %v11733
    %v12026 = vunpack.c.l.b16 %v11734
    %v12027 = vunpack.c.l.b16 %v11735
    %v12028 = vunpack.c.l.b16 %v11736
    %v12029 = vunpack.c.l.b16 %v11737
    %v12030 = vunpack.c.l.b16 %v11738
    %v12031 = vunpack.c.l.b16 %v11739
    %v12032 = vunpack.c.l.b16 %v11740
    %v12033 = vunpack.c.l.b16 %v11741
    %v12034 = vunpack.c.l.b16 %v11742
    %v12035 = vunpack.c.l.b16 %v11743
    %v12036 = vunpack.c.l.b16 %v11744
    %v12037 = vunpack.c.l.b16 %v11745
    %v12038 = vunpack.c.l.b16 %v11746
    %v12039 = vunpack.c.l.b16 %v11747
    %v12040 = vunpack.c.l.b16 %v11748
    %v12041 = vunpack.c.l.b16 %v11749
    %v12042 = vunpack.c.l.b16 %v11750
    %v12043 = vunpack.c.l.b16 %v11751
    %v12044 = vunpack.c.l.b16 %v11752
    %vm12045 = vcmask 1041409
    %v12046 = vsel %vm12045, %v11919, %v11917
    %vm12047 = vcmask 1042434
    %v12048 = vsel %vm12047, %v11921, %v12046
    %vm12049 = vcmask 1043459
    %v12050 = vsel %vm12049, %v11923, %v12048
    %vm12051 = vcmask 1044484
    %v12052 = vsel %vm12051, %v11925, %v12050
    %vm12053 = vcmask 1045509
    %v12054 = vsel %vm12053, %v11927, %v12052
    %vm12055 = vcmask 1046534
    %v12056 = vsel %vm12055, %v11929, %v12054
    %vm12057 = vcmask 1047559
    %v12058 = vsel %vm12057, %v11931, %v12056
    %v12059 = vsel %vm12045, %v11920, %v11918
    %v12060 = vsel %vm12047, %v11922, %v12059
    %v12061 = vsel %vm12049, %v11924, %v12060
    %v12062 = vsel %vm12051, %v11926, %v12061
    %v12063 = vsel %vm12053, %v11928, %v12062
    %v12064 = vsel %vm12055, %v11930, %v12063
    %v12065 = vsel %vm12057, %v11932, %v12064
    %v12066 = vsel %vm12045, %v11935, %v11933
    %v12067 = vsel %vm12047, %v11937, %v12066
    %v12068 = vsel %vm12049, %v11939, %v12067
    %v12069 = vsel %vm12051, %v11941, %v12068
    %v12070 = vsel %vm12053, %v11943, %v12069
    %v12071 = vsel %vm12055, %v11945, %v12070
    %v12072 = vsel %vm12057, %v11947, %v12071
    %v12073 = vsel %vm12045, %v11936, %v11934
    %v12074 = vsel %vm12047, %v11938, %v12073
    %v12075 = vsel %vm12049, %v11940, %v12074
    %v12076 = vsel %vm12051, %v11942, %v12075
    %v12077 = vsel %vm12053, %v11944, %v12076
    %v12078 = vsel %vm12055, %v11946, %v12077
    %v12079 = vsel %vm12057, %v11948, %v12078
    %v12080 = vsel %vm12045, %v11951, %v11949
    %v12081 = vsel %vm12047, %v11953, %v12080
    %v12082 = vsel %vm12049, %v11955, %v12081
    %v12083 = vsel %vm12051, %v11957, %v12082
    %v12084 = vsel %vm12053, %v11959, %v12083
    %v12085 = vsel %vm12055, %v11961, %v12084
    %v12086 = vsel %vm12057, %v11963, %v12085
    %v12087 = vsel %vm12045, %v11952, %v11950
    %v12088 = vsel %vm12047, %v11954, %v12087
    %v12089 = vsel %vm12049, %v11956, %v12088
    %v12090 = vsel %vm12051, %v11958, %v12089
    %v12091 = vsel %vm12053, %v11960, %v12090
    %v12092 = vsel %vm12055, %v11962, %v12091
    %v12093 = vsel %vm12057, %v11964, %v12092
    %v12094 = vsel %vm12045, %v11967, %v11965
    %v12095 = vsel %vm12047, %v11969, %v12094
    %v12096 = vsel %vm12049, %v11971, %v12095
    %v12097 = vsel %vm12051, %v11973, %v12096
    %v12098 = vsel %vm12053, %v11975, %v12097
    %v12099 = vsel %vm12055, %v11977, %v12098
    %v12100 = vsel %vm12057, %v11979, %v12099
    %v12101 = vsel %vm12045, %v11968, %v11966
    %v12102 = vsel %vm12047, %v11970, %v12101
    %v12103 = vsel %vm12049, %v11972, %v12102
    %v12104 = vsel %vm12051, %v11974, %v12103
    %v12105 = vsel %vm12053, %v11976, %v12104
    %v12106 = vsel %vm12055, %v11978, %v12105
    %v12107 = vsel %vm12057, %v11980, %v12106
    %v12108 = vsel %vm12045, %v11983, %v11981
    %v12109 = vsel %vm12047, %v11985, %v12108
    %v12110 = vsel %vm12049, %v11987, %v12109
    %v12111 = vsel %vm12051, %v11989, %v12110
    %v12112 = vsel %vm12053, %v11991, %v12111
    %v12113 = vsel %vm12055, %v11993, %v12112
    %v12114 = vsel %vm12057, %v11995, %v12113
    %v12115 = vsel %vm12045, %v11984, %v11982
    %v12116 = vsel %vm12047, %v11986, %v12115
    %v12117 = vsel %vm12049, %v11988, %v12116
    %v12118 = vsel %vm12051, %v11990, %v12117
    %v12119 = vsel %vm12053, %v11992, %v12118
    %v12120 = vsel %vm12055, %v11994, %v12119
    %v12121 = vsel %vm12057, %v11996, %v12120
    %v12122 = vsel %vm12045, %v11999, %v11997
    %v12123 = vsel %vm12047, %v12001, %v12122
    %v12124 = vsel %vm12049, %v12003, %v12123
    %v12125 = vsel %vm12051, %v12005, %v12124
    %v12126 = vsel %vm12053, %v12007, %v12125
    %v12127 = vsel %vm12055, %v12009, %v12126
    %v12128 = vsel %vm12057, %v12011, %v12127
    %v12129 = vsel %vm12045, %v12000, %v11998
    %v12130 = vsel %vm12047, %v12002, %v12129
    %v12131 = vsel %vm12049, %v12004, %v12130
    %v12132 = vsel %vm12051, %v12006, %v12131
    %v12133 = vsel %vm12053, %v12008, %v12132
    %v12134 = vsel %vm12055, %v12010, %v12133
    %v12135 = vsel %vm12057, %v12012, %v12134
    %v12136 = vsel %vm12045, %v12015, %v12013
    %v12137 = vsel %vm12047, %v12017, %v12136
    %v12138 = vsel %vm12049, %v12019, %v12137
    %v12139 = vsel %vm12051, %v12021, %v12138
    %v12140 = vsel %vm12053, %v12023, %v12139
    %v12141 = vsel %vm12055, %v12025, %v12140
    %v12142 = vsel %vm12057, %v12027, %v12141
    %v12143 = vsel %vm12045, %v12016, %v12014
    %v12144 = vsel %vm12047, %v12018, %v12143
    %v12145 = vsel %vm12049, %v12020, %v12144
    %v12146 = vsel %vm12051, %v12022, %v12145
    %v12147 = vsel %vm12053, %v12024, %v12146
    %v12148 = vsel %vm12055, %v12026, %v12147
    %v12149 = vsel %vm12057, %v12028, %v12148
    %v12150 = vsel %vm12045, %v12031, %v12029
    %v12151 = vsel %vm12047, %v12033, %v12150
    %v12152 = vsel %vm12049, %v12035, %v12151
    %v12153 = vsel %vm12051, %v12037, %v12152
    %v12154 = vsel %vm12053, %v12039, %v12153
    %v12155 = vsel %vm12055, %v12041, %v12154
    %v12156 = vsel %vm12057, %v12043, %v12155
    %v12157 = vsel %vm12045, %v12032, %v12030
    %v12158 = vsel %vm12047, %v12034, %v12157
    %v12159 = vsel %vm12049, %v12036, %v12158
    %v12160 = vsel %vm12051, %v12038, %v12159
    %v12161 = vsel %vm12053, %v12040, %v12160
    %v12162 = vsel %vm12055, %v12042, %v12161
    %v12163 = vsel %vm12057, %v12044, %v12162
    %v12164 = vpack.c.b16 %v12072, %v12058
    %v12165 = vpack.c.b16 %v12079, %v12065
    %v12166 = vpack.c.b16 %v12100, %v12086
    %v12167 = vpack.c.b16 %v12107, %v12093
    %v12168 = vpack.c.b16 %v12128, %v12114
    %v12169 = vpack.c.b16 %v12135, %v12121
    %v12170 = vpack.c.b16 %v12156, %v12142
    %v12171 = vpack.c.b16 %v12163, %v12149
    %v12212 = vunpack.c.l.b16 %v11753
    %v12213 = vunpack.c.l.b16 %v11754
    %v12214 = vunpack.c.l.b16 %v11755
    %v12215 = vunpack.c.l.b16 %v11756
    %v12216 = vunpack.c.l.b16 %v11757
    %v12217 = vunpack.c.l.b16 %v11758
    %v12218 = vunpack.c.l.b16 %v11759
    %v12219 = vunpack.c.l.b16 %v11760
    %v12220 = vunpack.c.l.b16 %v11761
    %v12221 = vunpack.c.l.b16 %v11762
    %v12222 = vunpack.c.l.b16 %v11763
    %v12223 = vunpack.c.l.b16 %v11764
    %v12224 = vunpack.c.l.b16 %v11765
    %v12225 = vunpack.c.l.b16 %v11766
    %v12226 = vunpack.c.l.b16 %v11767
    %v12227 = vunpack.c.l.b16 %v11768
    %v12228 = vunpack.c.l.b16 %v11769
    %v12229 = vunpack.c.l.b16 %v11770
    %v12230 = vunpack.c.l.b16 %v11771
    %v12231 = vunpack.c.l.b16 %v11772
    %v12232 = vunpack.c.l.b16 %v11773
    %v12233 = vunpack.c.l.b16 %v11774
    %v12234 = vunpack.c.l.b16 %v11775
    %v12235 = vunpack.c.l.b16 %v11776
    %v12236 = vunpack.c.l.b16 %v11777
    %v12237 = vunpack.c.l.b16 %v11778
    %v12238 = vunpack.c.l.b16 %v11779
    %v12239 = vunpack.c.l.b16 %v11780
    %v12240 = vunpack.c.l.b16 %v11781
    %v12241 = vunpack.c.l.b16 %v11782
    %v12242 = vunpack.c.l.b16 %v11783
    %v12243 = vunpack.c.l.b16 %v11784
    %v12244 = vpack.c.b16 %v12213, %v12212
    %v12245 = vpack.c.b16 %v12215, %v12214
    %v12246 = vpack.c.b16 %v12217, %v12216
    %v12247 = vpack.c.b16 %v12219, %v12218
    %v12248 = vpack.c.b16 %v12221, %v12220
    %v12249 = vpack.c.b16 %v12223, %v12222
    %v12250 = vpack.c.b16 %v12225, %v12224
    %v12251 = vpack.c.b16 %v12227, %v12226
    %v12252 = vpack.c.b16 %v12229, %v12228
    %v12253 = vpack.c.b16 %v12231, %v12230
    %v12254 = vpack.c.b16 %v12233, %v12232
    %v12255 = vpack.c.b16 %v12235, %v12234
    %v12256 = vpack.c.b16 %v12237, %v12236
    %v12257 = vpack.c.b16 %v12239, %v12238
    %v12258 = vpack.c.b16 %v12241, %v12240
    %v12259 = vpack.c.b16 %v12243, %v12242
    %12276 = vmatpush.bf16.msra.mxu0 %v12251
    %12277 = vmatpush.bf16.msra.mxu0 %v12250
    %12278 = vmatpush.bf16.msra.mxu0 %v12249
    %12279 = vmatpush.bf16.msra.mxu0 %v12248
    %12280 = vmatpush.bf16.msra.mxu0 %v12247
    %12281 = vmatpush.bf16.msra.mxu0 %v12246
    %12282 = vmatpush.bf16.msra.mxu0 %v12245
    %12283 = vmatpush.bf16.msra.mxu0 %v12244
    %12284 = vmatmul.bf16.gmra.mxu0 %v12164
    %v12285 = vpop.f32.mrf.mxu0
    %v12286 = vadd.f32 %v11787, %v12285
    %v12287 = vpop.f32.mrf.mxu0
    %v12288 = vadd.f32 %v11787, %v12287
    %12289 = vmatmul.bf16.gmra.mxu0 %v12166
    %v12290 = vpop.f32.mrf.mxu0
    %v12291 = vadd.f32 %v11787, %v12290
    %v12292 = vpop.f32.mrf.mxu0
    %v12293 = vadd.f32 %v11787, %v12292
    %12294 = vmatmul.bf16.gmra.mxu0 %v12168
    %v12295 = vpop.f32.mrf.mxu0
    %v12296 = vadd.f32 %v11787, %v12295
    %v12297 = vpop.f32.mrf.mxu0
    %v12298 = vadd.f32 %v11787, %v12297
    %12299 = vmatmul.bf16.gmra.mxu0 %v12170
    %v12300 = vpop.f32.mrf.mxu0
    %v12301 = vadd.f32 %v11787, %v12300
    %v12302 = vpop.f32.mrf.mxu0
    %v12303 = vadd.f32 %v11787, %v12302
    %12304 = vdwg.mxu0
    %12305 = vmatpush.bf16.msra.mxu0 %v12259
    %12306 = vmatpush.bf16.msra.mxu0 %v12258
    %12307 = vmatpush.bf16.msra.mxu0 %v12257
    %12308 = vmatpush.bf16.msra.mxu0 %v12256
    %12309 = vmatpush.bf16.msra.mxu0 %v12255
    %12310 = vmatpush.bf16.msra.mxu0 %v12254
    %12311 = vmatpush.bf16.msra.mxu0 %v12253
    %12312 = vmatpush.bf16.msra.mxu0 %v12252
    %12313 = vmatmul.bf16.gmra.mxu0 %v12165
    %v12314 = vpop.f32.mrf.mxu0
    %v12315 = vadd.f32 %v12286, %v12314
    %v12316 = vpop.f32.mrf.mxu0
    %v12317 = vadd.f32 %v12288, %v12316
    %12318 = vmatmul.bf16.gmra.mxu0 %v12167
    %v12319 = vpop.f32.mrf.mxu0
    %v12320 = vadd.f32 %v12291, %v12319
    %v12321 = vpop.f32.mrf.mxu0
    %v12322 = vadd.f32 %v12293, %v12321
    %12323 = vmatmul.bf16.gmra.mxu0 %v12169
    %v12324 = vpop.f32.mrf.mxu0
    %v12325 = vadd.f32 %v12296, %v12324
    %v12326 = vpop.f32.mrf.mxu0
    %v12327 = vadd.f32 %v12298, %v12326
    %12328 = vmatmul.bf16.gmra.mxu0 %v12171
    %v12329 = vpop.f32.mrf.mxu0
    %v12330 = vadd.f32 %v12301, %v12329
    %v12331 = vpop.f32.mrf.mxu0
    %v12332 = vadd.f32 %v12303, %v12331
    %12333 = vdwg.mxu0
    %v12334 = vmax.f32 %v12315, 0.0
    %v12335 = vmax.f32 %v12317, 0.0
    %v12336 = vmax.f32 %v12320, 0.0
    %v12337 = vmax.f32 %v12322, 0.0
    %v12338 = vmax.f32 %v12325, 0.0
    %v12339 = vmax.f32 %v12327, 0.0
    %v12340 = vmax.f32 %v12330, 0.0
    %v12341 = vmax.f32 %v12332, 0.0
    %v12342 = vpack.c.bf16 %v12335, %v12334
    %v12343 = vpack.c.bf16 %v12337, %v12336
    %v12344 = vpack.c.bf16 %v12339, %v12338
    %v12345 = vpack.c.bf16 %v12341, %v12340
    %v12346 = vld [vmem:[#allocation8] sm:$0xf]
    %v12347 = vld [vmem:[#allocation8 + $0x4] sm:$0xf]
    %v12348 = vld [vmem:[#allocation8 + $0x8] sm:$0xf]
    %v12349 = vld [vmem:[#allocation8 + $0xc] sm:$0xf]
    %v12350 = vld [vmem:[#allocation8 + $0x10] sm:$0xf]
    %v12351 = vld [vmem:[#allocation8 + $0x14] sm:$0xf]
    %v12352 = vld [vmem:[#allocation8 + $0x18] sm:$0xf]
    %v12353 = vld [vmem:[#allocation8 + $0x1c] sm:$0xf]
    %v12354 = vld [vmem:[#allocation8 + $0x20] sm:$0xf]
    %v12355 = vld [vmem:[#allocation8 + $0x24] sm:$0xf]
    %v12356 = vld [vmem:[#allocation8 + $0x28] sm:$0xf]
    %v12357 = vld [vmem:[#allocation8 + $0x2c] sm:$0xf]
    %v12358 = vld [vmem:[#allocation8 + $0x30] sm:$0xf]
    %v12359 = vld [vmem:[#allocation8 + $0x34] sm:$0xf]
    %v12360 = vld [vmem:[#allocation8 + $0x38] sm:$0xf]
    %v12361 = vld [vmem:[#allocation8 + $0x3c] sm:$0xf]
    %v12362 = vld [vmem:[%s9] sm:$0x1]
    %v12364 = vperm.slane %v12362, 0
    %v12382 = vunpack.c.l.b16 %v12346
    %v12383 = vunpack.c.l.b16 %v12347
    %v12384 = vunpack.c.l.b16 %v12348
    %v12385 = vunpack.c.l.b16 %v12349
    %v12386 = vunpack.c.l.b16 %v12350
    %v12387 = vunpack.c.l.b16 %v12351
    %v12388 = vunpack.c.l.b16 %v12352
    %v12389 = vunpack.c.l.b16 %v12353
    %v12390 = vunpack.c.l.b16 %v12354
    %v12391 = vunpack.c.l.b16 %v12355
    %v12392 = vunpack.c.l.b16 %v12356
    %v12393 = vunpack.c.l.b16 %v12357
    %v12394 = vunpack.c.l.b16 %v12358
    %v12395 = vunpack.c.l.b16 %v12359
    %v12396 = vunpack.c.l.b16 %v12360
    %v12397 = vunpack.c.l.b16 %v12361
    %v12398 = vpack.c.b16 %v12383, %v12382
    %v12399 = vpack.c.b16 %v12385, %v12384
    %v12400 = vpack.c.b16 %v12387, %v12386
    %v12401 = vpack.c.b16 %v12389, %v12388
    %v12402 = vpack.c.b16 %v12391, %v12390
    %v12403 = vpack.c.b16 %v12393, %v12392
    %v12404 = vpack.c.b16 %v12395, %v12394
    %v12405 = vpack.c.b16 %v12397, %v12396
    %12414 = vmatpush.bf16.msra.mxu0 %v12405
    %12415 = vmatpush.bf16.msra.mxu0 %v12404
    %12416 = vmatpush.bf16.msra.mxu0 %v12403
    %12417 = vmatpush.bf16.msra.mxu0 %v12402
    %12418 = vmatpush.bf16.msra.mxu0 %v12401
    %12419 = vmatpush.bf16.msra.mxu0 %v12400
    %12420 = vmatpush.bf16.msra.mxu0 %v12399
    %12421 = vmatpush.bf16.msra.mxu0 %v12398
    %12422 = vmatmul.bf16.gmra.mxu0 %v12342
    %v12423 = vpop.f32.mrf.mxu0
    %v12424 = vadd.f32 %v12364, %v12423
    %v12425 = vpop.f32.mrf.mxu0
    %v12426 = vadd.f32 %v12364, %v12425
    %12427 = vmatmul.bf16.gmra.mxu0 %v12343
    %v12428 = vpop.f32.mrf.mxu0
    %v12429 = vadd.f32 %v12364, %v12428
    %v12430 = vpop.f32.mrf.mxu0
    %v12431 = vadd.f32 %v12364, %v12430
    %12432 = vmatmul.bf16.gmra.mxu0 %v12344
    %v12433 = vpop.f32.mrf.mxu0
    %v12434 = vadd.f32 %v12364, %v12433
    %v12435 = vpop.f32.mrf.mxu0
    %v12436 = vadd.f32 %v12364, %v12435
    %12437 = vmatmul.bf16.gmra.mxu0 %v12345
    %v12438 = vpop.f32.mrf.mxu0
    %v12439 = vadd.f32 %v12364, %v12438
    %v12440 = vpop.f32.mrf.mxu0
    %v12441 = vadd.f32 %v12364, %v12440
    %12442 = vdwg.mxu0
    %12443 = vmax.xlane.f32.xlu0 %v12424
    %v12444 = vpop.xlane.xlu0 %12443
    %12445 = vmax.xlane.f32.xlu0 %v12426
    %v12446 = vpop.xlane.xlu0 %12445
    %12447 = vmax.xlane.f32.xlu0 %v12429
    %v12448 = vpop.xlane.xlu0 %12447
    %12449 = vmax.xlane.f32.xlu0 %v12431
    %v12450 = vpop.xlane.xlu0 %12449
    %12451 = vmax.xlane.f32.xlu0 %v12434
    %v12452 = vpop.xlane.xlu0 %12451
    %12453 = vmax.xlane.f32.xlu0 %v12436
    %v12454 = vpop.xlane.xlu0 %12453
    %12455 = vmax.xlane.f32.xlu0 %v12439
    %v12456 = vpop.xlane.xlu0 %12455
    %12457 = vmax.xlane.f32.xlu0 %v12441
    %v12458 = vpop.xlane.xlu0 %12457
    %v12459 = vsub.f32 %v12424, %v12444
    %v12460 = vsub.f32 %v12426, %v12446
    %v12461 = vsub.f32 %v12429, %v12448
    %v12462 = vsub.f32 %v12431, %v12450
    %v12463 = vsub.f32 %v12434, %v12452
    %v12464 = vsub.f32 %v12436, %v12454
    %v12465 = vsub.f32 %v12439, %v12456
    %v12466 = vsub.f32 %v12441, %v12458
    %v12467 = vmul.f32 %v12459, 1.442695
    %v12468 = vpow.pop %v12467
    %v12469 = vmul.f32 %v12460, 1.442695
    %v12470 = vpow.pop %v12469
    %v12471 = vmul.f32 %v12461, 1.442695
    %v12472 = vpow.pop %v12471
    %v12473 = vmul.f32 %v12462, 1.442695
    %v12474 = vpow.pop %v12473
    %v12475 = vmul.f32 %v12463, 1.442695
    %v12476 = vpow.pop %v12475
    %v12477 = vmul.f32 %v12464, 1.442695
    %v12478 = vpow.pop %v12477
    %v12479 = vmul.f32 %v12465, 1.442695
    %v12480 = vpow.pop %v12479
    %v12481 = vmul.f32 %v12466, 1.442695
    %v12482 = vpow.pop %v12481
    %12483 = vadd.xlane.f32.xlu0 %v12468
    %v12484 = vpop.xlane.xlu0 %12483
    %12485 = vadd.xlane.f32.xlu0 %v12470
    %v12486 = vpop.xlane.xlu0 %12485
    %12487 = vadd.xlane.f32.xlu0 %v12472
    %v12488 = vpop.xlane.xlu0 %12487
    %12489 = vadd.xlane.f32.xlu0 %v12474
    %v12490 = vpop.xlane.xlu0 %12489
    %12491 = vadd.xlane.f32.xlu0 %v12476
    %v12492 = vpop.xlane.xlu0 %12491
    %12493 = vadd.xlane.f32.xlu0 %v12478
    %v12494 = vpop.xlane.xlu0 %12493
    %12495 = vadd.xlane.f32.xlu0 %v12480
    %v12496 = vpop.xlane.xlu0 %12495
    %12497 = vadd.xlane.f32.xlu0 %v12482
    %v12498 = vpop.xlane.xlu0 %12497
    %v12499 = vrcp.pop %v12484
    %v12500 = vmul.f32 %v12484, %v12499
    %v12501 = vsub.f32 1.0, %v12500
    %v12502 = vmul.f32 %v12499, %v12501
    %v12503 = vadd.f32 %v12499, %v12502
    %vm12504 = vweird.f32 %v12484
    %vm12505 = vweird.f32 %v12499
    %vm12506 = vmor %vm12504, %vm12505
    %v12507 = vsel %vm12506, %v12499, %v12503
    %v12508 = vand.u32 2147483647, %v12484
    %vm12509 = vcmp.eq.f32.partialorder %v12508, 8.507059e+37
    %v12510 = vand.u32 %v12484, 2147483648
    %v12511 = vor.u32 1.1754944e-38, %v12510
    %v12512 = vsel %vm12509, %v12511, %v12507
    %v12513 = vmul.f32 %v12468, %v12512
    %v12514 = vrcp.pop %v12486
    %v12515 = vmul.f32 %v12486, %v12514
    %v12516 = vsub.f32 1.0, %v12515
    %v12517 = vmul.f32 %v12514, %v12516
    %v12518 = vadd.f32 %v12514, %v12517
    %vm12519 = vweird.f32 %v12486
    %vm12520 = vweird.f32 %v12514
    %vm12521 = vmor %vm12519, %vm12520
    %v12522 = vsel %vm12521, %v12514, %v12518
    %v12523 = vand.u32 2147483647, %v12486
    %vm12524 = vcmp.eq.f32.partialorder %v12523, 8.507059e+37
    %v12525 = vand.u32 %v12486, 2147483648
    %v12526 = vor.u32 1.1754944e-38, %v12525
    %v12527 = vsel %vm12524, %v12526, %v12522
    %v12528 = vmul.f32 %v12470, %v12527
    %v12529 = vrcp.pop %v12488
    %v12530 = vmul.f32 %v12488, %v12529
    %v12531 = vsub.f32 1.0, %v12530
    %v12532 = vmul.f32 %v12529, %v12531
    %v12533 = vadd.f32 %v12529, %v12532
    %vm12534 = vweird.f32 %v12488
    %vm12535 = vweird.f32 %v12529
    %vm12536 = vmor %vm12534, %vm12535
    %v12537 = vsel %vm12536, %v12529, %v12533
    %v12538 = vand.u32 2147483647, %v12488
    %vm12539 = vcmp.eq.f32.partialorder %v12538, 8.507059e+37
    %v12540 = vand.u32 %v12488, 2147483648
    %v12541 = vor.u32 1.1754944e-38, %v12540
    %v12542 = vsel %vm12539, %v12541, %v12537
    %v12543 = vmul.f32 %v12472, %v12542
    %v12544 = vrcp.pop %v12490
    %v12545 = vmul.f32 %v12490, %v12544
    %v12546 = vsub.f32 1.0, %v12545
    %v12547 = vmul.f32 %v12544, %v12546
    %v12548 = vadd.f32 %v12544, %v12547
    %vm12549 = vweird.f32 %v12490
    %vm12550 = vweird.f32 %v12544
    %vm12551 = vmor %vm12549, %vm12550
    %v12552 = vsel %vm12551, %v12544, %v12548
    %v12553 = vand.u32 2147483647, %v12490
    %vm12554 = vcmp.eq.f32.partialorder %v12553, 8.507059e+37
    %v12555 = vand.u32 %v12490, 2147483648
    %v12556 = vor.u32 1.1754944e-38, %v12555
    %v12557 = vsel %vm12554, %v12556, %v12552
    %v12558 = vmul.f32 %v12474, %v12557
    %v12559 = vrcp.pop %v12492
    %v12560 = vmul.f32 %v12492, %v12559
    %v12561 = vsub.f32 1.0, %v12560
    %v12562 = vmul.f32 %v12559, %v12561
    %v12563 = vadd.f32 %v12559, %v12562
    %vm12564 = vweird.f32 %v12492
    %vm12565 = vweird.f32 %v12559
    %vm12566 = vmor %vm12564, %vm12565
    %v12567 = vsel %vm12566, %v12559, %v12563
    %v12568 = vand.u32 2147483647, %v12492
    %vm12569 = vcmp.eq.f32.partialorder %v12568, 8.507059e+37
    %v12570 = vand.u32 %v12492, 2147483648
    %v12571 = vor.u32 1.1754944e-38, %v12570
    %v12572 = vsel %vm12569, %v12571, %v12567
    %v12573 = vmul.f32 %v12476, %v12572
    %v12574 = vrcp.pop %v12494
    %v12575 = vmul.f32 %v12494, %v12574
    %v12576 = vsub.f32 1.0, %v12575
    %v12577 = vmul.f32 %v12574, %v12576
    %v12578 = vadd.f32 %v12574, %v12577
    %vm12579 = vweird.f32 %v12494
    %vm12580 = vweird.f32 %v12574
    %vm12581 = vmor %vm12579, %vm12580
    %v12582 = vsel %vm12581, %v12574, %v12578
    %v12583 = vand.u32 2147483647, %v12494
    %vm12584 = vcmp.eq.f32.partialorder %v12583, 8.507059e+37
    %v12585 = vand.u32 %v12494, 2147483648
    %v12586 = vor.u32 1.1754944e-38, %v12585
    %v12587 = vsel %vm12584, %v12586, %v12582
    %v12588 = vmul.f32 %v12478, %v12587
    %v12589 = vrcp.pop %v12496
    %v12590 = vmul.f32 %v12496, %v12589
    %v12591 = vsub.f32 1.0, %v12590
    %v12592 = vmul.f32 %v12589, %v12591
    %v12593 = vadd.f32 %v12589, %v12592
    %vm12594 = vweird.f32 %v12496
    %vm12595 = vweird.f32 %v12589
    %vm12596 = vmor %vm12594, %vm12595
    %v12597 = vsel %vm12596, %v12589, %v12593
    %v12598 = vand.u32 2147483647, %v12496
    %vm12599 = vcmp.eq.f32.partialorder %v12598, 8.507059e+37
    %v12600 = vand.u32 %v12496, 2147483648
    %v12601 = vor.u32 1.1754944e-38, %v12600
    %v12602 = vsel %vm12599, %v12601, %v12597
    %v12603 = vmul.f32 %v12480, %v12602
    %v12604 = vrcp.pop %v12498
    %v12605 = vmul.f32 %v12498, %v12604
    %v12606 = vsub.f32 1.0, %v12605
    %v12607 = vmul.f32 %v12604, %v12606
    %v12608 = vadd.f32 %v12604, %v12607
    %vm12609 = vweird.f32 %v12498
    %vm12610 = vweird.f32 %v12604
    %vm12611 = vmor %vm12609, %vm12610
    %v12612 = vsel %vm12611, %v12604, %v12608
    %v12613 = vand.u32 2147483647, %v12498
    %vm12614 = vcmp.eq.f32.partialorder %v12613, 8.507059e+37
    %v12615 = vand.u32 %v12498, 2147483648
    %v12616 = vor.u32 1.1754944e-38, %v12615
    %v12617 = vsel %vm12614, %v12616, %v12612
    %v12618 = vmul.f32 %v12482, %v12617
    %12619 = vst [vmem:[#allocation10] sm:$0xff] %v12513
    %12620 = vst [vmem:[#allocation10 + $0x8] sm:$0xff] %v12528
    %12621 = vst [vmem:[#allocation10 + $0x10] sm:$0xff] %v12543
    %12622 = vst [vmem:[#allocation10 + $0x18] sm:$0xff] %v12558
    %12623 = vst [vmem:[#allocation10 + $0x20] sm:$0xff] %v12573
    %12624 = vst [vmem:[#allocation10 + $0x28] sm:$0xff] %v12588
    %12625 = vst [vmem:[#allocation10 + $0x30] sm:$0xff] %v12603
    %12626 = vst [vmem:[#allocation10 + $0x38] sm:$0xff] %v12618
    // Predicated region
    $region58: #{tpu_custom_call.1} parent=1 // pred_check
      _
    $region59: #{tpu_custom_call.1} parent=1 // pred_check_branch
      %12628 = sbr.rel (0) target = $region61
    $region60: #{tpu_custom_call.1} parent=1 // pred_region
      %12630 = vsyncadd [#allocation4], 0
      %s12631 = sshll.u32 [#allocation10], 4
      %s12632 = int_to_ptr.vmem [resolvable:$true] %s12631
      %s12633 = sshll.u32 %s10, 4
      %s12634 = int_to_ptr.hbm [resolvable:$true] %s12633
      %12639 = dma.vmem_to_hbm [thread:$0]  %s12632, 1024, %s12634, [#allocation4], 128, 128, 8
    $region61: #{tpu_custom_call.1} parent=1 // pred_fallthru
      _
    // Predicated region
    $region62: #{tpu_custom_call.1} parent=1 // pred_check
      _
    $region63: #{tpu_custom_call.1} parent=1 // pred_check_branch
      %12641 = sbr.rel (0) target = $region65
    $region64: #{tpu_custom_call.1} parent=1 // pred_region
      %12643 = dma.done [#allocation4], 1024
    $region65: #{tpu_custom_call.1} parent=1 // pred_fallthru
      _
    %12644 = vsyncpa [#allocation3], 1
    %12645 = vsyncpa [#allocation6], 1
    %12646 = vsyncpa [#allocation9], 1
    %12647 = vsyncpa [#allocation4], 1

</llo_original>
